<compile_context>
chip_gen: v7x
topology: tpu7x:2x2x1
jax: 0.10.0
libtpu: 0.0.40
codegen_flags: <defaults>
</compile_context>

<pallas_src>
import functools

import jax
import jax.numpy as jnp
from jax.experimental import pallas as pl
from jax.experimental.pallas import tpu as pltpu


def rbm_forward_kernel(v_ref, w_ref, wt_ref, vb_ref, hb_ref, nh_ref, nv_ref,
                       vout_ref, *, k):
    """One batch tile of the full k-step Gibbs chain, fully resident in VMEM."""
    W = w_ref[...].astype(jnp.bfloat16)      # (n_hid, n_vis)
    W_T = wt_ref[...].astype(jnp.bfloat16)   # (n_vis, n_hid)

    bt = v_ref.shape[0]
    n_vis = v_ref.shape[1]
    n_hid = W.shape[0]

    # Hoist bias broadcasts out of the unrolled Gibbs loop.
    hb_b = jnp.broadcast_to(hb_ref[...], (bt, n_hid))   # (bt, n_hid) f32
    vb_b = jnp.broadcast_to(vb_ref[...], (bt, n_vis))   # (bt, n_vis) f32

    def v_to_h(vis_bf16, step):
        # F.linear(v, W, h_bias) = v @ W.T + h_bias, canonical form via W_T.
        pre = jnp.dot(vis_bf16, W_T, preferred_element_type=jnp.float32) + hb_b
        # sample: sigmoid(pre) > u  <=>  pre > logit(u)  (logistic noise input)
        return (pre > nh_ref[step]).astype(jnp.bfloat16)

    def h_to_v(hid_bf16, step):
        # F.linear(h, W.t(), v_bias) = h @ W + v_bias.
        pre = jnp.dot(hid_bf16, W, preferred_element_type=jnp.float32) + vb_b
        return (pre > nv_ref[step]).astype(jnp.bfloat16)

    v0 = v_ref[...].astype(jnp.bfloat16)
    h_ = v_to_h(v0, 0)
    v_ = v0
    for step in range(k):          # k is small and static -> unrolled
        v_ = h_to_v(h_, step)
        h_ = v_to_h(v_, step + 1)

    vout_ref[...] = v_.astype(vout_ref.dtype)


def rbm_forward(v, W, v_bias, h_bias, key, *, k=5, batch_tile=None):
    """Returns (v, v_k) like RBM.forward.  Randomness comes from `key`."""
    assert k >= 1
    B, n_vis = v.shape
    n_hid = W.shape[0]
    if batch_tile is None:
        batch_tile = min(B, 256)
    assert B % batch_tile == 0, "batch must be a multiple of the batch tile"
    grid = (B // batch_tile,)

    # Draw all uniforms up front and convert to logistic noise (logit(u)) so the
    # kernel only needs a compare:  sigmoid(pre) > u  <=>  pre > logit(u).
    k_h, k_v = jax.random.split(key)
    u_h = jax.random.uniform(k_h, (k + 1, B, n_hid), dtype=jnp.float32)
    u_v = jax.random.uniform(k_v, (k, B, n_vis), dtype=jnp.float32)
    n_h = jnp.log(u_h) - jnp.log1p(-u_h)
    n_v = jnp.log(u_v) - jnp.log1p(-u_v)

    W_T = W.T                                # (n_vis, n_hid), transposed once
    vb = v_bias.reshape(1, n_vis).astype(jnp.float32)
    hb = h_bias.reshape(1, n_hid).astype(jnp.float32)

    kernel = functools.partial(rbm_forward_kernel, k=k)
    v_k = pl.pallas_call(
        kernel,
        out_shape=jax.ShapeDtypeStruct((B, n_vis), jnp.float32),
        grid=grid,
        in_specs=[
            pl.BlockSpec((batch_tile, n_vis), lambda i: (i, 0)),       # v tile
            pl.BlockSpec((n_hid, n_vis), lambda i: (0, 0)),            # W (resident)
            pl.BlockSpec((n_vis, n_hid), lambda i: (0, 0)),            # W_T (resident)
            pl.BlockSpec((1, n_vis), lambda i: (0, 0)),                # v_bias
            pl.BlockSpec((1, n_hid), lambda i: (0, 0)),                # h_bias
            pl.BlockSpec((k + 1, batch_tile, n_hid), lambda i: (0, i, 0)),  # hidden noise
            pl.BlockSpec((k, batch_tile, n_vis), lambda i: (0, i, 0)),      # visible noise
        ],
        out_specs=pl.BlockSpec((batch_tile, n_vis), lambda i: (i, 0)),
        compiler_params=pltpu.CompilerParams(
            dimension_semantics=("parallel",),   # chains are independent -> 2 TCs on v7x
        ),
    )(v, W, W_T, vb, hb, n_h, n_v)
    return v, v_k


if __name__ == "__main__":
    # Small but MXU-friendly shapes (multiples of 256 fill the v6e/v7x MXU;
    # batch_tile=256 fills the M dimension, grid of 2 exercises megacore).
    B, n_vis, n_hid, k = 512, 512, 256, 3
    batch_tile = 256

    key = jax.random.PRNGKey(0)
    k_w, k_v, k_noise = jax.random.split(key, 3)

    # Parameter init mirroring __init__: W ~ 0.01*randn, biases zero.
    W = 0.01 * jax.random.normal(k_w, (n_hid, n_vis), dtype=jnp.float32)
    v_bias = jnp.zeros((n_vis,), dtype=jnp.float32)
    h_bias = jnp.zeros((n_hid,), dtype=jnp.float32)

    # Binary visible units (RBM-style input).
    v = jax.random.bernoulli(k_v, 0.5, (B, n_vis)).astype(jnp.float32)

    v_in, v_out = rbm_forward(v, W, v_bias, h_bias, k_noise, k=k,
                              batch_tile=batch_tile)
    jax.block_until_ready(v_out)

    assert v_out.shape == (B, n_vis)
    assert bool(jnp.all((v_out == 0.0) | (v_out == 1.0)))  # samples are binary
    print("KERNEL_OK")
</pallas_src>

<mosaic_0001>
module attributes {stable_mosaic.version = 11 : i64} {
  func.func @rbm_forward_kernel(%arg0: i32, %arg1: memref<256x512xf32, #tpu.memory_space<vmem>>, %arg2: memref<256x512xf32, #tpu.memory_space<vmem>>, %arg3: memref<512x256xf32, #tpu.memory_space<vmem>>, %arg4: memref<1x512xf32, #tpu.memory_space<vmem>>, %arg5: memref<1x256xf32, #tpu.memory_space<vmem>>, %arg6: memref<4x256x256xf32, #tpu.memory_space<vmem>>, %arg7: memref<3x256x512xf32, #tpu.memory_space<vmem>>, %arg8: memref<256x512xf32, #tpu.memory_space<vmem>>) attributes {dimension_semantics = [#tpu.dimension_semantics<parallel>], iteration_bounds = array<i64: 2>, scalar_prefetch = 0 : i64, scratch_operands = 0 : i64, tpu.core_type = #tpu.core_type<tc>, window_params = [{transform_indices = @transform_0, window_bounds = array<i64: 256, 512>}, {pipeline_mode = #tpu.pipeline_mode<synchronous>, transform_indices = @transform_1, window_bounds = array<i64: 256, 512>}, {pipeline_mode = #tpu.pipeline_mode<synchronous>, transform_indices = @transform_2, window_bounds = array<i64: 512, 256>}, {pipeline_mode = #tpu.pipeline_mode<synchronous>, transform_indices = @transform_3, window_bounds = array<i64: 1, 512>}, {pipeline_mode = #tpu.pipeline_mode<synchronous>, transform_indices = @transform_4, window_bounds = array<i64: 1, 256>}, {transform_indices = @transform_5, window_bounds = array<i64: 4, 256, 256>}, {transform_indices = @transform_6, window_bounds = array<i64: 3, 256, 512>}, {transform_indices = @transform_7, window_bounds = array<i64: 256, 512>}]} {
    %c0 = arith.constant 0 : index
    %c0_0 = arith.constant 0 : index
    %0 = vector.load %arg2[%c0, %c0_0] : memref<256x512xf32, #tpu.memory_space<vmem>>, vector<256x512xf32>
    %1 = arith.truncf %0 : vector<256x512xf32> to vector<256x512xbf16>
    %c0_1 = arith.constant 0 : index
    %c0_2 = arith.constant 0 : index
    %2 = vector.load %arg3[%c0_1, %c0_2] : memref<512x256xf32, #tpu.memory_space<vmem>>, vector<512x256xf32>
    %3 = arith.truncf %2 : vector<512x256xf32> to vector<512x256xbf16>
    %c0_3 = arith.constant 0 : index
    %c0_4 = arith.constant 0 : index
    %4 = vector.load %arg5[%c0_3, %c0_4] : memref<1x256xf32, #tpu.memory_space<vmem>>, vector<1x256xf32>
    %5 = vector.shape_cast %4 : vector<1x256xf32> to vector<1x256xf32>
    %6 = vector.broadcast %5 : vector<1x256xf32> to vector<256x256xf32>
    %c0_5 = arith.constant 0 : index
    %c0_6 = arith.constant 0 : index
    %7 = vector.load %arg4[%c0_5, %c0_6] : memref<1x512xf32, #tpu.memory_space<vmem>>, vector<1x512xf32>
    %8 = vector.shape_cast %7 : vector<1x512xf32> to vector<1x512xf32>
    %9 = vector.broadcast %8 : vector<1x512xf32> to vector<256x512xf32>
    %c0_7 = arith.constant 0 : index
    %c0_8 = arith.constant 0 : index
    %10 = vector.load %arg1[%c0_7, %c0_8] : memref<256x512xf32, #tpu.memory_space<vmem>>, vector<256x512xf32>
    %11 = arith.truncf %10 : vector<256x512xf32> to vector<256x512xbf16>
    %cst = arith.constant dense<0.000000e+00> : vector<256x256xf32>
    %12 = tpu.matmul %11, %3, %cst {dimension_numbers = #tpu.dot_dimension_numbers<[1], [0], [0], [1], [0, 0, 1, 1], [], []>} : vector<256x512xbf16>, vector<512x256xbf16>, vector<256x256xf32> -> vector<256x256xf32>
    %13 = arith.addf %12, %6 : vector<256x256xf32>
    %c0_9 = arith.constant 0 : index
    %c0_10 = arith.constant 0 : index
    %c0_11 = arith.constant 0 : index
    %14 = vector.load %arg6[%c0_9, %c0_10, %c0_11] : memref<4x256x256xf32, #tpu.memory_space<vmem>>, vector<1x256x256xf32>
    %15 = vector.shape_cast %14 : vector<1x256x256xf32> to vector<256x256xf32>
    %16 = arith.cmpf ogt, %13, %15 : vector<256x256xf32>
    %17 = arith.extui %16 : vector<256x256xi1> to vector<256x256xi32>
    %18 = arith.sitofp %17 : vector<256x256xi32> to vector<256x256xf32>
    %19 = arith.truncf %18 : vector<256x256xf32> to vector<256x256xbf16>
    %cst_12 = arith.constant dense<0.000000e+00> : vector<256x512xf32>
    %20 = tpu.matmul %19, %1, %cst_12 {dimension_numbers = #tpu.dot_dimension_numbers<[1], [0], [0], [1], [0, 0, 1, 1], [], []>} : vector<256x256xbf16>, vector<256x512xbf16>, vector<256x512xf32> -> vector<256x512xf32>
    %21 = arith.addf %20, %9 : vector<256x512xf32>
    %c0_13 = arith.constant 0 : index
    %c0_14 = arith.constant 0 : index
    %c0_15 = arith.constant 0 : index
    %22 = vector.load %arg7[%c0_13, %c0_14, %c0_15] : memref<3x256x512xf32, #tpu.memory_space<vmem>>, vector<1x256x512xf32>
    %23 = vector.shape_cast %22 : vector<1x256x512xf32> to vector<256x512xf32>
    %24 = arith.cmpf ogt, %21, %23 : vector<256x512xf32>
    %25 = arith.extui %24 : vector<256x512xi1> to vector<256x512xi32>
    %26 = arith.sitofp %25 : vector<256x512xi32> to vector<256x512xf32>
    %27 = arith.truncf %26 : vector<256x512xf32> to vector<256x512xbf16>
    %cst_16 = arith.constant dense<0.000000e+00> : vector<256x256xf32>
    %28 = tpu.matmul %27, %3, %cst_16 {dimension_numbers = #tpu.dot_dimension_numbers<[1], [0], [0], [1], [0, 0, 1, 1], [], []>} : vector<256x512xbf16>, vector<512x256xbf16>, vector<256x256xf32> -> vector<256x256xf32>
    %29 = arith.addf %28, %6 : vector<256x256xf32>
    %c1 = arith.constant 1 : index
    %c0_17 = arith.constant 0 : index
    %c0_18 = arith.constant 0 : index
    %30 = vector.load %arg6[%c1, %c0_17, %c0_18] : memref<4x256x256xf32, #tpu.memory_space<vmem>>, vector<1x256x256xf32>
    %31 = vector.shape_cast %30 : vector<1x256x256xf32> to vector<256x256xf32>
    %32 = arith.cmpf ogt, %29, %31 : vector<256x256xf32>
    %33 = arith.extui %32 : vector<256x256xi1> to vector<256x256xi32>
    %34 = arith.sitofp %33 : vector<256x256xi32> to vector<256x256xf32>
    %35 = arith.truncf %34 : vector<256x256xf32> to vector<256x256xbf16>
    %cst_19 = arith.constant dense<0.000000e+00> : vector<256x512xf32>
    %36 = tpu.matmul %35, %1, %cst_19 {dimension_numbers = #tpu.dot_dimension_numbers<[1], [0], [0], [1], [0, 0, 1, 1], [], []>} : vector<256x256xbf16>, vector<256x512xbf16>, vector<256x512xf32> -> vector<256x512xf32>
    %37 = arith.addf %36, %9 : vector<256x512xf32>
    %c1_20 = arith.constant 1 : index
    %c0_21 = arith.constant 0 : index
    %c0_22 = arith.constant 0 : index
    %38 = vector.load %arg7[%c1_20, %c0_21, %c0_22] : memref<3x256x512xf32, #tpu.memory_space<vmem>>, vector<1x256x512xf32>
    %39 = vector.shape_cast %38 : vector<1x256x512xf32> to vector<256x512xf32>
    %40 = arith.cmpf ogt, %37, %39 : vector<256x512xf32>
    %41 = arith.extui %40 : vector<256x512xi1> to vector<256x512xi32>
    %42 = arith.sitofp %41 : vector<256x512xi32> to vector<256x512xf32>
    %43 = arith.truncf %42 : vector<256x512xf32> to vector<256x512xbf16>
    %cst_23 = arith.constant dense<0.000000e+00> : vector<256x256xf32>
    %44 = tpu.matmul %43, %3, %cst_23 {dimension_numbers = #tpu.dot_dimension_numbers<[1], [0], [0], [1], [0, 0, 1, 1], [], []>} : vector<256x512xbf16>, vector<512x256xbf16>, vector<256x256xf32> -> vector<256x256xf32>
    %45 = arith.addf %44, %6 : vector<256x256xf32>
    %c2 = arith.constant 2 : index
    %c0_24 = arith.constant 0 : index
    %c0_25 = arith.constant 0 : index
    %46 = vector.load %arg6[%c2, %c0_24, %c0_25] : memref<4x256x256xf32, #tpu.memory_space<vmem>>, vector<1x256x256xf32>
    %47 = vector.shape_cast %46 : vector<1x256x256xf32> to vector<256x256xf32>
    %48 = arith.cmpf ogt, %45, %47 : vector<256x256xf32>
    %49 = arith.extui %48 : vector<256x256xi1> to vector<256x256xi32>
    %50 = arith.sitofp %49 : vector<256x256xi32> to vector<256x256xf32>
    %51 = arith.truncf %50 : vector<256x256xf32> to vector<256x256xbf16>
    %cst_26 = arith.constant dense<0.000000e+00> : vector<256x512xf32>
    %52 = tpu.matmul %51, %1, %cst_26 {dimension_numbers = #tpu.dot_dimension_numbers<[1], [0], [0], [1], [0, 0, 1, 1], [], []>} : vector<256x256xbf16>, vector<256x512xbf16>, vector<256x512xf32> -> vector<256x512xf32>
    %53 = arith.addf %52, %9 : vector<256x512xf32>
    %c2_27 = arith.constant 2 : index
    %c0_28 = arith.constant 0 : index
    %c0_29 = arith.constant 0 : index
    %54 = vector.load %arg7[%c2_27, %c0_28, %c0_29] : memref<3x256x512xf32, #tpu.memory_space<vmem>>, vector<1x256x512xf32>
    %55 = vector.shape_cast %54 : vector<1x256x512xf32> to vector<256x512xf32>
    %56 = arith.cmpf ogt, %53, %55 : vector<256x512xf32>
    %57 = arith.extui %56 : vector<256x512xi1> to vector<256x512xi32>
    %58 = arith.sitofp %57 : vector<256x512xi32> to vector<256x512xf32>
    %59 = arith.truncf %58 : vector<256x512xf32> to vector<256x512xbf16>
    %60 = arith.extf %59 : vector<256x512xbf16> to vector<256x512xf32>
    %c0_30 = arith.constant 0 : index
    %c0_31 = arith.constant 0 : index
    %61 = vector.load %arg8[%c0_30, %c0_31] : memref<256x512xf32, #tpu.memory_space<vmem>>, vector<256x512xf32>
    tpu.vector_store %arg8[%c0_30, %c0_31], %60 {strides = array<i32>} : memref<256x512xf32, #tpu.memory_space<vmem>>, vector<256x512xf32>,
    return
  }
  func.func @transform_0(%arg0: i32) -> (i32, i32) {
    %c0_i32 = arith.constant 0 : i32
    %c0_i32_0 = arith.constant 0 : i32
    return %arg0, %c0_i32 : i32, i32
  }
  func.func @transform_1(%arg0: i32) -> (i32, i32) {
    %c0_i32 = arith.constant 0 : i32
    %c0_i32_0 = arith.constant 0 : i32
    %c0_i32_1 = arith.constant 0 : i32
    return %c0_i32, %c0_i32_0 : i32, i32
  }
  func.func @transform_2(%arg0: i32) -> (i32, i32) {
    %c0_i32 = arith.constant 0 : i32
    %c0_i32_0 = arith.constant 0 : i32
    %c0_i32_1 = arith.constant 0 : i32
    return %c0_i32, %c0_i32_0 : i32, i32
  }
  func.func @transform_3(%arg0: i32) -> (i32, i32) {
    %c0_i32 = arith.constant 0 : i32
    %c0_i32_0 = arith.constant 0 : i32
    %c0_i32_1 = arith.constant 0 : i32
    return %c0_i32, %c0_i32_0 : i32, i32
  }
  func.func @transform_4(%arg0: i32) -> (i32, i32) {
    %c0_i32 = arith.constant 0 : i32
    %c0_i32_0 = arith.constant 0 : i32
    %c0_i32_1 = arith.constant 0 : i32
    return %c0_i32, %c0_i32_0 : i32, i32
  }
  func.func @transform_5(%arg0: i32) -> (i32, i32, i32) {
    %c0_i32 = arith.constant 0 : i32
    %c0_i32_0 = arith.constant 0 : i32
    %c0_i32_1 = arith.constant 0 : i32
    return %c0_i32, %arg0, %c0_i32_0 : i32, i32, i32
  }
  func.func @transform_6(%arg0: i32) -> (i32, i32, i32) {
    %c0_i32 = arith.constant 0 : i32
    %c0_i32_0 = arith.constant 0 : i32
    %c0_i32_1 = arith.constant 0 : i32
    return %c0_i32, %arg0, %c0_i32_0 : i32, i32, i32
  }
  func.func @transform_7(%arg0: i32) -> (i32, i32) {
    %c0_i32 = arith.constant 0 : i32
    %c0_i32_0 = arith.constant 0 : i32
    return %arg0, %c0_i32 : i32, i32
  }
}

</mosaic_0001>

<llo_original>
// kernel: tpu_custom_call.1
$region0: #{tpu_custom_call.1}
  #allocation0 [shape = 'u32[]', space=smem, size = 0x4, offset = 0x4, fixed_abs, tag = 'smem constant byte address 0x4 - core index']
  #allocation1 [shape = 'u32[144,128]{1,0:T(1,128)}', space=vmem, size = 0x12000, scoped, tag = 'internal scratch']
  #allocation15 [shape = 's32[]', space=sflag, size = 0x4, offset = 0, fixed_abs, tag = 'sflag constant byte address 0x0 - dummy sync flag']
  #allocation17 [shape = 's32[]', space=sflag, size = 0x4, offset = 0, fixed_abs, tag = 'sflag constant byte address 0x0 - dummy sync flag']
  %s0 = inlined_call_operand.hbm [shape: f32[512,512], index: 0, kind: input, shape index: {}]
  %s1 = inlined_call_operand.hbm [shape: f32[256,512], index: 1, kind: input, shape index: {}]
  %s2 = inlined_call_operand.hbm [shape: f32[512,256], index: 2, kind: input, shape index: {}]
  %s3 = inlined_call_operand.hbm [shape: f32[1,512], index: 3, kind: input, shape index: {}]
  %s4 = inlined_call_operand.hbm [shape: f32[1,256], index: 4, kind: input, shape index: {}]
  %s5 = inlined_call_operand.hbm [shape: f32[4,512,256], index: 5, kind: input, shape index: {}]
  %s6 = inlined_call_operand.hbm [shape: f32[3,512,512], index: 6, kind: input, shape index: {}]
  %s7 = inlined_call_operand.hbm [shape: f32[512,512], index: 7, kind: output, shape index: {}]
  %s8 = sld [smem:[#allocation0]]
  $region89: #{tpu_custom_call.1} parent=0
    _
  %s10 = ssub.s32 1, %s8
  %s11 = scalar_select 0, %s10, %s8
  $region1: #{tpu_custom_call.1} parent=0
    #allocation2 [shape = 'u8[1048576]{0}', space=vmem, size = 0x100000, scoped, tag = 'input window, operand 0']
    #allocation3 [shape = 's32[2]{0}', space=sflag, size = 0x8, scoped, tag = 'scoped memory for tpu_custom_call.1']
    #allocation4 [shape = 's32[2]{0}', space=sflag, size = 0x8, scoped, tag = 'scoped memory for tpu_custom_call.1']
    #allocation5 [shape = 'u8[524288]{0}', space=vmem, size = 0x80000, scoped, tag = 'input window, operand 1, single buffered']
    #allocation6 [shape = 's32[1]{0}', space=sflag, size = 0x4, scoped, tag = 'scoped memory for tpu_custom_call.1']
    #allocation7 [shape = 'u8[524288]{0}', space=vmem, size = 0x80000, scoped, tag = 'input window, operand 2, single buffered']
    #allocation8 [shape = 'u8[2048]{0}', space=vmem, size = 0x800, scoped, tag = 'input window, operand 3, single buffered']
    #allocation9 [shape = 's32[1]{0}', space=sflag, size = 0x4, scoped, tag = 'scoped memory for tpu_custom_call.1']
    #allocation10 [shape = 'u8[1024]{0}', space=vmem, size = 0x400, scoped, tag = 'input window, operand 4, single buffered']
    #allocation11 [shape = 'u8[2097152]{0}', space=vmem, size = 0x200000, scoped, tag = 'input window, operand 5']
    #allocation12 [shape = 's32[2]{0}', space=sflag, size = 0x8, scoped, tag = 'scoped memory for tpu_custom_call.1']
    #allocation13 [shape = 'u8[3145728]{0}', space=vmem, size = 0x300000, scoped, tag = 'input window, operand 6']
    #allocation14 [shape = 'u8[1048576]{0}', space=vmem, size = 0x100000, scoped, tag = 'output window, operand 0']
    %12 = vsyncpa [#allocation3], 0
    %s13 = scalar_lea.sflag [#allocation3], 1
    %14 = vsyncpa %s13, 0
    %15 = vsyncpa [#allocation6], 0
    %16 = vsyncpa [#allocation9], 0
    %17 = vsyncpa [#allocation12], 0
    %s18 = scalar_lea.sflag [#allocation12], 1
    %19 = vsyncpa %s18, 0
    %20 = vsyncpa [#allocation4], 0
    %s21 = scalar_lea.sflag [#allocation4], 1
    %22 = vsyncpa %s21, 0
    loop: start=0, step=1, limit=4
    $region2: #{tpu_custom_call.1} parent=1 // loop_pre_header
      _
    $region3: #{tpu_custom_call.1} parent=1 // loop_header
      %s24 = sphi 0, %s28
      %p25 = scmp.ge.s32.totalorder %s24, 4
      %s34 = sphi 0, %s36
      %s37 = sphi 0, %s34
      %s38 = sphi 0, %s37
      %s54 = sphi 0, %s38
      %s58 = sphi 0, %s58
      %s60 = sphi 0, %s58
      %s61 = sphi 0, %s60
      %s75 = sphi 0, %s61
      %s79 = sphi 0, %s79
      %s81 = sphi 0, %s79
      %s82 = sphi 0, %s81
      %s96 = sphi 0, %s82
      %s100 = sphi 0, %s100
      %s102 = sphi 0, %s100
      %s103 = sphi 0, %s102
      %s117 = sphi 0, %s103
      %s121 = sphi 0, %s121
      %s123 = sphi 0, %s121
      %s124 = sphi 0, %s123
      %s138 = sphi 0, %s124
      %s144 = sphi 0, %s146
      %s147 = sphi 0, %s144
      %s148 = sphi 0, %s147
      %s164 = sphi 0, %s148
      %s170 = sphi 0, %s172
      %s173 = sphi 0, %s170
      %s174 = sphi 0, %s173
      %s190 = sphi 0, %s174
      %s196 = sphi 0, %s198
      %s199 = sphi 0, %s196
      %s200 = sphi 0, %s199
      %s216 = sphi 0, %s200
    $region4: #{tpu_custom_call.1} parent=1 // loop_header_branch
      %27 = sbr.rel (%p25) target = $region8
    $region5: #{tpu_custom_call.1} parent=1 // loop_body
      %s29 = ssub.s32 %s24, 1
      %s30 = ssub.s32 %s24, 2
      %s31 = sadd.s32 %s24, 1
      %s32 = ssub.s32 %s24, %s31
      %p33 = scmp.eq.s32.totalorder %s32, 0
      %s35 = sadd.s32 %s34, 1
      %s36 = scalar_select %p33, %s34, %s35
      %p39 = pneg %p33
      %p40 = scmp.eq.s32.totalorder %s24, 1
      %p41 = por %p39, %p40
      %p42 = scmp.ne.s32.totalorder %s34, %s37
      %p43 = scmp.eq.s32.totalorder %s24, 0
      %p44 = por %p42, %p43
      %p45 = scmp.ne.s32.totalorder %s34, %s37
      %p46 = scmp.eq.s32.totalorder %s29, 1
      %p47 = por %p45, %p46
      %p48 = scmp.ne.s32.totalorder %s37, %s38
      %p49 = scmp.eq.s32.totalorder %s29, 0
      %p50 = por %p48, %p49
      %p51 = scmp.ne.s32.totalorder %s37, %s38
      %p52 = scmp.eq.s32.totalorder %s30, 1
      %p53 = por %p51, %p52
      %p55 = scmp.ne.s32.totalorder %s38, %s54
      %p56 = scmp.eq.s32.totalorder %s30, 0
      %p57 = por %p55, %p56
      %s59 = sadd.s32 %s58, 1
      %p62 = scmp.eq.s32.totalorder %s24, 1
      %p63 = scmp.ne.s32.totalorder %s58, %s60
      %p64 = scmp.eq.s32.totalorder %s24, 0
      %p65 = por %p63, %p64
      %p66 = scmp.ne.s32.totalorder %s58, %s60
      %p67 = scmp.eq.s32.totalorder %s29, 1
      %p68 = por %p66, %p67
      %p69 = scmp.ne.s32.totalorder %s60, %s61
      %p70 = scmp.eq.s32.totalorder %s29, 0
      %p71 = por %p69, %p70
      %p72 = scmp.ne.s32.totalorder %s60, %s61
      %p73 = scmp.eq.s32.totalorder %s30, 1
      %p74 = por %p72, %p73
      %p76 = scmp.ne.s32.totalorder %s61, %s75
      %p77 = scmp.eq.s32.totalorder %s30, 0
      %p78 = por %p76, %p77
      %s80 = sadd.s32 %s79, 1
      %p83 = scmp.eq.s32.totalorder %s24, 1
      %p84 = scmp.ne.s32.totalorder %s79, %s81
      %p85 = scmp.eq.s32.totalorder %s24, 0
      %p86 = por %p84, %p85
      %p87 = scmp.ne.s32.totalorder %s79, %s81
      %p88 = scmp.eq.s32.totalorder %s29, 1
      %p89 = por %p87, %p88
      %p90 = scmp.ne.s32.totalorder %s81, %s82
      %p91 = scmp.eq.s32.totalorder %s29, 0
      %p92 = por %p90, %p91
      %p93 = scmp.ne.s32.totalorder %s81, %s82
      %p94 = scmp.eq.s32.totalorder %s30, 1
      %p95 = por %p93, %p94
      %p97 = scmp.ne.s32.totalorder %s82, %s96
      %p98 = scmp.eq.s32.totalorder %s30, 0
      %p99 = por %p97, %p98
      %s101 = sadd.s32 %s100, 1
      %p104 = scmp.eq.s32.totalorder %s24, 1
      %p105 = scmp.ne.s32.totalorder %s100, %s102
      %p106 = scmp.eq.s32.totalorder %s24, 0
      %p107 = por %p105, %p106
      %p108 = scmp.ne.s32.totalorder %s100, %s102
      %p109 = scmp.eq.s32.totalorder %s29, 1
      %p110 = por %p108, %p109
      %p111 = scmp.ne.s32.totalorder %s102, %s103
      %p112 = scmp.eq.s32.totalorder %s29, 0
      %p113 = por %p111, %p112
      %p114 = scmp.ne.s32.totalorder %s102, %s103
      %p115 = scmp.eq.s32.totalorder %s30, 1
      %p116 = por %p114, %p115
      %p118 = scmp.ne.s32.totalorder %s103, %s117
      %p119 = scmp.eq.s32.totalorder %s30, 0
      %p120 = por %p118, %p119
      %s122 = sadd.s32 %s121, 1
      %p125 = scmp.eq.s32.totalorder %s24, 1
      %p126 = scmp.ne.s32.totalorder %s121, %s123
      %p127 = scmp.eq.s32.totalorder %s24, 0
      %p128 = por %p126, %p127
      %p129 = scmp.ne.s32.totalorder %s121, %s123
      %p130 = scmp.eq.s32.totalorder %s29, 1
      %p131 = por %p129, %p130
      %p132 = scmp.ne.s32.totalorder %s123, %s124
      %p133 = scmp.eq.s32.totalorder %s29, 0
      %p134 = por %p132, %p133
      %p135 = scmp.ne.s32.totalorder %s123, %s124
      %p136 = scmp.eq.s32.totalorder %s30, 1
      %p137 = por %p135, %p136
      %p139 = scmp.ne.s32.totalorder %s124, %s138
      %p140 = scmp.eq.s32.totalorder %s30, 0
      %p141 = por %p139, %p140
      %s142 = ssub.s32 %s24, %s31
      %p143 = scmp.eq.s32.totalorder %s142, 0
      %s145 = sadd.s32 %s144, 1
      %s146 = scalar_select %p143, %s144, %s145
      %p149 = pneg %p143
      %p150 = scmp.eq.s32.totalorder %s24, 1
      %p151 = por %p149, %p150
      %p152 = scmp.ne.s32.totalorder %s144, %s147
      %p153 = scmp.eq.s32.totalorder %s24, 0
      %p154 = por %p152, %p153
      %p155 = scmp.ne.s32.totalorder %s144, %s147
      %p156 = scmp.eq.s32.totalorder %s29, 1
      %p157 = por %p155, %p156
      %p158 = scmp.ne.s32.totalorder %s147, %s148
      %p159 = scmp.eq.s32.totalorder %s29, 0
      %p160 = por %p158, %p159
      %p161 = scmp.ne.s32.totalorder %s147, %s148
      %p162 = scmp.eq.s32.totalorder %s30, 1
      %p163 = por %p161, %p162
      %p165 = scmp.ne.s32.totalorder %s148, %s164
      %p166 = scmp.eq.s32.totalorder %s30, 0
      %p167 = por %p165, %p166
      %s168 = ssub.s32 %s24, %s31
      %p169 = scmp.eq.s32.totalorder %s168, 0
      %s171 = sadd.s32 %s170, 1
      %s172 = scalar_select %p169, %s170, %s171
      %p175 = pneg %p169
      %p176 = scmp.eq.s32.totalorder %s24, 1
      %p177 = por %p175, %p176
      %p178 = scmp.ne.s32.totalorder %s170, %s173
      %p179 = scmp.eq.s32.totalorder %s24, 0
      %p180 = por %p178, %p179
      %p181 = scmp.ne.s32.totalorder %s170, %s173
      %p182 = scmp.eq.s32.totalorder %s29, 1
      %p183 = por %p181, %p182
      %p184 = scmp.ne.s32.totalorder %s173, %s174
      %p185 = scmp.eq.s32.totalorder %s29, 0
      %p186 = por %p184, %p185
      %p187 = scmp.ne.s32.totalorder %s173, %s174
      %p188 = scmp.eq.s32.totalorder %s30, 1
      %p189 = por %p187, %p188
      %p191 = scmp.ne.s32.totalorder %s174, %s190
      %p192 = scmp.eq.s32.totalorder %s30, 0
      %p193 = por %p191, %p192
      %s194 = ssub.s32 %s24, %s31
      %p195 = scmp.eq.s32.totalorder %s194, 0
      %s197 = sadd.s32 %s196, 1
      %s198 = scalar_select %p195, %s196, %s197
      %p201 = pneg %p195
      %p202 = scmp.eq.s32.totalorder %s24, 1
      %p203 = por %p201, %p202
      %p204 = scmp.ne.s32.totalorder %s196, %s199
      %p205 = scmp.eq.s32.totalorder %s24, 0
      %p206 = por %p204, %p205
      %p207 = scmp.ne.s32.totalorder %s196, %s199
      %p208 = scmp.eq.s32.totalorder %s29, 1
      %p209 = por %p207, %p208
      %p210 = scmp.ne.s32.totalorder %s199, %s200
      %p211 = scmp.eq.s32.totalorder %s29, 0
      %p212 = por %p210, %p211
      %p213 = scmp.ne.s32.totalorder %s199, %s200
      %p214 = scmp.eq.s32.totalorder %s30, 1
      %p215 = por %p213, %p214
      %p217 = scmp.ne.s32.totalorder %s200, %s216
      %p218 = scmp.eq.s32.totalorder %s30, 0
      %p219 = por %p217, %p218
      %p220 = scmp.le.s32.totalorder 1, %s24
      %p221 = scmp.lt.s32.totalorder %s24, 3
      %p222 = pnand %p220, %p221
      %p223 = pneg %p222
      // Predicated region
      $region9: #{tpu_custom_call.1} parent=5 // pred_check
        _
      $region10: #{tpu_custom_call.1} parent=5 // pred_check_branch
        %225 = sbr.rel (%p222) target = $region12
      $region11: #{tpu_custom_call.1} parent=5 // pred_region
        %s226 = ssub.s32 %s24, 1
        // Predicated region
        $region13: #{tpu_custom_call.1} parent=11 // pred_check
          %p227 = pneg %p71
        $region14: #{tpu_custom_call.1} parent=11 // pred_check_branch
          %229 = sbr.rel (%p227) target = $region16
        $region15: #{tpu_custom_call.1} parent=11 // pred_region
          %s231 = ssub.s32 16384, 16384
          %232 = vsyncadd [#allocation6], %s231
          %s233 = sshll.u32 [#allocation5], 4
          %s234 = int_to_ptr.vmem [resolvable:$true] %s233
          %239 = dma.hbm_to_vmem [thread:$0]  %s1, 16384, %s234, [#allocation6], 512, 512, 32
        $region16: #{tpu_custom_call.1} parent=11 // pred_fallthru
          _
        // Predicated region
        $region17: #{tpu_custom_call.1} parent=11 // pred_check
          %p240 = pneg %p92
        $region18: #{tpu_custom_call.1} parent=11 // pred_check_branch
          %242 = sbr.rel (%p240) target = $region20
        $region19: #{tpu_custom_call.1} parent=11 // pred_region
          %s244 = ssub.s32 16384, 16384
          %245 = vsyncadd [#allocation6], %s244
          %s246 = sshll.u32 [#allocation7], 4
          %s247 = int_to_ptr.vmem [resolvable:$true] %s246
          %252 = dma.hbm_to_vmem [thread:$0]  %s2, 16384, %s247, [#allocation6], 256, 256, 16
        $region20: #{tpu_custom_call.1} parent=11 // pred_fallthru
          _
        // Predicated region
        $region21: #{tpu_custom_call.1} parent=11 // pred_check
          %p253 = pneg %p113
        $region22: #{tpu_custom_call.1} parent=11 // pred_check_branch
          %255 = sbr.rel (%p253) target = $region24
        $region23: #{tpu_custom_call.1} parent=11 // pred_region
          %s257 = ssub.s32 64, 64
          %258 = vsyncadd [#allocation9], %s257
          %s260 = sshll.u32 [#allocation8], 4
          %s261 = int_to_ptr.vmem [resolvable:$true] %s260
          %263 = dma.hbm_to_vmem [thread:$0]  %s3, 64, %s261, [#allocation9]
        $region24: #{tpu_custom_call.1} parent=11 // pred_fallthru
          _
        // Predicated region
        $region25: #{tpu_custom_call.1} parent=11 // pred_check
          %p264 = pneg %p134
        $region26: #{tpu_custom_call.1} parent=11 // pred_check_branch
          %266 = sbr.rel (%p264) target = $region28
        $region27: #{tpu_custom_call.1} parent=11 // pred_region
          %s268 = ssub.s32 32, 32
          %269 = vsyncadd [#allocation9], %s268
          %s271 = sshll.u32 [#allocation10], 4
          %s272 = int_to_ptr.vmem [resolvable:$true] %s271
          %274 = dma.hbm_to_vmem [thread:$0]  %s4, 32, %s272, [#allocation9]
        $region28: #{tpu_custom_call.1} parent=11 // pred_fallthru
          _
      $region12: #{tpu_custom_call.1} parent=5 // pred_fallthru
        _
      %p275 = scmp.lt.s32.totalorder %s24, 2
      // Predicated region
      $region29: #{tpu_custom_call.1} parent=5 // pred_check
        %p276 = pneg %p275
      $region30: #{tpu_custom_call.1} parent=5 // pred_check_branch
        %278 = sbr.rel (%p276) target = $region32
      $region31: #{tpu_custom_call.1} parent=5 // pred_region
        // Predicated region
        $region33: #{tpu_custom_call.1} parent=31 // pred_check
          %p279 = pneg %p44
        $region34: #{tpu_custom_call.1} parent=31 // pred_check_branch
          %281 = sbr.rel (%p279) target = $region36
        $region35: #{tpu_custom_call.1} parent=31 // pred_region
          %s282 = sand.u32 %s34, 1
          %s283 = scalar_lea.sflag [#allocation3], %s282
          %s284 = sand.u32 %s34, 1
          %s285 = smul.addr %s284, 1024
          %s286 = scalar_lea.vmem [#allocation2], %s285
          %s287 = smul.u32 32, %s24
          %s289 = ssub.s32 16384, 16384
          %290 = vsyncadd %s283, %s289
          %s291 = smul.addr %s287, 4
          %s292 = smul.addr %s291, 128
          %s293 = scalar_lea.hbm %s0, %s292
          %s294 = sshll.u32 %s286, 4
          %s295 = int_to_ptr.vmem [resolvable:$true] %s294
          %300 = dma.hbm_to_vmem [thread:$0]  %s293, 16384, %s295, %s283, 512, 512, 32
        $region36: #{tpu_custom_call.1} parent=31 // pred_fallthru
          _
        // Predicated region
        $region37: #{tpu_custom_call.1} parent=31 // pred_check
          %p301 = pneg %p154
        $region38: #{tpu_custom_call.1} parent=31 // pred_check_branch
          %303 = sbr.rel (%p301) target = $region40
        $region39: #{tpu_custom_call.1} parent=31 // pred_region
          #allocation16 [shape = 'u32[6]{0}', space=smem, size = 0x18, scoped, tag = 'DMA stride descriptor']
          %s304 = sand.u32 %s24, 1
          %s305 = scalar_lea.sflag [#allocation12], %s304
          %s306 = sand.u32 %s144, 1
          %s307 = smul.addr %s306, 2048
          %s308 = scalar_lea.vmem [#allocation11], %s307
          %s309 = smul.u32 32, %s24
          %s311 = ssub.s32 32768, 32768
          %312 = vsyncadd %s305, %s311
          %s313 = smul.addr %s309, 2
          %s314 = smul.addr %s313, 128
          %s315 = scalar_lea.hbm %s5, %s314
          %s317 = sshll.u32 1, 14
          %s318 = sxor.u32 4294967295, %s317
          %s320 = sld [smem:[#allocation0]]
          %s321 = sadd.s32 2, %s320
          %s323 = sshll.u32 7, 26
          %s324 = sxor.u32 4294967295, %s323
          %s325 = sand.u32 0, %s324
          %s326 = sshll.u32 %s321, 26
          %s327 = sor.u32 %s325, %s326
          %s328 = sshll.u32 %s308, 4
          %s329 = int_to_ptr.vmem [resolvable:$true] %s328
          %335 = sst [smem:[#allocation16]] 16384
          %s336 = scalar_lea.smem [#allocation16], 1
          %337 = sst [smem:[%s336]] 8192
          %s338 = scalar_lea.smem [#allocation16], 2
          %339 = sst [smem:[%s338]] 32
          %s340 = scalar_lea.smem [#allocation16], 3
          %341 = sst [smem:[%s340]] 256
          %s342 = scalar_lea.smem [#allocation16], 4
          %343 = sst [smem:[%s342]] 256
          %s344 = scalar_lea.smem [#allocation16], 5
          %345 = sst [smem:[%s344]] 16
          %347 = dma.general %s315, 32768, %s329, %s305, [#allocation15], [#allocation16], %s327, 0
        $region40: #{tpu_custom_call.1} parent=31 // pred_fallthru
          _
        // Predicated region
        $region41: #{tpu_custom_call.1} parent=31 // pred_check
          %p348 = pneg %p180
        $region42: #{tpu_custom_call.1} parent=31 // pred_check_branch
          %350 = sbr.rel (%p348) target = $region44
        $region43: #{tpu_custom_call.1} parent=31 // pred_region
          #allocation18 [shape = 'u32[6]{0}', space=smem, size = 0x18, scoped, tag = 'DMA stride descriptor']
          %s351 = sand.u32 %s24, 1
          %s352 = scalar_lea.sflag [#allocation12], %s351
          %s353 = sand.u32 %s170, 1
          %s354 = smul.addr %s353, 3072
          %s355 = scalar_lea.vmem [#allocation13], %s354
          %s356 = smul.u32 32, %s24
          %s358 = ssub.s32 49152, 49152
          %359 = vsyncadd %s352, %s358
          %s360 = smul.addr %s356, 4
          %s361 = smul.addr %s360, 128
          %s362 = scalar_lea.hbm %s6, %s361
          %s364 = sshll.u32 1, 14
          %s365 = sxor.u32 4294967295, %s364
          %s367 = sld [smem:[#allocation0]]
          %s368 = sadd.s32 2, %s367
          %s370 = sshll.u32 7, 26
          %s371 = sxor.u32 4294967295, %s370
          %s372 = sand.u32 0, %s371
          %s373 = sshll.u32 %s368, 26
          %s374 = sor.u32 %s372, %s373
          %s375 = sshll.u32 %s355, 4
          %s376 = int_to_ptr.vmem [resolvable:$true] %s375
          %382 = sst [smem:[#allocation18]] 32768
          %s383 = scalar_lea.smem [#allocation18], 1
          %384 = sst [smem:[%s383]] 16384
          %s385 = scalar_lea.smem [#allocation18], 2
          %386 = sst [smem:[%s385]] 32
          %s387 = scalar_lea.smem [#allocation18], 3
          %388 = sst [smem:[%s387]] 512
          %s389 = scalar_lea.smem [#allocation18], 4
          %390 = sst [smem:[%s389]] 512
          %s391 = scalar_lea.smem [#allocation18], 5
          %392 = sst [smem:[%s391]] 32
          %394 = dma.general %s362, 49152, %s376, %s352, [#allocation17], [#allocation18], %s374, 0
        $region44: #{tpu_custom_call.1} parent=31 // pred_fallthru
          _
      $region32: #{tpu_custom_call.1} parent=5 // pred_fallthru
        _
      %p395 = scmp.le.s32.totalorder 1, %s24
      %p396 = scmp.lt.s32.totalorder %s24, 3
      %p397 = pnand %p395, %p396
      %p398 = pneg %p397
      // Predicated region
      $region45: #{tpu_custom_call.1} parent=5 // pred_check
        _
      $region46: #{tpu_custom_call.1} parent=5 // pred_check_branch
        %400 = sbr.rel (%p397) target = $region48
      $region47: #{tpu_custom_call.1} parent=5 // pred_region
        %s401 = ssub.s32 %s24, 1
        %s402 = sand.u32 %s37, 1
        %s403 = scalar_lea.sflag [#allocation3], %s402
        %s404 = sand.u32 %s37, 1
        %s405 = smul.addr %s404, 1024
        %s406 = scalar_lea.vmem [#allocation2], %s405
        // Predicated region
        $region49: #{tpu_custom_call.1} parent=47 // pred_check
          %p407 = pneg %p50
        $region50: #{tpu_custom_call.1} parent=47 // pred_check_branch
          %409 = sbr.rel (%p407) target = $region52
        $region51: #{tpu_custom_call.1} parent=47 // pred_region
          %410 = dma.done %s403, 16384
        $region52: #{tpu_custom_call.1} parent=47 // pred_fallthru
          _
        // Predicated region
        $region53: #{tpu_custom_call.1} parent=47 // pred_check
          %p411 = pneg %p71
        $region54: #{tpu_custom_call.1} parent=47 // pred_check_branch
          %413 = sbr.rel (%p411) target = $region56
        $region55: #{tpu_custom_call.1} parent=47 // pred_region
          %414 = dma.done [#allocation6], 16384
        $region56: #{tpu_custom_call.1} parent=47 // pred_fallthru
          _
        // Predicated region
        $region57: #{tpu_custom_call.1} parent=47 // pred_check
          %p415 = pneg %p92
        $region58: #{tpu_custom_call.1} parent=47 // pred_check_branch
          %417 = sbr.rel (%p415) target = $region60
        $region59: #{tpu_custom_call.1} parent=47 // pred_region
          %418 = dma.done [#allocation6], 16384
        $region60: #{tpu_custom_call.1} parent=47 // pred_fallthru
          _
        // Predicated region
        $region61: #{tpu_custom_call.1} parent=47 // pred_check
          %p419 = pneg %p113
        $region62: #{tpu_custom_call.1} parent=47 // pred_check_branch
          %421 = sbr.rel (%p419) target = $region64
        $region63: #{tpu_custom_call.1} parent=47 // pred_region
          %422 = dma.done [#allocation9], 64
        $region64: #{tpu_custom_call.1} parent=47 // pred_fallthru
          _
        // Predicated region
        $region65: #{tpu_custom_call.1} parent=47 // pred_check
          %p423 = pneg %p134
        $region66: #{tpu_custom_call.1} parent=47 // pred_check_branch
          %425 = sbr.rel (%p423) target = $region68
        $region67: #{tpu_custom_call.1} parent=47 // pred_region
          %426 = dma.done [#allocation9], 32
        $region68: #{tpu_custom_call.1} parent=47 // pred_fallthru
          _
        %s427 = sand.u32 %s29, 1
        %s428 = scalar_lea.sflag [#allocation12], %s427
        %s429 = sand.u32 %s147, 1
        %s430 = smul.addr %s429, 2048
        %s431 = scalar_lea.vmem [#allocation11], %s430
        // Predicated region
        $region69: #{tpu_custom_call.1} parent=47 // pred_check
          %p432 = pneg %p160
        $region70: #{tpu_custom_call.1} parent=47 // pred_check_branch
          %434 = sbr.rel (%p432) target = $region72
        $region71: #{tpu_custom_call.1} parent=47 // pred_region
          %435 = dma.done %s428, 32768
        $region72: #{tpu_custom_call.1} parent=47 // pred_fallthru
          _
        %s436 = sand.u32 %s29, 1
        %s437 = scalar_lea.sflag [#allocation12], %s436
        %s438 = sand.u32 %s173, 1
        %s439 = smul.addr %s438, 3072
        %s440 = scalar_lea.vmem [#allocation13], %s439
        // Predicated region
        $region73: #{tpu_custom_call.1} parent=47 // pred_check
          %p441 = pneg %p186
        $region74: #{tpu_custom_call.1} parent=47 // pred_check_branch
          %443 = sbr.rel (%p441) target = $region76
        $region75: #{tpu_custom_call.1} parent=47 // pred_region
          %444 = dma.done %s437, 49152
        $region76: #{tpu_custom_call.1} parent=47 // pred_fallthru
          _
        %s445 = sand.u32 %s37, 1
        %s446 = scalar_lea.sflag [#allocation3], %s445
        %s447 = sand.u32 %s37, 1
        %s448 = smul.addr %s447, 1024
        %s449 = scalar_lea.vmem [#allocation2], %s448
        %p450 = pneg %p50
        %p451 = pneg %p47
        %p452 = pneg %p71
        %p453 = pneg %p68
        %p454 = pneg %p92
        %p455 = pneg %p89
        %p456 = pneg %p113
        %p457 = pneg %p110
        %p458 = pneg %p134
        %p459 = pneg %p131
        %s460 = sand.u32 %s29, 1
        %s461 = scalar_lea.sflag [#allocation12], %s460
        %s462 = sand.u32 %s147, 1
        %s463 = smul.addr %s462, 2048
        %s464 = scalar_lea.vmem [#allocation11], %s463
        %p465 = pneg %p160
        %p466 = pneg %p157
        %s467 = sand.u32 %s29, 1
        %s468 = scalar_lea.sflag [#allocation12], %s467
        %s469 = sand.u32 %s173, 1
        %s470 = smul.addr %s469, 3072
        %s471 = scalar_lea.vmem [#allocation13], %s470
        %p472 = pneg %p186
        %p473 = pneg %p183
        %p474 = pneg %p212
        %p475 = pneg %p209
        %s476 = sand.u32 %s199, 1
        %s477 = scalar_lea.sflag [#allocation4], %s476
        %s478 = sand.u32 %s199, 1
        %s479 = smul.addr %s478, 1024
        %s480 = scalar_lea.vmem [#allocation14], %s479
        %s481 = smul.u32 32, %s29
        %s482 = smul.u32 32, %s29
        %s483 = smul.u32 32, %s29
        %s484 = smul.u32 32, %s29
        %v485 = vld [vmem:[#allocation5] sm:$0xff]
        %v486 = vld [vmem:[#allocation5 + $0x8] sm:$0xff]
        %v487 = vld [vmem:[#allocation5 + $0x10] sm:$0xff]
        %v488 = vld [vmem:[#allocation5 + $0x18] sm:$0xff]
        %v489 = vld [vmem:[#allocation5 + $0x20] sm:$0xff]
        %v490 = vld [vmem:[#allocation5 + $0x28] sm:$0xff]
        %v491 = vld [vmem:[#allocation5 + $0x30] sm:$0xff]
        %v492 = vld [vmem:[#allocation5 + $0x38] sm:$0xff]
        %v493 = vld [vmem:[#allocation5 + $0x40] sm:$0xff]
        %v494 = vld [vmem:[#allocation5 + $0x48] sm:$0xff]
        %v495 = vld [vmem:[#allocation5 + $0x50] sm:$0xff]
        %v496 = vld [vmem:[#allocation5 + $0x58] sm:$0xff]
        %v497 = vld [vmem:[#allocation5 + $0x60] sm:$0xff]
        %v498 = vld [vmem:[#allocation5 + $0x68] sm:$0xff]
        %v499 = vld [vmem:[#allocation5 + $0x70] sm:$0xff]
        %v500 = vld [vmem:[#allocation5 + $0x78] sm:$0xff]
        %v501 = vld [vmem:[#allocation5 + $0x80] sm:$0xff]
        %v502 = vld [vmem:[#allocation5 + $0x88] sm:$0xff]
        %v503 = vld [vmem:[#allocation5 + $0x90] sm:$0xff]
        %v504 = vld [vmem:[#allocation5 + $0x98] sm:$0xff]
        %v505 = vld [vmem:[#allocation5 + $0xa0] sm:$0xff]
        %v506 = vld [vmem:[#allocation5 + $0xa8] sm:$0xff]
        %v507 = vld [vmem:[#allocation5 + $0xb0] sm:$0xff]
        %v508 = vld [vmem:[#allocation5 + $0xb8] sm:$0xff]
        %v509 = vld [vmem:[#allocation5 + $0xc0] sm:$0xff]
        %v510 = vld [vmem:[#allocation5 + $0xc8] sm:$0xff]
        %v511 = vld [vmem:[#allocation5 + $0xd0] sm:$0xff]
        %v512 = vld [vmem:[#allocation5 + $0xd8] sm:$0xff]
        %v513 = vld [vmem:[#allocation5 + $0xe0] sm:$0xff]
        %v514 = vld [vmem:[#allocation5 + $0xe8] sm:$0xff]
        %v515 = vld [vmem:[#allocation5 + $0xf0] sm:$0xff]
        %v516 = vld [vmem:[#allocation5 + $0xf8] sm:$0xff]
        %v517 = vld [vmem:[#allocation5 + $0x100] sm:$0xff]
        %v518 = vld [vmem:[#allocation5 + $0x108] sm:$0xff]
        %v519 = vld [vmem:[#allocation5 + $0x110] sm:$0xff]
        %v520 = vld [vmem:[#allocation5 + $0x118] sm:$0xff]
        %v521 = vld [vmem:[#allocation5 + $0x120] sm:$0xff]
        %v522 = vld [vmem:[#allocation5 + $0x128] sm:$0xff]
        %v523 = vld [vmem:[#allocation5 + $0x130] sm:$0xff]
        %v524 = vld [vmem:[#allocation5 + $0x138] sm:$0xff]
        %v525 = vld [vmem:[#allocation5 + $0x140] sm:$0xff]
        %v526 = vld [vmem:[#allocation5 + $0x148] sm:$0xff]
        %v527 = vld [vmem:[#allocation5 + $0x150] sm:$0xff]
        %v528 = vld [vmem:[#allocation5 + $0x158] sm:$0xff]
        %v529 = vld [vmem:[#allocation5 + $0x160] sm:$0xff]
        %v530 = vld [vmem:[#allocation5 + $0x168] sm:$0xff]
        %v531 = vld [vmem:[#allocation5 + $0x170] sm:$0xff]
        %v532 = vld [vmem:[#allocation5 + $0x178] sm:$0xff]
        %v533 = vld [vmem:[#allocation5 + $0x180] sm:$0xff]
        %v534 = vld [vmem:[#allocation5 + $0x188] sm:$0xff]
        %v535 = vld [vmem:[#allocation5 + $0x190] sm:$0xff]
        %v536 = vld [vmem:[#allocation5 + $0x198] sm:$0xff]
        %v537 = vld [vmem:[#allocation5 + $0x1a0] sm:$0xff]
        %v538 = vld [vmem:[#allocation5 + $0x1a8] sm:$0xff]
        %v539 = vld [vmem:[#allocation5 + $0x1b0] sm:$0xff]
        %v540 = vld [vmem:[#allocation5 + $0x1b8] sm:$0xff]
        %v541 = vld [vmem:[#allocation5 + $0x1c0] sm:$0xff]
        %v542 = vld [vmem:[#allocation5 + $0x1c8] sm:$0xff]
        %v543 = vld [vmem:[#allocation5 + $0x1d0] sm:$0xff]
        %v544 = vld [vmem:[#allocation5 + $0x1d8] sm:$0xff]
        %v545 = vld [vmem:[#allocation5 + $0x1e0] sm:$0xff]
        %v546 = vld [vmem:[#allocation5 + $0x1e8] sm:$0xff]
        %v547 = vld [vmem:[#allocation5 + $0x1f0] sm:$0xff]
        %v548 = vld [vmem:[#allocation5 + $0x1f8] sm:$0xff]
        %v549 = vld [vmem:[#allocation5 + $0x200] sm:$0xff]
        %v550 = vld [vmem:[#allocation5 + $0x208] sm:$0xff]
        %v551 = vld [vmem:[#allocation5 + $0x210] sm:$0xff]
        %v552 = vld [vmem:[#allocation5 + $0x218] sm:$0xff]
        %v553 = vld [vmem:[#allocation5 + $0x220] sm:$0xff]
        %v554 = vld [vmem:[#allocation5 + $0x228] sm:$0xff]
        %v555 = vld [vmem:[#allocation5 + $0x230] sm:$0xff]
        %v556 = vld [vmem:[#allocation5 + $0x238] sm:$0xff]
        %v557 = vld [vmem:[#allocation5 + $0x240] sm:$0xff]
        %v558 = vld [vmem:[#allocation5 + $0x248] sm:$0xff]
        %v559 = vld [vmem:[#allocation5 + $0x250] sm:$0xff]
        %v560 = vld [vmem:[#allocation5 + $0x258] sm:$0xff]
        %v561 = vld [vmem:[#allocation5 + $0x260] sm:$0xff]
        %v562 = vld [vmem:[#allocation5 + $0x268] sm:$0xff]
        %v563 = vld [vmem:[#allocation5 + $0x270] sm:$0xff]
        %v564 = vld [vmem:[#allocation5 + $0x278] sm:$0xff]
        %v565 = vld [vmem:[#allocation5 + $0x280] sm:$0xff]
        %v566 = vld [vmem:[#allocation5 + $0x288] sm:$0xff]
        %v567 = vld [vmem:[#allocation5 + $0x290] sm:$0xff]
        %v568 = vld [vmem:[#allocation5 + $0x298] sm:$0xff]
        %v569 = vld [vmem:[#allocation5 + $0x2a0] sm:$0xff]
        %v570 = vld [vmem:[#allocation5 + $0x2a8] sm:$0xff]
        %v571 = vld [vmem:[#allocation5 + $0x2b0] sm:$0xff]
        %v572 = vld [vmem:[#allocation5 + $0x2b8] sm:$0xff]
        %v573 = vld [vmem:[#allocation5 + $0x2c0] sm:$0xff]
        %v574 = vld [vmem:[#allocation5 + $0x2c8] sm:$0xff]
        %v575 = vld [vmem:[#allocation5 + $0x2d0] sm:$0xff]
        %v576 = vld [vmem:[#allocation5 + $0x2d8] sm:$0xff]
        %v577 = vld [vmem:[#allocation5 + $0x2e0] sm:$0xff]
        %v578 = vld [vmem:[#allocation5 + $0x2e8] sm:$0xff]
        %v579 = vld [vmem:[#allocation5 + $0x2f0] sm:$0xff]
        %v580 = vld [vmem:[#allocation5 + $0x2f8] sm:$0xff]
        %v581 = vld [vmem:[#allocation5 + $0x300] sm:$0xff]
        %v582 = vld [vmem:[#allocation5 + $0x308] sm:$0xff]
        %v583 = vld [vmem:[#allocation5 + $0x310] sm:$0xff]
        %v584 = vld [vmem:[#allocation5 + $0x318] sm:$0xff]
        %v585 = vld [vmem:[#allocation5 + $0x320] sm:$0xff]
        %v586 = vld [vmem:[#allocation5 + $0x328] sm:$0xff]
        %v587 = vld [vmem:[#allocation5 + $0x330] sm:$0xff]
        %v588 = vld [vmem:[#allocation5 + $0x338] sm:$0xff]
        %v589 = vld [vmem:[#allocation5 + $0x340] sm:$0xff]
        %v590 = vld [vmem:[#allocation5 + $0x348] sm:$0xff]
        %v591 = vld [vmem:[#allocation5 + $0x350] sm:$0xff]
        %v592 = vld [vmem:[#allocation5 + $0x358] sm:$0xff]
        %v593 = vld [vmem:[#allocation5 + $0x360] sm:$0xff]
        %v594 = vld [vmem:[#allocation5 + $0x368] sm:$0xff]
        %v595 = vld [vmem:[#allocation5 + $0x370] sm:$0xff]
        %v596 = vld [vmem:[#allocation5 + $0x378] sm:$0xff]
        %v597 = vld [vmem:[#allocation5 + $0x380] sm:$0xff]
        %v598 = vld [vmem:[#allocation5 + $0x388] sm:$0xff]
        %v599 = vld [vmem:[#allocation5 + $0x390] sm:$0xff]
        %v600 = vld [vmem:[#allocation5 + $0x398] sm:$0xff]
        %v601 = vld [vmem:[#allocation5 + $0x3a0] sm:$0xff]
        %v602 = vld [vmem:[#allocation5 + $0x3a8] sm:$0xff]
        %v603 = vld [vmem:[#allocation5 + $0x3b0] sm:$0xff]
        %v604 = vld [vmem:[#allocation5 + $0x3b8] sm:$0xff]
        %v605 = vld [vmem:[#allocation5 + $0x3c0] sm:$0xff]
        %v606 = vld [vmem:[#allocation5 + $0x3c8] sm:$0xff]
        %v607 = vld [vmem:[#allocation5 + $0x3d0] sm:$0xff]
        %v608 = vld [vmem:[#allocation5 + $0x3d8] sm:$0xff]
        %v609 = vld [vmem:[#allocation5 + $0x3e0] sm:$0xff]
        %v610 = vld [vmem:[#allocation5 + $0x3e8] sm:$0xff]
        %v611 = vld [vmem:[#allocation5 + $0x3f0] sm:$0xff]
        %v612 = vld [vmem:[#allocation5 + $0x3f8] sm:$0xff]
        %v613 = vpack.c.bf16 %v489, %v485
        %v614 = vpack.c.bf16 %v490, %v486
        %v615 = vpack.c.bf16 %v491, %v487
        %v616 = vpack.c.bf16 %v492, %v488
        %v617 = vpack.c.bf16 %v497, %v493
        %v618 = vpack.c.bf16 %v498, %v494
        %v619 = vpack.c.bf16 %v499, %v495
        %v620 = vpack.c.bf16 %v500, %v496
        %v621 = vpack.c.bf16 %v505, %v501
        %v622 = vpack.c.bf16 %v506, %v502
        %v623 = vpack.c.bf16 %v507, %v503
        %v624 = vpack.c.bf16 %v508, %v504
        %v625 = vpack.c.bf16 %v513, %v509
        %v626 = vpack.c.bf16 %v514, %v510
        %v627 = vpack.c.bf16 %v515, %v511
        %v628 = vpack.c.bf16 %v516, %v512
        %v629 = vpack.c.bf16 %v521, %v517
        %v630 = vpack.c.bf16 %v522, %v518
        %v631 = vpack.c.bf16 %v523, %v519
        %v632 = vpack.c.bf16 %v524, %v520
        %v633 = vpack.c.bf16 %v529, %v525
        %v634 = vpack.c.bf16 %v530, %v526
        %v635 = vpack.c.bf16 %v531, %v527
        %v636 = vpack.c.bf16 %v532, %v528
        %v637 = vpack.c.bf16 %v537, %v533
        %v638 = vpack.c.bf16 %v538, %v534
        %v639 = vpack.c.bf16 %v539, %v535
        %v640 = vpack.c.bf16 %v540, %v536
        %v641 = vpack.c.bf16 %v545, %v541
        %v642 = vpack.c.bf16 %v546, %v542
        %v643 = vpack.c.bf16 %v547, %v543
        %v644 = vpack.c.bf16 %v548, %v544
        %v645 = vpack.c.bf16 %v553, %v549
        %v646 = vpack.c.bf16 %v554, %v550
        %v647 = vpack.c.bf16 %v555, %v551
        %v648 = vpack.c.bf16 %v556, %v552
        %v649 = vpack.c.bf16 %v561, %v557
        %v650 = vpack.c.bf16 %v562, %v558
        %v651 = vpack.c.bf16 %v563, %v559
        %v652 = vpack.c.bf16 %v564, %v560
        %v653 = vpack.c.bf16 %v569, %v565
        %v654 = vpack.c.bf16 %v570, %v566
        %v655 = vpack.c.bf16 %v571, %v567
        %v656 = vpack.c.bf16 %v572, %v568
        %v657 = vpack.c.bf16 %v577, %v573
        %v658 = vpack.c.bf16 %v578, %v574
        %v659 = vpack.c.bf16 %v579, %v575
        %v660 = vpack.c.bf16 %v580, %v576
        %v661 = vpack.c.bf16 %v585, %v581
        %v662 = vpack.c.bf16 %v586, %v582
        %v663 = vpack.c.bf16 %v587, %v583
        %v664 = vpack.c.bf16 %v588, %v584
        %v665 = vpack.c.bf16 %v593, %v589
        %v666 = vpack.c.bf16 %v594, %v590
        %v667 = vpack.c.bf16 %v595, %v591
        %v668 = vpack.c.bf16 %v596, %v592
        %v669 = vpack.c.bf16 %v601, %v597
        %v670 = vpack.c.bf16 %v602, %v598
        %v671 = vpack.c.bf16 %v603, %v599
        %v672 = vpack.c.bf16 %v604, %v600
        %v673 = vpack.c.bf16 %v609, %v605
        %v674 = vpack.c.bf16 %v610, %v606
        %v675 = vpack.c.bf16 %v611, %v607
        %v676 = vpack.c.bf16 %v612, %v608
        %v677 = vld [vmem:[#allocation7] sm:$0xff]
        %v678 = vld [vmem:[#allocation7 + $0x8] sm:$0xff]
        %v679 = vld [vmem:[#allocation7 + $0x10] sm:$0xff]
        %v680 = vld [vmem:[#allocation7 + $0x18] sm:$0xff]
        %v681 = vld [vmem:[#allocation7 + $0x20] sm:$0xff]
        %v682 = vld [vmem:[#allocation7 + $0x28] sm:$0xff]
        %v683 = vld [vmem:[#allocation7 + $0x30] sm:$0xff]
        %v684 = vld [vmem:[#allocation7 + $0x38] sm:$0xff]
        %v685 = vld [vmem:[#allocation7 + $0x40] sm:$0xff]
        %v686 = vld [vmem:[#allocation7 + $0x48] sm:$0xff]
        %v687 = vld [vmem:[#allocation7 + $0x50] sm:$0xff]
        %v688 = vld [vmem:[#allocation7 + $0x58] sm:$0xff]
        %v689 = vld [vmem:[#allocation7 + $0x60] sm:$0xff]
        %v690 = vld [vmem:[#allocation7 + $0x68] sm:$0xff]
        %v691 = vld [vmem:[#allocation7 + $0x70] sm:$0xff]
        %v692 = vld [vmem:[#allocation7 + $0x78] sm:$0xff]
        %v693 = vld [vmem:[#allocation7 + $0x80] sm:$0xff]
        %v694 = vld [vmem:[#allocation7 + $0x88] sm:$0xff]
        %v695 = vld [vmem:[#allocation7 + $0x90] sm:$0xff]
        %v696 = vld [vmem:[#allocation7 + $0x98] sm:$0xff]
        %v697 = vld [vmem:[#allocation7 + $0xa0] sm:$0xff]
        %v698 = vld [vmem:[#allocation7 + $0xa8] sm:$0xff]
        %v699 = vld [vmem:[#allocation7 + $0xb0] sm:$0xff]
        %v700 = vld [vmem:[#allocation7 + $0xb8] sm:$0xff]
        %v701 = vld [vmem:[#allocation7 + $0xc0] sm:$0xff]
        %v702 = vld [vmem:[#allocation7 + $0xc8] sm:$0xff]
        %v703 = vld [vmem:[#allocation7 + $0xd0] sm:$0xff]
        %v704 = vld [vmem:[#allocation7 + $0xd8] sm:$0xff]
        %v705 = vld [vmem:[#allocation7 + $0xe0] sm:$0xff]
        %v706 = vld [vmem:[#allocation7 + $0xe8] sm:$0xff]
        %v707 = vld [vmem:[#allocation7 + $0xf0] sm:$0xff]
        %v708 = vld [vmem:[#allocation7 + $0xf8] sm:$0xff]
        %v709 = vld [vmem:[#allocation7 + $0x100] sm:$0xff]
        %v710 = vld [vmem:[#allocation7 + $0x108] sm:$0xff]
        %v711 = vld [vmem:[#allocation7 + $0x110] sm:$0xff]
        %v712 = vld [vmem:[#allocation7 + $0x118] sm:$0xff]
        %v713 = vld [vmem:[#allocation7 + $0x120] sm:$0xff]
        %v714 = vld [vmem:[#allocation7 + $0x128] sm:$0xff]
        %v715 = vld [vmem:[#allocation7 + $0x130] sm:$0xff]
        %v716 = vld [vmem:[#allocation7 + $0x138] sm:$0xff]
        %v717 = vld [vmem:[#allocation7 + $0x140] sm:$0xff]
        %v718 = vld [vmem:[#allocation7 + $0x148] sm:$0xff]
        %v719 = vld [vmem:[#allocation7 + $0x150] sm:$0xff]
        %v720 = vld [vmem:[#allocation7 + $0x158] sm:$0xff]
        %v721 = vld [vmem:[#allocation7 + $0x160] sm:$0xff]
        %v722 = vld [vmem:[#allocation7 + $0x168] sm:$0xff]
        %v723 = vld [vmem:[#allocation7 + $0x170] sm:$0xff]
        %v724 = vld [vmem:[#allocation7 + $0x178] sm:$0xff]
        %v725 = vld [vmem:[#allocation7 + $0x180] sm:$0xff]
        %v726 = vld [vmem:[#allocation7 + $0x188] sm:$0xff]
        %v727 = vld [vmem:[#allocation7 + $0x190] sm:$0xff]
        %v728 = vld [vmem:[#allocation7 + $0x198] sm:$0xff]
        %v729 = vld [vmem:[#allocation7 + $0x1a0] sm:$0xff]
        %v730 = vld [vmem:[#allocation7 + $0x1a8] sm:$0xff]
        %v731 = vld [vmem:[#allocation7 + $0x1b0] sm:$0xff]
        %v732 = vld [vmem:[#allocation7 + $0x1b8] sm:$0xff]
        %v733 = vld [vmem:[#allocation7 + $0x1c0] sm:$0xff]
        %v734 = vld [vmem:[#allocation7 + $0x1c8] sm:$0xff]
        %v735 = vld [vmem:[#allocation7 + $0x1d0] sm:$0xff]
        %v736 = vld [vmem:[#allocation7 + $0x1d8] sm:$0xff]
        %v737 = vld [vmem:[#allocation7 + $0x1e0] sm:$0xff]
        %v738 = vld [vmem:[#allocation7 + $0x1e8] sm:$0xff]
        %v739 = vld [vmem:[#allocation7 + $0x1f0] sm:$0xff]
        %v740 = vld [vmem:[#allocation7 + $0x1f8] sm:$0xff]
        %v741 = vld [vmem:[#allocation7 + $0x200] sm:$0xff]
        %v742 = vld [vmem:[#allocation7 + $0x208] sm:$0xff]
        %v743 = vld [vmem:[#allocation7 + $0x210] sm:$0xff]
        %v744 = vld [vmem:[#allocation7 + $0x218] sm:$0xff]
        %v745 = vld [vmem:[#allocation7 + $0x220] sm:$0xff]
        %v746 = vld [vmem:[#allocation7 + $0x228] sm:$0xff]
        %v747 = vld [vmem:[#allocation7 + $0x230] sm:$0xff]
        %v748 = vld [vmem:[#allocation7 + $0x238] sm:$0xff]
        %v749 = vld [vmem:[#allocation7 + $0x240] sm:$0xff]
        %v750 = vld [vmem:[#allocation7 + $0x248] sm:$0xff]
        %v751 = vld [vmem:[#allocation7 + $0x250] sm:$0xff]
        %v752 = vld [vmem:[#allocation7 + $0x258] sm:$0xff]
        %v753 = vld [vmem:[#allocation7 + $0x260] sm:$0xff]
        %v754 = vld [vmem:[#allocation7 + $0x268] sm:$0xff]
        %v755 = vld [vmem:[#allocation7 + $0x270] sm:$0xff]
        %v756 = vld [vmem:[#allocation7 + $0x278] sm:$0xff]
        %v757 = vld [vmem:[#allocation7 + $0x280] sm:$0xff]
        %v758 = vld [vmem:[#allocation7 + $0x288] sm:$0xff]
        %v759 = vld [vmem:[#allocation7 + $0x290] sm:$0xff]
        %v760 = vld [vmem:[#allocation7 + $0x298] sm:$0xff]
        %v761 = vld [vmem:[#allocation7 + $0x2a0] sm:$0xff]
        %v762 = vld [vmem:[#allocation7 + $0x2a8] sm:$0xff]
        %v763 = vld [vmem:[#allocation7 + $0x2b0] sm:$0xff]
        %v764 = vld [vmem:[#allocation7 + $0x2b8] sm:$0xff]
        %v765 = vld [vmem:[#allocation7 + $0x2c0] sm:$0xff]
        %v766 = vld [vmem:[#allocation7 + $0x2c8] sm:$0xff]
        %v767 = vld [vmem:[#allocation7 + $0x2d0] sm:$0xff]
        %v768 = vld [vmem:[#allocation7 + $0x2d8] sm:$0xff]
        %v769 = vld [vmem:[#allocation7 + $0x2e0] sm:$0xff]
        %v770 = vld [vmem:[#allocation7 + $0x2e8] sm:$0xff]
        %v771 = vld [vmem:[#allocation7 + $0x2f0] sm:$0xff]
        %v772 = vld [vmem:[#allocation7 + $0x2f8] sm:$0xff]
        %v773 = vld [vmem:[#allocation7 + $0x300] sm:$0xff]
        %v774 = vld [vmem:[#allocation7 + $0x308] sm:$0xff]
        %v775 = vld [vmem:[#allocation7 + $0x310] sm:$0xff]
        %v776 = vld [vmem:[#allocation7 + $0x318] sm:$0xff]
        %v777 = vld [vmem:[#allocation7 + $0x320] sm:$0xff]
        %v778 = vld [vmem:[#allocation7 + $0x328] sm:$0xff]
        %v779 = vld [vmem:[#allocation7 + $0x330] sm:$0xff]
        %v780 = vld [vmem:[#allocation7 + $0x338] sm:$0xff]
        %v781 = vld [vmem:[#allocation7 + $0x340] sm:$0xff]
        %v782 = vld [vmem:[#allocation7 + $0x348] sm:$0xff]
        %v783 = vld [vmem:[#allocation7 + $0x350] sm:$0xff]
        %v784 = vld [vmem:[#allocation7 + $0x358] sm:$0xff]
        %v785 = vld [vmem:[#allocation7 + $0x360] sm:$0xff]
        %v786 = vld [vmem:[#allocation7 + $0x368] sm:$0xff]
        %v787 = vld [vmem:[#allocation7 + $0x370] sm:$0xff]
        %v788 = vld [vmem:[#allocation7 + $0x378] sm:$0xff]
        %v789 = vld [vmem:[#allocation7 + $0x380] sm:$0xff]
        %v790 = vld [vmem:[#allocation7 + $0x388] sm:$0xff]
        %v791 = vld [vmem:[#allocation7 + $0x390] sm:$0xff]
        %v792 = vld [vmem:[#allocation7 + $0x398] sm:$0xff]
        %v793 = vld [vmem:[#allocation7 + $0x3a0] sm:$0xff]
        %v794 = vld [vmem:[#allocation7 + $0x3a8] sm:$0xff]
        %v795 = vld [vmem:[#allocation7 + $0x3b0] sm:$0xff]
        %v796 = vld [vmem:[#allocation7 + $0x3b8] sm:$0xff]
        %v797 = vld [vmem:[#allocation7 + $0x3c0] sm:$0xff]
        %v798 = vld [vmem:[#allocation7 + $0x3c8] sm:$0xff]
        %v799 = vld [vmem:[#allocation7 + $0x3d0] sm:$0xff]
        %v800 = vld [vmem:[#allocation7 + $0x3d8] sm:$0xff]
        %v801 = vld [vmem:[#allocation7 + $0x3e0] sm:$0xff]
        %v802 = vld [vmem:[#allocation7 + $0x3e8] sm:$0xff]
        %v803 = vld [vmem:[#allocation7 + $0x3f0] sm:$0xff]
        %v804 = vld [vmem:[#allocation7 + $0x3f8] sm:$0xff]
        %v805 = vpack.c.bf16 %v679, %v677
        %v806 = vpack.c.bf16 %v680, %v678
        %v807 = vpack.c.bf16 %v683, %v681
        %v808 = vpack.c.bf16 %v684, %v682
        %v809 = vpack.c.bf16 %v687, %v685
        %v810 = vpack.c.bf16 %v688, %v686
        %v811 = vpack.c.bf16 %v691, %v689
        %v812 = vpack.c.bf16 %v692, %v690
        %v813 = vpack.c.bf16 %v695, %v693
        %v814 = vpack.c.bf16 %v696, %v694
        %v815 = vpack.c.bf16 %v699, %v697
        %v816 = vpack.c.bf16 %v700, %v698
        %v817 = vpack.c.bf16 %v703, %v701
        %v818 = vpack.c.bf16 %v704, %v702
        %v819 = vpack.c.bf16 %v707, %v705
        %v820 = vpack.c.bf16 %v708, %v706
        %v821 = vpack.c.bf16 %v711, %v709
        %v822 = vpack.c.bf16 %v712, %v710
        %v823 = vpack.c.bf16 %v715, %v713
        %v824 = vpack.c.bf16 %v716, %v714
        %v825 = vpack.c.bf16 %v719, %v717
        %v826 = vpack.c.bf16 %v720, %v718
        %v827 = vpack.c.bf16 %v723, %v721
        %v828 = vpack.c.bf16 %v724, %v722
        %v829 = vpack.c.bf16 %v727, %v725
        %v830 = vpack.c.bf16 %v728, %v726
        %v831 = vpack.c.bf16 %v731, %v729
        %v832 = vpack.c.bf16 %v732, %v730
        %v833 = vpack.c.bf16 %v735, %v733
        %v834 = vpack.c.bf16 %v736, %v734
        %v835 = vpack.c.bf16 %v739, %v737
        %v836 = vpack.c.bf16 %v740, %v738
        %v837 = vpack.c.bf16 %v743, %v741
        %v838 = vpack.c.bf16 %v744, %v742
        %v839 = vpack.c.bf16 %v747, %v745
        %v840 = vpack.c.bf16 %v748, %v746
        %v841 = vpack.c.bf16 %v751, %v749
        %v842 = vpack.c.bf16 %v752, %v750
        %v843 = vpack.c.bf16 %v755, %v753
        %v844 = vpack.c.bf16 %v756, %v754
        %v845 = vpack.c.bf16 %v759, %v757
        %v846 = vpack.c.bf16 %v760, %v758
        %v847 = vpack.c.bf16 %v763, %v761
        %v848 = vpack.c.bf16 %v764, %v762
        %v849 = vpack.c.bf16 %v767, %v765
        %v850 = vpack.c.bf16 %v768, %v766
        %v851 = vpack.c.bf16 %v771, %v769
        %v852 = vpack.c.bf16 %v772, %v770
        %v853 = vpack.c.bf16 %v775, %v773
        %v854 = vpack.c.bf16 %v776, %v774
        %v855 = vpack.c.bf16 %v779, %v777
        %v856 = vpack.c.bf16 %v780, %v778
        %v857 = vpack.c.bf16 %v783, %v781
        %v858 = vpack.c.bf16 %v784, %v782
        %v859 = vpack.c.bf16 %v787, %v785
        %v860 = vpack.c.bf16 %v788, %v786
        %v861 = vpack.c.bf16 %v791, %v789
        %v862 = vpack.c.bf16 %v792, %v790
        %v863 = vpack.c.bf16 %v795, %v793
        %v864 = vpack.c.bf16 %v796, %v794
        %v865 = vpack.c.bf16 %v799, %v797
        %v866 = vpack.c.bf16 %v800, %v798
        %v867 = vpack.c.bf16 %v803, %v801
        %v868 = vpack.c.bf16 %v804, %v802
        %v869 = vld [vmem:[#allocation10] sm:$0x3]
        %v871 = vlaneseq
        %v872 = vshrl.u32 %v871, 7
        %v873 = vsub.s32 0, %v872
        %v874 = vrot.slane %v869, %v873
        %v875 = vlaneseq
        %v876 = vshrl.u32 %v875, 7
        %v877 = vsub.s32 1, %v876
        %v878 = vrot.slane %v869, %v877
        %v881 = vld [vmem:[#allocation8] sm:$0xf]
        %v883 = vlaneseq
        %v884 = vshrl.u32 %v883, 7
        %v885 = vsub.s32 0, %v884
        %v886 = vrot.slane %v881, %v885
        %v887 = vlaneseq
        %v888 = vshrl.u32 %v887, 7
        %v889 = vsub.s32 1, %v888
        %v890 = vrot.slane %v881, %v889
        %v891 = vlaneseq
        %v892 = vshrl.u32 %v891, 7
        %v893 = vsub.s32 2, %v892
        %v894 = vrot.slane %v881, %v893
        %v895 = vlaneseq
        %v896 = vshrl.u32 %v895, 7
        %v897 = vsub.s32 3, %v896
        %v898 = vrot.slane %v881, %v897
        %v903 = vld [vmem:[%s406] sm:$0xff]
        %v904 = vld [vmem:[%s406 + $0x8] sm:$0xff]
        %v905 = vld [vmem:[%s406 + $0x10] sm:$0xff]
        %v906 = vld [vmem:[%s406 + $0x18] sm:$0xff]
        %v907 = vld [vmem:[%s406 + $0x20] sm:$0xff]
        %v908 = vld [vmem:[%s406 + $0x28] sm:$0xff]
        %v909 = vld [vmem:[%s406 + $0x30] sm:$0xff]
        %v910 = vld [vmem:[%s406 + $0x38] sm:$0xff]
        %v911 = vld [vmem:[%s406 + $0x40] sm:$0xff]
        %v912 = vld [vmem:[%s406 + $0x48] sm:$0xff]
        %v913 = vld [vmem:[%s406 + $0x50] sm:$0xff]
        %v914 = vld [vmem:[%s406 + $0x58] sm:$0xff]
        %v915 = vld [vmem:[%s406 + $0x60] sm:$0xff]
        %v916 = vld [vmem:[%s406 + $0x68] sm:$0xff]
        %v917 = vld [vmem:[%s406 + $0x70] sm:$0xff]
        %v918 = vld [vmem:[%s406 + $0x78] sm:$0xff]
        %v919 = vld [vmem:[%s406 + $0x80] sm:$0xff]
        %v920 = vld [vmem:[%s406 + $0x88] sm:$0xff]
        %v921 = vld [vmem:[%s406 + $0x90] sm:$0xff]
        %v922 = vld [vmem:[%s406 + $0x98] sm:$0xff]
        %v923 = vld [vmem:[%s406 + $0xa0] sm:$0xff]
        %v924 = vld [vmem:[%s406 + $0xa8] sm:$0xff]
        %v925 = vld [vmem:[%s406 + $0xb0] sm:$0xff]
        %v926 = vld [vmem:[%s406 + $0xb8] sm:$0xff]
        %v927 = vld [vmem:[%s406 + $0xc0] sm:$0xff]
        %v928 = vld [vmem:[%s406 + $0xc8] sm:$0xff]
        %v929 = vld [vmem:[%s406 + $0xd0] sm:$0xff]
        %v930 = vld [vmem:[%s406 + $0xd8] sm:$0xff]
        %v931 = vld [vmem:[%s406 + $0xe0] sm:$0xff]
        %v932 = vld [vmem:[%s406 + $0xe8] sm:$0xff]
        %v933 = vld [vmem:[%s406 + $0xf0] sm:$0xff]
        %v934 = vld [vmem:[%s406 + $0xf8] sm:$0xff]
        %v935 = vld [vmem:[%s406 + $0x100] sm:$0xff]
        %v936 = vld [vmem:[%s406 + $0x108] sm:$0xff]
        %v937 = vld [vmem:[%s406 + $0x110] sm:$0xff]
        %v938 = vld [vmem:[%s406 + $0x118] sm:$0xff]
        %v939 = vld [vmem:[%s406 + $0x120] sm:$0xff]
        %v940 = vld [vmem:[%s406 + $0x128] sm:$0xff]
        %v941 = vld [vmem:[%s406 + $0x130] sm:$0xff]
        %v942 = vld [vmem:[%s406 + $0x138] sm:$0xff]
        %v943 = vld [vmem:[%s406 + $0x140] sm:$0xff]
        %v944 = vld [vmem:[%s406 + $0x148] sm:$0xff]
        %v945 = vld [vmem:[%s406 + $0x150] sm:$0xff]
        %v946 = vld [vmem:[%s406 + $0x158] sm:$0xff]
        %v947 = vld [vmem:[%s406 + $0x160] sm:$0xff]
        %v948 = vld [vmem:[%s406 + $0x168] sm:$0xff]
        %v949 = vld [vmem:[%s406 + $0x170] sm:$0xff]
        %v950 = vld [vmem:[%s406 + $0x178] sm:$0xff]
        %v951 = vld [vmem:[%s406 + $0x180] sm:$0xff]
        %v952 = vld [vmem:[%s406 + $0x188] sm:$0xff]
        %v953 = vld [vmem:[%s406 + $0x190] sm:$0xff]
        %v954 = vld [vmem:[%s406 + $0x198] sm:$0xff]
        %v955 = vld [vmem:[%s406 + $0x1a0] sm:$0xff]
        %v956 = vld [vmem:[%s406 + $0x1a8] sm:$0xff]
        %v957 = vld [vmem:[%s406 + $0x1b0] sm:$0xff]
        %v958 = vld [vmem:[%s406 + $0x1b8] sm:$0xff]
        %v959 = vld [vmem:[%s406 + $0x1c0] sm:$0xff]
        %v960 = vld [vmem:[%s406 + $0x1c8] sm:$0xff]
        %v961 = vld [vmem:[%s406 + $0x1d0] sm:$0xff]
        %v962 = vld [vmem:[%s406 + $0x1d8] sm:$0xff]
        %v963 = vld [vmem:[%s406 + $0x1e0] sm:$0xff]
        %v964 = vld [vmem:[%s406 + $0x1e8] sm:$0xff]
        %v965 = vld [vmem:[%s406 + $0x1f0] sm:$0xff]
        %v966 = vld [vmem:[%s406 + $0x1f8] sm:$0xff]
        %v967 = vld [vmem:[%s406 + $0x200] sm:$0xff]
        %v968 = vld [vmem:[%s406 + $0x208] sm:$0xff]
        %v969 = vld [vmem:[%s406 + $0x210] sm:$0xff]
        %v970 = vld [vmem:[%s406 + $0x218] sm:$0xff]
        %v971 = vld [vmem:[%s406 + $0x220] sm:$0xff]
        %v972 = vld [vmem:[%s406 + $0x228] sm:$0xff]
        %v973 = vld [vmem:[%s406 + $0x230] sm:$0xff]
        %v974 = vld [vmem:[%s406 + $0x238] sm:$0xff]
        %v975 = vld [vmem:[%s406 + $0x240] sm:$0xff]
        %v976 = vld [vmem:[%s406 + $0x248] sm:$0xff]
        %v977 = vld [vmem:[%s406 + $0x250] sm:$0xff]
        %v978 = vld [vmem:[%s406 + $0x258] sm:$0xff]
        %v979 = vld [vmem:[%s406 + $0x260] sm:$0xff]
        %v980 = vld [vmem:[%s406 + $0x268] sm:$0xff]
        %v981 = vld [vmem:[%s406 + $0x270] sm:$0xff]
        %v982 = vld [vmem:[%s406 + $0x278] sm:$0xff]
        %v983 = vld [vmem:[%s406 + $0x280] sm:$0xff]
        %v984 = vld [vmem:[%s406 + $0x288] sm:$0xff]
        %v985 = vld [vmem:[%s406 + $0x290] sm:$0xff]
        %v986 = vld [vmem:[%s406 + $0x298] sm:$0xff]
        %v987 = vld [vmem:[%s406 + $0x2a0] sm:$0xff]
        %v988 = vld [vmem:[%s406 + $0x2a8] sm:$0xff]
        %v989 = vld [vmem:[%s406 + $0x2b0] sm:$0xff]
        %v990 = vld [vmem:[%s406 + $0x2b8] sm:$0xff]
        %v991 = vld [vmem:[%s406 + $0x2c0] sm:$0xff]
        %v992 = vld [vmem:[%s406 + $0x2c8] sm:$0xff]
        %v993 = vld [vmem:[%s406 + $0x2d0] sm:$0xff]
        %v994 = vld [vmem:[%s406 + $0x2d8] sm:$0xff]
        %v995 = vld [vmem:[%s406 + $0x2e0] sm:$0xff]
        %v996 = vld [vmem:[%s406 + $0x2e8] sm:$0xff]
        %v997 = vld [vmem:[%s406 + $0x2f0] sm:$0xff]
        %v998 = vld [vmem:[%s406 + $0x2f8] sm:$0xff]
        %v999 = vld [vmem:[%s406 + $0x300] sm:$0xff]
        %v1000 = vld [vmem:[%s406 + $0x308] sm:$0xff]
        %v1001 = vld [vmem:[%s406 + $0x310] sm:$0xff]
        %v1002 = vld [vmem:[%s406 + $0x318] sm:$0xff]
        %v1003 = vld [vmem:[%s406 + $0x320] sm:$0xff]
        %v1004 = vld [vmem:[%s406 + $0x328] sm:$0xff]
        %v1005 = vld [vmem:[%s406 + $0x330] sm:$0xff]
        %v1006 = vld [vmem:[%s406 + $0x338] sm:$0xff]
        %v1007 = vld [vmem:[%s406 + $0x340] sm:$0xff]
        %v1008 = vld [vmem:[%s406 + $0x348] sm:$0xff]
        %v1009 = vld [vmem:[%s406 + $0x350] sm:$0xff]
        %v1010 = vld [vmem:[%s406 + $0x358] sm:$0xff]
        %v1011 = vld [vmem:[%s406 + $0x360] sm:$0xff]
        %v1012 = vld [vmem:[%s406 + $0x368] sm:$0xff]
        %v1013 = vld [vmem:[%s406 + $0x370] sm:$0xff]
        %v1014 = vld [vmem:[%s406 + $0x378] sm:$0xff]
        %v1015 = vld [vmem:[%s406 + $0x380] sm:$0xff]
        %v1016 = vld [vmem:[%s406 + $0x388] sm:$0xff]
        %v1017 = vld [vmem:[%s406 + $0x390] sm:$0xff]
        %v1018 = vld [vmem:[%s406 + $0x398] sm:$0xff]
        %v1019 = vld [vmem:[%s406 + $0x3a0] sm:$0xff]
        %v1020 = vld [vmem:[%s406 + $0x3a8] sm:$0xff]
        %v1021 = vld [vmem:[%s406 + $0x3b0] sm:$0xff]
        %v1022 = vld [vmem:[%s406 + $0x3b8] sm:$0xff]
        %v1023 = vld [vmem:[%s406 + $0x3c0] sm:$0xff]
        %v1024 = vld [vmem:[%s406 + $0x3c8] sm:$0xff]
        %v1025 = vld [vmem:[%s406 + $0x3d0] sm:$0xff]
        %v1026 = vld [vmem:[%s406 + $0x3d8] sm:$0xff]
        %v1027 = vld [vmem:[%s406 + $0x3e0] sm:$0xff]
        %v1028 = vld [vmem:[%s406 + $0x3e8] sm:$0xff]
        %v1029 = vld [vmem:[%s406 + $0x3f0] sm:$0xff]
        %v1030 = vld [vmem:[%s406 + $0x3f8] sm:$0xff]
        %v1031 = vpack.c.bf16 %v907, %v903
        %v1032 = vpack.c.bf16 %v908, %v904
        %v1033 = vpack.c.bf16 %v909, %v905
        %v1034 = vpack.c.bf16 %v910, %v906
        %v1035 = vpack.c.bf16 %v915, %v911
        %v1036 = vpack.c.bf16 %v916, %v912
        %v1037 = vpack.c.bf16 %v917, %v913
        %v1038 = vpack.c.bf16 %v918, %v914
        %v1039 = vpack.c.bf16 %v923, %v919
        %v1040 = vpack.c.bf16 %v924, %v920
        %v1041 = vpack.c.bf16 %v925, %v921
        %v1042 = vpack.c.bf16 %v926, %v922
        %v1043 = vpack.c.bf16 %v931, %v927
        %v1044 = vpack.c.bf16 %v932, %v928
        %v1045 = vpack.c.bf16 %v933, %v929
        %v1046 = vpack.c.bf16 %v934, %v930
        %v1047 = vpack.c.bf16 %v939, %v935
        %v1048 = vpack.c.bf16 %v940, %v936
        %v1049 = vpack.c.bf16 %v941, %v937
        %v1050 = vpack.c.bf16 %v942, %v938
        %v1051 = vpack.c.bf16 %v947, %v943
        %v1052 = vpack.c.bf16 %v948, %v944
        %v1053 = vpack.c.bf16 %v949, %v945
        %v1054 = vpack.c.bf16 %v950, %v946
        %v1055 = vpack.c.bf16 %v955, %v951
        %v1056 = vpack.c.bf16 %v956, %v952
        %v1057 = vpack.c.bf16 %v957, %v953
        %v1058 = vpack.c.bf16 %v958, %v954
        %v1059 = vpack.c.bf16 %v963, %v959
        %v1060 = vpack.c.bf16 %v964, %v960
        %v1061 = vpack.c.bf16 %v965, %v961
        %v1062 = vpack.c.bf16 %v966, %v962
        %v1063 = vpack.c.bf16 %v971, %v967
        %v1064 = vpack.c.bf16 %v972, %v968
        %v1065 = vpack.c.bf16 %v973, %v969
        %v1066 = vpack.c.bf16 %v974, %v970
        %v1067 = vpack.c.bf16 %v979, %v975
        %v1068 = vpack.c.bf16 %v980, %v976
        %v1069 = vpack.c.bf16 %v981, %v977
        %v1070 = vpack.c.bf16 %v982, %v978
        %v1071 = vpack.c.bf16 %v987, %v983
        %v1072 = vpack.c.bf16 %v988, %v984
        %v1073 = vpack.c.bf16 %v989, %v985
        %v1074 = vpack.c.bf16 %v990, %v986
        %v1075 = vpack.c.bf16 %v995, %v991
        %v1076 = vpack.c.bf16 %v996, %v992
        %v1077 = vpack.c.bf16 %v997, %v993
        %v1078 = vpack.c.bf16 %v998, %v994
        %v1079 = vpack.c.bf16 %v1003, %v999
        %v1080 = vpack.c.bf16 %v1004, %v1000
        %v1081 = vpack.c.bf16 %v1005, %v1001
        %v1082 = vpack.c.bf16 %v1006, %v1002
        %v1083 = vpack.c.bf16 %v1011, %v1007
        %v1084 = vpack.c.bf16 %v1012, %v1008
        %v1085 = vpack.c.bf16 %v1013, %v1009
        %v1086 = vpack.c.bf16 %v1014, %v1010
        %v1087 = vpack.c.bf16 %v1019, %v1015
        %v1088 = vpack.c.bf16 %v1020, %v1016
        %v1089 = vpack.c.bf16 %v1021, %v1017
        %v1090 = vpack.c.bf16 %v1022, %v1018
        %v1091 = vpack.c.bf16 %v1027, %v1023
        %v1092 = vpack.c.bf16 %v1028, %v1024
        %v1093 = vpack.c.bf16 %v1029, %v1025
        %v1094 = vpack.c.bf16 %v1030, %v1026
        %1095 = vmatprep.subr.bf16.mxu0 %v806
        %1096 = vmatpush1.bf16.msra.mxu0 %v805
        %1097 = vmatprep.subr.bf16.mxu0 %v808
        %1098 = vmatpush1.bf16.msra.mxu0 %v807
        %1099 = vmatprep.subr.bf16.mxu0 %v810
        %1100 = vmatpush1.bf16.msra.mxu0 %v809
        %1101 = vmatprep.subr.bf16.mxu0 %v812
        %1102 = vmatpush1.bf16.msra.mxu0 %v811
        %1103 = vmatprep.subr.bf16.mxu0 %v814
        %1104 = vmatpush1.bf16.msra.mxu0 %v813
        %1105 = vmatprep.subr.bf16.mxu0 %v816
        %1106 = vmatpush1.bf16.msra.mxu0 %v815
        %1107 = vmatprep.subr.bf16.mxu0 %v818
        %1108 = vmatpush1.bf16.msra.mxu0 %v817
        %1109 = vmatprep.subr.bf16.mxu0 %v820
        %1110 = vmatpush1.bf16.msra.mxu0 %v819
        %1111 = vmatprep.subr.bf16.mxu0 %v822
        %1112 = vmatpush1.bf16.msra.mxu0 %v821
        %1113 = vmatprep.subr.bf16.mxu0 %v824
        %1114 = vmatpush1.bf16.msra.mxu0 %v823
        %1115 = vmatprep.subr.bf16.mxu0 %v826
        %1116 = vmatpush1.bf16.msra.mxu0 %v825
        %1117 = vmatprep.subr.bf16.mxu0 %v828
        %1118 = vmatpush1.bf16.msra.mxu0 %v827
        %1119 = vmatprep.subr.bf16.mxu0 %v830
        %1120 = vmatpush1.bf16.msra.mxu0 %v829
        %1121 = vmatprep.subr.bf16.mxu0 %v832
        %1122 = vmatpush1.bf16.msra.mxu0 %v831
        %1123 = vmatprep.subr.bf16.mxu0 %v834
        %1124 = vmatpush1.bf16.msra.mxu0 %v833
        %1125 = vmatprep.subr.bf16.mxu0 %v836
        %1126 = vmatpush1.bf16.msra.mxu0 %v835
        %1127 = vmatprep.mubr.bf16.mxu0 %v1032
        %1128 = vmatmul.mubr.bf16.gmra.mrb[0].mxu0 %v1031
        %v1129 = vpop.f32.mrb[0].mxu0
        %v1130 = vadd.f32 %v874, %v1129
        %v1131 = vpop.f32.mrb[0].mxu0
        %v1132 = vadd.f32 %v878, %v1131
        %v1133 = vpop.f32.mrb[0].mxu0
        %v1134 = vadd.f32 %v874, %v1133
        %v1135 = vpop.f32.mrb[0].mxu0
        %v1136 = vadd.f32 %v878, %v1135
        %1137 = vmatprep.mubr.bf16.mxu0 %v1036
        %1138 = vmatmul.mubr.bf16.gmra.mrb[0].mxu0 %v1035
        %v1139 = vpop.f32.mrb[0].mxu0
        %v1140 = vadd.f32 %v874, %v1139
        %v1141 = vpop.f32.mrb[0].mxu0
        %v1142 = vadd.f32 %v878, %v1141
        %v1143 = vpop.f32.mrb[0].mxu0
        %v1144 = vadd.f32 %v874, %v1143
        %v1145 = vpop.f32.mrb[0].mxu0
        %v1146 = vadd.f32 %v878, %v1145
        %1147 = vmatprep.mubr.bf16.mxu0 %v1040
        %1148 = vmatmul.mubr.bf16.gmra.mrb[0].mxu0 %v1039
        %v1149 = vpop.f32.mrb[0].mxu0
        %v1150 = vadd.f32 %v874, %v1149
        %v1151 = vpop.f32.mrb[0].mxu0
        %v1152 = vadd.f32 %v878, %v1151
        %v1153 = vpop.f32.mrb[0].mxu0
        %v1154 = vadd.f32 %v874, %v1153
        %v1155 = vpop.f32.mrb[0].mxu0
        %v1156 = vadd.f32 %v878, %v1155
        %1157 = vmatprep.mubr.bf16.mxu0 %v1044
        %1158 = vmatmul.mubr.bf16.gmra.mrb[0].mxu0 %v1043
        %v1159 = vpop.f32.mrb[0].mxu0
        %v1160 = vadd.f32 %v874, %v1159
        %v1161 = vpop.f32.mrb[0].mxu0
        %v1162 = vadd.f32 %v878, %v1161
        %v1163 = vpop.f32.mrb[0].mxu0
        %v1164 = vadd.f32 %v874, %v1163
        %v1165 = vpop.f32.mrb[0].mxu0
        %v1166 = vadd.f32 %v878, %v1165
        %1167 = vmatprep.mubr.bf16.mxu0 %v1048
        %1168 = vmatmul.mubr.bf16.gmra.mrb[0].mxu0 %v1047
        %v1169 = vpop.f32.mrb[0].mxu0
        %v1170 = vadd.f32 %v874, %v1169
        %v1171 = vpop.f32.mrb[0].mxu0
        %v1172 = vadd.f32 %v878, %v1171
        %v1173 = vpop.f32.mrb[0].mxu0
        %v1174 = vadd.f32 %v874, %v1173
        %v1175 = vpop.f32.mrb[0].mxu0
        %v1176 = vadd.f32 %v878, %v1175
        %1177 = vmatprep.mubr.bf16.mxu0 %v1052
        %1178 = vmatmul.mubr.bf16.gmra.mrb[0].mxu0 %v1051
        %v1179 = vpop.f32.mrb[0].mxu0
        %v1180 = vadd.f32 %v874, %v1179
        %v1181 = vpop.f32.mrb[0].mxu0
        %v1182 = vadd.f32 %v878, %v1181
        %v1183 = vpop.f32.mrb[0].mxu0
        %v1184 = vadd.f32 %v874, %v1183
        %v1185 = vpop.f32.mrb[0].mxu0
        %v1186 = vadd.f32 %v878, %v1185
        %1187 = vmatprep.mubr.bf16.mxu0 %v1056
        %1188 = vmatmul.mubr.bf16.gmra.mrb[0].mxu0 %v1055
        %v1189 = vpop.f32.mrb[0].mxu0
        %v1190 = vadd.f32 %v874, %v1189
        %v1191 = vpop.f32.mrb[0].mxu0
        %v1192 = vadd.f32 %v878, %v1191
        %v1193 = vpop.f32.mrb[0].mxu0
        %v1194 = vadd.f32 %v874, %v1193
        %v1195 = vpop.f32.mrb[0].mxu0
        %v1196 = vadd.f32 %v878, %v1195
        %1197 = vmatprep.mubr.bf16.mxu0 %v1060
        %1198 = vmatmul.mubr.bf16.gmra.mrb[0].mxu0 %v1059
        %v1199 = vpop.f32.mrb[0].mxu0
        %v1200 = vadd.f32 %v874, %v1199
        %v1201 = vpop.f32.mrb[0].mxu0
        %v1202 = vadd.f32 %v878, %v1201
        %v1203 = vpop.f32.mrb[0].mxu0
        %v1204 = vadd.f32 %v874, %v1203
        %v1205 = vpop.f32.mrb[0].mxu0
        %v1206 = vadd.f32 %v878, %v1205
        %1207 = vmatprep.mubr.bf16.mxu0 %v1064
        %1208 = vmatmul.mubr.bf16.gmra.mrb[0].mxu0 %v1063
        %v1209 = vpop.f32.mrb[0].mxu0
        %v1210 = vadd.f32 %v874, %v1209
        %v1211 = vpop.f32.mrb[0].mxu0
        %v1212 = vadd.f32 %v878, %v1211
        %v1213 = vpop.f32.mrb[0].mxu0
        %v1214 = vadd.f32 %v874, %v1213
        %v1215 = vpop.f32.mrb[0].mxu0
        %v1216 = vadd.f32 %v878, %v1215
        %1217 = vmatprep.mubr.bf16.mxu0 %v1068
        %1218 = vmatmul.mubr.bf16.gmra.mrb[0].mxu0 %v1067
        %v1219 = vpop.f32.mrb[0].mxu0
        %v1220 = vadd.f32 %v874, %v1219
        %v1221 = vpop.f32.mrb[0].mxu0
        %v1222 = vadd.f32 %v878, %v1221
        %v1223 = vpop.f32.mrb[0].mxu0
        %v1224 = vadd.f32 %v874, %v1223
        %v1225 = vpop.f32.mrb[0].mxu0
        %v1226 = vadd.f32 %v878, %v1225
        %1227 = vmatprep.mubr.bf16.mxu0 %v1072
        %1228 = vmatmul.mubr.bf16.gmra.mrb[0].mxu0 %v1071
        %v1229 = vpop.f32.mrb[0].mxu0
        %v1230 = vadd.f32 %v874, %v1229
        %v1231 = vpop.f32.mrb[0].mxu0
        %v1232 = vadd.f32 %v878, %v1231
        %v1233 = vpop.f32.mrb[0].mxu0
        %v1234 = vadd.f32 %v874, %v1233
        %v1235 = vpop.f32.mrb[0].mxu0
        %v1236 = vadd.f32 %v878, %v1235
        %1237 = vmatprep.mubr.bf16.mxu0 %v1076
        %1238 = vmatmul.mubr.bf16.gmra.mrb[0].mxu0 %v1075
        %v1239 = vpop.f32.mrb[0].mxu0
        %v1240 = vadd.f32 %v874, %v1239
        %v1241 = vpop.f32.mrb[0].mxu0
        %v1242 = vadd.f32 %v878, %v1241
        %v1243 = vpop.f32.mrb[0].mxu0
        %v1244 = vadd.f32 %v874, %v1243
        %v1245 = vpop.f32.mrb[0].mxu0
        %v1246 = vadd.f32 %v878, %v1245
        %1247 = vmatprep.mubr.bf16.mxu0 %v1080
        %1248 = vmatmul.mubr.bf16.gmra.mrb[0].mxu0 %v1079
        %v1249 = vpop.f32.mrb[0].mxu0
        %v1250 = vadd.f32 %v874, %v1249
        %v1251 = vpop.f32.mrb[0].mxu0
        %v1252 = vadd.f32 %v878, %v1251
        %v1253 = vpop.f32.mrb[0].mxu0
        %v1254 = vadd.f32 %v874, %v1253
        %v1255 = vpop.f32.mrb[0].mxu0
        %v1256 = vadd.f32 %v878, %v1255
        %1257 = vmatprep.mubr.bf16.mxu0 %v1084
        %1258 = vmatmul.mubr.bf16.gmra.mrb[0].mxu0 %v1083
        %v1259 = vpop.f32.mrb[0].mxu0
        %v1260 = vadd.f32 %v874, %v1259
        %v1261 = vpop.f32.mrb[0].mxu0
        %v1262 = vadd.f32 %v878, %v1261
        %v1263 = vpop.f32.mrb[0].mxu0
        %v1264 = vadd.f32 %v874, %v1263
        %v1265 = vpop.f32.mrb[0].mxu0
        %v1266 = vadd.f32 %v878, %v1265
        %1267 = vmatprep.mubr.bf16.mxu0 %v1088
        %1268 = vmatmul.mubr.bf16.gmra.mrb[0].mxu0 %v1087
        %v1269 = vpop.f32.mrb[0].mxu0
        %v1270 = vadd.f32 %v874, %v1269
        %v1271 = vpop.f32.mrb[0].mxu0
        %v1272 = vadd.f32 %v878, %v1271
        %v1273 = vpop.f32.mrb[0].mxu0
        %v1274 = vadd.f32 %v874, %v1273
        %v1275 = vpop.f32.mrb[0].mxu0
        %v1276 = vadd.f32 %v878, %v1275
        %1277 = vmatprep.mubr.bf16.mxu0 %v1092
        %1278 = vmatmul.mubr.bf16.gmra.mrb[0].mxu0 %v1091
        %v1279 = vpop.f32.mrb[0].mxu0
        %v1280 = vadd.f32 %v874, %v1279
        %v1281 = vpop.f32.mrb[0].mxu0
        %v1282 = vadd.f32 %v878, %v1281
        %v1283 = vpop.f32.mrb[0].mxu0
        %v1284 = vadd.f32 %v874, %v1283
        %v1285 = vpop.f32.mrb[0].mxu0
        %v1286 = vadd.f32 %v878, %v1285
        %1287 = vdwg.mxu0
        %1288 = vmatprep.subr.bf16.mxu0 %v838
        %1289 = vmatpush1.bf16.msra.mxu0 %v837
        %1290 = vmatprep.subr.bf16.mxu0 %v840
        %1291 = vmatpush1.bf16.msra.mxu0 %v839
        %1292 = vmatprep.subr.bf16.mxu0 %v842
        %1293 = vmatpush1.bf16.msra.mxu0 %v841
        %1294 = vmatprep.subr.bf16.mxu0 %v844
        %1295 = vmatpush1.bf16.msra.mxu0 %v843
        %1296 = vmatprep.subr.bf16.mxu0 %v846
        %1297 = vmatpush1.bf16.msra.mxu0 %v845
        %1298 = vmatprep.subr.bf16.mxu0 %v848
        %1299 = vmatpush1.bf16.msra.mxu0 %v847
        %1300 = vmatprep.subr.bf16.mxu0 %v850
        %1301 = vmatpush1.bf16.msra.mxu0 %v849
        %1302 = vmatprep.subr.bf16.mxu0 %v852
        %1303 = vmatpush1.bf16.msra.mxu0 %v851
        %1304 = vmatprep.subr.bf16.mxu0 %v854
        %1305 = vmatpush1.bf16.msra.mxu0 %v853
        %1306 = vmatprep.subr.bf16.mxu0 %v856
        %1307 = vmatpush1.bf16.msra.mxu0 %v855
        %1308 = vmatprep.subr.bf16.mxu0 %v858
        %1309 = vmatpush1.bf16.msra.mxu0 %v857
        %1310 = vmatprep.subr.bf16.mxu0 %v860
        %1311 = vmatpush1.bf16.msra.mxu0 %v859
        %1312 = vmatprep.subr.bf16.mxu0 %v862
        %1313 = vmatpush1.bf16.msra.mxu0 %v861
        %1314 = vmatprep.subr.bf16.mxu0 %v864
        %1315 = vmatpush1.bf16.msra.mxu0 %v863
        %1316 = vmatprep.subr.bf16.mxu0 %v866
        %1317 = vmatpush1.bf16.msra.mxu0 %v865
        %1318 = vmatprep.subr.bf16.mxu0 %v868
        %1319 = vmatpush1.bf16.msra.mxu0 %v867
        %1320 = vmatprep.mubr.bf16.mxu0 %v1034
        %1321 = vmatmul.mubr.bf16.gmra.mrb[0].mxu0 %v1033
        %v1322 = vpop.f32.mrb[0].mxu0
        %v1323 = vadd.f32 %v1130, %v1322
        %v1324 = vpop.f32.mrb[0].mxu0
        %v1325 = vadd.f32 %v1132, %v1324
        %v1326 = vpop.f32.mrb[0].mxu0
        %v1327 = vadd.f32 %v1134, %v1326
        %v1328 = vpop.f32.mrb[0].mxu0
        %v1329 = vadd.f32 %v1136, %v1328
        %1330 = vmatprep.mubr.bf16.mxu0 %v1038
        %1331 = vmatmul.mubr.bf16.gmra.mrb[0].mxu0 %v1037
        %v1332 = vpop.f32.mrb[0].mxu0
        %v1333 = vadd.f32 %v1140, %v1332
        %v1334 = vpop.f32.mrb[0].mxu0
        %v1335 = vadd.f32 %v1142, %v1334
        %v1336 = vpop.f32.mrb[0].mxu0
        %v1337 = vadd.f32 %v1144, %v1336
        %v1338 = vpop.f32.mrb[0].mxu0
        %v1339 = vadd.f32 %v1146, %v1338
        %1340 = vmatprep.mubr.bf16.mxu0 %v1042
        %1341 = vmatmul.mubr.bf16.gmra.mrb[0].mxu0 %v1041
        %v1342 = vpop.f32.mrb[0].mxu0
        %v1343 = vadd.f32 %v1150, %v1342
        %v1344 = vpop.f32.mrb[0].mxu0
        %v1345 = vadd.f32 %v1152, %v1344
        %v1346 = vpop.f32.mrb[0].mxu0
        %v1347 = vadd.f32 %v1154, %v1346
        %v1348 = vpop.f32.mrb[0].mxu0
        %v1349 = vadd.f32 %v1156, %v1348
        %1350 = vmatprep.mubr.bf16.mxu0 %v1046
        %1351 = vmatmul.mubr.bf16.gmra.mrb[0].mxu0 %v1045
        %v1352 = vpop.f32.mrb[0].mxu0
        %v1353 = vadd.f32 %v1160, %v1352
        %v1354 = vpop.f32.mrb[0].mxu0
        %v1355 = vadd.f32 %v1162, %v1354
        %v1356 = vpop.f32.mrb[0].mxu0
        %v1357 = vadd.f32 %v1164, %v1356
        %v1358 = vpop.f32.mrb[0].mxu0
        %v1359 = vadd.f32 %v1166, %v1358
        %1360 = vmatprep.mubr.bf16.mxu0 %v1050
        %1361 = vmatmul.mubr.bf16.gmra.mrb[0].mxu0 %v1049
        %v1362 = vpop.f32.mrb[0].mxu0
        %v1363 = vadd.f32 %v1170, %v1362
        %v1364 = vpop.f32.mrb[0].mxu0
        %v1365 = vadd.f32 %v1172, %v1364
        %v1366 = vpop.f32.mrb[0].mxu0
        %v1367 = vadd.f32 %v1174, %v1366
        %v1368 = vpop.f32.mrb[0].mxu0
        %v1369 = vadd.f32 %v1176, %v1368
        %1370 = vmatprep.mubr.bf16.mxu0 %v1054
        %1371 = vmatmul.mubr.bf16.gmra.mrb[0].mxu0 %v1053
        %v1372 = vpop.f32.mrb[0].mxu0
        %v1373 = vadd.f32 %v1180, %v1372
        %v1374 = vpop.f32.mrb[0].mxu0
        %v1375 = vadd.f32 %v1182, %v1374
        %v1376 = vpop.f32.mrb[0].mxu0
        %v1377 = vadd.f32 %v1184, %v1376
        %v1378 = vpop.f32.mrb[0].mxu0
        %v1379 = vadd.f32 %v1186, %v1378
        %1380 = vmatprep.mubr.bf16.mxu0 %v1058
        %1381 = vmatmul.mubr.bf16.gmra.mrb[0].mxu0 %v1057
        %v1382 = vpop.f32.mrb[0].mxu0
        %v1383 = vadd.f32 %v1190, %v1382
        %v1384 = vpop.f32.mrb[0].mxu0
        %v1385 = vadd.f32 %v1192, %v1384
        %v1386 = vpop.f32.mrb[0].mxu0
        %v1387 = vadd.f32 %v1194, %v1386
        %v1388 = vpop.f32.mrb[0].mxu0
        %v1389 = vadd.f32 %v1196, %v1388
        %1390 = vmatprep.mubr.bf16.mxu0 %v1062
        %1391 = vmatmul.mubr.bf16.gmra.mrb[0].mxu0 %v1061
        %v1392 = vpop.f32.mrb[0].mxu0
        %v1393 = vadd.f32 %v1200, %v1392
        %v1394 = vpop.f32.mrb[0].mxu0
        %v1395 = vadd.f32 %v1202, %v1394
        %v1396 = vpop.f32.mrb[0].mxu0
        %v1397 = vadd.f32 %v1204, %v1396
        %v1398 = vpop.f32.mrb[0].mxu0
        %v1399 = vadd.f32 %v1206, %v1398
        %1400 = vmatprep.mubr.bf16.mxu0 %v1066
        %1401 = vmatmul.mubr.bf16.gmra.mrb[0].mxu0 %v1065
        %v1402 = vpop.f32.mrb[0].mxu0
        %v1403 = vadd.f32 %v1210, %v1402
        %v1404 = vpop.f32.mrb[0].mxu0
        %v1405 = vadd.f32 %v1212, %v1404
        %v1406 = vpop.f32.mrb[0].mxu0
        %v1407 = vadd.f32 %v1214, %v1406
        %v1408 = vpop.f32.mrb[0].mxu0
        %v1409 = vadd.f32 %v1216, %v1408
        %1410 = vmatprep.mubr.bf16.mxu0 %v1070
        %1411 = vmatmul.mubr.bf16.gmra.mrb[0].mxu0 %v1069
        %v1412 = vpop.f32.mrb[0].mxu0
        %v1413 = vadd.f32 %v1220, %v1412
        %v1414 = vpop.f32.mrb[0].mxu0
        %v1415 = vadd.f32 %v1222, %v1414
        %v1416 = vpop.f32.mrb[0].mxu0
        %v1417 = vadd.f32 %v1224, %v1416
        %v1418 = vpop.f32.mrb[0].mxu0
        %v1419 = vadd.f32 %v1226, %v1418
        %1420 = vmatprep.mubr.bf16.mxu0 %v1074
        %1421 = vmatmul.mubr.bf16.gmra.mrb[0].mxu0 %v1073
        %v1422 = vpop.f32.mrb[0].mxu0
        %v1423 = vadd.f32 %v1230, %v1422
        %v1424 = vpop.f32.mrb[0].mxu0
        %v1425 = vadd.f32 %v1232, %v1424
        %v1426 = vpop.f32.mrb[0].mxu0
        %v1427 = vadd.f32 %v1234, %v1426
        %v1428 = vpop.f32.mrb[0].mxu0
        %v1429 = vadd.f32 %v1236, %v1428
        %1430 = vmatprep.mubr.bf16.mxu0 %v1078
        %1431 = vmatmul.mubr.bf16.gmra.mrb[0].mxu0 %v1077
        %v1432 = vpop.f32.mrb[0].mxu0
        %v1433 = vadd.f32 %v1240, %v1432
        %v1434 = vpop.f32.mrb[0].mxu0
        %v1435 = vadd.f32 %v1242, %v1434
        %v1436 = vpop.f32.mrb[0].mxu0
        %v1437 = vadd.f32 %v1244, %v1436
        %v1438 = vpop.f32.mrb[0].mxu0
        %v1439 = vadd.f32 %v1246, %v1438
        %1440 = vmatprep.mubr.bf16.mxu0 %v1082
        %1441 = vmatmul.mubr.bf16.gmra.mrb[0].mxu0 %v1081
        %v1442 = vpop.f32.mrb[0].mxu0
        %v1443 = vadd.f32 %v1250, %v1442
        %v1444 = vpop.f32.mrb[0].mxu0
        %v1445 = vadd.f32 %v1252, %v1444
        %v1446 = vpop.f32.mrb[0].mxu0
        %v1447 = vadd.f32 %v1254, %v1446
        %v1448 = vpop.f32.mrb[0].mxu0
        %v1449 = vadd.f32 %v1256, %v1448
        %1450 = vmatprep.mubr.bf16.mxu0 %v1086
        %1451 = vmatmul.mubr.bf16.gmra.mrb[0].mxu0 %v1085
        %v1452 = vpop.f32.mrb[0].mxu0
        %v1453 = vadd.f32 %v1260, %v1452
        %v1454 = vpop.f32.mrb[0].mxu0
        %v1455 = vadd.f32 %v1262, %v1454
        %v1456 = vpop.f32.mrb[0].mxu0
        %v1457 = vadd.f32 %v1264, %v1456
        %v1458 = vpop.f32.mrb[0].mxu0
        %v1459 = vadd.f32 %v1266, %v1458
        %1460 = vmatprep.mubr.bf16.mxu0 %v1090
        %1461 = vmatmul.mubr.bf16.gmra.mrb[0].mxu0 %v1089
        %v1462 = vpop.f32.mrb[0].mxu0
        %v1463 = vadd.f32 %v1270, %v1462
        %v1464 = vpop.f32.mrb[0].mxu0
        %v1465 = vadd.f32 %v1272, %v1464
        %v1466 = vpop.f32.mrb[0].mxu0
        %v1467 = vadd.f32 %v1274, %v1466
        %v1468 = vpop.f32.mrb[0].mxu0
        %v1469 = vadd.f32 %v1276, %v1468
        %1470 = vmatprep.mubr.bf16.mxu0 %v1094
        %1471 = vmatmul.mubr.bf16.gmra.mrb[0].mxu0 %v1093
        %v1472 = vpop.f32.mrb[0].mxu0
        %v1473 = vadd.f32 %v1280, %v1472
        %v1474 = vpop.f32.mrb[0].mxu0
        %v1475 = vadd.f32 %v1282, %v1474
        %v1476 = vpop.f32.mrb[0].mxu0
        %v1477 = vadd.f32 %v1284, %v1476
        %v1478 = vpop.f32.mrb[0].mxu0
        %v1479 = vadd.f32 %v1286, %v1478
        %1480 = vdwg.mxu0
        %v1481 = vld [vmem:[%s431] sm:$0xff]
        %v1482 = vld [vmem:[%s431 + $0x8] sm:$0xff]
        %v1483 = vld [vmem:[%s431 + $0x10] sm:$0xff]
        %v1484 = vld [vmem:[%s431 + $0x18] sm:$0xff]
        %v1485 = vld [vmem:[%s431 + $0x20] sm:$0xff]
        %v1486 = vld [vmem:[%s431 + $0x28] sm:$0xff]
        %v1487 = vld [vmem:[%s431 + $0x30] sm:$0xff]
        %v1488 = vld [vmem:[%s431 + $0x38] sm:$0xff]
        %v1489 = vld [vmem:[%s431 + $0x40] sm:$0xff]
        %v1490 = vld [vmem:[%s431 + $0x48] sm:$0xff]
        %v1491 = vld [vmem:[%s431 + $0x50] sm:$0xff]
        %v1492 = vld [vmem:[%s431 + $0x58] sm:$0xff]
        %v1493 = vld [vmem:[%s431 + $0x60] sm:$0xff]
        %v1494 = vld [vmem:[%s431 + $0x68] sm:$0xff]
        %v1495 = vld [vmem:[%s431 + $0x70] sm:$0xff]
        %v1496 = vld [vmem:[%s431 + $0x78] sm:$0xff]
        %v1497 = vld [vmem:[%s431 + $0x80] sm:$0xff]
        %v1498 = vld [vmem:[%s431 + $0x88] sm:$0xff]
        %v1499 = vld [vmem:[%s431 + $0x90] sm:$0xff]
        %v1500 = vld [vmem:[%s431 + $0x98] sm:$0xff]
        %v1501 = vld [vmem:[%s431 + $0xa0] sm:$0xff]
        %v1502 = vld [vmem:[%s431 + $0xa8] sm:$0xff]
        %v1503 = vld [vmem:[%s431 + $0xb0] sm:$0xff]
        %v1504 = vld [vmem:[%s431 + $0xb8] sm:$0xff]
        %v1505 = vld [vmem:[%s431 + $0xc0] sm:$0xff]
        %v1506 = vld [vmem:[%s431 + $0xc8] sm:$0xff]
        %v1507 = vld [vmem:[%s431 + $0xd0] sm:$0xff]
        %v1508 = vld [vmem:[%s431 + $0xd8] sm:$0xff]
        %v1509 = vld [vmem:[%s431 + $0xe0] sm:$0xff]
        %v1510 = vld [vmem:[%s431 + $0xe8] sm:$0xff]
        %v1511 = vld [vmem:[%s431 + $0xf0] sm:$0xff]
        %v1512 = vld [vmem:[%s431 + $0xf8] sm:$0xff]
        %v1513 = vld [vmem:[%s431 + $0x100] sm:$0xff]
        %v1514 = vld [vmem:[%s431 + $0x108] sm:$0xff]
        %v1515 = vld [vmem:[%s431 + $0x110] sm:$0xff]
        %v1516 = vld [vmem:[%s431 + $0x118] sm:$0xff]
        %v1517 = vld [vmem:[%s431 + $0x120] sm:$0xff]
        %v1518 = vld [vmem:[%s431 + $0x128] sm:$0xff]
        %v1519 = vld [vmem:[%s431 + $0x130] sm:$0xff]
        %v1520 = vld [vmem:[%s431 + $0x138] sm:$0xff]
        %v1521 = vld [vmem:[%s431 + $0x140] sm:$0xff]
        %v1522 = vld [vmem:[%s431 + $0x148] sm:$0xff]
        %v1523 = vld [vmem:[%s431 + $0x150] sm:$0xff]
        %v1524 = vld [vmem:[%s431 + $0x158] sm:$0xff]
        %v1525 = vld [vmem:[%s431 + $0x160] sm:$0xff]
        %v1526 = vld [vmem:[%s431 + $0x168] sm:$0xff]
        %v1527 = vld [vmem:[%s431 + $0x170] sm:$0xff]
        %v1528 = vld [vmem:[%s431 + $0x178] sm:$0xff]
        %v1529 = vld [vmem:[%s431 + $0x180] sm:$0xff]
        %v1530 = vld [vmem:[%s431 + $0x188] sm:$0xff]
        %v1531 = vld [vmem:[%s431 + $0x190] sm:$0xff]
        %v1532 = vld [vmem:[%s431 + $0x198] sm:$0xff]
        %v1533 = vld [vmem:[%s431 + $0x1a0] sm:$0xff]
        %v1534 = vld [vmem:[%s431 + $0x1a8] sm:$0xff]
        %v1535 = vld [vmem:[%s431 + $0x1b0] sm:$0xff]
        %v1536 = vld [vmem:[%s431 + $0x1b8] sm:$0xff]
        %v1537 = vld [vmem:[%s431 + $0x1c0] sm:$0xff]
        %v1538 = vld [vmem:[%s431 + $0x1c8] sm:$0xff]
        %v1539 = vld [vmem:[%s431 + $0x1d0] sm:$0xff]
        %v1540 = vld [vmem:[%s431 + $0x1d8] sm:$0xff]
        %v1541 = vld [vmem:[%s431 + $0x1e0] sm:$0xff]
        %v1542 = vld [vmem:[%s431 + $0x1e8] sm:$0xff]
        %v1543 = vld [vmem:[%s431 + $0x1f0] sm:$0xff]
        %v1544 = vld [vmem:[%s431 + $0x1f8] sm:$0xff]
        %vm1545 = vcmp.gt.f32.partialorder %v1323, %v1481
        %vm1546 = vcmp.gt.f32.partialorder %v1325, %v1482
        %vm1547 = vcmp.gt.f32.partialorder %v1327, %v1483
        %vm1548 = vcmp.gt.f32.partialorder %v1329, %v1484
        %vm1549 = vcmp.gt.f32.partialorder %v1333, %v1485
        %vm1550 = vcmp.gt.f32.partialorder %v1335, %v1486
        %vm1551 = vcmp.gt.f32.partialorder %v1337, %v1487
        %vm1552 = vcmp.gt.f32.partialorder %v1339, %v1488
        %vm1553 = vcmp.gt.f32.partialorder %v1343, %v1489
        %vm1554 = vcmp.gt.f32.partialorder %v1345, %v1490
        %vm1555 = vcmp.gt.f32.partialorder %v1347, %v1491
        %vm1556 = vcmp.gt.f32.partialorder %v1349, %v1492
        %vm1557 = vcmp.gt.f32.partialorder %v1353, %v1493
        %vm1558 = vcmp.gt.f32.partialorder %v1355, %v1494
        %vm1559 = vcmp.gt.f32.partialorder %v1357, %v1495
        %vm1560 = vcmp.gt.f32.partialorder %v1359, %v1496
        %vm1561 = vcmp.gt.f32.partialorder %v1363, %v1497
        %vm1562 = vcmp.gt.f32.partialorder %v1365, %v1498
        %vm1563 = vcmp.gt.f32.partialorder %v1367, %v1499
        %vm1564 = vcmp.gt.f32.partialorder %v1369, %v1500
        %vm1565 = vcmp.gt.f32.partialorder %v1373, %v1501
        %vm1566 = vcmp.gt.f32.partialorder %v1375, %v1502
        %vm1567 = vcmp.gt.f32.partialorder %v1377, %v1503
        %vm1568 = vcmp.gt.f32.partialorder %v1379, %v1504
        %vm1569 = vcmp.gt.f32.partialorder %v1383, %v1505
        %vm1570 = vcmp.gt.f32.partialorder %v1385, %v1506
        %vm1571 = vcmp.gt.f32.partialorder %v1387, %v1507
        %vm1572 = vcmp.gt.f32.partialorder %v1389, %v1508
        %vm1573 = vcmp.gt.f32.partialorder %v1393, %v1509
        %vm1574 = vcmp.gt.f32.partialorder %v1395, %v1510
        %vm1575 = vcmp.gt.f32.partialorder %v1397, %v1511
        %vm1576 = vcmp.gt.f32.partialorder %v1399, %v1512
        %vm1577 = vcmp.gt.f32.partialorder %v1403, %v1513
        %vm1578 = vcmp.gt.f32.partialorder %v1405, %v1514
        %vm1579 = vcmp.gt.f32.partialorder %v1407, %v1515
        %vm1580 = vcmp.gt.f32.partialorder %v1409, %v1516
        %vm1581 = vcmp.gt.f32.partialorder %v1413, %v1517
        %vm1582 = vcmp.gt.f32.partialorder %v1415, %v1518
        %vm1583 = vcmp.gt.f32.partialorder %v1417, %v1519
        %vm1584 = vcmp.gt.f32.partialorder %v1419, %v1520
        %vm1585 = vcmp.gt.f32.partialorder %v1423, %v1521
        %vm1586 = vcmp.gt.f32.partialorder %v1425, %v1522
        %vm1587 = vcmp.gt.f32.partialorder %v1427, %v1523
        %vm1588 = vcmp.gt.f32.partialorder %v1429, %v1524
        %vm1589 = vcmp.gt.f32.partialorder %v1433, %v1525
        %vm1590 = vcmp.gt.f32.partialorder %v1435, %v1526
        %vm1591 = vcmp.gt.f32.partialorder %v1437, %v1527
        %vm1592 = vcmp.gt.f32.partialorder %v1439, %v1528
        %vm1593 = vcmp.gt.f32.partialorder %v1443, %v1529
        %vm1594 = vcmp.gt.f32.partialorder %v1445, %v1530
        %vm1595 = vcmp.gt.f32.partialorder %v1447, %v1531
        %vm1596 = vcmp.gt.f32.partialorder %v1449, %v1532
        %vm1597 = vcmp.gt.f32.partialorder %v1453, %v1533
        %vm1598 = vcmp.gt.f32.partialorder %v1455, %v1534
        %vm1599 = vcmp.gt.f32.partialorder %v1457, %v1535
        %vm1600 = vcmp.gt.f32.partialorder %v1459, %v1536
        %vm1601 = vcmp.gt.f32.partialorder %v1463, %v1537
        %vm1602 = vcmp.gt.f32.partialorder %v1465, %v1538
        %vm1603 = vcmp.gt.f32.partialorder %v1467, %v1539
        %vm1604 = vcmp.gt.f32.partialorder %v1469, %v1540
        %vm1605 = vcmp.gt.f32.partialorder %v1473, %v1541
        %vm1606 = vcmp.gt.f32.partialorder %v1475, %v1542
        %vm1607 = vcmp.gt.f32.partialorder %v1477, %v1543
        %vm1608 = vcmp.gt.f32.partialorder %v1479, %v1544
        %v1609 = vsel %vm1545, 1, 0
        %v1610 = vsel %vm1546, 1, 0
        %v1611 = vsel %vm1547, 1, 0
        %v1612 = vsel %vm1548, 1, 0
        %v1613 = vsel %vm1549, 1, 0
        %v1614 = vsel %vm1550, 1, 0
        %v1615 = vsel %vm1551, 1, 0
        %v1616 = vsel %vm1552, 1, 0
        %v1617 = vsel %vm1553, 1, 0
        %v1618 = vsel %vm1554, 1, 0
        %v1619 = vsel %vm1555, 1, 0
        %v1620 = vsel %vm1556, 1, 0
        %v1621 = vsel %vm1557, 1, 0
        %v1622 = vsel %vm1558, 1, 0
        %v1623 = vsel %vm1559, 1, 0
        %v1624 = vsel %vm1560, 1, 0
        %v1625 = vsel %vm1561, 1, 0
        %v1626 = vsel %vm1562, 1, 0
        %v1627 = vsel %vm1563, 1, 0
        %v1628 = vsel %vm1564, 1, 0
        %v1629 = vsel %vm1565, 1, 0
        %v1630 = vsel %vm1566, 1, 0
        %v1631 = vsel %vm1567, 1, 0
        %v1632 = vsel %vm1568, 1, 0
        %v1633 = vsel %vm1569, 1, 0
        %v1634 = vsel %vm1570, 1, 0
        %v1635 = vsel %vm1571, 1, 0
        %v1636 = vsel %vm1572, 1, 0
        %v1637 = vsel %vm1573, 1, 0
        %v1638 = vsel %vm1574, 1, 0
        %v1639 = vsel %vm1575, 1, 0
        %v1640 = vsel %vm1576, 1, 0
        %v1641 = vsel %vm1577, 1, 0
        %v1642 = vsel %vm1578, 1, 0
        %v1643 = vsel %vm1579, 1, 0
        %v1644 = vsel %vm1580, 1, 0
        %v1645 = vsel %vm1581, 1, 0
        %v1646 = vsel %vm1582, 1, 0
        %v1647 = vsel %vm1583, 1, 0
        %v1648 = vsel %vm1584, 1, 0
        %v1649 = vsel %vm1585, 1, 0
        %v1650 = vsel %vm1586, 1, 0
        %v1651 = vsel %vm1587, 1, 0
        %v1652 = vsel %vm1588, 1, 0
        %v1653 = vsel %vm1589, 1, 0
        %v1654 = vsel %vm1590, 1, 0
        %v1655 = vsel %vm1591, 1, 0
        %v1656 = vsel %vm1592, 1, 0
        %v1657 = vsel %vm1593, 1, 0
        %v1658 = vsel %vm1594, 1, 0
        %v1659 = vsel %vm1595, 1, 0
        %v1660 = vsel %vm1596, 1, 0
        %v1661 = vsel %vm1597, 1, 0
        %v1662 = vsel %vm1598, 1, 0
        %v1663 = vsel %vm1599, 1, 0
        %v1664 = vsel %vm1600, 1, 0
        %v1665 = vsel %vm1601, 1, 0
        %v1666 = vsel %vm1602, 1, 0
        %v1667 = vsel %vm1603, 1, 0
        %v1668 = vsel %vm1604, 1, 0
        %v1669 = vsel %vm1605, 1, 0
        %v1670 = vsel %vm1606, 1, 0
        %v1671 = vsel %vm1607, 1, 0
        %v1672 = vsel %vm1608, 1, 0
        %v1673 = vcvt.s32.f32 %v1609
        %v1674 = vcvt.s32.f32 %v1610
        %v1675 = vcvt.s32.f32 %v1611
        %v1676 = vcvt.s32.f32 %v1612
        %v1677 = vcvt.s32.f32 %v1613
        %v1678 = vcvt.s32.f32 %v1614
        %v1679 = vcvt.s32.f32 %v1615
        %v1680 = vcvt.s32.f32 %v1616
        %v1681 = vcvt.s32.f32 %v1617
        %v1682 = vcvt.s32.f32 %v1618
        %v1683 = vcvt.s32.f32 %v1619
        %v1684 = vcvt.s32.f32 %v1620
        %v1685 = vcvt.s32.f32 %v1621
        %v1686 = vcvt.s32.f32 %v1622
        %v1687 = vcvt.s32.f32 %v1623
        %v1688 = vcvt.s32.f32 %v1624
        %v1689 = vcvt.s32.f32 %v1625
        %v1690 = vcvt.s32.f32 %v1626
        %v1691 = vcvt.s32.f32 %v1627
        %v1692 = vcvt.s32.f32 %v1628
        %v1693 = vcvt.s32.f32 %v1629
        %v1694 = vcvt.s32.f32 %v1630
        %v1695 = vcvt.s32.f32 %v1631
        %v1696 = vcvt.s32.f32 %v1632
        %v1697 = vcvt.s32.f32 %v1633
        %v1698 = vcvt.s32.f32 %v1634
        %v1699 = vcvt.s32.f32 %v1635
        %v1700 = vcvt.s32.f32 %v1636
        %v1701 = vcvt.s32.f32 %v1637
        %v1702 = vcvt.s32.f32 %v1638
        %v1703 = vcvt.s32.f32 %v1639
        %v1704 = vcvt.s32.f32 %v1640
        %v1705 = vcvt.s32.f32 %v1641
        %v1706 = vcvt.s32.f32 %v1642
        %v1707 = vcvt.s32.f32 %v1643
        %v1708 = vcvt.s32.f32 %v1644
        %v1709 = vcvt.s32.f32 %v1645
        %v1710 = vcvt.s32.f32 %v1646
        %v1711 = vcvt.s32.f32 %v1647
        %v1712 = vcvt.s32.f32 %v1648
        %v1713 = vcvt.s32.f32 %v1649
        %v1714 = vcvt.s32.f32 %v1650
        %v1715 = vcvt.s32.f32 %v1651
        %v1716 = vcvt.s32.f32 %v1652
        %v1717 = vcvt.s32.f32 %v1653
        %v1718 = vcvt.s32.f32 %v1654
        %v1719 = vcvt.s32.f32 %v1655
        %v1720 = vcvt.s32.f32 %v1656
        %v1721 = vcvt.s32.f32 %v1657
        %v1722 = vcvt.s32.f32 %v1658
        %v1723 = vcvt.s32.f32 %v1659
        %v1724 = vcvt.s32.f32 %v1660
        %v1725 = vcvt.s32.f32 %v1661
        %v1726 = vcvt.s32.f32 %v1662
        %v1727 = vcvt.s32.f32 %v1663
        %v1728 = vcvt.s32.f32 %v1664
        %v1729 = vcvt.s32.f32 %v1665
        %v1730 = vcvt.s32.f32 %v1666
        %v1731 = vcvt.s32.f32 %v1667
        %v1732 = vcvt.s32.f32 %v1668
        %v1733 = vcvt.s32.f32 %v1669
        %v1734 = vcvt.s32.f32 %v1670
        %v1735 = vcvt.s32.f32 %v1671
        %v1736 = vcvt.s32.f32 %v1672
        %v1737 = vpack.c.bf16 %v1675, %v1673
        %v1738 = vpack.c.bf16 %v1676, %v1674
        %v1739 = vpack.c.bf16 %v1679, %v1677
        %v1740 = vpack.c.bf16 %v1680, %v1678
        %v1741 = vpack.c.bf16 %v1683, %v1681
        %v1742 = vpack.c.bf16 %v1684, %v1682
        %v1743 = vpack.c.bf16 %v1687, %v1685
        %v1744 = vpack.c.bf16 %v1688, %v1686
        %v1745 = vpack.c.bf16 %v1691, %v1689
        %v1746 = vpack.c.bf16 %v1692, %v1690
        %v1747 = vpack.c.bf16 %v1695, %v1693
        %v1748 = vpack.c.bf16 %v1696, %v1694
        %v1749 = vpack.c.bf16 %v1699, %v1697
        %v1750 = vpack.c.bf16 %v1700, %v1698
        %v1751 = vpack.c.bf16 %v1703, %v1701
        %v1752 = vpack.c.bf16 %v1704, %v1702
        %v1753 = vpack.c.bf16 %v1707, %v1705
        %v1754 = vpack.c.bf16 %v1708, %v1706
        %v1755 = vpack.c.bf16 %v1711, %v1709
        %v1756 = vpack.c.bf16 %v1712, %v1710
        %v1757 = vpack.c.bf16 %v1715, %v1713
        %v1758 = vpack.c.bf16 %v1716, %v1714
        %v1759 = vpack.c.bf16 %v1719, %v1717
        %v1760 = vpack.c.bf16 %v1720, %v1718
        %v1761 = vpack.c.bf16 %v1723, %v1721
        %v1762 = vpack.c.bf16 %v1724, %v1722
        %v1763 = vpack.c.bf16 %v1727, %v1725
        %v1764 = vpack.c.bf16 %v1728, %v1726
        %v1765 = vpack.c.bf16 %v1731, %v1729
        %v1766 = vpack.c.bf16 %v1732, %v1730
        %v1767 = vpack.c.bf16 %v1735, %v1733
        %v1768 = vpack.c.bf16 %v1736, %v1734
        %1769 = vmatprep.subr.bf16.mxu0 %v614
        %1770 = vmatpush1.bf16.msra.mxu0 %v613
        %1771 = vmatprep.subr.bf16.mxu0 %v618
        %1772 = vmatpush1.bf16.msra.mxu0 %v617
        %1773 = vmatprep.subr.bf16.mxu0 %v622
        %1774 = vmatpush1.bf16.msra.mxu0 %v621
        %1775 = vmatprep.subr.bf16.mxu0 %v626
        %1776 = vmatpush1.bf16.msra.mxu0 %v625
        %1777 = vmatprep.subr.bf16.mxu0 %v630
        %1778 = vmatpush1.bf16.msra.mxu0 %v629
        %1779 = vmatprep.subr.bf16.mxu0 %v634
        %1780 = vmatpush1.bf16.msra.mxu0 %v633
        %1781 = vmatprep.subr.bf16.mxu0 %v638
        %1782 = vmatpush1.bf16.msra.mxu0 %v637
        %1783 = vmatprep.subr.bf16.mxu0 %v642
        %1784 = vmatpush1.bf16.msra.mxu0 %v641
        %1785 = vmatprep.subr.bf16.mxu0 %v646
        %1786 = vmatpush1.bf16.msra.mxu0 %v645
        %1787 = vmatprep.subr.bf16.mxu0 %v650
        %1788 = vmatpush1.bf16.msra.mxu0 %v649
        %1789 = vmatprep.subr.bf16.mxu0 %v654
        %1790 = vmatpush1.bf16.msra.mxu0 %v653
        %1791 = vmatprep.subr.bf16.mxu0 %v658
        %1792 = vmatpush1.bf16.msra.mxu0 %v657
        %1793 = vmatprep.subr.bf16.mxu0 %v662
        %1794 = vmatpush1.bf16.msra.mxu0 %v661
        %1795 = vmatprep.subr.bf16.mxu0 %v666
        %1796 = vmatpush1.bf16.msra.mxu0 %v665
        %1797 = vmatprep.subr.bf16.mxu0 %v670
        %1798 = vmatpush1.bf16.msra.mxu0 %v669
        %1799 = vmatprep.subr.bf16.mxu0 %v674
        %1800 = vmatpush1.bf16.msra.mxu0 %v673
        %1801 = vmatprep.mubr.bf16.mxu0 %v1738
        %1802 = vmatmul.mubr.bf16.gmra.mrb[0].mxu0 %v1737
        %v1803 = vpop.f32.mrb[0].mxu0
        %v1804 = vadd.f32 %v886, %v1803
        %v1805 = vpop.f32.mrb[0].mxu0
        %v1806 = vadd.f32 %v890, %v1805
        %v1807 = vpop.f32.mrb[0].mxu0
        %v1808 = vadd.f32 %v886, %v1807
        %v1809 = vpop.f32.mrb[0].mxu0
        %v1810 = vadd.f32 %v890, %v1809
        %1811 = vmatprep.mubr.bf16.mxu0 %v1740
        %1812 = vmatmul.mubr.bf16.gmra.mrb[0].mxu0 %v1739
        %v1813 = vpop.f32.mrb[0].mxu0
        %v1814 = vadd.f32 %v886, %v1813
        %v1815 = vpop.f32.mrb[0].mxu0
        %v1816 = vadd.f32 %v890, %v1815
        %v1817 = vpop.f32.mrb[0].mxu0
        %v1818 = vadd.f32 %v886, %v1817
        %v1819 = vpop.f32.mrb[0].mxu0
        %v1820 = vadd.f32 %v890, %v1819
        %1821 = vmatprep.mubr.bf16.mxu0 %v1742
        %1822 = vmatmul.mubr.bf16.gmra.mrb[0].mxu0 %v1741
        %v1823 = vpop.f32.mrb[0].mxu0
        %v1824 = vadd.f32 %v886, %v1823
        %v1825 = vpop.f32.mrb[0].mxu0
        %v1826 = vadd.f32 %v890, %v1825
        %v1827 = vpop.f32.mrb[0].mxu0
        %v1828 = vadd.f32 %v886, %v1827
        %v1829 = vpop.f32.mrb[0].mxu0
        %v1830 = vadd.f32 %v890, %v1829
        %1831 = vmatprep.mubr.bf16.mxu0 %v1744
        %1832 = vmatmul.mubr.bf16.gmra.mrb[0].mxu0 %v1743
        %v1833 = vpop.f32.mrb[0].mxu0
        %v1834 = vadd.f32 %v886, %v1833
        %v1835 = vpop.f32.mrb[0].mxu0
        %v1836 = vadd.f32 %v890, %v1835
        %v1837 = vpop.f32.mrb[0].mxu0
        %v1838 = vadd.f32 %v886, %v1837
        %v1839 = vpop.f32.mrb[0].mxu0
        %v1840 = vadd.f32 %v890, %v1839
        %1841 = vmatprep.mubr.bf16.mxu0 %v1746
        %1842 = vmatmul.mubr.bf16.gmra.mrb[0].mxu0 %v1745
        %v1843 = vpop.f32.mrb[0].mxu0
        %v1844 = vadd.f32 %v886, %v1843
        %v1845 = vpop.f32.mrb[0].mxu0
        %v1846 = vadd.f32 %v890, %v1845
        %v1847 = vpop.f32.mrb[0].mxu0
        %v1848 = vadd.f32 %v886, %v1847
        %v1849 = vpop.f32.mrb[0].mxu0
        %v1850 = vadd.f32 %v890, %v1849
        %1851 = vmatprep.mubr.bf16.mxu0 %v1748
        %1852 = vmatmul.mubr.bf16.gmra.mrb[0].mxu0 %v1747
        %v1853 = vpop.f32.mrb[0].mxu0
        %v1854 = vadd.f32 %v886, %v1853
        %v1855 = vpop.f32.mrb[0].mxu0
        %v1856 = vadd.f32 %v890, %v1855
        %v1857 = vpop.f32.mrb[0].mxu0
        %v1858 = vadd.f32 %v886, %v1857
        %v1859 = vpop.f32.mrb[0].mxu0
        %v1860 = vadd.f32 %v890, %v1859
        %1861 = vmatprep.mubr.bf16.mxu0 %v1750
        %1862 = vmatmul.mubr.bf16.gmra.mrb[0].mxu0 %v1749
        %v1863 = vpop.f32.mrb[0].mxu0
        %v1864 = vadd.f32 %v886, %v1863
        %v1865 = vpop.f32.mrb[0].mxu0
        %v1866 = vadd.f32 %v890, %v1865
        %v1867 = vpop.f32.mrb[0].mxu0
        %v1868 = vadd.f32 %v886, %v1867
        %v1869 = vpop.f32.mrb[0].mxu0
        %v1870 = vadd.f32 %v890, %v1869
        %1871 = vmatprep.mubr.bf16.mxu0 %v1752
        %1872 = vmatmul.mubr.bf16.gmra.mrb[0].mxu0 %v1751
        %v1873 = vpop.f32.mrb[0].mxu0
        %v1874 = vadd.f32 %v886, %v1873
        %v1875 = vpop.f32.mrb[0].mxu0
        %v1876 = vadd.f32 %v890, %v1875
        %v1877 = vpop.f32.mrb[0].mxu0
        %v1878 = vadd.f32 %v886, %v1877
        %v1879 = vpop.f32.mrb[0].mxu0
        %v1880 = vadd.f32 %v890, %v1879
        %1881 = vmatprep.mubr.bf16.mxu0 %v1754
        %1882 = vmatmul.mubr.bf16.gmra.mrb[0].mxu0 %v1753
        %v1883 = vpop.f32.mrb[0].mxu0
        %v1884 = vadd.f32 %v886, %v1883
        %v1885 = vpop.f32.mrb[0].mxu0
        %v1886 = vadd.f32 %v890, %v1885
        %v1887 = vpop.f32.mrb[0].mxu0
        %v1888 = vadd.f32 %v886, %v1887
        %v1889 = vpop.f32.mrb[0].mxu0
        %v1890 = vadd.f32 %v890, %v1889
        %1891 = vmatprep.mubr.bf16.mxu0 %v1756
        %1892 = vmatmul.mubr.bf16.gmra.mrb[0].mxu0 %v1755
        %v1893 = vpop.f32.mrb[0].mxu0
        %v1894 = vadd.f32 %v886, %v1893
        %v1895 = vpop.f32.mrb[0].mxu0
        %v1896 = vadd.f32 %v890, %v1895
        %v1897 = vpop.f32.mrb[0].mxu0
        %v1898 = vadd.f32 %v886, %v1897
        %v1899 = vpop.f32.mrb[0].mxu0
        %v1900 = vadd.f32 %v890, %v1899
        %1901 = vmatprep.mubr.bf16.mxu0 %v1758
        %1902 = vmatmul.mubr.bf16.gmra.mrb[0].mxu0 %v1757
        %v1903 = vpop.f32.mrb[0].mxu0
        %v1904 = vadd.f32 %v886, %v1903
        %v1905 = vpop.f32.mrb[0].mxu0
        %v1906 = vadd.f32 %v890, %v1905
        %v1907 = vpop.f32.mrb[0].mxu0
        %v1908 = vadd.f32 %v886, %v1907
        %v1909 = vpop.f32.mrb[0].mxu0
        %v1910 = vadd.f32 %v890, %v1909
        %1911 = vmatprep.mubr.bf16.mxu0 %v1760
        %1912 = vmatmul.mubr.bf16.gmra.mrb[0].mxu0 %v1759
        %v1913 = vpop.f32.mrb[0].mxu0
        %v1914 = vadd.f32 %v886, %v1913
        %v1915 = vpop.f32.mrb[0].mxu0
        %v1916 = vadd.f32 %v890, %v1915
        %v1917 = vpop.f32.mrb[0].mxu0
        %v1918 = vadd.f32 %v886, %v1917
        %v1919 = vpop.f32.mrb[0].mxu0
        %v1920 = vadd.f32 %v890, %v1919
        %1921 = vmatprep.mubr.bf16.mxu0 %v1762
        %1922 = vmatmul.mubr.bf16.gmra.mrb[0].mxu0 %v1761
        %v1923 = vpop.f32.mrb[0].mxu0
        %v1924 = vadd.f32 %v886, %v1923
        %v1925 = vpop.f32.mrb[0].mxu0
        %v1926 = vadd.f32 %v890, %v1925
        %v1927 = vpop.f32.mrb[0].mxu0
        %v1928 = vadd.f32 %v886, %v1927
        %v1929 = vpop.f32.mrb[0].mxu0
        %v1930 = vadd.f32 %v890, %v1929
        %1931 = vmatprep.mubr.bf16.mxu0 %v1764
        %1932 = vmatmul.mubr.bf16.gmra.mrb[0].mxu0 %v1763
        %v1933 = vpop.f32.mrb[0].mxu0
        %v1934 = vadd.f32 %v886, %v1933
        %v1935 = vpop.f32.mrb[0].mxu0
        %v1936 = vadd.f32 %v890, %v1935
        %v1937 = vpop.f32.mrb[0].mxu0
        %v1938 = vadd.f32 %v886, %v1937
        %v1939 = vpop.f32.mrb[0].mxu0
        %v1940 = vadd.f32 %v890, %v1939
        %1941 = vmatprep.mubr.bf16.mxu0 %v1766
        %1942 = vmatmul.mubr.bf16.gmra.mrb[0].mxu0 %v1765
        %v1943 = vpop.f32.mrb[0].mxu0
        %v1944 = vadd.f32 %v886, %v1943
        %v1945 = vpop.f32.mrb[0].mxu0
        %v1946 = vadd.f32 %v890, %v1945
        %v1947 = vpop.f32.mrb[0].mxu0
        %v1948 = vadd.f32 %v886, %v1947
        %v1949 = vpop.f32.mrb[0].mxu0
        %v1950 = vadd.f32 %v890, %v1949
        %1951 = vmatprep.mubr.bf16.mxu0 %v1768
        %1952 = vmatmul.mubr.bf16.gmra.mrb[0].mxu0 %v1767
        %v1953 = vpop.f32.mrb[0].mxu0
        %v1954 = vadd.f32 %v886, %v1953
        %v1955 = vpop.f32.mrb[0].mxu0
        %v1956 = vadd.f32 %v890, %v1955
        %v1957 = vpop.f32.mrb[0].mxu0
        %v1958 = vadd.f32 %v886, %v1957
        %v1959 = vpop.f32.mrb[0].mxu0
        %v1960 = vadd.f32 %v890, %v1959
        %1961 = vdwg.mxu0
        %1962 = vmatprep.subr.bf16.mxu0 %v616
        %1963 = vmatpush1.bf16.msra.mxu0 %v615
        %1964 = vmatprep.subr.bf16.mxu0 %v620
        %1965 = vmatpush1.bf16.msra.mxu0 %v619
        %1966 = vmatprep.subr.bf16.mxu0 %v624
        %1967 = vmatpush1.bf16.msra.mxu0 %v623
        %1968 = vmatprep.subr.bf16.mxu0 %v628
        %1969 = vmatpush1.bf16.msra.mxu0 %v627
        %1970 = vmatprep.subr.bf16.mxu0 %v632
        %1971 = vmatpush1.bf16.msra.mxu0 %v631
        %1972 = vmatprep.subr.bf16.mxu0 %v636
        %1973 = vmatpush1.bf16.msra.mxu0 %v635
        %1974 = vmatprep.subr.bf16.mxu0 %v640
        %1975 = vmatpush1.bf16.msra.mxu0 %v639
        %1976 = vmatprep.subr.bf16.mxu0 %v644
        %1977 = vmatpush1.bf16.msra.mxu0 %v643
        %1978 = vmatprep.subr.bf16.mxu0 %v648
        %1979 = vmatpush1.bf16.msra.mxu0 %v647
        %1980 = vmatprep.subr.bf16.mxu0 %v652
        %1981 = vmatpush1.bf16.msra.mxu0 %v651
        %1982 = vmatprep.subr.bf16.mxu0 %v656
        %1983 = vmatpush1.bf16.msra.mxu0 %v655
        %1984 = vmatprep.subr.bf16.mxu0 %v660
        %1985 = vmatpush1.bf16.msra.mxu0 %v659
        %1986 = vmatprep.subr.bf16.mxu0 %v664
        %1987 = vmatpush1.bf16.msra.mxu0 %v663
        %1988 = vmatprep.subr.bf16.mxu0 %v668
        %1989 = vmatpush1.bf16.msra.mxu0 %v667
        %1990 = vmatprep.subr.bf16.mxu0 %v672
        %1991 = vmatpush1.bf16.msra.mxu0 %v671
        %1992 = vmatprep.subr.bf16.mxu0 %v676
        %1993 = vmatpush1.bf16.msra.mxu0 %v675
        %1994 = vmatprep.mubr.bf16.mxu0 %v1738
        %1995 = vmatmul.mubr.bf16.gmra.mrb[0].mxu0 %v1737
        %v1996 = vpop.f32.mrb[0].mxu0
        %v1997 = vadd.f32 %v894, %v1996
        %v1998 = vpop.f32.mrb[0].mxu0
        %v1999 = vadd.f32 %v898, %v1998
        %v2000 = vpop.f32.mrb[0].mxu0
        %v2001 = vadd.f32 %v894, %v2000
        %v2002 = vpop.f32.mrb[0].mxu0
        %v2003 = vadd.f32 %v898, %v2002
        %2004 = vmatprep.mubr.bf16.mxu0 %v1740
        %2005 = vmatmul.mubr.bf16.gmra.mrb[0].mxu0 %v1739
        %v2006 = vpop.f32.mrb[0].mxu0
        %v2007 = vadd.f32 %v894, %v2006
        %v2008 = vpop.f32.mrb[0].mxu0
        %v2009 = vadd.f32 %v898, %v2008
        %v2010 = vpop.f32.mrb[0].mxu0
        %v2011 = vadd.f32 %v894, %v2010
        %v2012 = vpop.f32.mrb[0].mxu0
        %v2013 = vadd.f32 %v898, %v2012
        %2014 = vmatprep.mubr.bf16.mxu0 %v1742
        %2015 = vmatmul.mubr.bf16.gmra.mrb[0].mxu0 %v1741
        %v2016 = vpop.f32.mrb[0].mxu0
        %v2017 = vadd.f32 %v894, %v2016
        %v2018 = vpop.f32.mrb[0].mxu0
        %v2019 = vadd.f32 %v898, %v2018
        %v2020 = vpop.f32.mrb[0].mxu0
        %v2021 = vadd.f32 %v894, %v2020
        %v2022 = vpop.f32.mrb[0].mxu0
        %v2023 = vadd.f32 %v898, %v2022
        %2024 = vmatprep.mubr.bf16.mxu0 %v1744
        %2025 = vmatmul.mubr.bf16.gmra.mrb[0].mxu0 %v1743
        %v2026 = vpop.f32.mrb[0].mxu0
        %v2027 = vadd.f32 %v894, %v2026
        %v2028 = vpop.f32.mrb[0].mxu0
        %v2029 = vadd.f32 %v898, %v2028
        %v2030 = vpop.f32.mrb[0].mxu0
        %v2031 = vadd.f32 %v894, %v2030
        %v2032 = vpop.f32.mrb[0].mxu0
        %v2033 = vadd.f32 %v898, %v2032
        %2034 = vmatprep.mubr.bf16.mxu0 %v1746
        %2035 = vmatmul.mubr.bf16.gmra.mrb[0].mxu0 %v1745
        %v2036 = vpop.f32.mrb[0].mxu0
        %v2037 = vadd.f32 %v894, %v2036
        %v2038 = vpop.f32.mrb[0].mxu0
        %v2039 = vadd.f32 %v898, %v2038
        %v2040 = vpop.f32.mrb[0].mxu0
        %v2041 = vadd.f32 %v894, %v2040
        %v2042 = vpop.f32.mrb[0].mxu0
        %v2043 = vadd.f32 %v898, %v2042
        %2044 = vmatprep.mubr.bf16.mxu0 %v1748
        %2045 = vmatmul.mubr.bf16.gmra.mrb[0].mxu0 %v1747
        %v2046 = vpop.f32.mrb[0].mxu0
        %v2047 = vadd.f32 %v894, %v2046
        %v2048 = vpop.f32.mrb[0].mxu0
        %v2049 = vadd.f32 %v898, %v2048
        %v2050 = vpop.f32.mrb[0].mxu0
        %v2051 = vadd.f32 %v894, %v2050
        %v2052 = vpop.f32.mrb[0].mxu0
        %v2053 = vadd.f32 %v898, %v2052
        %2054 = vmatprep.mubr.bf16.mxu0 %v1750
        %2055 = vmatmul.mubr.bf16.gmra.mrb[0].mxu0 %v1749
        %v2056 = vpop.f32.mrb[0].mxu0
        %v2057 = vadd.f32 %v894, %v2056
        %v2058 = vpop.f32.mrb[0].mxu0
        %v2059 = vadd.f32 %v898, %v2058
        %v2060 = vpop.f32.mrb[0].mxu0
        %v2061 = vadd.f32 %v894, %v2060
        %v2062 = vpop.f32.mrb[0].mxu0
        %v2063 = vadd.f32 %v898, %v2062
        %2064 = vmatprep.mubr.bf16.mxu0 %v1752
        %2065 = vmatmul.mubr.bf16.gmra.mrb[0].mxu0 %v1751
        %v2066 = vpop.f32.mrb[0].mxu0
        %v2067 = vadd.f32 %v894, %v2066
        %v2068 = vpop.f32.mrb[0].mxu0
        %v2069 = vadd.f32 %v898, %v2068
        %v2070 = vpop.f32.mrb[0].mxu0
        %v2071 = vadd.f32 %v894, %v2070
        %v2072 = vpop.f32.mrb[0].mxu0
        %v2073 = vadd.f32 %v898, %v2072
        %2074 = vmatprep.mubr.bf16.mxu0 %v1754
        %2075 = vmatmul.mubr.bf16.gmra.mrb[0].mxu0 %v1753
        %v2076 = vpop.f32.mrb[0].mxu0
        %v2077 = vadd.f32 %v894, %v2076
        %v2078 = vpop.f32.mrb[0].mxu0
        %v2079 = vadd.f32 %v898, %v2078
        %v2080 = vpop.f32.mrb[0].mxu0
        %v2081 = vadd.f32 %v894, %v2080
        %v2082 = vpop.f32.mrb[0].mxu0
        %v2083 = vadd.f32 %v898, %v2082
        %2084 = vmatprep.mubr.bf16.mxu0 %v1756
        %2085 = vmatmul.mubr.bf16.gmra.mrb[0].mxu0 %v1755
        %v2086 = vpop.f32.mrb[0].mxu0
        %v2087 = vadd.f32 %v894, %v2086
        %v2088 = vpop.f32.mrb[0].mxu0
        %v2089 = vadd.f32 %v898, %v2088
        %v2090 = vpop.f32.mrb[0].mxu0
        %v2091 = vadd.f32 %v894, %v2090
        %v2092 = vpop.f32.mrb[0].mxu0
        %v2093 = vadd.f32 %v898, %v2092
        %2094 = vmatprep.mubr.bf16.mxu0 %v1758
        %2095 = vmatmul.mubr.bf16.gmra.mrb[0].mxu0 %v1757
        %v2096 = vpop.f32.mrb[0].mxu0
        %v2097 = vadd.f32 %v894, %v2096
        %v2098 = vpop.f32.mrb[0].mxu0
        %v2099 = vadd.f32 %v898, %v2098
        %v2100 = vpop.f32.mrb[0].mxu0
        %v2101 = vadd.f32 %v894, %v2100
        %v2102 = vpop.f32.mrb[0].mxu0
        %v2103 = vadd.f32 %v898, %v2102
        %2104 = vmatprep.mubr.bf16.mxu0 %v1760
        %2105 = vmatmul.mubr.bf16.gmra.mrb[0].mxu0 %v1759
        %v2106 = vpop.f32.mrb[0].mxu0
        %v2107 = vadd.f32 %v894, %v2106
        %v2108 = vpop.f32.mrb[0].mxu0
        %v2109 = vadd.f32 %v898, %v2108
        %v2110 = vpop.f32.mrb[0].mxu0
        %v2111 = vadd.f32 %v894, %v2110
        %v2112 = vpop.f32.mrb[0].mxu0
        %v2113 = vadd.f32 %v898, %v2112
        %2114 = vmatprep.mubr.bf16.mxu0 %v1762
        %2115 = vmatmul.mubr.bf16.gmra.mrb[0].mxu0 %v1761
        %v2116 = vpop.f32.mrb[0].mxu0
        %v2117 = vadd.f32 %v894, %v2116
        %v2118 = vpop.f32.mrb[0].mxu0
        %v2119 = vadd.f32 %v898, %v2118
        %v2120 = vpop.f32.mrb[0].mxu0
        %v2121 = vadd.f32 %v894, %v2120
        %v2122 = vpop.f32.mrb[0].mxu0
        %v2123 = vadd.f32 %v898, %v2122
        %2124 = vmatprep.mubr.bf16.mxu0 %v1764
        %2125 = vmatmul.mubr.bf16.gmra.mrb[0].mxu0 %v1763
        %v2126 = vpop.f32.mrb[0].mxu0
        %v2127 = vadd.f32 %v894, %v2126
        %v2128 = vpop.f32.mrb[0].mxu0
        %v2129 = vadd.f32 %v898, %v2128
        %v2130 = vpop.f32.mrb[0].mxu0
        %v2131 = vadd.f32 %v894, %v2130
        %v2132 = vpop.f32.mrb[0].mxu0
        %v2133 = vadd.f32 %v898, %v2132
        %2134 = vmatprep.mubr.bf16.mxu0 %v1766
        %2135 = vmatmul.mubr.bf16.gmra.mrb[0].mxu0 %v1765
        %v2136 = vpop.f32.mrb[0].mxu0
        %v2137 = vadd.f32 %v894, %v2136
        %v2138 = vpop.f32.mrb[0].mxu0
        %v2139 = vadd.f32 %v898, %v2138
        %v2140 = vpop.f32.mrb[0].mxu0
        %v2141 = vadd.f32 %v894, %v2140
        %v2142 = vpop.f32.mrb[0].mxu0
        %v2143 = vadd.f32 %v898, %v2142
        %2144 = vmatprep.mubr.bf16.mxu0 %v1768
        %2145 = vmatmul.mubr.bf16.gmra.mrb[0].mxu0 %v1767
        %v2146 = vpop.f32.mrb[0].mxu0
        %v2147 = vadd.f32 %v894, %v2146
        %v2148 = vpop.f32.mrb[0].mxu0
        %v2149 = vadd.f32 %v898, %v2148
        %v2150 = vpop.f32.mrb[0].mxu0
        %v2151 = vadd.f32 %v894, %v2150
        %v2152 = vpop.f32.mrb[0].mxu0
        %v2153 = vadd.f32 %v898, %v2152
        %2154 = vdwg.mxu0
        %v2155 = vld [vmem:[%s440] sm:$0xff]
        %v2156 = vld [vmem:[%s440 + $0x8] sm:$0xff]
        %v2157 = vld [vmem:[%s440 + $0x10] sm:$0xff]
        %v2158 = vld [vmem:[%s440 + $0x18] sm:$0xff]
        %v2159 = vld [vmem:[%s440 + $0x20] sm:$0xff]
        %v2160 = vld [vmem:[%s440 + $0x28] sm:$0xff]
        %v2161 = vld [vmem:[%s440 + $0x30] sm:$0xff]
        %v2162 = vld [vmem:[%s440 + $0x38] sm:$0xff]
        %v2163 = vld [vmem:[%s440 + $0x40] sm:$0xff]
        %v2164 = vld [vmem:[%s440 + $0x48] sm:$0xff]
        %v2165 = vld [vmem:[%s440 + $0x50] sm:$0xff]
        %v2166 = vld [vmem:[%s440 + $0x58] sm:$0xff]
        %v2167 = vld [vmem:[%s440 + $0x60] sm:$0xff]
        %v2168 = vld [vmem:[%s440 + $0x68] sm:$0xff]
        %v2169 = vld [vmem:[%s440 + $0x70] sm:$0xff]
        %v2170 = vld [vmem:[%s440 + $0x78] sm:$0xff]
        %v2171 = vld [vmem:[%s440 + $0x80] sm:$0xff]
        %v2172 = vld [vmem:[%s440 + $0x88] sm:$0xff]
        %v2173 = vld [vmem:[%s440 + $0x90] sm:$0xff]
        %v2174 = vld [vmem:[%s440 + $0x98] sm:$0xff]
        %v2175 = vld [vmem:[%s440 + $0xa0] sm:$0xff]
        %v2176 = vld [vmem:[%s440 + $0xa8] sm:$0xff]
        %v2177 = vld [vmem:[%s440 + $0xb0] sm:$0xff]
        %v2178 = vld [vmem:[%s440 + $0xb8] sm:$0xff]
        %v2179 = vld [vmem:[%s440 + $0xc0] sm:$0xff]
        %v2180 = vld [vmem:[%s440 + $0xc8] sm:$0xff]
        %v2181 = vld [vmem:[%s440 + $0xd0] sm:$0xff]
        %v2182 = vld [vmem:[%s440 + $0xd8] sm:$0xff]
        %v2183 = vld [vmem:[%s440 + $0xe0] sm:$0xff]
        %v2184 = vld [vmem:[%s440 + $0xe8] sm:$0xff]
        %v2185 = vld [vmem:[%s440 + $0xf0] sm:$0xff]
        %v2186 = vld [vmem:[%s440 + $0xf8] sm:$0xff]
        %v2187 = vld [vmem:[%s440 + $0x100] sm:$0xff]
        %v2188 = vld [vmem:[%s440 + $0x108] sm:$0xff]
        %v2189 = vld [vmem:[%s440 + $0x110] sm:$0xff]
        %v2190 = vld [vmem:[%s440 + $0x118] sm:$0xff]
        %v2191 = vld [vmem:[%s440 + $0x120] sm:$0xff]
        %v2192 = vld [vmem:[%s440 + $0x128] sm:$0xff]
        %v2193 = vld [vmem:[%s440 + $0x130] sm:$0xff]
        %v2194 = vld [vmem:[%s440 + $0x138] sm:$0xff]
        %v2195 = vld [vmem:[%s440 + $0x140] sm:$0xff]
        %v2196 = vld [vmem:[%s440 + $0x148] sm:$0xff]
        %v2197 = vld [vmem:[%s440 + $0x150] sm:$0xff]
        %v2198 = vld [vmem:[%s440 + $0x158] sm:$0xff]
        %v2199 = vld [vmem:[%s440 + $0x160] sm:$0xff]
        %v2200 = vld [vmem:[%s440 + $0x168] sm:$0xff]
        %v2201 = vld [vmem:[%s440 + $0x170] sm:$0xff]
        %v2202 = vld [vmem:[%s440 + $0x178] sm:$0xff]
        %v2203 = vld [vmem:[%s440 + $0x180] sm:$0xff]
        %v2204 = vld [vmem:[%s440 + $0x188] sm:$0xff]
        %v2205 = vld [vmem:[%s440 + $0x190] sm:$0xff]
        %v2206 = vld [vmem:[%s440 + $0x198] sm:$0xff]
        %v2207 = vld [vmem:[%s440 + $0x1a0] sm:$0xff]
        %v2208 = vld [vmem:[%s440 + $0x1a8] sm:$0xff]
        %v2209 = vld [vmem:[%s440 + $0x1b0] sm:$0xff]
        %v2210 = vld [vmem:[%s440 + $0x1b8] sm:$0xff]
        %v2211 = vld [vmem:[%s440 + $0x1c0] sm:$0xff]
        %v2212 = vld [vmem:[%s440 + $0x1c8] sm:$0xff]
        %v2213 = vld [vmem:[%s440 + $0x1d0] sm:$0xff]
        %v2214 = vld [vmem:[%s440 + $0x1d8] sm:$0xff]
        %v2215 = vld [vmem:[%s440 + $0x1e0] sm:$0xff]
        %v2216 = vld [vmem:[%s440 + $0x1e8] sm:$0xff]
        %v2217 = vld [vmem:[%s440 + $0x1f0] sm:$0xff]
        %v2218 = vld [vmem:[%s440 + $0x1f8] sm:$0xff]
        %v2219 = vld [vmem:[%s440 + $0x200] sm:$0xff]
        %v2220 = vld [vmem:[%s440 + $0x208] sm:$0xff]
        %v2221 = vld [vmem:[%s440 + $0x210] sm:$0xff]
        %v2222 = vld [vmem:[%s440 + $0x218] sm:$0xff]
        %v2223 = vld [vmem:[%s440 + $0x220] sm:$0xff]
        %v2224 = vld [vmem:[%s440 + $0x228] sm:$0xff]
        %v2225 = vld [vmem:[%s440 + $0x230] sm:$0xff]
        %v2226 = vld [vmem:[%s440 + $0x238] sm:$0xff]
        %v2227 = vld [vmem:[%s440 + $0x240] sm:$0xff]
        %v2228 = vld [vmem:[%s440 + $0x248] sm:$0xff]
        %v2229 = vld [vmem:[%s440 + $0x250] sm:$0xff]
        %v2230 = vld [vmem:[%s440 + $0x258] sm:$0xff]
        %v2231 = vld [vmem:[%s440 + $0x260] sm:$0xff]
        %v2232 = vld [vmem:[%s440 + $0x268] sm:$0xff]
        %v2233 = vld [vmem:[%s440 + $0x270] sm:$0xff]
        %v2234 = vld [vmem:[%s440 + $0x278] sm:$0xff]
        %v2235 = vld [vmem:[%s440 + $0x280] sm:$0xff]
        %v2236 = vld [vmem:[%s440 + $0x288] sm:$0xff]
        %v2237 = vld [vmem:[%s440 + $0x290] sm:$0xff]
        %v2238 = vld [vmem:[%s440 + $0x298] sm:$0xff]
        %v2239 = vld [vmem:[%s440 + $0x2a0] sm:$0xff]
        %v2240 = vld [vmem:[%s440 + $0x2a8] sm:$0xff]
        %v2241 = vld [vmem:[%s440 + $0x2b0] sm:$0xff]
        %v2242 = vld [vmem:[%s440 + $0x2b8] sm:$0xff]
        %v2243 = vld [vmem:[%s440 + $0x2c0] sm:$0xff]
        %v2244 = vld [vmem:[%s440 + $0x2c8] sm:$0xff]
        %v2245 = vld [vmem:[%s440 + $0x2d0] sm:$0xff]
        %v2246 = vld [vmem:[%s440 + $0x2d8] sm:$0xff]
        %v2247 = vld [vmem:[%s440 + $0x2e0] sm:$0xff]
        %v2248 = vld [vmem:[%s440 + $0x2e8] sm:$0xff]
        %v2249 = vld [vmem:[%s440 + $0x2f0] sm:$0xff]
        %v2250 = vld [vmem:[%s440 + $0x2f8] sm:$0xff]
        %v2251 = vld [vmem:[%s440 + $0x300] sm:$0xff]
        %v2252 = vld [vmem:[%s440 + $0x308] sm:$0xff]
        %v2253 = vld [vmem:[%s440 + $0x310] sm:$0xff]
        %v2254 = vld [vmem:[%s440 + $0x318] sm:$0xff]
        %v2255 = vld [vmem:[%s440 + $0x320] sm:$0xff]
        %v2256 = vld [vmem:[%s440 + $0x328] sm:$0xff]
        %v2257 = vld [vmem:[%s440 + $0x330] sm:$0xff]
        %v2258 = vld [vmem:[%s440 + $0x338] sm:$0xff]
        %v2259 = vld [vmem:[%s440 + $0x340] sm:$0xff]
        %v2260 = vld [vmem:[%s440 + $0x348] sm:$0xff]
        %v2261 = vld [vmem:[%s440 + $0x350] sm:$0xff]
        %v2262 = vld [vmem:[%s440 + $0x358] sm:$0xff]
        %v2263 = vld [vmem:[%s440 + $0x360] sm:$0xff]
        %v2264 = vld [vmem:[%s440 + $0x368] sm:$0xff]
        %v2265 = vld [vmem:[%s440 + $0x370] sm:$0xff]
        %v2266 = vld [vmem:[%s440 + $0x378] sm:$0xff]
        %v2267 = vld [vmem:[%s440 + $0x380] sm:$0xff]
        %v2268 = vld [vmem:[%s440 + $0x388] sm:$0xff]
        %v2269 = vld [vmem:[%s440 + $0x390] sm:$0xff]
        %v2270 = vld [vmem:[%s440 + $0x398] sm:$0xff]
        %v2271 = vld [vmem:[%s440 + $0x3a0] sm:$0xff]
        %v2272 = vld [vmem:[%s440 + $0x3a8] sm:$0xff]
        %v2273 = vld [vmem:[%s440 + $0x3b0] sm:$0xff]
        %v2274 = vld [vmem:[%s440 + $0x3b8] sm:$0xff]
        %v2275 = vld [vmem:[%s440 + $0x3c0] sm:$0xff]
        %v2276 = vld [vmem:[%s440 + $0x3c8] sm:$0xff]
        %v2277 = vld [vmem:[%s440 + $0x3d0] sm:$0xff]
        %v2278 = vld [vmem:[%s440 + $0x3d8] sm:$0xff]
        %v2279 = vld [vmem:[%s440 + $0x3e0] sm:$0xff]
        %v2280 = vld [vmem:[%s440 + $0x3e8] sm:$0xff]
        %v2281 = vld [vmem:[%s440 + $0x3f0] sm:$0xff]
        %v2282 = vld [vmem:[%s440 + $0x3f8] sm:$0xff]
        %vm2283 = vcmp.gt.f32.partialorder %v1804, %v2155
        %vm2284 = vcmp.gt.f32.partialorder %v1806, %v2156
        %vm2285 = vcmp.gt.f32.partialorder %v1997, %v2157
        %vm2286 = vcmp.gt.f32.partialorder %v1999, %v2158
        %vm2287 = vcmp.gt.f32.partialorder %v1808, %v2159
        %vm2288 = vcmp.gt.f32.partialorder %v1810, %v2160
        %vm2289 = vcmp.gt.f32.partialorder %v2001, %v2161
        %vm2290 = vcmp.gt.f32.partialorder %v2003, %v2162
        %vm2291 = vcmp.gt.f32.partialorder %v1814, %v2163
        %vm2292 = vcmp.gt.f32.partialorder %v1816, %v2164
        %vm2293 = vcmp.gt.f32.partialorder %v2007, %v2165
        %vm2294 = vcmp.gt.f32.partialorder %v2009, %v2166
        %vm2295 = vcmp.gt.f32.partialorder %v1818, %v2167
        %vm2296 = vcmp.gt.f32.partialorder %v1820, %v2168
        %vm2297 = vcmp.gt.f32.partialorder %v2011, %v2169
        %vm2298 = vcmp.gt.f32.partialorder %v2013, %v2170
        %vm2299 = vcmp.gt.f32.partialorder %v1824, %v2171
        %vm2300 = vcmp.gt.f32.partialorder %v1826, %v2172
        %vm2301 = vcmp.gt.f32.partialorder %v2017, %v2173
        %vm2302 = vcmp.gt.f32.partialorder %v2019, %v2174
        %vm2303 = vcmp.gt.f32.partialorder %v1828, %v2175
        %vm2304 = vcmp.gt.f32.partialorder %v1830, %v2176
        %vm2305 = vcmp.gt.f32.partialorder %v2021, %v2177
        %vm2306 = vcmp.gt.f32.partialorder %v2023, %v2178
        %vm2307 = vcmp.gt.f32.partialorder %v1834, %v2179
        %vm2308 = vcmp.gt.f32.partialorder %v1836, %v2180
        %vm2309 = vcmp.gt.f32.partialorder %v2027, %v2181
        %vm2310 = vcmp.gt.f32.partialorder %v2029, %v2182
        %vm2311 = vcmp.gt.f32.partialorder %v1838, %v2183
        %vm2312 = vcmp.gt.f32.partialorder %v1840, %v2184
        %vm2313 = vcmp.gt.f32.partialorder %v2031, %v2185
        %vm2314 = vcmp.gt.f32.partialorder %v2033, %v2186
        %vm2315 = vcmp.gt.f32.partialorder %v1844, %v2187
        %vm2316 = vcmp.gt.f32.partialorder %v1846, %v2188
        %vm2317 = vcmp.gt.f32.partialorder %v2037, %v2189
        %vm2318 = vcmp.gt.f32.partialorder %v2039, %v2190
        %vm2319 = vcmp.gt.f32.partialorder %v1848, %v2191
        %vm2320 = vcmp.gt.f32.partialorder %v1850, %v2192
        %vm2321 = vcmp.gt.f32.partialorder %v2041, %v2193
        %vm2322 = vcmp.gt.f32.partialorder %v2043, %v2194
        %vm2323 = vcmp.gt.f32.partialorder %v1854, %v2195
        %vm2324 = vcmp.gt.f32.partialorder %v1856, %v2196
        %vm2325 = vcmp.gt.f32.partialorder %v2047, %v2197
        %vm2326 = vcmp.gt.f32.partialorder %v2049, %v2198
        %vm2327 = vcmp.gt.f32.partialorder %v1858, %v2199
        %vm2328 = vcmp.gt.f32.partialorder %v1860, %v2200
        %vm2329 = vcmp.gt.f32.partialorder %v2051, %v2201
        %vm2330 = vcmp.gt.f32.partialorder %v2053, %v2202
        %vm2331 = vcmp.gt.f32.partialorder %v1864, %v2203
        %vm2332 = vcmp.gt.f32.partialorder %v1866, %v2204
        %vm2333 = vcmp.gt.f32.partialorder %v2057, %v2205
        %vm2334 = vcmp.gt.f32.partialorder %v2059, %v2206
        %vm2335 = vcmp.gt.f32.partialorder %v1868, %v2207
        %vm2336 = vcmp.gt.f32.partialorder %v1870, %v2208
        %vm2337 = vcmp.gt.f32.partialorder %v2061, %v2209
        %vm2338 = vcmp.gt.f32.partialorder %v2063, %v2210
        %vm2339 = vcmp.gt.f32.partialorder %v1874, %v2211
        %vm2340 = vcmp.gt.f32.partialorder %v1876, %v2212
        %vm2341 = vcmp.gt.f32.partialorder %v2067, %v2213
        %vm2342 = vcmp.gt.f32.partialorder %v2069, %v2214
        %vm2343 = vcmp.gt.f32.partialorder %v1878, %v2215
        %vm2344 = vcmp.gt.f32.partialorder %v1880, %v2216
        %vm2345 = vcmp.gt.f32.partialorder %v2071, %v2217
        %vm2346 = vcmp.gt.f32.partialorder %v2073, %v2218
        %vm2347 = vcmp.gt.f32.partialorder %v1884, %v2219
        %vm2348 = vcmp.gt.f32.partialorder %v1886, %v2220
        %vm2349 = vcmp.gt.f32.partialorder %v2077, %v2221
        %vm2350 = vcmp.gt.f32.partialorder %v2079, %v2222
        %vm2351 = vcmp.gt.f32.partialorder %v1888, %v2223
        %vm2352 = vcmp.gt.f32.partialorder %v1890, %v2224
        %vm2353 = vcmp.gt.f32.partialorder %v2081, %v2225
        %vm2354 = vcmp.gt.f32.partialorder %v2083, %v2226
        %vm2355 = vcmp.gt.f32.partialorder %v1894, %v2227
        %vm2356 = vcmp.gt.f32.partialorder %v1896, %v2228
        %vm2357 = vcmp.gt.f32.partialorder %v2087, %v2229
        %vm2358 = vcmp.gt.f32.partialorder %v2089, %v2230
        %vm2359 = vcmp.gt.f32.partialorder %v1898, %v2231
        %vm2360 = vcmp.gt.f32.partialorder %v1900, %v2232
        %vm2361 = vcmp.gt.f32.partialorder %v2091, %v2233
        %vm2362 = vcmp.gt.f32.partialorder %v2093, %v2234
        %vm2363 = vcmp.gt.f32.partialorder %v1904, %v2235
        %vm2364 = vcmp.gt.f32.partialorder %v1906, %v2236
        %vm2365 = vcmp.gt.f32.partialorder %v2097, %v2237
        %vm2366 = vcmp.gt.f32.partialorder %v2099, %v2238
        %vm2367 = vcmp.gt.f32.partialorder %v1908, %v2239
        %vm2368 = vcmp.gt.f32.partialorder %v1910, %v2240
        %vm2369 = vcmp.gt.f32.partialorder %v2101, %v2241
        %vm2370 = vcmp.gt.f32.partialorder %v2103, %v2242
        %vm2371 = vcmp.gt.f32.partialorder %v1914, %v2243
        %vm2372 = vcmp.gt.f32.partialorder %v1916, %v2244
        %vm2373 = vcmp.gt.f32.partialorder %v2107, %v2245
        %vm2374 = vcmp.gt.f32.partialorder %v2109, %v2246
        %vm2375 = vcmp.gt.f32.partialorder %v1918, %v2247
        %vm2376 = vcmp.gt.f32.partialorder %v1920, %v2248
        %vm2377 = vcmp.gt.f32.partialorder %v2111, %v2249
        %vm2378 = vcmp.gt.f32.partialorder %v2113, %v2250
        %vm2379 = vcmp.gt.f32.partialorder %v1924, %v2251
        %vm2380 = vcmp.gt.f32.partialorder %v1926, %v2252
        %vm2381 = vcmp.gt.f32.partialorder %v2117, %v2253
        %vm2382 = vcmp.gt.f32.partialorder %v2119, %v2254
        %vm2383 = vcmp.gt.f32.partialorder %v1928, %v2255
        %vm2384 = vcmp.gt.f32.partialorder %v1930, %v2256
        %vm2385 = vcmp.gt.f32.partialorder %v2121, %v2257
        %vm2386 = vcmp.gt.f32.partialorder %v2123, %v2258
        %vm2387 = vcmp.gt.f32.partialorder %v1934, %v2259
        %vm2388 = vcmp.gt.f32.partialorder %v1936, %v2260
        %vm2389 = vcmp.gt.f32.partialorder %v2127, %v2261
        %vm2390 = vcmp.gt.f32.partialorder %v2129, %v2262
        %vm2391 = vcmp.gt.f32.partialorder %v1938, %v2263
        %vm2392 = vcmp.gt.f32.partialorder %v1940, %v2264
        %vm2393 = vcmp.gt.f32.partialorder %v2131, %v2265
        %vm2394 = vcmp.gt.f32.partialorder %v2133, %v2266
        %vm2395 = vcmp.gt.f32.partialorder %v1944, %v2267
        %vm2396 = vcmp.gt.f32.partialorder %v1946, %v2268
        %vm2397 = vcmp.gt.f32.partialorder %v2137, %v2269
        %vm2398 = vcmp.gt.f32.partialorder %v2139, %v2270
        %vm2399 = vcmp.gt.f32.partialorder %v1948, %v2271
        %vm2400 = vcmp.gt.f32.partialorder %v1950, %v2272
        %vm2401 = vcmp.gt.f32.partialorder %v2141, %v2273
        %vm2402 = vcmp.gt.f32.partialorder %v2143, %v2274
        %vm2403 = vcmp.gt.f32.partialorder %v1954, %v2275
        %vm2404 = vcmp.gt.f32.partialorder %v1956, %v2276
        %vm2405 = vcmp.gt.f32.partialorder %v2147, %v2277
        %vm2406 = vcmp.gt.f32.partialorder %v2149, %v2278
        %vm2407 = vcmp.gt.f32.partialorder %v1958, %v2279
        %vm2408 = vcmp.gt.f32.partialorder %v1960, %v2280
        %vm2409 = vcmp.gt.f32.partialorder %v2151, %v2281
        %vm2410 = vcmp.gt.f32.partialorder %v2153, %v2282
        %v2411 = vsel %vm2283, 1, 0
        %v2412 = vsel %vm2284, 1, 0
        %v2413 = vsel %vm2285, 1, 0
        %v2414 = vsel %vm2286, 1, 0
        %v2415 = vsel %vm2287, 1, 0
        %v2416 = vsel %vm2288, 1, 0
        %v2417 = vsel %vm2289, 1, 0
        %v2418 = vsel %vm2290, 1, 0
        %v2419 = vsel %vm2291, 1, 0
        %v2420 = vsel %vm2292, 1, 0
        %v2421 = vsel %vm2293, 1, 0
        %v2422 = vsel %vm2294, 1, 0
        %v2423 = vsel %vm2295, 1, 0
        %v2424 = vsel %vm2296, 1, 0
        %v2425 = vsel %vm2297, 1, 0
        %v2426 = vsel %vm2298, 1, 0
        %v2427 = vsel %vm2299, 1, 0
        %v2428 = vsel %vm2300, 1, 0
        %v2429 = vsel %vm2301, 1, 0
        %v2430 = vsel %vm2302, 1, 0
        %v2431 = vsel %vm2303, 1, 0
        %v2432 = vsel %vm2304, 1, 0
        %v2433 = vsel %vm2305, 1, 0
        %v2434 = vsel %vm2306, 1, 0
        %v2435 = vsel %vm2307, 1, 0
        %v2436 = vsel %vm2308, 1, 0
        %v2437 = vsel %vm2309, 1, 0
        %v2438 = vsel %vm2310, 1, 0
        %v2439 = vsel %vm2311, 1, 0
        %v2440 = vsel %vm2312, 1, 0
        %v2441 = vsel %vm2313, 1, 0
        %v2442 = vsel %vm2314, 1, 0
        %v2443 = vsel %vm2315, 1, 0
        %v2444 = vsel %vm2316, 1, 0
        %v2445 = vsel %vm2317, 1, 0
        %v2446 = vsel %vm2318, 1, 0
        %v2447 = vsel %vm2319, 1, 0
        %v2448 = vsel %vm2320, 1, 0
        %v2449 = vsel %vm2321, 1, 0
        %v2450 = vsel %vm2322, 1, 0
        %v2451 = vsel %vm2323, 1, 0
        %v2452 = vsel %vm2324, 1, 0
        %v2453 = vsel %vm2325, 1, 0
        %v2454 = vsel %vm2326, 1, 0
        %v2455 = vsel %vm2327, 1, 0
        %v2456 = vsel %vm2328, 1, 0
        %v2457 = vsel %vm2329, 1, 0
        %v2458 = vsel %vm2330, 1, 0
        %v2459 = vsel %vm2331, 1, 0
        %v2460 = vsel %vm2332, 1, 0
        %v2461 = vsel %vm2333, 1, 0
        %v2462 = vsel %vm2334, 1, 0
        %v2463 = vsel %vm2335, 1, 0
        %v2464 = vsel %vm2336, 1, 0
        %v2465 = vsel %vm2337, 1, 0
        %v2466 = vsel %vm2338, 1, 0
        %v2467 = vsel %vm2339, 1, 0
        %v2468 = vsel %vm2340, 1, 0
        %v2469 = vsel %vm2341, 1, 0
        %v2470 = vsel %vm2342, 1, 0
        %v2471 = vsel %vm2343, 1, 0
        %v2472 = vsel %vm2344, 1, 0
        %v2473 = vsel %vm2345, 1, 0
        %v2474 = vsel %vm2346, 1, 0
        %v2475 = vsel %vm2347, 1, 0
        %v2476 = vsel %vm2348, 1, 0
        %v2477 = vsel %vm2349, 1, 0
        %v2478 = vsel %vm2350, 1, 0
        %v2479 = vsel %vm2351, 1, 0
        %v2480 = vsel %vm2352, 1, 0
        %v2481 = vsel %vm2353, 1, 0
        %v2482 = vsel %vm2354, 1, 0
        %v2483 = vsel %vm2355, 1, 0
        %v2484 = vsel %vm2356, 1, 0
        %v2485 = vsel %vm2357, 1, 0
        %v2486 = vsel %vm2358, 1, 0
        %v2487 = vsel %vm2359, 1, 0
        %v2488 = vsel %vm2360, 1, 0
        %v2489 = vsel %vm2361, 1, 0
        %v2490 = vsel %vm2362, 1, 0
        %v2491 = vsel %vm2363, 1, 0
        %v2492 = vsel %vm2364, 1, 0
        %v2493 = vsel %vm2365, 1, 0
        %v2494 = vsel %vm2366, 1, 0
        %v2495 = vsel %vm2367, 1, 0
        %v2496 = vsel %vm2368, 1, 0
        %v2497 = vsel %vm2369, 1, 0
        %v2498 = vsel %vm2370, 1, 0
        %v2499 = vsel %vm2371, 1, 0
        %v2500 = vsel %vm2372, 1, 0
        %v2501 = vsel %vm2373, 1, 0
        %v2502 = vsel %vm2374, 1, 0
        %v2503 = vsel %vm2375, 1, 0
        %v2504 = vsel %vm2376, 1, 0
        %v2505 = vsel %vm2377, 1, 0
        %v2506 = vsel %vm2378, 1, 0
        %v2507 = vsel %vm2379, 1, 0
        %v2508 = vsel %vm2380, 1, 0
        %v2509 = vsel %vm2381, 1, 0
        %v2510 = vsel %vm2382, 1, 0
        %v2511 = vsel %vm2383, 1, 0
        %v2512 = vsel %vm2384, 1, 0
        %v2513 = vsel %vm2385, 1, 0
        %v2514 = vsel %vm2386, 1, 0
        %v2515 = vsel %vm2387, 1, 0
        %v2516 = vsel %vm2388, 1, 0
        %v2517 = vsel %vm2389, 1, 0
        %v2518 = vsel %vm2390, 1, 0
        %v2519 = vsel %vm2391, 1, 0
        %v2520 = vsel %vm2392, 1, 0
        %v2521 = vsel %vm2393, 1, 0
        %v2522 = vsel %vm2394, 1, 0
        %v2523 = vsel %vm2395, 1, 0
        %v2524 = vsel %vm2396, 1, 0
        %v2525 = vsel %vm2397, 1, 0
        %v2526 = vsel %vm2398, 1, 0
        %v2527 = vsel %vm2399, 1, 0
        %v2528 = vsel %vm2400, 1, 0
        %v2529 = vsel %vm2401, 1, 0
        %v2530 = vsel %vm2402, 1, 0
        %v2531 = vsel %vm2403, 1, 0
        %v2532 = vsel %vm2404, 1, 0
        %v2533 = vsel %vm2405, 1, 0
        %v2534 = vsel %vm2406, 1, 0
        %v2535 = vsel %vm2407, 1, 0
        %v2536 = vsel %vm2408, 1, 0
        %v2537 = vsel %vm2409, 1, 0
        %v2538 = vsel %vm2410, 1, 0
        %v2539 = vcvt.s32.f32 %v2411
        %v2540 = vcvt.s32.f32 %v2412
        %v2541 = vcvt.s32.f32 %v2413
        %v2542 = vcvt.s32.f32 %v2414
        %v2543 = vcvt.s32.f32 %v2415
        %v2544 = vcvt.s32.f32 %v2416
        %v2545 = vcvt.s32.f32 %v2417
        %v2546 = vcvt.s32.f32 %v2418
        %v2547 = vcvt.s32.f32 %v2419
        %v2548 = vcvt.s32.f32 %v2420
        %v2549 = vcvt.s32.f32 %v2421
        %v2550 = vcvt.s32.f32 %v2422
        %v2551 = vcvt.s32.f32 %v2423
        %v2552 = vcvt.s32.f32 %v2424
        %v2553 = vcvt.s32.f32 %v2425
        %v2554 = vcvt.s32.f32 %v2426
        %v2555 = vcvt.s32.f32 %v2427
        %v2556 = vcvt.s32.f32 %v2428
        %v2557 = vcvt.s32.f32 %v2429
        %v2558 = vcvt.s32.f32 %v2430
        %v2559 = vcvt.s32.f32 %v2431
        %v2560 = vcvt.s32.f32 %v2432
        %v2561 = vcvt.s32.f32 %v2433
        %v2562 = vcvt.s32.f32 %v2434
        %v2563 = vcvt.s32.f32 %v2435
        %v2564 = vcvt.s32.f32 %v2436
        %v2565 = vcvt.s32.f32 %v2437
        %v2566 = vcvt.s32.f32 %v2438
        %v2567 = vcvt.s32.f32 %v2439
        %v2568 = vcvt.s32.f32 %v2440
        %v2569 = vcvt.s32.f32 %v2441
        %v2570 = vcvt.s32.f32 %v2442
        %v2571 = vcvt.s32.f32 %v2443
        %v2572 = vcvt.s32.f32 %v2444
        %v2573 = vcvt.s32.f32 %v2445
        %v2574 = vcvt.s32.f32 %v2446
        %v2575 = vcvt.s32.f32 %v2447
        %v2576 = vcvt.s32.f32 %v2448
        %v2577 = vcvt.s32.f32 %v2449
        %v2578 = vcvt.s32.f32 %v2450
        %v2579 = vcvt.s32.f32 %v2451
        %v2580 = vcvt.s32.f32 %v2452
        %v2581 = vcvt.s32.f32 %v2453
        %v2582 = vcvt.s32.f32 %v2454
        %v2583 = vcvt.s32.f32 %v2455
        %v2584 = vcvt.s32.f32 %v2456
        %v2585 = vcvt.s32.f32 %v2457
        %v2586 = vcvt.s32.f32 %v2458
        %v2587 = vcvt.s32.f32 %v2459
        %v2588 = vcvt.s32.f32 %v2460
        %v2589 = vcvt.s32.f32 %v2461
        %v2590 = vcvt.s32.f32 %v2462
        %v2591 = vcvt.s32.f32 %v2463
        %v2592 = vcvt.s32.f32 %v2464
        %v2593 = vcvt.s32.f32 %v2465
        %v2594 = vcvt.s32.f32 %v2466
        %v2595 = vcvt.s32.f32 %v2467
        %v2596 = vcvt.s32.f32 %v2468
        %v2597 = vcvt.s32.f32 %v2469
        %v2598 = vcvt.s32.f32 %v2470
        %v2599 = vcvt.s32.f32 %v2471
        %v2600 = vcvt.s32.f32 %v2472
        %v2601 = vcvt.s32.f32 %v2473
        %v2602 = vcvt.s32.f32 %v2474
        %v2603 = vcvt.s32.f32 %v2475
        %v2604 = vcvt.s32.f32 %v2476
        %v2605 = vcvt.s32.f32 %v2477
        %v2606 = vcvt.s32.f32 %v2478
        %v2607 = vcvt.s32.f32 %v2479
        %v2608 = vcvt.s32.f32 %v2480
        %v2609 = vcvt.s32.f32 %v2481
        %v2610 = vcvt.s32.f32 %v2482
        %v2611 = vcvt.s32.f32 %v2483
        %v2612 = vcvt.s32.f32 %v2484
        %v2613 = vcvt.s32.f32 %v2485
        %v2614 = vcvt.s32.f32 %v2486
        %v2615 = vcvt.s32.f32 %v2487
        %v2616 = vcvt.s32.f32 %v2488
        %v2617 = vcvt.s32.f32 %v2489
        %v2618 = vcvt.s32.f32 %v2490
        %v2619 = vcvt.s32.f32 %v2491
        %v2620 = vcvt.s32.f32 %v2492
        %v2621 = vcvt.s32.f32 %v2493
        %v2622 = vcvt.s32.f32 %v2494
        %v2623 = vcvt.s32.f32 %v2495
        %v2624 = vcvt.s32.f32 %v2496
        %v2625 = vcvt.s32.f32 %v2497
        %v2626 = vcvt.s32.f32 %v2498
        %v2627 = vcvt.s32.f32 %v2499
        %v2628 = vcvt.s32.f32 %v2500
        %v2629 = vcvt.s32.f32 %v2501
        %v2630 = vcvt.s32.f32 %v2502
        %v2631 = vcvt.s32.f32 %v2503
        %v2632 = vcvt.s32.f32 %v2504
        %v2633 = vcvt.s32.f32 %v2505
        %v2634 = vcvt.s32.f32 %v2506
        %v2635 = vcvt.s32.f32 %v2507
        %v2636 = vcvt.s32.f32 %v2508
        %v2637 = vcvt.s32.f32 %v2509
        %v2638 = vcvt.s32.f32 %v2510
        %v2639 = vcvt.s32.f32 %v2511
        %v2640 = vcvt.s32.f32 %v2512
        %v2641 = vcvt.s32.f32 %v2513
        %v2642 = vcvt.s32.f32 %v2514
        %v2643 = vcvt.s32.f32 %v2515
        %v2644 = vcvt.s32.f32 %v2516
        %v2645 = vcvt.s32.f32 %v2517
        %v2646 = vcvt.s32.f32 %v2518
        %v2647 = vcvt.s32.f32 %v2519
        %v2648 = vcvt.s32.f32 %v2520
        %v2649 = vcvt.s32.f32 %v2521
        %v2650 = vcvt.s32.f32 %v2522
        %v2651 = vcvt.s32.f32 %v2523
        %v2652 = vcvt.s32.f32 %v2524
        %v2653 = vcvt.s32.f32 %v2525
        %v2654 = vcvt.s32.f32 %v2526
        %v2655 = vcvt.s32.f32 %v2527
        %v2656 = vcvt.s32.f32 %v2528
        %v2657 = vcvt.s32.f32 %v2529
        %v2658 = vcvt.s32.f32 %v2530
        %v2659 = vcvt.s32.f32 %v2531
        %v2660 = vcvt.s32.f32 %v2532
        %v2661 = vcvt.s32.f32 %v2533
        %v2662 = vcvt.s32.f32 %v2534
        %v2663 = vcvt.s32.f32 %v2535
        %v2664 = vcvt.s32.f32 %v2536
        %v2665 = vcvt.s32.f32 %v2537
        %v2666 = vcvt.s32.f32 %v2538
        %v2667 = vpack.c.bf16 %v2543, %v2539
        %v2668 = vpack.c.bf16 %v2544, %v2540
        %v2669 = vpack.c.bf16 %v2545, %v2541
        %v2670 = vpack.c.bf16 %v2546, %v2542
        %v2671 = vpack.c.bf16 %v2551, %v2547
        %v2672 = vpack.c.bf16 %v2552, %v2548
        %v2673 = vpack.c.bf16 %v2553, %v2549
        %v2674 = vpack.c.bf16 %v2554, %v2550
        %v2675 = vpack.c.bf16 %v2559, %v2555
        %v2676 = vpack.c.bf16 %v2560, %v2556
        %v2677 = vpack.c.bf16 %v2561, %v2557
        %v2678 = vpack.c.bf16 %v2562, %v2558
        %v2679 = vpack.c.bf16 %v2567, %v2563
        %v2680 = vpack.c.bf16 %v2568, %v2564
        %v2681 = vpack.c.bf16 %v2569, %v2565
        %v2682 = vpack.c.bf16 %v2570, %v2566
        %v2683 = vpack.c.bf16 %v2575, %v2571
        %v2684 = vpack.c.bf16 %v2576, %v2572
        %v2685 = vpack.c.bf16 %v2577, %v2573
        %v2686 = vpack.c.bf16 %v2578, %v2574
        %v2687 = vpack.c.bf16 %v2583, %v2579
        %v2688 = vpack.c.bf16 %v2584, %v2580
        %v2689 = vpack.c.bf16 %v2585, %v2581
        %v2690 = vpack.c.bf16 %v2586, %v2582
        %v2691 = vpack.c.bf16 %v2591, %v2587
        %v2692 = vpack.c.bf16 %v2592, %v2588
        %v2693 = vpack.c.bf16 %v2593, %v2589
        %v2694 = vpack.c.bf16 %v2594, %v2590
        %v2695 = vpack.c.bf16 %v2599, %v2595
        %v2696 = vpack.c.bf16 %v2600, %v2596
        %v2697 = vpack.c.bf16 %v2601, %v2597
        %v2698 = vpack.c.bf16 %v2602, %v2598
        %v2699 = vpack.c.bf16 %v2607, %v2603
        %v2700 = vpack.c.bf16 %v2608, %v2604
        %v2701 = vpack.c.bf16 %v2609, %v2605
        %v2702 = vpack.c.bf16 %v2610, %v2606
        %v2703 = vpack.c.bf16 %v2615, %v2611
        %v2704 = vpack.c.bf16 %v2616, %v2612
        %v2705 = vpack.c.bf16 %v2617, %v2613
        %v2706 = vpack.c.bf16 %v2618, %v2614
        %v2707 = vpack.c.bf16 %v2623, %v2619
        %v2708 = vpack.c.bf16 %v2624, %v2620
        %v2709 = vpack.c.bf16 %v2625, %v2621
        %v2710 = vpack.c.bf16 %v2626, %v2622
        %v2711 = vpack.c.bf16 %v2631, %v2627
        %v2712 = vpack.c.bf16 %v2632, %v2628
        %v2713 = vpack.c.bf16 %v2633, %v2629
        %v2714 = vpack.c.bf16 %v2634, %v2630
        %v2715 = vpack.c.bf16 %v2639, %v2635
        %v2716 = vpack.c.bf16 %v2640, %v2636
        %v2717 = vpack.c.bf16 %v2641, %v2637
        %v2718 = vpack.c.bf16 %v2642, %v2638
        %v2719 = vpack.c.bf16 %v2647, %v2643
        %v2720 = vpack.c.bf16 %v2648, %v2644
        %v2721 = vpack.c.bf16 %v2649, %v2645
        %v2722 = vpack.c.bf16 %v2650, %v2646
        %v2723 = vpack.c.bf16 %v2655, %v2651
        %v2724 = vpack.c.bf16 %v2656, %v2652
        %v2725 = vpack.c.bf16 %v2657, %v2653
        %v2726 = vpack.c.bf16 %v2658, %v2654
        %v2727 = vpack.c.bf16 %v2663, %v2659
        %v2728 = vpack.c.bf16 %v2664, %v2660
        %v2729 = vpack.c.bf16 %v2665, %v2661
        %v2730 = vpack.c.bf16 %v2666, %v2662
        %2731 = vmatprep.subr.bf16.mxu0 %v806
        %2732 = vmatpush1.bf16.msra.mxu0 %v805
        %2733 = vmatprep.subr.bf16.mxu0 %v808
        %2734 = vmatpush1.bf16.msra.mxu0 %v807
        %2735 = vmatprep.subr.bf16.mxu0 %v810
        %2736 = vmatpush1.bf16.msra.mxu0 %v809
        %2737 = vmatprep.subr.bf16.mxu0 %v812
        %2738 = vmatpush1.bf16.msra.mxu0 %v811
        %2739 = vmatprep.subr.bf16.mxu0 %v814
        %2740 = vmatpush1.bf16.msra.mxu0 %v813
        %2741 = vmatprep.subr.bf16.mxu0 %v816
        %2742 = vmatpush1.bf16.msra.mxu0 %v815
        %2743 = vmatprep.subr.bf16.mxu0 %v818
        %2744 = vmatpush1.bf16.msra.mxu0 %v817
        %2745 = vmatprep.subr.bf16.mxu0 %v820
        %2746 = vmatpush1.bf16.msra.mxu0 %v819
        %2747 = vmatprep.subr.bf16.mxu0 %v822
        %2748 = vmatpush1.bf16.msra.mxu0 %v821
        %2749 = vmatprep.subr.bf16.mxu0 %v824
        %2750 = vmatpush1.bf16.msra.mxu0 %v823
        %2751 = vmatprep.subr.bf16.mxu0 %v826
        %2752 = vmatpush1.bf16.msra.mxu0 %v825
        %2753 = vmatprep.subr.bf16.mxu0 %v828
        %2754 = vmatpush1.bf16.msra.mxu0 %v827
        %2755 = vmatprep.subr.bf16.mxu0 %v830
        %2756 = vmatpush1.bf16.msra.mxu0 %v829
        %2757 = vmatprep.subr.bf16.mxu0 %v832
        %2758 = vmatpush1.bf16.msra.mxu0 %v831
        %2759 = vmatprep.subr.bf16.mxu0 %v834
        %2760 = vmatpush1.bf16.msra.mxu0 %v833
        %2761 = vmatprep.subr.bf16.mxu0 %v836
        %2762 = vmatpush1.bf16.msra.mxu0 %v835
        %2763 = vmatprep.mubr.bf16.mxu0 %v2668
        %2764 = vmatmul.mubr.bf16.gmra.mrb[0].mxu0 %v2667
        %v2765 = vpop.f32.mrb[0].mxu0
        %v2766 = vadd.f32 %v874, %v2765
        %v2767 = vpop.f32.mrb[0].mxu0
        %v2768 = vadd.f32 %v878, %v2767
        %v2769 = vpop.f32.mrb[0].mxu0
        %v2770 = vadd.f32 %v874, %v2769
        %v2771 = vpop.f32.mrb[0].mxu0
        %v2772 = vadd.f32 %v878, %v2771
        %2773 = vmatprep.mubr.bf16.mxu0 %v2672
        %2774 = vmatmul.mubr.bf16.gmra.mrb[0].mxu0 %v2671
        %v2775 = vpop.f32.mrb[0].mxu0
        %v2776 = vadd.f32 %v874, %v2775
        %v2777 = vpop.f32.mrb[0].mxu0
        %v2778 = vadd.f32 %v878, %v2777
        %v2779 = vpop.f32.mrb[0].mxu0
        %v2780 = vadd.f32 %v874, %v2779
        %v2781 = vpop.f32.mrb[0].mxu0
        %v2782 = vadd.f32 %v878, %v2781
        %2783 = vmatprep.mubr.bf16.mxu0 %v2676
        %2784 = vmatmul.mubr.bf16.gmra.mrb[0].mxu0 %v2675
        %v2785 = vpop.f32.mrb[0].mxu0
        %v2786 = vadd.f32 %v874, %v2785
        %v2787 = vpop.f32.mrb[0].mxu0
        %v2788 = vadd.f32 %v878, %v2787
        %v2789 = vpop.f32.mrb[0].mxu0
        %v2790 = vadd.f32 %v874, %v2789
        %v2791 = vpop.f32.mrb[0].mxu0
        %v2792 = vadd.f32 %v878, %v2791
        %2793 = vmatprep.mubr.bf16.mxu0 %v2680
        %2794 = vmatmul.mubr.bf16.gmra.mrb[0].mxu0 %v2679
        %v2795 = vpop.f32.mrb[0].mxu0
        %v2796 = vadd.f32 %v874, %v2795
        %v2797 = vpop.f32.mrb[0].mxu0
        %v2798 = vadd.f32 %v878, %v2797
        %v2799 = vpop.f32.mrb[0].mxu0
        %v2800 = vadd.f32 %v874, %v2799
        %v2801 = vpop.f32.mrb[0].mxu0
        %v2802 = vadd.f32 %v878, %v2801
        %2803 = vmatprep.mubr.bf16.mxu0 %v2684
        %2804 = vmatmul.mubr.bf16.gmra.mrb[0].mxu0 %v2683
        %v2805 = vpop.f32.mrb[0].mxu0
        %v2806 = vadd.f32 %v874, %v2805
        %v2807 = vpop.f32.mrb[0].mxu0
        %v2808 = vadd.f32 %v878, %v2807
        %v2809 = vpop.f32.mrb[0].mxu0
        %v2810 = vadd.f32 %v874, %v2809
        %v2811 = vpop.f32.mrb[0].mxu0
        %v2812 = vadd.f32 %v878, %v2811
        %2813 = vmatprep.mubr.bf16.mxu0 %v2688
        %2814 = vmatmul.mubr.bf16.gmra.mrb[0].mxu0 %v2687
        %v2815 = vpop.f32.mrb[0].mxu0
        %v2816 = vadd.f32 %v874, %v2815
        %v2817 = vpop.f32.mrb[0].mxu0
        %v2818 = vadd.f32 %v878, %v2817
        %v2819 = vpop.f32.mrb[0].mxu0
        %v2820 = vadd.f32 %v874, %v2819
        %v2821 = vpop.f32.mrb[0].mxu0
        %v2822 = vadd.f32 %v878, %v2821
        %2823 = vmatprep.mubr.bf16.mxu0 %v2692
        %2824 = vmatmul.mubr.bf16.gmra.mrb[0].mxu0 %v2691
        %v2825 = vpop.f32.mrb[0].mxu0
        %v2826 = vadd.f32 %v874, %v2825
        %v2827 = vpop.f32.mrb[0].mxu0
        %v2828 = vadd.f32 %v878, %v2827
        %v2829 = vpop.f32.mrb[0].mxu0
        %v2830 = vadd.f32 %v874, %v2829
        %v2831 = vpop.f32.mrb[0].mxu0
        %v2832 = vadd.f32 %v878, %v2831
        %2833 = vmatprep.mubr.bf16.mxu0 %v2696
        %2834 = vmatmul.mubr.bf16.gmra.mrb[0].mxu0 %v2695
        %v2835 = vpop.f32.mrb[0].mxu0
        %v2836 = vadd.f32 %v874, %v2835
        %v2837 = vpop.f32.mrb[0].mxu0
        %v2838 = vadd.f32 %v878, %v2837
        %v2839 = vpop.f32.mrb[0].mxu0
        %v2840 = vadd.f32 %v874, %v2839
        %v2841 = vpop.f32.mrb[0].mxu0
        %v2842 = vadd.f32 %v878, %v2841
        %2843 = vmatprep.mubr.bf16.mxu0 %v2700
        %2844 = vmatmul.mubr.bf16.gmra.mrb[0].mxu0 %v2699
        %v2845 = vpop.f32.mrb[0].mxu0
        %v2846 = vadd.f32 %v874, %v2845
        %v2847 = vpop.f32.mrb[0].mxu0
        %v2848 = vadd.f32 %v878, %v2847
        %v2849 = vpop.f32.mrb[0].mxu0
        %v2850 = vadd.f32 %v874, %v2849
        %v2851 = vpop.f32.mrb[0].mxu0
        %v2852 = vadd.f32 %v878, %v2851
        %2853 = vmatprep.mubr.bf16.mxu0 %v2704
        %2854 = vmatmul.mubr.bf16.gmra.mrb[0].mxu0 %v2703
        %v2855 = vpop.f32.mrb[0].mxu0
        %v2856 = vadd.f32 %v874, %v2855
        %v2857 = vpop.f32.mrb[0].mxu0
        %v2858 = vadd.f32 %v878, %v2857
        %v2859 = vpop.f32.mrb[0].mxu0
        %v2860 = vadd.f32 %v874, %v2859
        %v2861 = vpop.f32.mrb[0].mxu0
        %v2862 = vadd.f32 %v878, %v2861
        %2863 = vmatprep.mubr.bf16.mxu0 %v2708
        %2864 = vmatmul.mubr.bf16.gmra.mrb[0].mxu0 %v2707
        %v2865 = vpop.f32.mrb[0].mxu0
        %v2866 = vadd.f32 %v874, %v2865
        %v2867 = vpop.f32.mrb[0].mxu0
        %v2868 = vadd.f32 %v878, %v2867
        %v2869 = vpop.f32.mrb[0].mxu0
        %v2870 = vadd.f32 %v874, %v2869
        %v2871 = vpop.f32.mrb[0].mxu0
        %v2872 = vadd.f32 %v878, %v2871
        %2873 = vmatprep.mubr.bf16.mxu0 %v2712
        %2874 = vmatmul.mubr.bf16.gmra.mrb[0].mxu0 %v2711
        %v2875 = vpop.f32.mrb[0].mxu0
        %v2876 = vadd.f32 %v874, %v2875
        %v2877 = vpop.f32.mrb[0].mxu0
        %v2878 = vadd.f32 %v878, %v2877
        %v2879 = vpop.f32.mrb[0].mxu0
        %v2880 = vadd.f32 %v874, %v2879
        %v2881 = vpop.f32.mrb[0].mxu0
        %v2882 = vadd.f32 %v878, %v2881
        %2883 = vmatprep.mubr.bf16.mxu0 %v2716
        %2884 = vmatmul.mubr.bf16.gmra.mrb[0].mxu0 %v2715
        %v2885 = vpop.f32.mrb[0].mxu0
        %v2886 = vadd.f32 %v874, %v2885
        %v2887 = vpop.f32.mrb[0].mxu0
        %v2888 = vadd.f32 %v878, %v2887
        %v2889 = vpop.f32.mrb[0].mxu0
        %v2890 = vadd.f32 %v874, %v2889
        %v2891 = vpop.f32.mrb[0].mxu0
        %v2892 = vadd.f32 %v878, %v2891
        %2893 = vmatprep.mubr.bf16.mxu0 %v2720
        %2894 = vmatmul.mubr.bf16.gmra.mrb[0].mxu0 %v2719
        %v2895 = vpop.f32.mrb[0].mxu0
        %v2896 = vadd.f32 %v874, %v2895
        %v2897 = vpop.f32.mrb[0].mxu0
        %v2898 = vadd.f32 %v878, %v2897
        %v2899 = vpop.f32.mrb[0].mxu0
        %v2900 = vadd.f32 %v874, %v2899
        %v2901 = vpop.f32.mrb[0].mxu0
        %v2902 = vadd.f32 %v878, %v2901
        %2903 = vmatprep.mubr.bf16.mxu0 %v2724
        %2904 = vmatmul.mubr.bf16.gmra.mrb[0].mxu0 %v2723
        %v2905 = vpop.f32.mrb[0].mxu0
        %v2906 = vadd.f32 %v874, %v2905
        %v2907 = vpop.f32.mrb[0].mxu0
        %v2908 = vadd.f32 %v878, %v2907
        %v2909 = vpop.f32.mrb[0].mxu0
        %v2910 = vadd.f32 %v874, %v2909
        %v2911 = vpop.f32.mrb[0].mxu0
        %v2912 = vadd.f32 %v878, %v2911
        %2913 = vmatprep.mubr.bf16.mxu0 %v2728
        %2914 = vmatmul.mubr.bf16.gmra.mrb[0].mxu0 %v2727
        %v2915 = vpop.f32.mrb[0].mxu0
        %v2916 = vadd.f32 %v874, %v2915
        %v2917 = vpop.f32.mrb[0].mxu0
        %v2918 = vadd.f32 %v878, %v2917
        %v2919 = vpop.f32.mrb[0].mxu0
        %v2920 = vadd.f32 %v874, %v2919
        %v2921 = vpop.f32.mrb[0].mxu0
        %v2922 = vadd.f32 %v878, %v2921
        %2923 = vdwg.mxu0
        %2924 = vmatprep.subr.bf16.mxu0 %v838
        %2925 = vmatpush1.bf16.msra.mxu0 %v837
        %2926 = vmatprep.subr.bf16.mxu0 %v840
        %2927 = vmatpush1.bf16.msra.mxu0 %v839
        %2928 = vmatprep.subr.bf16.mxu0 %v842
        %2929 = vmatpush1.bf16.msra.mxu0 %v841
        %2930 = vmatprep.subr.bf16.mxu0 %v844
        %2931 = vmatpush1.bf16.msra.mxu0 %v843
        %2932 = vmatprep.subr.bf16.mxu0 %v846
        %2933 = vmatpush1.bf16.msra.mxu0 %v845
        %2934 = vmatprep.subr.bf16.mxu0 %v848
        %2935 = vmatpush1.bf16.msra.mxu0 %v847
        %2936 = vmatprep.subr.bf16.mxu0 %v850
        %2937 = vmatpush1.bf16.msra.mxu0 %v849
        %2938 = vmatprep.subr.bf16.mxu0 %v852
        %2939 = vmatpush1.bf16.msra.mxu0 %v851
        %2940 = vmatprep.subr.bf16.mxu0 %v854
        %2941 = vmatpush1.bf16.msra.mxu0 %v853
        %2942 = vmatprep.subr.bf16.mxu0 %v856
        %2943 = vmatpush1.bf16.msra.mxu0 %v855
        %2944 = vmatprep.subr.bf16.mxu0 %v858
        %2945 = vmatpush1.bf16.msra.mxu0 %v857
        %2946 = vmatprep.subr.bf16.mxu0 %v860
        %2947 = vmatpush1.bf16.msra.mxu0 %v859
        %2948 = vmatprep.subr.bf16.mxu0 %v862
        %2949 = vmatpush1.bf16.msra.mxu0 %v861
        %2950 = vmatprep.subr.bf16.mxu0 %v864
        %2951 = vmatpush1.bf16.msra.mxu0 %v863
        %2952 = vmatprep.subr.bf16.mxu0 %v866
        %2953 = vmatpush1.bf16.msra.mxu0 %v865
        %2954 = vmatprep.subr.bf16.mxu0 %v868
        %2955 = vmatpush1.bf16.msra.mxu0 %v867
        %2956 = vmatprep.mubr.bf16.mxu0 %v2670
        %2957 = vmatmul.mubr.bf16.gmra.mrb[0].mxu0 %v2669
        %v2958 = vpop.f32.mrb[0].mxu0
        %v2959 = vadd.f32 %v2766, %v2958
        %v2960 = vpop.f32.mrb[0].mxu0
        %v2961 = vadd.f32 %v2768, %v2960
        %v2962 = vpop.f32.mrb[0].mxu0
        %v2963 = vadd.f32 %v2770, %v2962
        %v2964 = vpop.f32.mrb[0].mxu0
        %v2965 = vadd.f32 %v2772, %v2964
        %2966 = vmatprep.mubr.bf16.mxu0 %v2674
        %2967 = vmatmul.mubr.bf16.gmra.mrb[0].mxu0 %v2673
        %v2968 = vpop.f32.mrb[0].mxu0
        %v2969 = vadd.f32 %v2776, %v2968
        %v2970 = vpop.f32.mrb[0].mxu0
        %v2971 = vadd.f32 %v2778, %v2970
        %v2972 = vpop.f32.mrb[0].mxu0
        %v2973 = vadd.f32 %v2780, %v2972
        %v2974 = vpop.f32.mrb[0].mxu0
        %v2975 = vadd.f32 %v2782, %v2974
        %2976 = vmatprep.mubr.bf16.mxu0 %v2678
        %2977 = vmatmul.mubr.bf16.gmra.mrb[0].mxu0 %v2677
        %v2978 = vpop.f32.mrb[0].mxu0
        %v2979 = vadd.f32 %v2786, %v2978
        %v2980 = vpop.f32.mrb[0].mxu0
        %v2981 = vadd.f32 %v2788, %v2980
        %v2982 = vpop.f32.mrb[0].mxu0
        %v2983 = vadd.f32 %v2790, %v2982
        %v2984 = vpop.f32.mrb[0].mxu0
        %v2985 = vadd.f32 %v2792, %v2984
        %2986 = vmatprep.mubr.bf16.mxu0 %v2682
        %2987 = vmatmul.mubr.bf16.gmra.mrb[0].mxu0 %v2681
        %v2988 = vpop.f32.mrb[0].mxu0
        %v2989 = vadd.f32 %v2796, %v2988
        %v2990 = vpop.f32.mrb[0].mxu0
        %v2991 = vadd.f32 %v2798, %v2990
        %v2992 = vpop.f32.mrb[0].mxu0
        %v2993 = vadd.f32 %v2800, %v2992
        %v2994 = vpop.f32.mrb[0].mxu0
        %v2995 = vadd.f32 %v2802, %v2994
        %2996 = vmatprep.mubr.bf16.mxu0 %v2686
        %2997 = vmatmul.mubr.bf16.gmra.mrb[0].mxu0 %v2685
        %v2998 = vpop.f32.mrb[0].mxu0
        %v2999 = vadd.f32 %v2806, %v2998
        %v3000 = vpop.f32.mrb[0].mxu0
        %v3001 = vadd.f32 %v2808, %v3000
        %v3002 = vpop.f32.mrb[0].mxu0
        %v3003 = vadd.f32 %v2810, %v3002
        %v3004 = vpop.f32.mrb[0].mxu0
        %v3005 = vadd.f32 %v2812, %v3004
        %3006 = vmatprep.mubr.bf16.mxu0 %v2690
        %3007 = vmatmul.mubr.bf16.gmra.mrb[0].mxu0 %v2689
        %v3008 = vpop.f32.mrb[0].mxu0
        %v3009 = vadd.f32 %v2816, %v3008
        %v3010 = vpop.f32.mrb[0].mxu0
        %v3011 = vadd.f32 %v2818, %v3010
        %v3012 = vpop.f32.mrb[0].mxu0
        %v3013 = vadd.f32 %v2820, %v3012
        %v3014 = vpop.f32.mrb[0].mxu0
        %v3015 = vadd.f32 %v2822, %v3014
        %3016 = vmatprep.mubr.bf16.mxu0 %v2694
        %3017 = vmatmul.mubr.bf16.gmra.mrb[0].mxu0 %v2693
        %v3018 = vpop.f32.mrb[0].mxu0
        %v3019 = vadd.f32 %v2826, %v3018
        %v3020 = vpop.f32.mrb[0].mxu0
        %v3021 = vadd.f32 %v2828, %v3020
        %v3022 = vpop.f32.mrb[0].mxu0
        %v3023 = vadd.f32 %v2830, %v3022
        %v3024 = vpop.f32.mrb[0].mxu0
        %v3025 = vadd.f32 %v2832, %v3024
        %3026 = vmatprep.mubr.bf16.mxu0 %v2698
        %3027 = vmatmul.mubr.bf16.gmra.mrb[0].mxu0 %v2697
        %v3028 = vpop.f32.mrb[0].mxu0
        %v3029 = vadd.f32 %v2836, %v3028
        %v3030 = vpop.f32.mrb[0].mxu0
        %v3031 = vadd.f32 %v2838, %v3030
        %v3032 = vpop.f32.mrb[0].mxu0
        %v3033 = vadd.f32 %v2840, %v3032
        %v3034 = vpop.f32.mrb[0].mxu0
        %v3035 = vadd.f32 %v2842, %v3034
        %3036 = vmatprep.mubr.bf16.mxu0 %v2702
        %3037 = vmatmul.mubr.bf16.gmra.mrb[0].mxu0 %v2701
        %v3038 = vpop.f32.mrb[0].mxu0
        %v3039 = vadd.f32 %v2846, %v3038
        %v3040 = vpop.f32.mrb[0].mxu0
        %v3041 = vadd.f32 %v2848, %v3040
        %v3042 = vpop.f32.mrb[0].mxu0
        %v3043 = vadd.f32 %v2850, %v3042
        %v3044 = vpop.f32.mrb[0].mxu0
        %v3045 = vadd.f32 %v2852, %v3044
        %3046 = vmatprep.mubr.bf16.mxu0 %v2706
        %3047 = vmatmul.mubr.bf16.gmra.mrb[0].mxu0 %v2705
        %v3048 = vpop.f32.mrb[0].mxu0
        %v3049 = vadd.f32 %v2856, %v3048
        %v3050 = vpop.f32.mrb[0].mxu0
        %v3051 = vadd.f32 %v2858, %v3050
        %v3052 = vpop.f32.mrb[0].mxu0
        %v3053 = vadd.f32 %v2860, %v3052
        %v3054 = vpop.f32.mrb[0].mxu0
        %v3055 = vadd.f32 %v2862, %v3054
        %3056 = vmatprep.mubr.bf16.mxu0 %v2710
        %3057 = vmatmul.mubr.bf16.gmra.mrb[0].mxu0 %v2709
        %v3058 = vpop.f32.mrb[0].mxu0
        %v3059 = vadd.f32 %v2866, %v3058
        %v3060 = vpop.f32.mrb[0].mxu0
        %v3061 = vadd.f32 %v2868, %v3060
        %v3062 = vpop.f32.mrb[0].mxu0
        %v3063 = vadd.f32 %v2870, %v3062
        %v3064 = vpop.f32.mrb[0].mxu0
        %v3065 = vadd.f32 %v2872, %v3064
        %3066 = vmatprep.mubr.bf16.mxu0 %v2714
        %3067 = vmatmul.mubr.bf16.gmra.mrb[0].mxu0 %v2713
        %v3068 = vpop.f32.mrb[0].mxu0
        %v3069 = vadd.f32 %v2876, %v3068
        %v3070 = vpop.f32.mrb[0].mxu0
        %v3071 = vadd.f32 %v2878, %v3070
        %v3072 = vpop.f32.mrb[0].mxu0
        %v3073 = vadd.f32 %v2880, %v3072
        %v3074 = vpop.f32.mrb[0].mxu0
        %v3075 = vadd.f32 %v2882, %v3074
        %3076 = vmatprep.mubr.bf16.mxu0 %v2718
        %3077 = vmatmul.mubr.bf16.gmra.mrb[0].mxu0 %v2717
        %v3078 = vpop.f32.mrb[0].mxu0
        %v3079 = vadd.f32 %v2886, %v3078
        %v3080 = vpop.f32.mrb[0].mxu0
        %v3081 = vadd.f32 %v2888, %v3080
        %v3082 = vpop.f32.mrb[0].mxu0
        %v3083 = vadd.f32 %v2890, %v3082
        %v3084 = vpop.f32.mrb[0].mxu0
        %v3085 = vadd.f32 %v2892, %v3084
        %3086 = vmatprep.mubr.bf16.mxu0 %v2722
        %3087 = vmatmul.mubr.bf16.gmra.mrb[0].mxu0 %v2721
        %v3088 = vpop.f32.mrb[0].mxu0
        %v3089 = vadd.f32 %v2896, %v3088
        %v3090 = vpop.f32.mrb[0].mxu0
        %v3091 = vadd.f32 %v2898, %v3090
        %v3092 = vpop.f32.mrb[0].mxu0
        %v3093 = vadd.f32 %v2900, %v3092
        %v3094 = vpop.f32.mrb[0].mxu0
        %v3095 = vadd.f32 %v2902, %v3094
        %3096 = vmatprep.mubr.bf16.mxu0 %v2726
        %3097 = vmatmul.mubr.bf16.gmra.mrb[0].mxu0 %v2725
        %v3098 = vpop.f32.mrb[0].mxu0
        %v3099 = vadd.f32 %v2906, %v3098
        %v3100 = vpop.f32.mrb[0].mxu0
        %v3101 = vadd.f32 %v2908, %v3100
        %v3102 = vpop.f32.mrb[0].mxu0
        %v3103 = vadd.f32 %v2910, %v3102
        %v3104 = vpop.f32.mrb[0].mxu0
        %v3105 = vadd.f32 %v2912, %v3104
        %3106 = vmatprep.mubr.bf16.mxu0 %v2730
        %3107 = vmatmul.mubr.bf16.gmra.mrb[0].mxu0 %v2729
        %v3108 = vpop.f32.mrb[0].mxu0
        %v3109 = vadd.f32 %v2916, %v3108
        %v3110 = vpop.f32.mrb[0].mxu0
        %v3111 = vadd.f32 %v2918, %v3110
        %v3112 = vpop.f32.mrb[0].mxu0
        %v3113 = vadd.f32 %v2920, %v3112
        %v3114 = vpop.f32.mrb[0].mxu0
        %v3115 = vadd.f32 %v2922, %v3114
        %3116 = vdwg.mxu0
        %s3117 = scalar_lea.vmem %s431, 512 [#allocation11]
        %v3118 = vld [vmem:[%s3117] sm:$0xff]
        %v3119 = vld [vmem:[%s3117 + $0x8] sm:$0xff]
        %v3120 = vld [vmem:[%s3117 + $0x10] sm:$0xff]
        %v3121 = vld [vmem:[%s3117 + $0x18] sm:$0xff]
        %v3122 = vld [vmem:[%s3117 + $0x20] sm:$0xff]
        %v3123 = vld [vmem:[%s3117 + $0x28] sm:$0xff]
        %v3124 = vld [vmem:[%s3117 + $0x30] sm:$0xff]
        %v3125 = vld [vmem:[%s3117 + $0x38] sm:$0xff]
        %v3126 = vld [vmem:[%s3117 + $0x40] sm:$0xff]
        %v3127 = vld [vmem:[%s3117 + $0x48] sm:$0xff]
        %v3128 = vld [vmem:[%s3117 + $0x50] sm:$0xff]
        %v3129 = vld [vmem:[%s3117 + $0x58] sm:$0xff]
        %v3130 = vld [vmem:[%s3117 + $0x60] sm:$0xff]
        %v3131 = vld [vmem:[%s3117 + $0x68] sm:$0xff]
        %v3132 = vld [vmem:[%s3117 + $0x70] sm:$0xff]
        %v3133 = vld [vmem:[%s3117 + $0x78] sm:$0xff]
        %v3134 = vld [vmem:[%s3117 + $0x80] sm:$0xff]
        %v3135 = vld [vmem:[%s3117 + $0x88] sm:$0xff]
        %v3136 = vld [vmem:[%s3117 + $0x90] sm:$0xff]
        %v3137 = vld [vmem:[%s3117 + $0x98] sm:$0xff]
        %v3138 = vld [vmem:[%s3117 + $0xa0] sm:$0xff]
        %v3139 = vld [vmem:[%s3117 + $0xa8] sm:$0xff]
        %v3140 = vld [vmem:[%s3117 + $0xb0] sm:$0xff]
        %v3141 = vld [vmem:[%s3117 + $0xb8] sm:$0xff]
        %v3142 = vld [vmem:[%s3117 + $0xc0] sm:$0xff]
        %v3143 = vld [vmem:[%s3117 + $0xc8] sm:$0xff]
        %v3144 = vld [vmem:[%s3117 + $0xd0] sm:$0xff]
        %v3145 = vld [vmem:[%s3117 + $0xd8] sm:$0xff]
        %v3146 = vld [vmem:[%s3117 + $0xe0] sm:$0xff]
        %v3147 = vld [vmem:[%s3117 + $0xe8] sm:$0xff]
        %v3148 = vld [vmem:[%s3117 + $0xf0] sm:$0xff]
        %v3149 = vld [vmem:[%s3117 + $0xf8] sm:$0xff]
        %v3150 = vld [vmem:[%s3117 + $0x100] sm:$0xff]
        %v3151 = vld [vmem:[%s3117 + $0x108] sm:$0xff]
        %v3152 = vld [vmem:[%s3117 + $0x110] sm:$0xff]
        %v3153 = vld [vmem:[%s3117 + $0x118] sm:$0xff]
        %v3154 = vld [vmem:[%s3117 + $0x120] sm:$0xff]
        %v3155 = vld [vmem:[%s3117 + $0x128] sm:$0xff]
        %v3156 = vld [vmem:[%s3117 + $0x130] sm:$0xff]
        %v3157 = vld [vmem:[%s3117 + $0x138] sm:$0xff]
        %v3158 = vld [vmem:[%s3117 + $0x140] sm:$0xff]
        %v3159 = vld [vmem:[%s3117 + $0x148] sm:$0xff]
        %v3160 = vld [vmem:[%s3117 + $0x150] sm:$0xff]
        %v3161 = vld [vmem:[%s3117 + $0x158] sm:$0xff]
        %v3162 = vld [vmem:[%s3117 + $0x160] sm:$0xff]
        %v3163 = vld [vmem:[%s3117 + $0x168] sm:$0xff]
        %v3164 = vld [vmem:[%s3117 + $0x170] sm:$0xff]
        %v3165 = vld [vmem:[%s3117 + $0x178] sm:$0xff]
        %v3166 = vld [vmem:[%s3117 + $0x180] sm:$0xff]
        %v3167 = vld [vmem:[%s3117 + $0x188] sm:$0xff]
        %v3168 = vld [vmem:[%s3117 + $0x190] sm:$0xff]
        %v3169 = vld [vmem:[%s3117 + $0x198] sm:$0xff]
        %v3170 = vld [vmem:[%s3117 + $0x1a0] sm:$0xff]
        %v3171 = vld [vmem:[%s3117 + $0x1a8] sm:$0xff]
        %v3172 = vld [vmem:[%s3117 + $0x1b0] sm:$0xff]
        %v3173 = vld [vmem:[%s3117 + $0x1b8] sm:$0xff]
        %v3174 = vld [vmem:[%s3117 + $0x1c0] sm:$0xff]
        %v3175 = vld [vmem:[%s3117 + $0x1c8] sm:$0xff]
        %v3176 = vld [vmem:[%s3117 + $0x1d0] sm:$0xff]
        %v3177 = vld [vmem:[%s3117 + $0x1d8] sm:$0xff]
        %v3178 = vld [vmem:[%s3117 + $0x1e0] sm:$0xff]
        %v3179 = vld [vmem:[%s3117 + $0x1e8] sm:$0xff]
        %v3180 = vld [vmem:[%s3117 + $0x1f0] sm:$0xff]
        %v3181 = vld [vmem:[%s3117 + $0x1f8] sm:$0xff]
        %vm3182 = vcmp.gt.f32.partialorder %v2959, %v3118
        %vm3183 = vcmp.gt.f32.partialorder %v2961, %v3119
        %vm3184 = vcmp.gt.f32.partialorder %v2963, %v3120
        %vm3185 = vcmp.gt.f32.partialorder %v2965, %v3121
        %vm3186 = vcmp.gt.f32.partialorder %v2969, %v3122
        %vm3187 = vcmp.gt.f32.partialorder %v2971, %v3123
        %vm3188 = vcmp.gt.f32.partialorder %v2973, %v3124
        %vm3189 = vcmp.gt.f32.partialorder %v2975, %v3125
        %vm3190 = vcmp.gt.f32.partialorder %v2979, %v3126
        %vm3191 = vcmp.gt.f32.partialorder %v2981, %v3127
        %vm3192 = vcmp.gt.f32.partialorder %v2983, %v3128
        %vm3193 = vcmp.gt.f32.partialorder %v2985, %v3129
        %vm3194 = vcmp.gt.f32.partialorder %v2989, %v3130
        %vm3195 = vcmp.gt.f32.partialorder %v2991, %v3131
        %vm3196 = vcmp.gt.f32.partialorder %v2993, %v3132
        %vm3197 = vcmp.gt.f32.partialorder %v2995, %v3133
        %vm3198 = vcmp.gt.f32.partialorder %v2999, %v3134
        %vm3199 = vcmp.gt.f32.partialorder %v3001, %v3135
        %vm3200 = vcmp.gt.f32.partialorder %v3003, %v3136
        %vm3201 = vcmp.gt.f32.partialorder %v3005, %v3137
        %vm3202 = vcmp.gt.f32.partialorder %v3009, %v3138
        %vm3203 = vcmp.gt.f32.partialorder %v3011, %v3139
        %vm3204 = vcmp.gt.f32.partialorder %v3013, %v3140
        %vm3205 = vcmp.gt.f32.partialorder %v3015, %v3141
        %vm3206 = vcmp.gt.f32.partialorder %v3019, %v3142
        %vm3207 = vcmp.gt.f32.partialorder %v3021, %v3143
        %vm3208 = vcmp.gt.f32.partialorder %v3023, %v3144
        %vm3209 = vcmp.gt.f32.partialorder %v3025, %v3145
        %vm3210 = vcmp.gt.f32.partialorder %v3029, %v3146
        %vm3211 = vcmp.gt.f32.partialorder %v3031, %v3147
        %vm3212 = vcmp.gt.f32.partialorder %v3033, %v3148
        %vm3213 = vcmp.gt.f32.partialorder %v3035, %v3149
        %vm3214 = vcmp.gt.f32.partialorder %v3039, %v3150
        %vm3215 = vcmp.gt.f32.partialorder %v3041, %v3151
        %vm3216 = vcmp.gt.f32.partialorder %v3043, %v3152
        %vm3217 = vcmp.gt.f32.partialorder %v3045, %v3153
        %vm3218 = vcmp.gt.f32.partialorder %v3049, %v3154
        %vm3219 = vcmp.gt.f32.partialorder %v3051, %v3155
        %vm3220 = vcmp.gt.f32.partialorder %v3053, %v3156
        %vm3221 = vcmp.gt.f32.partialorder %v3055, %v3157
        %vm3222 = vcmp.gt.f32.partialorder %v3059, %v3158
        %vm3223 = vcmp.gt.f32.partialorder %v3061, %v3159
        %vm3224 = vcmp.gt.f32.partialorder %v3063, %v3160
        %vm3225 = vcmp.gt.f32.partialorder %v3065, %v3161
        %vm3226 = vcmp.gt.f32.partialorder %v3069, %v3162
        %vm3227 = vcmp.gt.f32.partialorder %v3071, %v3163
        %vm3228 = vcmp.gt.f32.partialorder %v3073, %v3164
        %vm3229 = vcmp.gt.f32.partialorder %v3075, %v3165
        %vm3230 = vcmp.gt.f32.partialorder %v3079, %v3166
        %vm3231 = vcmp.gt.f32.partialorder %v3081, %v3167
        %vm3232 = vcmp.gt.f32.partialorder %v3083, %v3168
        %vm3233 = vcmp.gt.f32.partialorder %v3085, %v3169
        %vm3234 = vcmp.gt.f32.partialorder %v3089, %v3170
        %vm3235 = vcmp.gt.f32.partialorder %v3091, %v3171
        %vm3236 = vcmp.gt.f32.partialorder %v3093, %v3172
        %vm3237 = vcmp.gt.f32.partialorder %v3095, %v3173
        %vm3238 = vcmp.gt.f32.partialorder %v3099, %v3174
        %vm3239 = vcmp.gt.f32.partialorder %v3101, %v3175
        %vm3240 = vcmp.gt.f32.partialorder %v3103, %v3176
        %vm3241 = vcmp.gt.f32.partialorder %v3105, %v3177
        %vm3242 = vcmp.gt.f32.partialorder %v3109, %v3178
        %vm3243 = vcmp.gt.f32.partialorder %v3111, %v3179
        %vm3244 = vcmp.gt.f32.partialorder %v3113, %v3180
        %vm3245 = vcmp.gt.f32.partialorder %v3115, %v3181
        %v3246 = vsel %vm3182, 1, 0
        %v3247 = vsel %vm3183, 1, 0
        %v3248 = vsel %vm3184, 1, 0
        %v3249 = vsel %vm3185, 1, 0
        %v3250 = vsel %vm3186, 1, 0
        %v3251 = vsel %vm3187, 1, 0
        %v3252 = vsel %vm3188, 1, 0
        %v3253 = vsel %vm3189, 1, 0
        %v3254 = vsel %vm3190, 1, 0
        %v3255 = vsel %vm3191, 1, 0
        %v3256 = vsel %vm3192, 1, 0
        %v3257 = vsel %vm3193, 1, 0
        %v3258 = vsel %vm3194, 1, 0
        %v3259 = vsel %vm3195, 1, 0
        %v3260 = vsel %vm3196, 1, 0
        %v3261 = vsel %vm3197, 1, 0
        %v3262 = vsel %vm3198, 1, 0
        %v3263 = vsel %vm3199, 1, 0
        %v3264 = vsel %vm3200, 1, 0
        %v3265 = vsel %vm3201, 1, 0
        %v3266 = vsel %vm3202, 1, 0
        %v3267 = vsel %vm3203, 1, 0
        %v3268 = vsel %vm3204, 1, 0
        %v3269 = vsel %vm3205, 1, 0
        %v3270 = vsel %vm3206, 1, 0
        %v3271 = vsel %vm3207, 1, 0
        %v3272 = vsel %vm3208, 1, 0
        %v3273 = vsel %vm3209, 1, 0
        %v3274 = vsel %vm3210, 1, 0
        %v3275 = vsel %vm3211, 1, 0
        %v3276 = vsel %vm3212, 1, 0
        %v3277 = vsel %vm3213, 1, 0
        %v3278 = vsel %vm3214, 1, 0
        %v3279 = vsel %vm3215, 1, 0
        %v3280 = vsel %vm3216, 1, 0
        %v3281 = vsel %vm3217, 1, 0
        %v3282 = vsel %vm3218, 1, 0
        %v3283 = vsel %vm3219, 1, 0
        %v3284 = vsel %vm3220, 1, 0
        %v3285 = vsel %vm3221, 1, 0
        %v3286 = vsel %vm3222, 1, 0
        %v3287 = vsel %vm3223, 1, 0
        %v3288 = vsel %vm3224, 1, 0
        %v3289 = vsel %vm3225, 1, 0
        %v3290 = vsel %vm3226, 1, 0
        %v3291 = vsel %vm3227, 1, 0
        %v3292 = vsel %vm3228, 1, 0
        %v3293 = vsel %vm3229, 1, 0
        %v3294 = vsel %vm3230, 1, 0
        %v3295 = vsel %vm3231, 1, 0
        %v3296 = vsel %vm3232, 1, 0
        %v3297 = vsel %vm3233, 1, 0
        %v3298 = vsel %vm3234, 1, 0
        %v3299 = vsel %vm3235, 1, 0
        %v3300 = vsel %vm3236, 1, 0
        %v3301 = vsel %vm3237, 1, 0
        %v3302 = vsel %vm3238, 1, 0
        %v3303 = vsel %vm3239, 1, 0
        %v3304 = vsel %vm3240, 1, 0
        %v3305 = vsel %vm3241, 1, 0
        %v3306 = vsel %vm3242, 1, 0
        %v3307 = vsel %vm3243, 1, 0
        %v3308 = vsel %vm3244, 1, 0
        %v3309 = vsel %vm3245, 1, 0
        %v3310 = vcvt.s32.f32 %v3246
        %v3311 = vcvt.s32.f32 %v3247
        %v3312 = vcvt.s32.f32 %v3248
        %v3313 = vcvt.s32.f32 %v3249
        %v3314 = vcvt.s32.f32 %v3250
        %v3315 = vcvt.s32.f32 %v3251
        %v3316 = vcvt.s32.f32 %v3252
        %v3317 = vcvt.s32.f32 %v3253
        %v3318 = vcvt.s32.f32 %v3254
        %v3319 = vcvt.s32.f32 %v3255
        %v3320 = vcvt.s32.f32 %v3256
        %v3321 = vcvt.s32.f32 %v3257
        %v3322 = vcvt.s32.f32 %v3258
        %v3323 = vcvt.s32.f32 %v3259
        %v3324 = vcvt.s32.f32 %v3260
        %v3325 = vcvt.s32.f32 %v3261
        %v3326 = vcvt.s32.f32 %v3262
        %v3327 = vcvt.s32.f32 %v3263
        %v3328 = vcvt.s32.f32 %v3264
        %v3329 = vcvt.s32.f32 %v3265
        %v3330 = vcvt.s32.f32 %v3266
        %v3331 = vcvt.s32.f32 %v3267
        %v3332 = vcvt.s32.f32 %v3268
        %v3333 = vcvt.s32.f32 %v3269
        %v3334 = vcvt.s32.f32 %v3270
        %v3335 = vcvt.s32.f32 %v3271
        %v3336 = vcvt.s32.f32 %v3272
        %v3337 = vcvt.s32.f32 %v3273
        %v3338 = vcvt.s32.f32 %v3274
        %v3339 = vcvt.s32.f32 %v3275
        %v3340 = vcvt.s32.f32 %v3276
        %v3341 = vcvt.s32.f32 %v3277
        %v3342 = vcvt.s32.f32 %v3278
        %v3343 = vcvt.s32.f32 %v3279
        %v3344 = vcvt.s32.f32 %v3280
        %v3345 = vcvt.s32.f32 %v3281
        %v3346 = vcvt.s32.f32 %v3282
        %v3347 = vcvt.s32.f32 %v3283
        %v3348 = vcvt.s32.f32 %v3284
        %v3349 = vcvt.s32.f32 %v3285
        %v3350 = vcvt.s32.f32 %v3286
        %v3351 = vcvt.s32.f32 %v3287
        %v3352 = vcvt.s32.f32 %v3288
        %v3353 = vcvt.s32.f32 %v3289
        %v3354 = vcvt.s32.f32 %v3290
        %v3355 = vcvt.s32.f32 %v3291
        %v3356 = vcvt.s32.f32 %v3292
        %v3357 = vcvt.s32.f32 %v3293
        %v3358 = vcvt.s32.f32 %v3294
        %v3359 = vcvt.s32.f32 %v3295
        %v3360 = vcvt.s32.f32 %v3296
        %v3361 = vcvt.s32.f32 %v3297
        %v3362 = vcvt.s32.f32 %v3298
        %v3363 = vcvt.s32.f32 %v3299
        %v3364 = vcvt.s32.f32 %v3300
        %v3365 = vcvt.s32.f32 %v3301
        %v3366 = vcvt.s32.f32 %v3302
        %v3367 = vcvt.s32.f32 %v3303
        %v3368 = vcvt.s32.f32 %v3304
        %v3369 = vcvt.s32.f32 %v3305
        %v3370 = vcvt.s32.f32 %v3306
        %v3371 = vcvt.s32.f32 %v3307
        %v3372 = vcvt.s32.f32 %v3308
        %v3373 = vcvt.s32.f32 %v3309
        %v3374 = vpack.c.bf16 %v3312, %v3310
        %v3375 = vpack.c.bf16 %v3313, %v3311
        %v3376 = vpack.c.bf16 %v3316, %v3314
        %v3377 = vpack.c.bf16 %v3317, %v3315
        %v3378 = vpack.c.bf16 %v3320, %v3318
        %v3379 = vpack.c.bf16 %v3321, %v3319
        %v3380 = vpack.c.bf16 %v3324, %v3322
        %v3381 = vpack.c.bf16 %v3325, %v3323
        %v3382 = vpack.c.bf16 %v3328, %v3326
        %v3383 = vpack.c.bf16 %v3329, %v3327
        %v3384 = vpack.c.bf16 %v3332, %v3330
        %v3385 = vpack.c.bf16 %v3333, %v3331
        %v3386 = vpack.c.bf16 %v3336, %v3334
        %v3387 = vpack.c.bf16 %v3337, %v3335
        %v3388 = vpack.c.bf16 %v3340, %v3338
        %v3389 = vpack.c.bf16 %v3341, %v3339
        %v3390 = vpack.c.bf16 %v3344, %v3342
        %v3391 = vpack.c.bf16 %v3345, %v3343
        %v3392 = vpack.c.bf16 %v3348, %v3346
        %v3393 = vpack.c.bf16 %v3349, %v3347
        %v3394 = vpack.c.bf16 %v3352, %v3350
        %v3395 = vpack.c.bf16 %v3353, %v3351
        %v3396 = vpack.c.bf16 %v3356, %v3354
        %v3397 = vpack.c.bf16 %v3357, %v3355
        %v3398 = vpack.c.bf16 %v3360, %v3358
        %v3399 = vpack.c.bf16 %v3361, %v3359
        %v3400 = vpack.c.bf16 %v3364, %v3362
        %v3401 = vpack.c.bf16 %v3365, %v3363
        %v3402 = vpack.c.bf16 %v3368, %v3366
        %v3403 = vpack.c.bf16 %v3369, %v3367
        %v3404 = vpack.c.bf16 %v3372, %v3370
        %v3405 = vpack.c.bf16 %v3373, %v3371
        %3406 = vmatprep.subr.bf16.mxu0 %v614
        %3407 = vmatpush1.bf16.msra.mxu0 %v613
        %3408 = vmatprep.subr.bf16.mxu0 %v618
        %3409 = vmatpush1.bf16.msra.mxu0 %v617
        %3410 = vmatprep.subr.bf16.mxu0 %v622
        %3411 = vmatpush1.bf16.msra.mxu0 %v621
        %3412 = vmatprep.subr.bf16.mxu0 %v626
        %3413 = vmatpush1.bf16.msra.mxu0 %v625
        %3414 = vmatprep.subr.bf16.mxu0 %v630
        %3415 = vmatpush1.bf16.msra.mxu0 %v629
        %3416 = vmatprep.subr.bf16.mxu0 %v634
        %3417 = vmatpush1.bf16.msra.mxu0 %v633
        %3418 = vmatprep.subr.bf16.mxu0 %v638
        %3419 = vmatpush1.bf16.msra.mxu0 %v637
        %3420 = vmatprep.subr.bf16.mxu0 %v642
        %3421 = vmatpush1.bf16.msra.mxu0 %v641
        %3422 = vmatprep.subr.bf16.mxu0 %v646
        %3423 = vmatpush1.bf16.msra.mxu0 %v645
        %3424 = vmatprep.subr.bf16.mxu0 %v650
        %3425 = vmatpush1.bf16.msra.mxu0 %v649
        %3426 = vmatprep.subr.bf16.mxu0 %v654
        %3427 = vmatpush1.bf16.msra.mxu0 %v653
        %3428 = vmatprep.subr.bf16.mxu0 %v658
        %3429 = vmatpush1.bf16.msra.mxu0 %v657
        %3430 = vmatprep.subr.bf16.mxu0 %v662
        %3431 = vmatpush1.bf16.msra.mxu0 %v661
        %3432 = vmatprep.subr.bf16.mxu0 %v666
        %3433 = vmatpush1.bf16.msra.mxu0 %v665
        %3434 = vmatprep.subr.bf16.mxu0 %v670
        %3435 = vmatpush1.bf16.msra.mxu0 %v669
        %3436 = vmatprep.subr.bf16.mxu0 %v674
        %3437 = vmatpush1.bf16.msra.mxu0 %v673
        %3438 = vmatprep.mubr.bf16.mxu0 %v3375
        %3439 = vmatmul.mubr.bf16.gmra.mrb[0].mxu0 %v3374
        %v3440 = vpop.f32.mrb[0].mxu0
        %v3441 = vadd.f32 %v886, %v3440
        %v3442 = vpop.f32.mrb[0].mxu0
        %v3443 = vadd.f32 %v890, %v3442
        %v3444 = vpop.f32.mrb[0].mxu0
        %v3445 = vadd.f32 %v886, %v3444
        %v3446 = vpop.f32.mrb[0].mxu0
        %v3447 = vadd.f32 %v890, %v3446
        %3448 = vmatprep.mubr.bf16.mxu0 %v3377
        %3449 = vmatmul.mubr.bf16.gmra.mrb[0].mxu0 %v3376
        %v3450 = vpop.f32.mrb[0].mxu0
        %v3451 = vadd.f32 %v886, %v3450
        %v3452 = vpop.f32.mrb[0].mxu0
        %v3453 = vadd.f32 %v890, %v3452
        %v3454 = vpop.f32.mrb[0].mxu0
        %v3455 = vadd.f32 %v886, %v3454
        %v3456 = vpop.f32.mrb[0].mxu0
        %v3457 = vadd.f32 %v890, %v3456
        %3458 = vmatprep.mubr.bf16.mxu0 %v3379
        %3459 = vmatmul.mubr.bf16.gmra.mrb[0].mxu0 %v3378
        %v3460 = vpop.f32.mrb[0].mxu0
        %v3461 = vadd.f32 %v886, %v3460
        %v3462 = vpop.f32.mrb[0].mxu0
        %v3463 = vadd.f32 %v890, %v3462
        %v3464 = vpop.f32.mrb[0].mxu0
        %v3465 = vadd.f32 %v886, %v3464
        %v3466 = vpop.f32.mrb[0].mxu0
        %v3467 = vadd.f32 %v890, %v3466
        %3468 = vmatprep.mubr.bf16.mxu0 %v3381
        %3469 = vmatmul.mubr.bf16.gmra.mrb[0].mxu0 %v3380
        %v3470 = vpop.f32.mrb[0].mxu0
        %v3471 = vadd.f32 %v886, %v3470
        %v3472 = vpop.f32.mrb[0].mxu0
        %v3473 = vadd.f32 %v890, %v3472
        %v3474 = vpop.f32.mrb[0].mxu0
        %v3475 = vadd.f32 %v886, %v3474
        %v3476 = vpop.f32.mrb[0].mxu0
        %v3477 = vadd.f32 %v890, %v3476
        %3478 = vmatprep.mubr.bf16.mxu0 %v3383
        %3479 = vmatmul.mubr.bf16.gmra.mrb[0].mxu0 %v3382
        %v3480 = vpop.f32.mrb[0].mxu0
        %v3481 = vadd.f32 %v886, %v3480
        %v3482 = vpop.f32.mrb[0].mxu0
        %v3483 = vadd.f32 %v890, %v3482
        %v3484 = vpop.f32.mrb[0].mxu0
        %v3485 = vadd.f32 %v886, %v3484
        %v3486 = vpop.f32.mrb[0].mxu0
        %v3487 = vadd.f32 %v890, %v3486
        %3488 = vmatprep.mubr.bf16.mxu0 %v3385
        %3489 = vmatmul.mubr.bf16.gmra.mrb[0].mxu0 %v3384
        %v3490 = vpop.f32.mrb[0].mxu0
        %v3491 = vadd.f32 %v886, %v3490
        %v3492 = vpop.f32.mrb[0].mxu0
        %v3493 = vadd.f32 %v890, %v3492
        %v3494 = vpop.f32.mrb[0].mxu0
        %v3495 = vadd.f32 %v886, %v3494
        %v3496 = vpop.f32.mrb[0].mxu0
        %v3497 = vadd.f32 %v890, %v3496
        %3498 = vmatprep.mubr.bf16.mxu0 %v3387
        %3499 = vmatmul.mubr.bf16.gmra.mrb[0].mxu0 %v3386
        %v3500 = vpop.f32.mrb[0].mxu0
        %v3501 = vadd.f32 %v886, %v3500
        %v3502 = vpop.f32.mrb[0].mxu0
        %v3503 = vadd.f32 %v890, %v3502
        %v3504 = vpop.f32.mrb[0].mxu0
        %v3505 = vadd.f32 %v886, %v3504
        %v3506 = vpop.f32.mrb[0].mxu0
        %v3507 = vadd.f32 %v890, %v3506
        %3508 = vmatprep.mubr.bf16.mxu0 %v3389
        %3509 = vmatmul.mubr.bf16.gmra.mrb[0].mxu0 %v3388
        %v3510 = vpop.f32.mrb[0].mxu0
        %v3511 = vadd.f32 %v886, %v3510
        %v3512 = vpop.f32.mrb[0].mxu0
        %v3513 = vadd.f32 %v890, %v3512
        %v3514 = vpop.f32.mrb[0].mxu0
        %v3515 = vadd.f32 %v886, %v3514
        %v3516 = vpop.f32.mrb[0].mxu0
        %v3517 = vadd.f32 %v890, %v3516
        %3518 = vmatprep.mubr.bf16.mxu0 %v3391
        %3519 = vmatmul.mubr.bf16.gmra.mrb[0].mxu0 %v3390
        %v3520 = vpop.f32.mrb[0].mxu0
        %v3521 = vadd.f32 %v886, %v3520
        %v3522 = vpop.f32.mrb[0].mxu0
        %v3523 = vadd.f32 %v890, %v3522
        %v3524 = vpop.f32.mrb[0].mxu0
        %v3525 = vadd.f32 %v886, %v3524
        %v3526 = vpop.f32.mrb[0].mxu0
        %v3527 = vadd.f32 %v890, %v3526
        %3528 = vmatprep.mubr.bf16.mxu0 %v3393
        %3529 = vmatmul.mubr.bf16.gmra.mrb[0].mxu0 %v3392
        %v3530 = vpop.f32.mrb[0].mxu0
        %v3531 = vadd.f32 %v886, %v3530
        %v3532 = vpop.f32.mrb[0].mxu0
        %v3533 = vadd.f32 %v890, %v3532
        %v3534 = vpop.f32.mrb[0].mxu0
        %v3535 = vadd.f32 %v886, %v3534
        %v3536 = vpop.f32.mrb[0].mxu0
        %v3537 = vadd.f32 %v890, %v3536
        %3538 = vmatprep.mubr.bf16.mxu0 %v3395
        %3539 = vmatmul.mubr.bf16.gmra.mrb[0].mxu0 %v3394
        %v3540 = vpop.f32.mrb[0].mxu0
        %v3541 = vadd.f32 %v886, %v3540
        %v3542 = vpop.f32.mrb[0].mxu0
        %v3543 = vadd.f32 %v890, %v3542
        %v3544 = vpop.f32.mrb[0].mxu0
        %v3545 = vadd.f32 %v886, %v3544
        %v3546 = vpop.f32.mrb[0].mxu0
        %v3547 = vadd.f32 %v890, %v3546
        %3548 = vmatprep.mubr.bf16.mxu0 %v3397
        %3549 = vmatmul.mubr.bf16.gmra.mrb[0].mxu0 %v3396
        %v3550 = vpop.f32.mrb[0].mxu0
        %v3551 = vadd.f32 %v886, %v3550
        %v3552 = vpop.f32.mrb[0].mxu0
        %v3553 = vadd.f32 %v890, %v3552
        %v3554 = vpop.f32.mrb[0].mxu0
        %v3555 = vadd.f32 %v886, %v3554
        %v3556 = vpop.f32.mrb[0].mxu0
        %v3557 = vadd.f32 %v890, %v3556
        %3558 = vmatprep.mubr.bf16.mxu0 %v3399
        %3559 = vmatmul.mubr.bf16.gmra.mrb[0].mxu0 %v3398
        %v3560 = vpop.f32.mrb[0].mxu0
        %v3561 = vadd.f32 %v886, %v3560
        %v3562 = vpop.f32.mrb[0].mxu0
        %v3563 = vadd.f32 %v890, %v3562
        %v3564 = vpop.f32.mrb[0].mxu0
        %v3565 = vadd.f32 %v886, %v3564
        %v3566 = vpop.f32.mrb[0].mxu0
        %v3567 = vadd.f32 %v890, %v3566
        %3568 = vmatprep.mubr.bf16.mxu0 %v3401
        %3569 = vmatmul.mubr.bf16.gmra.mrb[0].mxu0 %v3400
        %v3570 = vpop.f32.mrb[0].mxu0
        %v3571 = vadd.f32 %v886, %v3570
        %v3572 = vpop.f32.mrb[0].mxu0
        %v3573 = vadd.f32 %v890, %v3572
        %v3574 = vpop.f32.mrb[0].mxu0
        %v3575 = vadd.f32 %v886, %v3574
        %v3576 = vpop.f32.mrb[0].mxu0
        %v3577 = vadd.f32 %v890, %v3576
        %3578 = vmatprep.mubr.bf16.mxu0 %v3403
        %3579 = vmatmul.mubr.bf16.gmra.mrb[0].mxu0 %v3402
        %v3580 = vpop.f32.mrb[0].mxu0
        %v3581 = vadd.f32 %v886, %v3580
        %v3582 = vpop.f32.mrb[0].mxu0
        %v3583 = vadd.f32 %v890, %v3582
        %v3584 = vpop.f32.mrb[0].mxu0
        %v3585 = vadd.f32 %v886, %v3584
        %v3586 = vpop.f32.mrb[0].mxu0
        %v3587 = vadd.f32 %v890, %v3586
        %3588 = vmatprep.mubr.bf16.mxu0 %v3405
        %3589 = vmatmul.mubr.bf16.gmra.mrb[0].mxu0 %v3404
        %v3590 = vpop.f32.mrb[0].mxu0
        %v3591 = vadd.f32 %v886, %v3590
        %v3592 = vpop.f32.mrb[0].mxu0
        %v3593 = vadd.f32 %v890, %v3592
        %v3594 = vpop.f32.mrb[0].mxu0
        %v3595 = vadd.f32 %v886, %v3594
        %v3596 = vpop.f32.mrb[0].mxu0
        %v3597 = vadd.f32 %v890, %v3596
        %3598 = vdwg.mxu0
        %3599 = vmatprep.subr.bf16.mxu0 %v616
        %3600 = vmatpush1.bf16.msra.mxu0 %v615
        %3601 = vmatprep.subr.bf16.mxu0 %v620
        %3602 = vmatpush1.bf16.msra.mxu0 %v619
        %3603 = vmatprep.subr.bf16.mxu0 %v624
        %3604 = vmatpush1.bf16.msra.mxu0 %v623
        %3605 = vmatprep.subr.bf16.mxu0 %v628
        %3606 = vmatpush1.bf16.msra.mxu0 %v627
        %3607 = vmatprep.subr.bf16.mxu0 %v632
        %3608 = vmatpush1.bf16.msra.mxu0 %v631
        %3609 = vmatprep.subr.bf16.mxu0 %v636
        %3610 = vmatpush1.bf16.msra.mxu0 %v635
        %3611 = vmatprep.subr.bf16.mxu0 %v640
        %3612 = vmatpush1.bf16.msra.mxu0 %v639
        %3613 = vmatprep.subr.bf16.mxu0 %v644
        %3614 = vmatpush1.bf16.msra.mxu0 %v643
        %3615 = vmatprep.subr.bf16.mxu0 %v648
        %3616 = vmatpush1.bf16.msra.mxu0 %v647
        %3617 = vmatprep.subr.bf16.mxu0 %v652
        %3618 = vmatpush1.bf16.msra.mxu0 %v651
        %3619 = vmatprep.subr.bf16.mxu0 %v656
        %3620 = vmatpush1.bf16.msra.mxu0 %v655
        %3621 = vmatprep.subr.bf16.mxu0 %v660
        %3622 = vmatpush1.bf16.msra.mxu0 %v659
        %3623 = vmatprep.subr.bf16.mxu0 %v664
        %3624 = vmatpush1.bf16.msra.mxu0 %v663
        %3625 = vmatprep.subr.bf16.mxu0 %v668
        %3626 = vmatpush1.bf16.msra.mxu0 %v667
        %3627 = vmatprep.subr.bf16.mxu0 %v672
        %3628 = vmatpush1.bf16.msra.mxu0 %v671
        %3629 = vmatprep.subr.bf16.mxu0 %v676
        %3630 = vmatpush1.bf16.msra.mxu0 %v675
        %3631 = vmatprep.mubr.bf16.mxu0 %v3375
        %3632 = vmatmul.mubr.bf16.gmra.mrb[0].mxu0 %v3374
        %v3633 = vpop.f32.mrb[0].mxu0
        %v3634 = vadd.f32 %v894, %v3633
        %v3635 = vpop.f32.mrb[0].mxu0
        %v3636 = vadd.f32 %v898, %v3635
        %v3637 = vpop.f32.mrb[0].mxu0
        %v3638 = vadd.f32 %v894, %v3637
        %v3639 = vpop.f32.mrb[0].mxu0
        %v3640 = vadd.f32 %v898, %v3639
        %3641 = vmatprep.mubr.bf16.mxu0 %v3377
        %3642 = vmatmul.mubr.bf16.gmra.mrb[0].mxu0 %v3376
        %v3643 = vpop.f32.mrb[0].mxu0
        %v3644 = vadd.f32 %v894, %v3643
        %v3645 = vpop.f32.mrb[0].mxu0
        %v3646 = vadd.f32 %v898, %v3645
        %v3647 = vpop.f32.mrb[0].mxu0
        %v3648 = vadd.f32 %v894, %v3647
        %v3649 = vpop.f32.mrb[0].mxu0
        %v3650 = vadd.f32 %v898, %v3649
        %3651 = vmatprep.mubr.bf16.mxu0 %v3379
        %3652 = vmatmul.mubr.bf16.gmra.mrb[0].mxu0 %v3378
        %v3653 = vpop.f32.mrb[0].mxu0
        %v3654 = vadd.f32 %v894, %v3653
        %v3655 = vpop.f32.mrb[0].mxu0
        %v3656 = vadd.f32 %v898, %v3655
        %v3657 = vpop.f32.mrb[0].mxu0
        %v3658 = vadd.f32 %v894, %v3657
        %v3659 = vpop.f32.mrb[0].mxu0
        %v3660 = vadd.f32 %v898, %v3659
        %3661 = vmatprep.mubr.bf16.mxu0 %v3381
        %3662 = vmatmul.mubr.bf16.gmra.mrb[0].mxu0 %v3380
        %v3663 = vpop.f32.mrb[0].mxu0
        %v3664 = vadd.f32 %v894, %v3663
        %v3665 = vpop.f32.mrb[0].mxu0
        %v3666 = vadd.f32 %v898, %v3665
        %v3667 = vpop.f32.mrb[0].mxu0
        %v3668 = vadd.f32 %v894, %v3667
        %v3669 = vpop.f32.mrb[0].mxu0
        %v3670 = vadd.f32 %v898, %v3669
        %3671 = vmatprep.mubr.bf16.mxu0 %v3383
        %3672 = vmatmul.mubr.bf16.gmra.mrb[0].mxu0 %v3382
        %v3673 = vpop.f32.mrb[0].mxu0
        %v3674 = vadd.f32 %v894, %v3673
        %v3675 = vpop.f32.mrb[0].mxu0
        %v3676 = vadd.f32 %v898, %v3675
        %v3677 = vpop.f32.mrb[0].mxu0
        %v3678 = vadd.f32 %v894, %v3677
        %v3679 = vpop.f32.mrb[0].mxu0
        %v3680 = vadd.f32 %v898, %v3679
        %3681 = vmatprep.mubr.bf16.mxu0 %v3385
        %3682 = vmatmul.mubr.bf16.gmra.mrb[0].mxu0 %v3384
        %v3683 = vpop.f32.mrb[0].mxu0
        %v3684 = vadd.f32 %v894, %v3683
        %v3685 = vpop.f32.mrb[0].mxu0
        %v3686 = vadd.f32 %v898, %v3685
        %v3687 = vpop.f32.mrb[0].mxu0
        %v3688 = vadd.f32 %v894, %v3687
        %v3689 = vpop.f32.mrb[0].mxu0
        %v3690 = vadd.f32 %v898, %v3689
        %3691 = vmatprep.mubr.bf16.mxu0 %v3387
        %3692 = vmatmul.mubr.bf16.gmra.mrb[0].mxu0 %v3386
        %v3693 = vpop.f32.mrb[0].mxu0
        %v3694 = vadd.f32 %v894, %v3693
        %v3695 = vpop.f32.mrb[0].mxu0
        %v3696 = vadd.f32 %v898, %v3695
        %v3697 = vpop.f32.mrb[0].mxu0
        %v3698 = vadd.f32 %v894, %v3697
        %v3699 = vpop.f32.mrb[0].mxu0
        %v3700 = vadd.f32 %v898, %v3699
        %3701 = vmatprep.mubr.bf16.mxu0 %v3389
        %3702 = vmatmul.mubr.bf16.gmra.mrb[0].mxu0 %v3388
        %v3703 = vpop.f32.mrb[0].mxu0
        %v3704 = vadd.f32 %v894, %v3703
        %v3705 = vpop.f32.mrb[0].mxu0
        %v3706 = vadd.f32 %v898, %v3705
        %v3707 = vpop.f32.mrb[0].mxu0
        %v3708 = vadd.f32 %v894, %v3707
        %v3709 = vpop.f32.mrb[0].mxu0
        %v3710 = vadd.f32 %v898, %v3709
        %3711 = vmatprep.mubr.bf16.mxu0 %v3391
        %3712 = vmatmul.mubr.bf16.gmra.mrb[0].mxu0 %v3390
        %v3713 = vpop.f32.mrb[0].mxu0
        %v3714 = vadd.f32 %v894, %v3713
        %v3715 = vpop.f32.mrb[0].mxu0
        %v3716 = vadd.f32 %v898, %v3715
        %v3717 = vpop.f32.mrb[0].mxu0
        %v3718 = vadd.f32 %v894, %v3717
        %v3719 = vpop.f32.mrb[0].mxu0
        %v3720 = vadd.f32 %v898, %v3719
        %3721 = vmatprep.mubr.bf16.mxu0 %v3393
        %3722 = vmatmul.mubr.bf16.gmra.mrb[0].mxu0 %v3392
        %v3723 = vpop.f32.mrb[0].mxu0
        %v3724 = vadd.f32 %v894, %v3723
        %v3725 = vpop.f32.mrb[0].mxu0
        %v3726 = vadd.f32 %v898, %v3725
        %v3727 = vpop.f32.mrb[0].mxu0
        %v3728 = vadd.f32 %v894, %v3727
        %v3729 = vpop.f32.mrb[0].mxu0
        %v3730 = vadd.f32 %v898, %v3729
        %3731 = vmatprep.mubr.bf16.mxu0 %v3395
        %3732 = vmatmul.mubr.bf16.gmra.mrb[0].mxu0 %v3394
        %v3733 = vpop.f32.mrb[0].mxu0
        %v3734 = vadd.f32 %v894, %v3733
        %v3735 = vpop.f32.mrb[0].mxu0
        %v3736 = vadd.f32 %v898, %v3735
        %v3737 = vpop.f32.mrb[0].mxu0
        %v3738 = vadd.f32 %v894, %v3737
        %v3739 = vpop.f32.mrb[0].mxu0
        %v3740 = vadd.f32 %v898, %v3739
        %3741 = vmatprep.mubr.bf16.mxu0 %v3397
        %3742 = vmatmul.mubr.bf16.gmra.mrb[0].mxu0 %v3396
        %v3743 = vpop.f32.mrb[0].mxu0
        %v3744 = vadd.f32 %v894, %v3743
        %v3745 = vpop.f32.mrb[0].mxu0
        %v3746 = vadd.f32 %v898, %v3745
        %v3747 = vpop.f32.mrb[0].mxu0
        %v3748 = vadd.f32 %v894, %v3747
        %v3749 = vpop.f32.mrb[0].mxu0
        %v3750 = vadd.f32 %v898, %v3749
        %3751 = vmatprep.mubr.bf16.mxu0 %v3399
        %3752 = vmatmul.mubr.bf16.gmra.mrb[0].mxu0 %v3398
        %v3753 = vpop.f32.mrb[0].mxu0
        %v3754 = vadd.f32 %v894, %v3753
        %v3755 = vpop.f32.mrb[0].mxu0
        %v3756 = vadd.f32 %v898, %v3755
        %v3757 = vpop.f32.mrb[0].mxu0
        %v3758 = vadd.f32 %v894, %v3757
        %v3759 = vpop.f32.mrb[0].mxu0
        %v3760 = vadd.f32 %v898, %v3759
        %3761 = vmatprep.mubr.bf16.mxu0 %v3401
        %3762 = vmatmul.mubr.bf16.gmra.mrb[0].mxu0 %v3400
        %v3763 = vpop.f32.mrb[0].mxu0
        %v3764 = vadd.f32 %v894, %v3763
        %v3765 = vpop.f32.mrb[0].mxu0
        %v3766 = vadd.f32 %v898, %v3765
        %v3767 = vpop.f32.mrb[0].mxu0
        %v3768 = vadd.f32 %v894, %v3767
        %v3769 = vpop.f32.mrb[0].mxu0
        %v3770 = vadd.f32 %v898, %v3769
        %3771 = vmatprep.mubr.bf16.mxu0 %v3403
        %3772 = vmatmul.mubr.bf16.gmra.mrb[0].mxu0 %v3402
        %v3773 = vpop.f32.mrb[0].mxu0
        %v3774 = vadd.f32 %v894, %v3773
        %v3775 = vpop.f32.mrb[0].mxu0
        %v3776 = vadd.f32 %v898, %v3775
        %v3777 = vpop.f32.mrb[0].mxu0
        %v3778 = vadd.f32 %v894, %v3777
        %v3779 = vpop.f32.mrb[0].mxu0
        %v3780 = vadd.f32 %v898, %v3779
        %3781 = vmatprep.mubr.bf16.mxu0 %v3405
        %3782 = vmatmul.mubr.bf16.gmra.mrb[0].mxu0 %v3404
        %v3783 = vpop.f32.mrb[0].mxu0
        %v3784 = vadd.f32 %v894, %v3783
        %v3785 = vpop.f32.mrb[0].mxu0
        %v3786 = vadd.f32 %v898, %v3785
        %v3787 = vpop.f32.mrb[0].mxu0
        %v3788 = vadd.f32 %v894, %v3787
        %v3789 = vpop.f32.mrb[0].mxu0
        %v3790 = vadd.f32 %v898, %v3789
        %3791 = vdwg.mxu0
        %s3792 = scalar_lea.vmem %s440, 1024 [#allocation13]
        %v3793 = vld [vmem:[%s3792] sm:$0xff]
        %v3794 = vld [vmem:[%s3792 + $0x8] sm:$0xff]
        %v3795 = vld [vmem:[%s3792 + $0x10] sm:$0xff]
        %v3796 = vld [vmem:[%s3792 + $0x18] sm:$0xff]
        %v3797 = vld [vmem:[%s3792 + $0x20] sm:$0xff]
        %v3798 = vld [vmem:[%s3792 + $0x28] sm:$0xff]
        %v3799 = vld [vmem:[%s3792 + $0x30] sm:$0xff]
        %v3800 = vld [vmem:[%s3792 + $0x38] sm:$0xff]
        %v3801 = vld [vmem:[%s3792 + $0x40] sm:$0xff]
        %v3802 = vld [vmem:[%s3792 + $0x48] sm:$0xff]
        %v3803 = vld [vmem:[%s3792 + $0x50] sm:$0xff]
        %v3804 = vld [vmem:[%s3792 + $0x58] sm:$0xff]
        %v3805 = vld [vmem:[%s3792 + $0x60] sm:$0xff]
        %v3806 = vld [vmem:[%s3792 + $0x68] sm:$0xff]
        %v3807 = vld [vmem:[%s3792 + $0x70] sm:$0xff]
        %v3808 = vld [vmem:[%s3792 + $0x78] sm:$0xff]
        %v3809 = vld [vmem:[%s3792 + $0x80] sm:$0xff]
        %v3810 = vld [vmem:[%s3792 + $0x88] sm:$0xff]
        %v3811 = vld [vmem:[%s3792 + $0x90] sm:$0xff]
        %v3812 = vld [vmem:[%s3792 + $0x98] sm:$0xff]
        %v3813 = vld [vmem:[%s3792 + $0xa0] sm:$0xff]
        %v3814 = vld [vmem:[%s3792 + $0xa8] sm:$0xff]
        %v3815 = vld [vmem:[%s3792 + $0xb0] sm:$0xff]
        %v3816 = vld [vmem:[%s3792 + $0xb8] sm:$0xff]
        %v3817 = vld [vmem:[%s3792 + $0xc0] sm:$0xff]
        %v3818 = vld [vmem:[%s3792 + $0xc8] sm:$0xff]
        %v3819 = vld [vmem:[%s3792 + $0xd0] sm:$0xff]
        %v3820 = vld [vmem:[%s3792 + $0xd8] sm:$0xff]
        %v3821 = vld [vmem:[%s3792 + $0xe0] sm:$0xff]
        %v3822 = vld [vmem:[%s3792 + $0xe8] sm:$0xff]
        %v3823 = vld [vmem:[%s3792 + $0xf0] sm:$0xff]
        %v3824 = vld [vmem:[%s3792 + $0xf8] sm:$0xff]
        %v3825 = vld [vmem:[%s3792 + $0x100] sm:$0xff]
        %v3826 = vld [vmem:[%s3792 + $0x108] sm:$0xff]
        %v3827 = vld [vmem:[%s3792 + $0x110] sm:$0xff]
        %v3828 = vld [vmem:[%s3792 + $0x118] sm:$0xff]
        %v3829 = vld [vmem:[%s3792 + $0x120] sm:$0xff]
        %v3830 = vld [vmem:[%s3792 + $0x128] sm:$0xff]
        %v3831 = vld [vmem:[%s3792 + $0x130] sm:$0xff]
        %v3832 = vld [vmem:[%s3792 + $0x138] sm:$0xff]
        %v3833 = vld [vmem:[%s3792 + $0x140] sm:$0xff]
        %v3834 = vld [vmem:[%s3792 + $0x148] sm:$0xff]
        %v3835 = vld [vmem:[%s3792 + $0x150] sm:$0xff]
        %v3836 = vld [vmem:[%s3792 + $0x158] sm:$0xff]
        %v3837 = vld [vmem:[%s3792 + $0x160] sm:$0xff]
        %v3838 = vld [vmem:[%s3792 + $0x168] sm:$0xff]
        %v3839 = vld [vmem:[%s3792 + $0x170] sm:$0xff]
        %v3840 = vld [vmem:[%s3792 + $0x178] sm:$0xff]
        %v3841 = vld [vmem:[%s3792 + $0x180] sm:$0xff]
        %v3842 = vld [vmem:[%s3792 + $0x188] sm:$0xff]
        %v3843 = vld [vmem:[%s3792 + $0x190] sm:$0xff]
        %v3844 = vld [vmem:[%s3792 + $0x198] sm:$0xff]
        %v3845 = vld [vmem:[%s3792 + $0x1a0] sm:$0xff]
        %v3846 = vld [vmem:[%s3792 + $0x1a8] sm:$0xff]
        %v3847 = vld [vmem:[%s3792 + $0x1b0] sm:$0xff]
        %v3848 = vld [vmem:[%s3792 + $0x1b8] sm:$0xff]
        %v3849 = vld [vmem:[%s3792 + $0x1c0] sm:$0xff]
        %v3850 = vld [vmem:[%s3792 + $0x1c8] sm:$0xff]
        %v3851 = vld [vmem:[%s3792 + $0x1d0] sm:$0xff]
        %v3852 = vld [vmem:[%s3792 + $0x1d8] sm:$0xff]
        %v3853 = vld [vmem:[%s3792 + $0x1e0] sm:$0xff]
        %v3854 = vld [vmem:[%s3792 + $0x1e8] sm:$0xff]
        %v3855 = vld [vmem:[%s3792 + $0x1f0] sm:$0xff]
        %v3856 = vld [vmem:[%s3792 + $0x1f8] sm:$0xff]
        %v3857 = vld [vmem:[%s3792 + $0x200] sm:$0xff]
        %v3858 = vld [vmem:[%s3792 + $0x208] sm:$0xff]
        %v3859 = vld [vmem:[%s3792 + $0x210] sm:$0xff]
        %v3860 = vld [vmem:[%s3792 + $0x218] sm:$0xff]
        %v3861 = vld [vmem:[%s3792 + $0x220] sm:$0xff]
        %v3862 = vld [vmem:[%s3792 + $0x228] sm:$0xff]
        %v3863 = vld [vmem:[%s3792 + $0x230] sm:$0xff]
        %v3864 = vld [vmem:[%s3792 + $0x238] sm:$0xff]
        %v3865 = vld [vmem:[%s3792 + $0x240] sm:$0xff]
        %v3866 = vld [vmem:[%s3792 + $0x248] sm:$0xff]
        %v3867 = vld [vmem:[%s3792 + $0x250] sm:$0xff]
        %v3868 = vld [vmem:[%s3792 + $0x258] sm:$0xff]
        %v3869 = vld [vmem:[%s3792 + $0x260] sm:$0xff]
        %v3870 = vld [vmem:[%s3792 + $0x268] sm:$0xff]
        %v3871 = vld [vmem:[%s3792 + $0x270] sm:$0xff]
        %v3872 = vld [vmem:[%s3792 + $0x278] sm:$0xff]
        %v3873 = vld [vmem:[%s3792 + $0x280] sm:$0xff]
        %v3874 = vld [vmem:[%s3792 + $0x288] sm:$0xff]
        %v3875 = vld [vmem:[%s3792 + $0x290] sm:$0xff]
        %v3876 = vld [vmem:[%s3792 + $0x298] sm:$0xff]
        %v3877 = vld [vmem:[%s3792 + $0x2a0] sm:$0xff]
        %v3878 = vld [vmem:[%s3792 + $0x2a8] sm:$0xff]
        %v3879 = vld [vmem:[%s3792 + $0x2b0] sm:$0xff]
        %v3880 = vld [vmem:[%s3792 + $0x2b8] sm:$0xff]
        %v3881 = vld [vmem:[%s3792 + $0x2c0] sm:$0xff]
        %v3882 = vld [vmem:[%s3792 + $0x2c8] sm:$0xff]
        %v3883 = vld [vmem:[%s3792 + $0x2d0] sm:$0xff]
        %v3884 = vld [vmem:[%s3792 + $0x2d8] sm:$0xff]
        %v3885 = vld [vmem:[%s3792 + $0x2e0] sm:$0xff]
        %v3886 = vld [vmem:[%s3792 + $0x2e8] sm:$0xff]
        %v3887 = vld [vmem:[%s3792 + $0x2f0] sm:$0xff]
        %v3888 = vld [vmem:[%s3792 + $0x2f8] sm:$0xff]
        %v3889 = vld [vmem:[%s3792 + $0x300] sm:$0xff]
        %v3890 = vld [vmem:[%s3792 + $0x308] sm:$0xff]
        %v3891 = vld [vmem:[%s3792 + $0x310] sm:$0xff]
        %v3892 = vld [vmem:[%s3792 + $0x318] sm:$0xff]
        %v3893 = vld [vmem:[%s3792 + $0x320] sm:$0xff]
        %v3894 = vld [vmem:[%s3792 + $0x328] sm:$0xff]
        %v3895 = vld [vmem:[%s3792 + $0x330] sm:$0xff]
        %v3896 = vld [vmem:[%s3792 + $0x338] sm:$0xff]
        %v3897 = vld [vmem:[%s3792 + $0x340] sm:$0xff]
        %v3898 = vld [vmem:[%s3792 + $0x348] sm:$0xff]
        %v3899 = vld [vmem:[%s3792 + $0x350] sm:$0xff]
        %v3900 = vld [vmem:[%s3792 + $0x358] sm:$0xff]
        %v3901 = vld [vmem:[%s3792 + $0x360] sm:$0xff]
        %v3902 = vld [vmem:[%s3792 + $0x368] sm:$0xff]
        %v3903 = vld [vmem:[%s3792 + $0x370] sm:$0xff]
        %v3904 = vld [vmem:[%s3792 + $0x378] sm:$0xff]
        %v3905 = vld [vmem:[%s3792 + $0x380] sm:$0xff]
        %v3906 = vld [vmem:[%s3792 + $0x388] sm:$0xff]
        %v3907 = vld [vmem:[%s3792 + $0x390] sm:$0xff]
        %v3908 = vld [vmem:[%s3792 + $0x398] sm:$0xff]
        %v3909 = vld [vmem:[%s3792 + $0x3a0] sm:$0xff]
        %v3910 = vld [vmem:[%s3792 + $0x3a8] sm:$0xff]
        %v3911 = vld [vmem:[%s3792 + $0x3b0] sm:$0xff]
        %v3912 = vld [vmem:[%s3792 + $0x3b8] sm:$0xff]
        %v3913 = vld [vmem:[%s3792 + $0x3c0] sm:$0xff]
        %v3914 = vld [vmem:[%s3792 + $0x3c8] sm:$0xff]
        %v3915 = vld [vmem:[%s3792 + $0x3d0] sm:$0xff]
        %v3916 = vld [vmem:[%s3792 + $0x3d8] sm:$0xff]
        %v3917 = vld [vmem:[%s3792 + $0x3e0] sm:$0xff]
        %v3918 = vld [vmem:[%s3792 + $0x3e8] sm:$0xff]
        %v3919 = vld [vmem:[%s3792 + $0x3f0] sm:$0xff]
        %v3920 = vld [vmem:[%s3792 + $0x3f8] sm:$0xff]
        %vm3921 = vcmp.gt.f32.partialorder %v3441, %v3793
        %vm3922 = vcmp.gt.f32.partialorder %v3443, %v3794
        %vm3923 = vcmp.gt.f32.partialorder %v3634, %v3795
        %vm3924 = vcmp.gt.f32.partialorder %v3636, %v3796
        %vm3925 = vcmp.gt.f32.partialorder %v3445, %v3797
        %vm3926 = vcmp.gt.f32.partialorder %v3447, %v3798
        %vm3927 = vcmp.gt.f32.partialorder %v3638, %v3799
        %vm3928 = vcmp.gt.f32.partialorder %v3640, %v3800
        %vm3929 = vcmp.gt.f32.partialorder %v3451, %v3801
        %vm3930 = vcmp.gt.f32.partialorder %v3453, %v3802
        %vm3931 = vcmp.gt.f32.partialorder %v3644, %v3803
        %vm3932 = vcmp.gt.f32.partialorder %v3646, %v3804
        %vm3933 = vcmp.gt.f32.partialorder %v3455, %v3805
        %vm3934 = vcmp.gt.f32.partialorder %v3457, %v3806
        %vm3935 = vcmp.gt.f32.partialorder %v3648, %v3807
        %vm3936 = vcmp.gt.f32.partialorder %v3650, %v3808
        %vm3937 = vcmp.gt.f32.partialorder %v3461, %v3809
        %vm3938 = vcmp.gt.f32.partialorder %v3463, %v3810
        %vm3939 = vcmp.gt.f32.partialorder %v3654, %v3811
        %vm3940 = vcmp.gt.f32.partialorder %v3656, %v3812
        %vm3941 = vcmp.gt.f32.partialorder %v3465, %v3813
        %vm3942 = vcmp.gt.f32.partialorder %v3467, %v3814
        %vm3943 = vcmp.gt.f32.partialorder %v3658, %v3815
        %vm3944 = vcmp.gt.f32.partialorder %v3660, %v3816
        %vm3945 = vcmp.gt.f32.partialorder %v3471, %v3817
        %vm3946 = vcmp.gt.f32.partialorder %v3473, %v3818
        %vm3947 = vcmp.gt.f32.partialorder %v3664, %v3819
        %vm3948 = vcmp.gt.f32.partialorder %v3666, %v3820
        %vm3949 = vcmp.gt.f32.partialorder %v3475, %v3821
        %vm3950 = vcmp.gt.f32.partialorder %v3477, %v3822
        %vm3951 = vcmp.gt.f32.partialorder %v3668, %v3823
        %vm3952 = vcmp.gt.f32.partialorder %v3670, %v3824
        %vm3953 = vcmp.gt.f32.partialorder %v3481, %v3825
        %vm3954 = vcmp.gt.f32.partialorder %v3483, %v3826
        %vm3955 = vcmp.gt.f32.partialorder %v3674, %v3827
        %vm3956 = vcmp.gt.f32.partialorder %v3676, %v3828
        %vm3957 = vcmp.gt.f32.partialorder %v3485, %v3829
        %vm3958 = vcmp.gt.f32.partialorder %v3487, %v3830
        %vm3959 = vcmp.gt.f32.partialorder %v3678, %v3831
        %vm3960 = vcmp.gt.f32.partialorder %v3680, %v3832
        %vm3961 = vcmp.gt.f32.partialorder %v3491, %v3833
        %vm3962 = vcmp.gt.f32.partialorder %v3493, %v3834
        %vm3963 = vcmp.gt.f32.partialorder %v3684, %v3835
        %vm3964 = vcmp.gt.f32.partialorder %v3686, %v3836
        %vm3965 = vcmp.gt.f32.partialorder %v3495, %v3837
        %vm3966 = vcmp.gt.f32.partialorder %v3497, %v3838
        %vm3967 = vcmp.gt.f32.partialorder %v3688, %v3839
        %vm3968 = vcmp.gt.f32.partialorder %v3690, %v3840
        %vm3969 = vcmp.gt.f32.partialorder %v3501, %v3841
        %vm3970 = vcmp.gt.f32.partialorder %v3503, %v3842
        %vm3971 = vcmp.gt.f32.partialorder %v3694, %v3843
        %vm3972 = vcmp.gt.f32.partialorder %v3696, %v3844
        %vm3973 = vcmp.gt.f32.partialorder %v3505, %v3845
        %vm3974 = vcmp.gt.f32.partialorder %v3507, %v3846
        %vm3975 = vcmp.gt.f32.partialorder %v3698, %v3847
        %vm3976 = vcmp.gt.f32.partialorder %v3700, %v3848
        %vm3977 = vcmp.gt.f32.partialorder %v3511, %v3849
        %vm3978 = vcmp.gt.f32.partialorder %v3513, %v3850
        %vm3979 = vcmp.gt.f32.partialorder %v3704, %v3851
        %vm3980 = vcmp.gt.f32.partialorder %v3706, %v3852
        %vm3981 = vcmp.gt.f32.partialorder %v3515, %v3853
        %vm3982 = vcmp.gt.f32.partialorder %v3517, %v3854
        %vm3983 = vcmp.gt.f32.partialorder %v3708, %v3855
        %vm3984 = vcmp.gt.f32.partialorder %v3710, %v3856
        %vm3985 = vcmp.gt.f32.partialorder %v3521, %v3857
        %vm3986 = vcmp.gt.f32.partialorder %v3523, %v3858
        %vm3987 = vcmp.gt.f32.partialorder %v3714, %v3859
        %vm3988 = vcmp.gt.f32.partialorder %v3716, %v3860
        %vm3989 = vcmp.gt.f32.partialorder %v3525, %v3861
        %vm3990 = vcmp.gt.f32.partialorder %v3527, %v3862
        %vm3991 = vcmp.gt.f32.partialorder %v3718, %v3863
        %vm3992 = vcmp.gt.f32.partialorder %v3720, %v3864
        %vm3993 = vcmp.gt.f32.partialorder %v3531, %v3865
        %vm3994 = vcmp.gt.f32.partialorder %v3533, %v3866
        %vm3995 = vcmp.gt.f32.partialorder %v3724, %v3867
        %vm3996 = vcmp.gt.f32.partialorder %v3726, %v3868
        %vm3997 = vcmp.gt.f32.partialorder %v3535, %v3869
        %vm3998 = vcmp.gt.f32.partialorder %v3537, %v3870
        %vm3999 = vcmp.gt.f32.partialorder %v3728, %v3871
        %vm4000 = vcmp.gt.f32.partialorder %v3730, %v3872
        %vm4001 = vcmp.gt.f32.partialorder %v3541, %v3873
        %vm4002 = vcmp.gt.f32.partialorder %v3543, %v3874
        %vm4003 = vcmp.gt.f32.partialorder %v3734, %v3875
        %vm4004 = vcmp.gt.f32.partialorder %v3736, %v3876
        %vm4005 = vcmp.gt.f32.partialorder %v3545, %v3877
        %vm4006 = vcmp.gt.f32.partialorder %v3547, %v3878
        %vm4007 = vcmp.gt.f32.partialorder %v3738, %v3879
        %vm4008 = vcmp.gt.f32.partialorder %v3740, %v3880
        %vm4009 = vcmp.gt.f32.partialorder %v3551, %v3881
        %vm4010 = vcmp.gt.f32.partialorder %v3553, %v3882
        %vm4011 = vcmp.gt.f32.partialorder %v3744, %v3883
        %vm4012 = vcmp.gt.f32.partialorder %v3746, %v3884
        %vm4013 = vcmp.gt.f32.partialorder %v3555, %v3885
        %vm4014 = vcmp.gt.f32.partialorder %v3557, %v3886
        %vm4015 = vcmp.gt.f32.partialorder %v3748, %v3887
        %vm4016 = vcmp.gt.f32.partialorder %v3750, %v3888
        %vm4017 = vcmp.gt.f32.partialorder %v3561, %v3889
        %vm4018 = vcmp.gt.f32.partialorder %v3563, %v3890
        %vm4019 = vcmp.gt.f32.partialorder %v3754, %v3891
        %vm4020 = vcmp.gt.f32.partialorder %v3756, %v3892
        %vm4021 = vcmp.gt.f32.partialorder %v3565, %v3893
        %vm4022 = vcmp.gt.f32.partialorder %v3567, %v3894
        %vm4023 = vcmp.gt.f32.partialorder %v3758, %v3895
        %vm4024 = vcmp.gt.f32.partialorder %v3760, %v3896
        %vm4025 = vcmp.gt.f32.partialorder %v3571, %v3897
        %vm4026 = vcmp.gt.f32.partialorder %v3573, %v3898
        %vm4027 = vcmp.gt.f32.partialorder %v3764, %v3899
        %vm4028 = vcmp.gt.f32.partialorder %v3766, %v3900
        %vm4029 = vcmp.gt.f32.partialorder %v3575, %v3901
        %vm4030 = vcmp.gt.f32.partialorder %v3577, %v3902
        %vm4031 = vcmp.gt.f32.partialorder %v3768, %v3903
        %vm4032 = vcmp.gt.f32.partialorder %v3770, %v3904
        %vm4033 = vcmp.gt.f32.partialorder %v3581, %v3905
        %vm4034 = vcmp.gt.f32.partialorder %v3583, %v3906
        %vm4035 = vcmp.gt.f32.partialorder %v3774, %v3907
        %vm4036 = vcmp.gt.f32.partialorder %v3776, %v3908
        %vm4037 = vcmp.gt.f32.partialorder %v3585, %v3909
        %vm4038 = vcmp.gt.f32.partialorder %v3587, %v3910
        %vm4039 = vcmp.gt.f32.partialorder %v3778, %v3911
        %vm4040 = vcmp.gt.f32.partialorder %v3780, %v3912
        %vm4041 = vcmp.gt.f32.partialorder %v3591, %v3913
        %vm4042 = vcmp.gt.f32.partialorder %v3593, %v3914
        %vm4043 = vcmp.gt.f32.partialorder %v3784, %v3915
        %vm4044 = vcmp.gt.f32.partialorder %v3786, %v3916
        %vm4045 = vcmp.gt.f32.partialorder %v3595, %v3917
        %vm4046 = vcmp.gt.f32.partialorder %v3597, %v3918
        %vm4047 = vcmp.gt.f32.partialorder %v3788, %v3919
        %vm4048 = vcmp.gt.f32.partialorder %v3790, %v3920
        %v4049 = vsel %vm3921, 1, 0
        %v4050 = vsel %vm3922, 1, 0
        %v4051 = vsel %vm3923, 1, 0
        %v4052 = vsel %vm3924, 1, 0
        %v4053 = vsel %vm3925, 1, 0
        %v4054 = vsel %vm3926, 1, 0
        %v4055 = vsel %vm3927, 1, 0
        %v4056 = vsel %vm3928, 1, 0
        %v4057 = vsel %vm3929, 1, 0
        %v4058 = vsel %vm3930, 1, 0
        %v4059 = vsel %vm3931, 1, 0
        %v4060 = vsel %vm3932, 1, 0
        %v4061 = vsel %vm3933, 1, 0
        %v4062 = vsel %vm3934, 1, 0
        %v4063 = vsel %vm3935, 1, 0
        %v4064 = vsel %vm3936, 1, 0
        %v4065 = vsel %vm3937, 1, 0
        %v4066 = vsel %vm3938, 1, 0
        %v4067 = vsel %vm3939, 1, 0
        %v4068 = vsel %vm3940, 1, 0
        %v4069 = vsel %vm3941, 1, 0
        %v4070 = vsel %vm3942, 1, 0
        %v4071 = vsel %vm3943, 1, 0
        %v4072 = vsel %vm3944, 1, 0
        %v4073 = vsel %vm3945, 1, 0
        %v4074 = vsel %vm3946, 1, 0
        %v4075 = vsel %vm3947, 1, 0
        %v4076 = vsel %vm3948, 1, 0
        %v4077 = vsel %vm3949, 1, 0
        %v4078 = vsel %vm3950, 1, 0
        %v4079 = vsel %vm3951, 1, 0
        %v4080 = vsel %vm3952, 1, 0
        %v4081 = vsel %vm3953, 1, 0
        %v4082 = vsel %vm3954, 1, 0
        %v4083 = vsel %vm3955, 1, 0
        %v4084 = vsel %vm3956, 1, 0
        %v4085 = vsel %vm3957, 1, 0
        %v4086 = vsel %vm3958, 1, 0
        %v4087 = vsel %vm3959, 1, 0
        %v4088 = vsel %vm3960, 1, 0
        %v4089 = vsel %vm3961, 1, 0
        %v4090 = vsel %vm3962, 1, 0
        %v4091 = vsel %vm3963, 1, 0
        %v4092 = vsel %vm3964, 1, 0
        %v4093 = vsel %vm3965, 1, 0
        %v4094 = vsel %vm3966, 1, 0
        %v4095 = vsel %vm3967, 1, 0
        %v4096 = vsel %vm3968, 1, 0
        %v4097 = vsel %vm3969, 1, 0
        %v4098 = vsel %vm3970, 1, 0
        %v4099 = vsel %vm3971, 1, 0
        %v4100 = vsel %vm3972, 1, 0
        %v4101 = vsel %vm3973, 1, 0
        %v4102 = vsel %vm3974, 1, 0
        %v4103 = vsel %vm3975, 1, 0
        %v4104 = vsel %vm3976, 1, 0
        %v4105 = vsel %vm3977, 1, 0
        %v4106 = vsel %vm3978, 1, 0
        %v4107 = vsel %vm3979, 1, 0
        %v4108 = vsel %vm3980, 1, 0
        %v4109 = vsel %vm3981, 1, 0
        %v4110 = vsel %vm3982, 1, 0
        %v4111 = vsel %vm3983, 1, 0
        %v4112 = vsel %vm3984, 1, 0
        %v4113 = vsel %vm3985, 1, 0
        %v4114 = vsel %vm3986, 1, 0
        %v4115 = vsel %vm3987, 1, 0
        %v4116 = vsel %vm3988, 1, 0
        %v4117 = vsel %vm3989, 1, 0
        %v4118 = vsel %vm3990, 1, 0
        %v4119 = vsel %vm3991, 1, 0
        %v4120 = vsel %vm3992, 1, 0
        %v4121 = vsel %vm3993, 1, 0
        %v4122 = vsel %vm3994, 1, 0
        %v4123 = vsel %vm3995, 1, 0
        %v4124 = vsel %vm3996, 1, 0
        %v4125 = vsel %vm3997, 1, 0
        %v4126 = vsel %vm3998, 1, 0
        %v4127 = vsel %vm3999, 1, 0
        %v4128 = vsel %vm4000, 1, 0
        %v4129 = vsel %vm4001, 1, 0
        %v4130 = vsel %vm4002, 1, 0
        %v4131 = vsel %vm4003, 1, 0
        %v4132 = vsel %vm4004, 1, 0
        %v4133 = vsel %vm4005, 1, 0
        %v4134 = vsel %vm4006, 1, 0
        %v4135 = vsel %vm4007, 1, 0
        %v4136 = vsel %vm4008, 1, 0
        %v4137 = vsel %vm4009, 1, 0
        %v4138 = vsel %vm4010, 1, 0
        %v4139 = vsel %vm4011, 1, 0
        %v4140 = vsel %vm4012, 1, 0
        %v4141 = vsel %vm4013, 1, 0
        %v4142 = vsel %vm4014, 1, 0
        %v4143 = vsel %vm4015, 1, 0
        %v4144 = vsel %vm4016, 1, 0
        %v4145 = vsel %vm4017, 1, 0
        %v4146 = vsel %vm4018, 1, 0
        %v4147 = vsel %vm4019, 1, 0
        %v4148 = vsel %vm4020, 1, 0
        %v4149 = vsel %vm4021, 1, 0
        %v4150 = vsel %vm4022, 1, 0
        %v4151 = vsel %vm4023, 1, 0
        %v4152 = vsel %vm4024, 1, 0
        %v4153 = vsel %vm4025, 1, 0
        %v4154 = vsel %vm4026, 1, 0
        %v4155 = vsel %vm4027, 1, 0
        %v4156 = vsel %vm4028, 1, 0
        %v4157 = vsel %vm4029, 1, 0
        %v4158 = vsel %vm4030, 1, 0
        %v4159 = vsel %vm4031, 1, 0
        %v4160 = vsel %vm4032, 1, 0
        %v4161 = vsel %vm4033, 1, 0
        %v4162 = vsel %vm4034, 1, 0
        %v4163 = vsel %vm4035, 1, 0
        %v4164 = vsel %vm4036, 1, 0
        %v4165 = vsel %vm4037, 1, 0
        %v4166 = vsel %vm4038, 1, 0
        %v4167 = vsel %vm4039, 1, 0
        %v4168 = vsel %vm4040, 1, 0
        %v4169 = vsel %vm4041, 1, 0
        %v4170 = vsel %vm4042, 1, 0
        %v4171 = vsel %vm4043, 1, 0
        %v4172 = vsel %vm4044, 1, 0
        %v4173 = vsel %vm4045, 1, 0
        %v4174 = vsel %vm4046, 1, 0
        %v4175 = vsel %vm4047, 1, 0
        %v4176 = vsel %vm4048, 1, 0
        %v4177 = vcvt.s32.f32 %v4049
        %v4178 = vcvt.s32.f32 %v4050
        %v4179 = vcvt.s32.f32 %v4051
        %v4180 = vcvt.s32.f32 %v4052
        %v4181 = vcvt.s32.f32 %v4053
        %v4182 = vcvt.s32.f32 %v4054
        %v4183 = vcvt.s32.f32 %v4055
        %v4184 = vcvt.s32.f32 %v4056
        %v4185 = vcvt.s32.f32 %v4057
        %v4186 = vcvt.s32.f32 %v4058
        %v4187 = vcvt.s32.f32 %v4059
        %v4188 = vcvt.s32.f32 %v4060
        %v4189 = vcvt.s32.f32 %v4061
        %v4190 = vcvt.s32.f32 %v4062
        %v4191 = vcvt.s32.f32 %v4063
        %v4192 = vcvt.s32.f32 %v4064
        %v4193 = vcvt.s32.f32 %v4065
        %v4194 = vcvt.s32.f32 %v4066
        %v4195 = vcvt.s32.f32 %v4067
        %v4196 = vcvt.s32.f32 %v4068
        %v4197 = vcvt.s32.f32 %v4069
        %v4198 = vcvt.s32.f32 %v4070
        %v4199 = vcvt.s32.f32 %v4071
        %v4200 = vcvt.s32.f32 %v4072
        %v4201 = vcvt.s32.f32 %v4073
        %v4202 = vcvt.s32.f32 %v4074
        %v4203 = vcvt.s32.f32 %v4075
        %v4204 = vcvt.s32.f32 %v4076
        %v4205 = vcvt.s32.f32 %v4077
        %v4206 = vcvt.s32.f32 %v4078
        %v4207 = vcvt.s32.f32 %v4079
        %v4208 = vcvt.s32.f32 %v4080
        %v4209 = vcvt.s32.f32 %v4081
        %v4210 = vcvt.s32.f32 %v4082
        %v4211 = vcvt.s32.f32 %v4083
        %v4212 = vcvt.s32.f32 %v4084
        %v4213 = vcvt.s32.f32 %v4085
        %v4214 = vcvt.s32.f32 %v4086
        %v4215 = vcvt.s32.f32 %v4087
        %v4216 = vcvt.s32.f32 %v4088
        %v4217 = vcvt.s32.f32 %v4089
        %v4218 = vcvt.s32.f32 %v4090
        %v4219 = vcvt.s32.f32 %v4091
        %v4220 = vcvt.s32.f32 %v4092
        %v4221 = vcvt.s32.f32 %v4093
        %v4222 = vcvt.s32.f32 %v4094
        %v4223 = vcvt.s32.f32 %v4095
        %v4224 = vcvt.s32.f32 %v4096
        %v4225 = vcvt.s32.f32 %v4097
        %v4226 = vcvt.s32.f32 %v4098
        %v4227 = vcvt.s32.f32 %v4099
        %v4228 = vcvt.s32.f32 %v4100
        %v4229 = vcvt.s32.f32 %v4101
        %v4230 = vcvt.s32.f32 %v4102
        %v4231 = vcvt.s32.f32 %v4103
        %v4232 = vcvt.s32.f32 %v4104
        %v4233 = vcvt.s32.f32 %v4105
        %v4234 = vcvt.s32.f32 %v4106
        %v4235 = vcvt.s32.f32 %v4107
        %v4236 = vcvt.s32.f32 %v4108
        %v4237 = vcvt.s32.f32 %v4109
        %v4238 = vcvt.s32.f32 %v4110
        %v4239 = vcvt.s32.f32 %v4111
        %v4240 = vcvt.s32.f32 %v4112
        %v4241 = vcvt.s32.f32 %v4113
        %v4242 = vcvt.s32.f32 %v4114
        %v4243 = vcvt.s32.f32 %v4115
        %v4244 = vcvt.s32.f32 %v4116
        %v4245 = vcvt.s32.f32 %v4117
        %v4246 = vcvt.s32.f32 %v4118
        %v4247 = vcvt.s32.f32 %v4119
        %v4248 = vcvt.s32.f32 %v4120
        %v4249 = vcvt.s32.f32 %v4121
        %v4250 = vcvt.s32.f32 %v4122
        %v4251 = vcvt.s32.f32 %v4123
        %v4252 = vcvt.s32.f32 %v4124
        %v4253 = vcvt.s32.f32 %v4125
        %v4254 = vcvt.s32.f32 %v4126
        %v4255 = vcvt.s32.f32 %v4127
        %v4256 = vcvt.s32.f32 %v4128
        %v4257 = vcvt.s32.f32 %v4129
        %v4258 = vcvt.s32.f32 %v4130
        %v4259 = vcvt.s32.f32 %v4131
        %v4260 = vcvt.s32.f32 %v4132
        %v4261 = vcvt.s32.f32 %v4133
        %v4262 = vcvt.s32.f32 %v4134
        %v4263 = vcvt.s32.f32 %v4135
        %v4264 = vcvt.s32.f32 %v4136
        %v4265 = vcvt.s32.f32 %v4137
        %v4266 = vcvt.s32.f32 %v4138
        %v4267 = vcvt.s32.f32 %v4139
        %v4268 = vcvt.s32.f32 %v4140
        %v4269 = vcvt.s32.f32 %v4141
        %v4270 = vcvt.s32.f32 %v4142
        %v4271 = vcvt.s32.f32 %v4143
        %v4272 = vcvt.s32.f32 %v4144
        %v4273 = vcvt.s32.f32 %v4145
        %v4274 = vcvt.s32.f32 %v4146
        %v4275 = vcvt.s32.f32 %v4147
        %v4276 = vcvt.s32.f32 %v4148
        %v4277 = vcvt.s32.f32 %v4149
        %v4278 = vcvt.s32.f32 %v4150
        %v4279 = vcvt.s32.f32 %v4151
        %v4280 = vcvt.s32.f32 %v4152
        %v4281 = vcvt.s32.f32 %v4153
        %v4282 = vcvt.s32.f32 %v4154
        %v4283 = vcvt.s32.f32 %v4155
        %v4284 = vcvt.s32.f32 %v4156
        %v4285 = vcvt.s32.f32 %v4157
        %v4286 = vcvt.s32.f32 %v4158
        %v4287 = vcvt.s32.f32 %v4159
        %v4288 = vcvt.s32.f32 %v4160
        %v4289 = vcvt.s32.f32 %v4161
        %v4290 = vcvt.s32.f32 %v4162
        %v4291 = vcvt.s32.f32 %v4163
        %v4292 = vcvt.s32.f32 %v4164
        %v4293 = vcvt.s32.f32 %v4165
        %v4294 = vcvt.s32.f32 %v4166
        %v4295 = vcvt.s32.f32 %v4167
        %v4296 = vcvt.s32.f32 %v4168
        %v4297 = vcvt.s32.f32 %v4169
        %v4298 = vcvt.s32.f32 %v4170
        %v4299 = vcvt.s32.f32 %v4171
        %v4300 = vcvt.s32.f32 %v4172
        %v4301 = vcvt.s32.f32 %v4173
        %v4302 = vcvt.s32.f32 %v4174
        %v4303 = vcvt.s32.f32 %v4175
        %v4304 = vcvt.s32.f32 %v4176
        %v4305 = vpack.c.bf16 %v4181, %v4177
        %v4306 = vpack.c.bf16 %v4182, %v4178
        %v4307 = vpack.c.bf16 %v4183, %v4179
        %v4308 = vpack.c.bf16 %v4184, %v4180
        %v4309 = vpack.c.bf16 %v4189, %v4185
        %v4310 = vpack.c.bf16 %v4190, %v4186
        %v4311 = vpack.c.bf16 %v4191, %v4187
        %v4312 = vpack.c.bf16 %v4192, %v4188
        %v4313 = vpack.c.bf16 %v4197, %v4193
        %v4314 = vpack.c.bf16 %v4198, %v4194
        %v4315 = vpack.c.bf16 %v4199, %v4195
        %v4316 = vpack.c.bf16 %v4200, %v4196
        %v4317 = vpack.c.bf16 %v4205, %v4201
        %v4318 = vpack.c.bf16 %v4206, %v4202
        %v4319 = vpack.c.bf16 %v4207, %v4203
        %v4320 = vpack.c.bf16 %v4208, %v4204
        %v4321 = vpack.c.bf16 %v4213, %v4209
        %v4322 = vpack.c.bf16 %v4214, %v4210
        %v4323 = vpack.c.bf16 %v4215, %v4211
        %v4324 = vpack.c.bf16 %v4216, %v4212
        %v4325 = vpack.c.bf16 %v4221, %v4217
        %v4326 = vpack.c.bf16 %v4222, %v4218
        %v4327 = vpack.c.bf16 %v4223, %v4219
        %v4328 = vpack.c.bf16 %v4224, %v4220
        %v4329 = vpack.c.bf16 %v4229, %v4225
        %v4330 = vpack.c.bf16 %v4230, %v4226
        %v4331 = vpack.c.bf16 %v4231, %v4227
        %v4332 = vpack.c.bf16 %v4232, %v4228
        %v4333 = vpack.c.bf16 %v4237, %v4233
        %v4334 = vpack.c.bf16 %v4238, %v4234
        %v4335 = vpack.c.bf16 %v4239, %v4235
        %v4336 = vpack.c.bf16 %v4240, %v4236
        %v4337 = vpack.c.bf16 %v4245, %v4241
        %v4338 = vpack.c.bf16 %v4246, %v4242
        %v4339 = vpack.c.bf16 %v4247, %v4243
        %v4340 = vpack.c.bf16 %v4248, %v4244
        %v4341 = vpack.c.bf16 %v4253, %v4249
        %v4342 = vpack.c.bf16 %v4254, %v4250
        %v4343 = vpack.c.bf16 %v4255, %v4251
        %v4344 = vpack.c.bf16 %v4256, %v4252
        %v4345 = vpack.c.bf16 %v4261, %v4257
        %v4346 = vpack.c.bf16 %v4262, %v4258
        %v4347 = vpack.c.bf16 %v4263, %v4259
        %v4348 = vpack.c.bf16 %v4264, %v4260
        %v4349 = vpack.c.bf16 %v4269, %v4265
        %v4350 = vpack.c.bf16 %v4270, %v4266
        %v4351 = vpack.c.bf16 %v4271, %v4267
        %v4352 = vpack.c.bf16 %v4272, %v4268
        %v4353 = vpack.c.bf16 %v4277, %v4273
        %v4354 = vpack.c.bf16 %v4278, %v4274
        %v4355 = vpack.c.bf16 %v4279, %v4275
        %v4356 = vpack.c.bf16 %v4280, %v4276
        %v4357 = vpack.c.bf16 %v4285, %v4281
        %v4358 = vpack.c.bf16 %v4286, %v4282
        %v4359 = vpack.c.bf16 %v4287, %v4283
        %v4360 = vpack.c.bf16 %v4288, %v4284
        %v4361 = vpack.c.bf16 %v4293, %v4289
        %v4362 = vpack.c.bf16 %v4294, %v4290
        %v4363 = vpack.c.bf16 %v4295, %v4291
        %v4364 = vpack.c.bf16 %v4296, %v4292
        %v4365 = vpack.c.bf16 %v4301, %v4297
        %v4366 = vpack.c.bf16 %v4302, %v4298
        %v4367 = vpack.c.bf16 %v4303, %v4299
        %v4368 = vpack.c.bf16 %v4304, %v4300
        %4369 = vmatprep.subr.bf16.mxu0 %v806
        %4370 = vmatpush1.bf16.msra.mxu0 %v805
        %4371 = vmatprep.subr.bf16.mxu0 %v808
        %4372 = vmatpush1.bf16.msra.mxu0 %v807
        %4373 = vmatprep.subr.bf16.mxu0 %v810
        %4374 = vmatpush1.bf16.msra.mxu0 %v809
        %4375 = vmatprep.subr.bf16.mxu0 %v812
        %4376 = vmatpush1.bf16.msra.mxu0 %v811
        %4377 = vmatprep.subr.bf16.mxu0 %v814
        %4378 = vmatpush1.bf16.msra.mxu0 %v813
        %4379 = vmatprep.subr.bf16.mxu0 %v816
        %4380 = vmatpush1.bf16.msra.mxu0 %v815
        %4381 = vmatprep.subr.bf16.mxu0 %v818
        %4382 = vmatpush1.bf16.msra.mxu0 %v817
        %4383 = vmatprep.subr.bf16.mxu0 %v820
        %4384 = vmatpush1.bf16.msra.mxu0 %v819
        %4385 = vmatprep.subr.bf16.mxu0 %v822
        %4386 = vmatpush1.bf16.msra.mxu0 %v821
        %4387 = vmatprep.subr.bf16.mxu0 %v824
        %4388 = vmatpush1.bf16.msra.mxu0 %v823
        %4389 = vmatprep.subr.bf16.mxu0 %v826
        %4390 = vmatpush1.bf16.msra.mxu0 %v825
        %4391 = vmatprep.subr.bf16.mxu0 %v828
        %4392 = vmatpush1.bf16.msra.mxu0 %v827
        %4393 = vmatprep.subr.bf16.mxu0 %v830
        %4394 = vmatpush1.bf16.msra.mxu0 %v829
        %4395 = vmatprep.subr.bf16.mxu0 %v832
        %4396 = vmatpush1.bf16.msra.mxu0 %v831
        %4397 = vmatprep.subr.bf16.mxu0 %v834
        %4398 = vmatpush1.bf16.msra.mxu0 %v833
        %4399 = vmatprep.subr.bf16.mxu0 %v836
        %4400 = vmatpush1.bf16.msra.mxu0 %v835
        %4401 = vmatprep.mubr.bf16.mxu0 %v4306
        %4402 = vmatmul.mubr.bf16.gmra.mrb[0].mxu0 %v4305
        %v4403 = vpop.f32.mrb[0].mxu0
        %v4404 = vadd.f32 %v874, %v4403
        %v4405 = vpop.f32.mrb[0].mxu0
        %v4406 = vadd.f32 %v878, %v4405
        %v4407 = vpop.f32.mrb[0].mxu0
        %v4408 = vadd.f32 %v874, %v4407
        %v4409 = vpop.f32.mrb[0].mxu0
        %v4410 = vadd.f32 %v878, %v4409
        %4411 = vmatprep.mubr.bf16.mxu0 %v4310
        %4412 = vmatmul.mubr.bf16.gmra.mrb[0].mxu0 %v4309
        %v4413 = vpop.f32.mrb[0].mxu0
        %v4414 = vadd.f32 %v874, %v4413
        %v4415 = vpop.f32.mrb[0].mxu0
        %v4416 = vadd.f32 %v878, %v4415
        %v4417 = vpop.f32.mrb[0].mxu0
        %v4418 = vadd.f32 %v874, %v4417
        %v4419 = vpop.f32.mrb[0].mxu0
        %v4420 = vadd.f32 %v878, %v4419
        %4421 = vmatprep.mubr.bf16.mxu0 %v4314
        %4422 = vmatmul.mubr.bf16.gmra.mrb[0].mxu0 %v4313
        %v4423 = vpop.f32.mrb[0].mxu0
        %v4424 = vadd.f32 %v874, %v4423
        %v4425 = vpop.f32.mrb[0].mxu0
        %v4426 = vadd.f32 %v878, %v4425
        %v4427 = vpop.f32.mrb[0].mxu0
        %v4428 = vadd.f32 %v874, %v4427
        %v4429 = vpop.f32.mrb[0].mxu0
        %v4430 = vadd.f32 %v878, %v4429
        %4431 = vmatprep.mubr.bf16.mxu0 %v4318
        %4432 = vmatmul.mubr.bf16.gmra.mrb[0].mxu0 %v4317
        %v4433 = vpop.f32.mrb[0].mxu0
        %v4434 = vadd.f32 %v874, %v4433
        %v4435 = vpop.f32.mrb[0].mxu0
        %v4436 = vadd.f32 %v878, %v4435
        %v4437 = vpop.f32.mrb[0].mxu0
        %v4438 = vadd.f32 %v874, %v4437
        %v4439 = vpop.f32.mrb[0].mxu0
        %v4440 = vadd.f32 %v878, %v4439
        %4441 = vmatprep.mubr.bf16.mxu0 %v4322
        %4442 = vmatmul.mubr.bf16.gmra.mrb[0].mxu0 %v4321
        %v4443 = vpop.f32.mrb[0].mxu0
        %v4444 = vadd.f32 %v874, %v4443
        %v4445 = vpop.f32.mrb[0].mxu0
        %v4446 = vadd.f32 %v878, %v4445
        %v4447 = vpop.f32.mrb[0].mxu0
        %v4448 = vadd.f32 %v874, %v4447
        %v4449 = vpop.f32.mrb[0].mxu0
        %v4450 = vadd.f32 %v878, %v4449
        %4451 = vmatprep.mubr.bf16.mxu0 %v4326
        %4452 = vmatmul.mubr.bf16.gmra.mrb[0].mxu0 %v4325
        %v4453 = vpop.f32.mrb[0].mxu0
        %v4454 = vadd.f32 %v874, %v4453
        %v4455 = vpop.f32.mrb[0].mxu0
        %v4456 = vadd.f32 %v878, %v4455
        %v4457 = vpop.f32.mrb[0].mxu0
        %v4458 = vadd.f32 %v874, %v4457
        %v4459 = vpop.f32.mrb[0].mxu0
        %v4460 = vadd.f32 %v878, %v4459
        %4461 = vmatprep.mubr.bf16.mxu0 %v4330
        %4462 = vmatmul.mubr.bf16.gmra.mrb[0].mxu0 %v4329
        %v4463 = vpop.f32.mrb[0].mxu0
        %v4464 = vadd.f32 %v874, %v4463
        %v4465 = vpop.f32.mrb[0].mxu0
        %v4466 = vadd.f32 %v878, %v4465
        %v4467 = vpop.f32.mrb[0].mxu0
        %v4468 = vadd.f32 %v874, %v4467
        %v4469 = vpop.f32.mrb[0].mxu0
        %v4470 = vadd.f32 %v878, %v4469
        %4471 = vmatprep.mubr.bf16.mxu0 %v4334
        %4472 = vmatmul.mubr.bf16.gmra.mrb[0].mxu0 %v4333
        %v4473 = vpop.f32.mrb[0].mxu0
        %v4474 = vadd.f32 %v874, %v4473
        %v4475 = vpop.f32.mrb[0].mxu0
        %v4476 = vadd.f32 %v878, %v4475
        %v4477 = vpop.f32.mrb[0].mxu0
        %v4478 = vadd.f32 %v874, %v4477
        %v4479 = vpop.f32.mrb[0].mxu0
        %v4480 = vadd.f32 %v878, %v4479
        %4481 = vmatprep.mubr.bf16.mxu0 %v4338
        %4482 = vmatmul.mubr.bf16.gmra.mrb[0].mxu0 %v4337
        %v4483 = vpop.f32.mrb[0].mxu0
        %v4484 = vadd.f32 %v874, %v4483
        %v4485 = vpop.f32.mrb[0].mxu0
        %v4486 = vadd.f32 %v878, %v4485
        %v4487 = vpop.f32.mrb[0].mxu0
        %v4488 = vadd.f32 %v874, %v4487
        %v4489 = vpop.f32.mrb[0].mxu0
        %v4490 = vadd.f32 %v878, %v4489
        %4491 = vmatprep.mubr.bf16.mxu0 %v4342
        %4492 = vmatmul.mubr.bf16.gmra.mrb[0].mxu0 %v4341
        %v4493 = vpop.f32.mrb[0].mxu0
        %v4494 = vadd.f32 %v874, %v4493
        %v4495 = vpop.f32.mrb[0].mxu0
        %v4496 = vadd.f32 %v878, %v4495
        %v4497 = vpop.f32.mrb[0].mxu0
        %v4498 = vadd.f32 %v874, %v4497
        %v4499 = vpop.f32.mrb[0].mxu0
        %v4500 = vadd.f32 %v878, %v4499
        %4501 = vmatprep.mubr.bf16.mxu0 %v4346
        %4502 = vmatmul.mubr.bf16.gmra.mrb[0].mxu0 %v4345
        %v4503 = vpop.f32.mrb[0].mxu0
        %v4504 = vadd.f32 %v874, %v4503
        %v4505 = vpop.f32.mrb[0].mxu0
        %v4506 = vadd.f32 %v878, %v4505
        %v4507 = vpop.f32.mrb[0].mxu0
        %v4508 = vadd.f32 %v874, %v4507
        %v4509 = vpop.f32.mrb[0].mxu0
        %v4510 = vadd.f32 %v878, %v4509
        %4511 = vmatprep.mubr.bf16.mxu0 %v4350
        %4512 = vmatmul.mubr.bf16.gmra.mrb[0].mxu0 %v4349
        %v4513 = vpop.f32.mrb[0].mxu0
        %v4514 = vadd.f32 %v874, %v4513
        %v4515 = vpop.f32.mrb[0].mxu0
        %v4516 = vadd.f32 %v878, %v4515
        %v4517 = vpop.f32.mrb[0].mxu0
        %v4518 = vadd.f32 %v874, %v4517
        %v4519 = vpop.f32.mrb[0].mxu0
        %v4520 = vadd.f32 %v878, %v4519
        %4521 = vmatprep.mubr.bf16.mxu0 %v4354
        %4522 = vmatmul.mubr.bf16.gmra.mrb[0].mxu0 %v4353
        %v4523 = vpop.f32.mrb[0].mxu0
        %v4524 = vadd.f32 %v874, %v4523
        %v4525 = vpop.f32.mrb[0].mxu0
        %v4526 = vadd.f32 %v878, %v4525
        %v4527 = vpop.f32.mrb[0].mxu0
        %v4528 = vadd.f32 %v874, %v4527
        %v4529 = vpop.f32.mrb[0].mxu0
        %v4530 = vadd.f32 %v878, %v4529
        %4531 = vmatprep.mubr.bf16.mxu0 %v4358
        %4532 = vmatmul.mubr.bf16.gmra.mrb[0].mxu0 %v4357
        %v4533 = vpop.f32.mrb[0].mxu0
        %v4534 = vadd.f32 %v874, %v4533
        %v4535 = vpop.f32.mrb[0].mxu0
        %v4536 = vadd.f32 %v878, %v4535
        %v4537 = vpop.f32.mrb[0].mxu0
        %v4538 = vadd.f32 %v874, %v4537
        %v4539 = vpop.f32.mrb[0].mxu0
        %v4540 = vadd.f32 %v878, %v4539
        %4541 = vmatprep.mubr.bf16.mxu0 %v4362
        %4542 = vmatmul.mubr.bf16.gmra.mrb[0].mxu0 %v4361
        %v4543 = vpop.f32.mrb[0].mxu0
        %v4544 = vadd.f32 %v874, %v4543
        %v4545 = vpop.f32.mrb[0].mxu0
        %v4546 = vadd.f32 %v878, %v4545
        %v4547 = vpop.f32.mrb[0].mxu0
        %v4548 = vadd.f32 %v874, %v4547
        %v4549 = vpop.f32.mrb[0].mxu0
        %v4550 = vadd.f32 %v878, %v4549
        %4551 = vmatprep.mubr.bf16.mxu0 %v4366
        %4552 = vmatmul.mubr.bf16.gmra.mrb[0].mxu0 %v4365
        %v4553 = vpop.f32.mrb[0].mxu0
        %v4554 = vadd.f32 %v874, %v4553
        %v4555 = vpop.f32.mrb[0].mxu0
        %v4556 = vadd.f32 %v878, %v4555
        %v4557 = vpop.f32.mrb[0].mxu0
        %v4558 = vadd.f32 %v874, %v4557
        %v4559 = vpop.f32.mrb[0].mxu0
        %v4560 = vadd.f32 %v878, %v4559
        %4561 = vdwg.mxu0
        %4562 = vmatprep.subr.bf16.mxu0 %v838
        %4563 = vmatpush1.bf16.msra.mxu0 %v837
        %4564 = vmatprep.subr.bf16.mxu0 %v840
        %4565 = vmatpush1.bf16.msra.mxu0 %v839
        %4566 = vmatprep.subr.bf16.mxu0 %v842
        %4567 = vmatpush1.bf16.msra.mxu0 %v841
        %4568 = vmatprep.subr.bf16.mxu0 %v844
        %4569 = vmatpush1.bf16.msra.mxu0 %v843
        %4570 = vmatprep.subr.bf16.mxu0 %v846
        %4571 = vmatpush1.bf16.msra.mxu0 %v845
        %4572 = vmatprep.subr.bf16.mxu0 %v848
        %4573 = vmatpush1.bf16.msra.mxu0 %v847
        %4574 = vmatprep.subr.bf16.mxu0 %v850
        %4575 = vmatpush1.bf16.msra.mxu0 %v849
        %4576 = vmatprep.subr.bf16.mxu0 %v852
        %4577 = vmatpush1.bf16.msra.mxu0 %v851
        %4578 = vmatprep.subr.bf16.mxu0 %v854
        %4579 = vmatpush1.bf16.msra.mxu0 %v853
        %4580 = vmatprep.subr.bf16.mxu0 %v856
        %4581 = vmatpush1.bf16.msra.mxu0 %v855
        %4582 = vmatprep.subr.bf16.mxu0 %v858
        %4583 = vmatpush1.bf16.msra.mxu0 %v857
        %4584 = vmatprep.subr.bf16.mxu0 %v860
        %4585 = vmatpush1.bf16.msra.mxu0 %v859
        %4586 = vmatprep.subr.bf16.mxu0 %v862
        %4587 = vmatpush1.bf16.msra.mxu0 %v861
        %4588 = vmatprep.subr.bf16.mxu0 %v864
        %4589 = vmatpush1.bf16.msra.mxu0 %v863
        %4590 = vmatprep.subr.bf16.mxu0 %v866
        %4591 = vmatpush1.bf16.msra.mxu0 %v865
        %4592 = vmatprep.subr.bf16.mxu0 %v868
        %4593 = vmatpush1.bf16.msra.mxu0 %v867
        %4594 = vmatprep.mubr.bf16.mxu0 %v4308
        %4595 = vmatmul.mubr.bf16.gmra.mrb[0].mxu0 %v4307
        %v4596 = vpop.f32.mrb[0].mxu0
        %v4597 = vadd.f32 %v4404, %v4596
        %v4598 = vpop.f32.mrb[0].mxu0
        %v4599 = vadd.f32 %v4406, %v4598
        %v4600 = vpop.f32.mrb[0].mxu0
        %v4601 = vadd.f32 %v4408, %v4600
        %v4602 = vpop.f32.mrb[0].mxu0
        %v4603 = vadd.f32 %v4410, %v4602
        %4604 = vmatprep.mubr.bf16.mxu0 %v4312
        %4605 = vmatmul.mubr.bf16.gmra.mrb[0].mxu0 %v4311
        %v4606 = vpop.f32.mrb[0].mxu0
        %v4607 = vadd.f32 %v4414, %v4606
        %v4608 = vpop.f32.mrb[0].mxu0
        %v4609 = vadd.f32 %v4416, %v4608
        %v4610 = vpop.f32.mrb[0].mxu0
        %v4611 = vadd.f32 %v4418, %v4610
        %v4612 = vpop.f32.mrb[0].mxu0
        %v4613 = vadd.f32 %v4420, %v4612
        %4614 = vmatprep.mubr.bf16.mxu0 %v4316
        %4615 = vmatmul.mubr.bf16.gmra.mrb[0].mxu0 %v4315
        %v4616 = vpop.f32.mrb[0].mxu0
        %v4617 = vadd.f32 %v4424, %v4616
        %v4618 = vpop.f32.mrb[0].mxu0
        %v4619 = vadd.f32 %v4426, %v4618
        %v4620 = vpop.f32.mrb[0].mxu0
        %v4621 = vadd.f32 %v4428, %v4620
        %v4622 = vpop.f32.mrb[0].mxu0
        %v4623 = vadd.f32 %v4430, %v4622
        %4624 = vmatprep.mubr.bf16.mxu0 %v4320
        %4625 = vmatmul.mubr.bf16.gmra.mrb[0].mxu0 %v4319
        %v4626 = vpop.f32.mrb[0].mxu0
        %v4627 = vadd.f32 %v4434, %v4626
        %v4628 = vpop.f32.mrb[0].mxu0
        %v4629 = vadd.f32 %v4436, %v4628
        %v4630 = vpop.f32.mrb[0].mxu0
        %v4631 = vadd.f32 %v4438, %v4630
        %v4632 = vpop.f32.mrb[0].mxu0
        %v4633 = vadd.f32 %v4440, %v4632
        %4634 = vmatprep.mubr.bf16.mxu0 %v4324
        %4635 = vmatmul.mubr.bf16.gmra.mrb[0].mxu0 %v4323
        %v4636 = vpop.f32.mrb[0].mxu0
        %v4637 = vadd.f32 %v4444, %v4636
        %v4638 = vpop.f32.mrb[0].mxu0
        %v4639 = vadd.f32 %v4446, %v4638
        %v4640 = vpop.f32.mrb[0].mxu0
        %v4641 = vadd.f32 %v4448, %v4640
        %v4642 = vpop.f32.mrb[0].mxu0
        %v4643 = vadd.f32 %v4450, %v4642
        %4644 = vmatprep.mubr.bf16.mxu0 %v4328
        %4645 = vmatmul.mubr.bf16.gmra.mrb[0].mxu0 %v4327
        %v4646 = vpop.f32.mrb[0].mxu0
        %v4647 = vadd.f32 %v4454, %v4646
        %v4648 = vpop.f32.mrb[0].mxu0
        %v4649 = vadd.f32 %v4456, %v4648
        %v4650 = vpop.f32.mrb[0].mxu0
        %v4651 = vadd.f32 %v4458, %v4650
        %v4652 = vpop.f32.mrb[0].mxu0
        %v4653 = vadd.f32 %v4460, %v4652
        %4654 = vmatprep.mubr.bf16.mxu0 %v4332
        %4655 = vmatmul.mubr.bf16.gmra.mrb[0].mxu0 %v4331
        %v4656 = vpop.f32.mrb[0].mxu0
        %v4657 = vadd.f32 %v4464, %v4656
        %v4658 = vpop.f32.mrb[0].mxu0
        %v4659 = vadd.f32 %v4466, %v4658
        %v4660 = vpop.f32.mrb[0].mxu0
        %v4661 = vadd.f32 %v4468, %v4660
        %v4662 = vpop.f32.mrb[0].mxu0
        %v4663 = vadd.f32 %v4470, %v4662
        %4664 = vmatprep.mubr.bf16.mxu0 %v4336
        %4665 = vmatmul.mubr.bf16.gmra.mrb[0].mxu0 %v4335
        %v4666 = vpop.f32.mrb[0].mxu0
        %v4667 = vadd.f32 %v4474, %v4666
        %v4668 = vpop.f32.mrb[0].mxu0
        %v4669 = vadd.f32 %v4476, %v4668
        %v4670 = vpop.f32.mrb[0].mxu0
        %v4671 = vadd.f32 %v4478, %v4670
        %v4672 = vpop.f32.mrb[0].mxu0
        %v4673 = vadd.f32 %v4480, %v4672
        %4674 = vmatprep.mubr.bf16.mxu0 %v4340
        %4675 = vmatmul.mubr.bf16.gmra.mrb[0].mxu0 %v4339
        %v4676 = vpop.f32.mrb[0].mxu0
        %v4677 = vadd.f32 %v4484, %v4676
        %v4678 = vpop.f32.mrb[0].mxu0
        %v4679 = vadd.f32 %v4486, %v4678
        %v4680 = vpop.f32.mrb[0].mxu0
        %v4681 = vadd.f32 %v4488, %v4680
        %v4682 = vpop.f32.mrb[0].mxu0
        %v4683 = vadd.f32 %v4490, %v4682
        %4684 = vmatprep.mubr.bf16.mxu0 %v4344
        %4685 = vmatmul.mubr.bf16.gmra.mrb[0].mxu0 %v4343
        %v4686 = vpop.f32.mrb[0].mxu0
        %v4687 = vadd.f32 %v4494, %v4686
        %v4688 = vpop.f32.mrb[0].mxu0
        %v4689 = vadd.f32 %v4496, %v4688
        %v4690 = vpop.f32.mrb[0].mxu0
        %v4691 = vadd.f32 %v4498, %v4690
        %v4692 = vpop.f32.mrb[0].mxu0
        %v4693 = vadd.f32 %v4500, %v4692
        %4694 = vmatprep.mubr.bf16.mxu0 %v4348
        %4695 = vmatmul.mubr.bf16.gmra.mrb[0].mxu0 %v4347
        %v4696 = vpop.f32.mrb[0].mxu0
        %v4697 = vadd.f32 %v4504, %v4696
        %v4698 = vpop.f32.mrb[0].mxu0
        %v4699 = vadd.f32 %v4506, %v4698
        %v4700 = vpop.f32.mrb[0].mxu0
        %v4701 = vadd.f32 %v4508, %v4700
        %v4702 = vpop.f32.mrb[0].mxu0
        %v4703 = vadd.f32 %v4510, %v4702
        %4704 = vmatprep.mubr.bf16.mxu0 %v4352
        %4705 = vmatmul.mubr.bf16.gmra.mrb[0].mxu0 %v4351
        %v4706 = vpop.f32.mrb[0].mxu0
        %v4707 = vadd.f32 %v4514, %v4706
        %v4708 = vpop.f32.mrb[0].mxu0
        %v4709 = vadd.f32 %v4516, %v4708
        %v4710 = vpop.f32.mrb[0].mxu0
        %v4711 = vadd.f32 %v4518, %v4710
        %v4712 = vpop.f32.mrb[0].mxu0
        %v4713 = vadd.f32 %v4520, %v4712
        %4714 = vmatprep.mubr.bf16.mxu0 %v4356
        %4715 = vmatmul.mubr.bf16.gmra.mrb[0].mxu0 %v4355
        %v4716 = vpop.f32.mrb[0].mxu0
        %v4717 = vadd.f32 %v4524, %v4716
        %v4718 = vpop.f32.mrb[0].mxu0
        %v4719 = vadd.f32 %v4526, %v4718
        %v4720 = vpop.f32.mrb[0].mxu0
        %v4721 = vadd.f32 %v4528, %v4720
        %v4722 = vpop.f32.mrb[0].mxu0
        %v4723 = vadd.f32 %v4530, %v4722
        %4724 = vmatprep.mubr.bf16.mxu0 %v4360
        %4725 = vmatmul.mubr.bf16.gmra.mrb[0].mxu0 %v4359
        %v4726 = vpop.f32.mrb[0].mxu0
        %v4727 = vadd.f32 %v4534, %v4726
        %v4728 = vpop.f32.mrb[0].mxu0
        %v4729 = vadd.f32 %v4536, %v4728
        %v4730 = vpop.f32.mrb[0].mxu0
        %v4731 = vadd.f32 %v4538, %v4730
        %v4732 = vpop.f32.mrb[0].mxu0
        %v4733 = vadd.f32 %v4540, %v4732
        %4734 = vmatprep.mubr.bf16.mxu0 %v4364
        %4735 = vmatmul.mubr.bf16.gmra.mrb[0].mxu0 %v4363
        %v4736 = vpop.f32.mrb[0].mxu0
        %v4737 = vadd.f32 %v4544, %v4736
        %v4738 = vpop.f32.mrb[0].mxu0
        %v4739 = vadd.f32 %v4546, %v4738
        %v4740 = vpop.f32.mrb[0].mxu0
        %v4741 = vadd.f32 %v4548, %v4740
        %v4742 = vpop.f32.mrb[0].mxu0
        %v4743 = vadd.f32 %v4550, %v4742
        %4744 = vmatprep.mubr.bf16.mxu0 %v4368
        %4745 = vmatmul.mubr.bf16.gmra.mrb[0].mxu0 %v4367
        %v4746 = vpop.f32.mrb[0].mxu0
        %v4747 = vadd.f32 %v4554, %v4746
        %v4748 = vpop.f32.mrb[0].mxu0
        %v4749 = vadd.f32 %v4556, %v4748
        %v4750 = vpop.f32.mrb[0].mxu0
        %v4751 = vadd.f32 %v4558, %v4750
        %v4752 = vpop.f32.mrb[0].mxu0
        %v4753 = vadd.f32 %v4560, %v4752
        %4754 = vdwg.mxu0
        %s4755 = scalar_lea.vmem %s431, 1024 [#allocation11]
        %v4756 = vld [vmem:[%s4755] sm:$0xff]
        %v4757 = vld [vmem:[%s4755 + $0x8] sm:$0xff]
        %v4758 = vld [vmem:[%s4755 + $0x10] sm:$0xff]
        %v4759 = vld [vmem:[%s4755 + $0x18] sm:$0xff]
        %v4760 = vld [vmem:[%s4755 + $0x20] sm:$0xff]
        %v4761 = vld [vmem:[%s4755 + $0x28] sm:$0xff]
        %v4762 = vld [vmem:[%s4755 + $0x30] sm:$0xff]
        %v4763 = vld [vmem:[%s4755 + $0x38] sm:$0xff]
        %v4764 = vld [vmem:[%s4755 + $0x40] sm:$0xff]
        %v4765 = vld [vmem:[%s4755 + $0x48] sm:$0xff]
        %v4766 = vld [vmem:[%s4755 + $0x50] sm:$0xff]
        %v4767 = vld [vmem:[%s4755 + $0x58] sm:$0xff]
        %v4768 = vld [vmem:[%s4755 + $0x60] sm:$0xff]
        %v4769 = vld [vmem:[%s4755 + $0x68] sm:$0xff]
        %v4770 = vld [vmem:[%s4755 + $0x70] sm:$0xff]
        %v4771 = vld [vmem:[%s4755 + $0x78] sm:$0xff]
        %v4772 = vld [vmem:[%s4755 + $0x80] sm:$0xff]
        %v4773 = vld [vmem:[%s4755 + $0x88] sm:$0xff]
        %v4774 = vld [vmem:[%s4755 + $0x90] sm:$0xff]
        %v4775 = vld [vmem:[%s4755 + $0x98] sm:$0xff]
        %v4776 = vld [vmem:[%s4755 + $0xa0] sm:$0xff]
        %v4777 = vld [vmem:[%s4755 + $0xa8] sm:$0xff]
        %v4778 = vld [vmem:[%s4755 + $0xb0] sm:$0xff]
        %v4779 = vld [vmem:[%s4755 + $0xb8] sm:$0xff]
        %v4780 = vld [vmem:[%s4755 + $0xc0] sm:$0xff]
        %v4781 = vld [vmem:[%s4755 + $0xc8] sm:$0xff]
        %v4782 = vld [vmem:[%s4755 + $0xd0] sm:$0xff]
        %v4783 = vld [vmem:[%s4755 + $0xd8] sm:$0xff]
        %v4784 = vld [vmem:[%s4755 + $0xe0] sm:$0xff]
        %v4785 = vld [vmem:[%s4755 + $0xe8] sm:$0xff]
        %v4786 = vld [vmem:[%s4755 + $0xf0] sm:$0xff]
        %v4787 = vld [vmem:[%s4755 + $0xf8] sm:$0xff]
        %v4788 = vld [vmem:[%s4755 + $0x100] sm:$0xff]
        %v4789 = vld [vmem:[%s4755 + $0x108] sm:$0xff]
        %v4790 = vld [vmem:[%s4755 + $0x110] sm:$0xff]
        %v4791 = vld [vmem:[%s4755 + $0x118] sm:$0xff]
        %v4792 = vld [vmem:[%s4755 + $0x120] sm:$0xff]
        %v4793 = vld [vmem:[%s4755 + $0x128] sm:$0xff]
        %v4794 = vld [vmem:[%s4755 + $0x130] sm:$0xff]
        %v4795 = vld [vmem:[%s4755 + $0x138] sm:$0xff]
        %v4796 = vld [vmem:[%s4755 + $0x140] sm:$0xff]
        %v4797 = vld [vmem:[%s4755 + $0x148] sm:$0xff]
        %v4798 = vld [vmem:[%s4755 + $0x150] sm:$0xff]
        %v4799 = vld [vmem:[%s4755 + $0x158] sm:$0xff]
        %v4800 = vld [vmem:[%s4755 + $0x160] sm:$0xff]
        %v4801 = vld [vmem:[%s4755 + $0x168] sm:$0xff]
        %v4802 = vld [vmem:[%s4755 + $0x170] sm:$0xff]
        %v4803 = vld [vmem:[%s4755 + $0x178] sm:$0xff]
        %v4804 = vld [vmem:[%s4755 + $0x180] sm:$0xff]
        %v4805 = vld [vmem:[%s4755 + $0x188] sm:$0xff]
        %v4806 = vld [vmem:[%s4755 + $0x190] sm:$0xff]
        %v4807 = vld [vmem:[%s4755 + $0x198] sm:$0xff]
        %v4808 = vld [vmem:[%s4755 + $0x1a0] sm:$0xff]
        %v4809 = vld [vmem:[%s4755 + $0x1a8] sm:$0xff]
        %v4810 = vld [vmem:[%s4755 + $0x1b0] sm:$0xff]
        %v4811 = vld [vmem:[%s4755 + $0x1b8] sm:$0xff]
        %v4812 = vld [vmem:[%s4755 + $0x1c0] sm:$0xff]
        %v4813 = vld [vmem:[%s4755 + $0x1c8] sm:$0xff]
        %v4814 = vld [vmem:[%s4755 + $0x1d0] sm:$0xff]
        %v4815 = vld [vmem:[%s4755 + $0x1d8] sm:$0xff]
        %v4816 = vld [vmem:[%s4755 + $0x1e0] sm:$0xff]
        %v4817 = vld [vmem:[%s4755 + $0x1e8] sm:$0xff]
        %v4818 = vld [vmem:[%s4755 + $0x1f0] sm:$0xff]
        %v4819 = vld [vmem:[%s4755 + $0x1f8] sm:$0xff]
        %vm4820 = vcmp.gt.f32.partialorder %v4597, %v4756
        %vm4821 = vcmp.gt.f32.partialorder %v4599, %v4757
        %vm4822 = vcmp.gt.f32.partialorder %v4601, %v4758
        %vm4823 = vcmp.gt.f32.partialorder %v4603, %v4759
        %vm4824 = vcmp.gt.f32.partialorder %v4607, %v4760
        %vm4825 = vcmp.gt.f32.partialorder %v4609, %v4761
        %vm4826 = vcmp.gt.f32.partialorder %v4611, %v4762
        %vm4827 = vcmp.gt.f32.partialorder %v4613, %v4763
        %vm4828 = vcmp.gt.f32.partialorder %v4617, %v4764
        %vm4829 = vcmp.gt.f32.partialorder %v4619, %v4765
        %vm4830 = vcmp.gt.f32.partialorder %v4621, %v4766
        %vm4831 = vcmp.gt.f32.partialorder %v4623, %v4767
        %vm4832 = vcmp.gt.f32.partialorder %v4627, %v4768
        %vm4833 = vcmp.gt.f32.partialorder %v4629, %v4769
        %vm4834 = vcmp.gt.f32.partialorder %v4631, %v4770
        %vm4835 = vcmp.gt.f32.partialorder %v4633, %v4771
        %vm4836 = vcmp.gt.f32.partialorder %v4637, %v4772
        %vm4837 = vcmp.gt.f32.partialorder %v4639, %v4773
        %vm4838 = vcmp.gt.f32.partialorder %v4641, %v4774
        %vm4839 = vcmp.gt.f32.partialorder %v4643, %v4775
        %vm4840 = vcmp.gt.f32.partialorder %v4647, %v4776
        %vm4841 = vcmp.gt.f32.partialorder %v4649, %v4777
        %vm4842 = vcmp.gt.f32.partialorder %v4651, %v4778
        %vm4843 = vcmp.gt.f32.partialorder %v4653, %v4779
        %vm4844 = vcmp.gt.f32.partialorder %v4657, %v4780
        %vm4845 = vcmp.gt.f32.partialorder %v4659, %v4781
        %vm4846 = vcmp.gt.f32.partialorder %v4661, %v4782
        %vm4847 = vcmp.gt.f32.partialorder %v4663, %v4783
        %vm4848 = vcmp.gt.f32.partialorder %v4667, %v4784
        %vm4849 = vcmp.gt.f32.partialorder %v4669, %v4785
        %vm4850 = vcmp.gt.f32.partialorder %v4671, %v4786
        %vm4851 = vcmp.gt.f32.partialorder %v4673, %v4787
        %vm4852 = vcmp.gt.f32.partialorder %v4677, %v4788
        %vm4853 = vcmp.gt.f32.partialorder %v4679, %v4789
        %vm4854 = vcmp.gt.f32.partialorder %v4681, %v4790
        %vm4855 = vcmp.gt.f32.partialorder %v4683, %v4791
        %vm4856 = vcmp.gt.f32.partialorder %v4687, %v4792
        %vm4857 = vcmp.gt.f32.partialorder %v4689, %v4793
        %vm4858 = vcmp.gt.f32.partialorder %v4691, %v4794
        %vm4859 = vcmp.gt.f32.partialorder %v4693, %v4795
        %vm4860 = vcmp.gt.f32.partialorder %v4697, %v4796
        %vm4861 = vcmp.gt.f32.partialorder %v4699, %v4797
        %vm4862 = vcmp.gt.f32.partialorder %v4701, %v4798
        %vm4863 = vcmp.gt.f32.partialorder %v4703, %v4799
        %vm4864 = vcmp.gt.f32.partialorder %v4707, %v4800
        %vm4865 = vcmp.gt.f32.partialorder %v4709, %v4801
        %vm4866 = vcmp.gt.f32.partialorder %v4711, %v4802
        %vm4867 = vcmp.gt.f32.partialorder %v4713, %v4803
        %vm4868 = vcmp.gt.f32.partialorder %v4717, %v4804
        %vm4869 = vcmp.gt.f32.partialorder %v4719, %v4805
        %vm4870 = vcmp.gt.f32.partialorder %v4721, %v4806
        %vm4871 = vcmp.gt.f32.partialorder %v4723, %v4807
        %vm4872 = vcmp.gt.f32.partialorder %v4727, %v4808
        %vm4873 = vcmp.gt.f32.partialorder %v4729, %v4809
        %vm4874 = vcmp.gt.f32.partialorder %v4731, %v4810
        %vm4875 = vcmp.gt.f32.partialorder %v4733, %v4811
        %vm4876 = vcmp.gt.f32.partialorder %v4737, %v4812
        %vm4877 = vcmp.gt.f32.partialorder %v4739, %v4813
        %vm4878 = vcmp.gt.f32.partialorder %v4741, %v4814
        %vm4879 = vcmp.gt.f32.partialorder %v4743, %v4815
        %vm4880 = vcmp.gt.f32.partialorder %v4747, %v4816
        %vm4881 = vcmp.gt.f32.partialorder %v4749, %v4817
        %vm4882 = vcmp.gt.f32.partialorder %v4751, %v4818
        %vm4883 = vcmp.gt.f32.partialorder %v4753, %v4819
        %v4884 = vsel %vm4820, 1, 0
        %v4885 = vsel %vm4821, 1, 0
        %v4886 = vsel %vm4822, 1, 0
        %v4887 = vsel %vm4823, 1, 0
        %v4888 = vsel %vm4824, 1, 0
        %v4889 = vsel %vm4825, 1, 0
        %v4890 = vsel %vm4826, 1, 0
        %v4891 = vsel %vm4827, 1, 0
        %v4892 = vsel %vm4828, 1, 0
        %v4893 = vsel %vm4829, 1, 0
        %v4894 = vsel %vm4830, 1, 0
        %v4895 = vsel %vm4831, 1, 0
        %v4896 = vsel %vm4832, 1, 0
        %v4897 = vsel %vm4833, 1, 0
        %v4898 = vsel %vm4834, 1, 0
        %v4899 = vsel %vm4835, 1, 0
        %v4900 = vsel %vm4836, 1, 0
        %v4901 = vsel %vm4837, 1, 0
        %v4902 = vsel %vm4838, 1, 0
        %v4903 = vsel %vm4839, 1, 0
        %v4904 = vsel %vm4840, 1, 0
        %v4905 = vsel %vm4841, 1, 0
        %v4906 = vsel %vm4842, 1, 0
        %v4907 = vsel %vm4843, 1, 0
        %v4908 = vsel %vm4844, 1, 0
        %v4909 = vsel %vm4845, 1, 0
        %v4910 = vsel %vm4846, 1, 0
        %v4911 = vsel %vm4847, 1, 0
        %v4912 = vsel %vm4848, 1, 0
        %v4913 = vsel %vm4849, 1, 0
        %v4914 = vsel %vm4850, 1, 0
        %v4915 = vsel %vm4851, 1, 0
        %v4916 = vsel %vm4852, 1, 0
        %v4917 = vsel %vm4853, 1, 0
        %v4918 = vsel %vm4854, 1, 0
        %v4919 = vsel %vm4855, 1, 0
        %v4920 = vsel %vm4856, 1, 0
        %v4921 = vsel %vm4857, 1, 0
        %v4922 = vsel %vm4858, 1, 0
        %v4923 = vsel %vm4859, 1, 0
        %v4924 = vsel %vm4860, 1, 0
        %v4925 = vsel %vm4861, 1, 0
        %v4926 = vsel %vm4862, 1, 0
        %v4927 = vsel %vm4863, 1, 0
        %v4928 = vsel %vm4864, 1, 0
        %v4929 = vsel %vm4865, 1, 0
        %v4930 = vsel %vm4866, 1, 0
        %v4931 = vsel %vm4867, 1, 0
        %v4932 = vsel %vm4868, 1, 0
        %v4933 = vsel %vm4869, 1, 0
        %v4934 = vsel %vm4870, 1, 0
        %v4935 = vsel %vm4871, 1, 0
        %v4936 = vsel %vm4872, 1, 0
        %v4937 = vsel %vm4873, 1, 0
        %v4938 = vsel %vm4874, 1, 0
        %v4939 = vsel %vm4875, 1, 0
        %v4940 = vsel %vm4876, 1, 0
        %v4941 = vsel %vm4877, 1, 0
        %v4942 = vsel %vm4878, 1, 0
        %v4943 = vsel %vm4879, 1, 0
        %v4944 = vsel %vm4880, 1, 0
        %v4945 = vsel %vm4881, 1, 0
        %v4946 = vsel %vm4882, 1, 0
        %v4947 = vsel %vm4883, 1, 0
        %v4948 = vcvt.s32.f32 %v4884
        %v4949 = vcvt.s32.f32 %v4885
        %v4950 = vcvt.s32.f32 %v4886
        %v4951 = vcvt.s32.f32 %v4887
        %v4952 = vcvt.s32.f32 %v4888
        %v4953 = vcvt.s32.f32 %v4889
        %v4954 = vcvt.s32.f32 %v4890
        %v4955 = vcvt.s32.f32 %v4891
        %v4956 = vcvt.s32.f32 %v4892
        %v4957 = vcvt.s32.f32 %v4893
        %v4958 = vcvt.s32.f32 %v4894
        %v4959 = vcvt.s32.f32 %v4895
        %v4960 = vcvt.s32.f32 %v4896
        %v4961 = vcvt.s32.f32 %v4897
        %v4962 = vcvt.s32.f32 %v4898
        %v4963 = vcvt.s32.f32 %v4899
        %v4964 = vcvt.s32.f32 %v4900
        %v4965 = vcvt.s32.f32 %v4901
        %v4966 = vcvt.s32.f32 %v4902
        %v4967 = vcvt.s32.f32 %v4903
        %v4968 = vcvt.s32.f32 %v4904
        %v4969 = vcvt.s32.f32 %v4905
        %v4970 = vcvt.s32.f32 %v4906
        %v4971 = vcvt.s32.f32 %v4907
        %v4972 = vcvt.s32.f32 %v4908
        %v4973 = vcvt.s32.f32 %v4909
        %v4974 = vcvt.s32.f32 %v4910
        %v4975 = vcvt.s32.f32 %v4911
        %v4976 = vcvt.s32.f32 %v4912
        %v4977 = vcvt.s32.f32 %v4913
        %v4978 = vcvt.s32.f32 %v4914
        %v4979 = vcvt.s32.f32 %v4915
        %v4980 = vcvt.s32.f32 %v4916
        %v4981 = vcvt.s32.f32 %v4917
        %v4982 = vcvt.s32.f32 %v4918
        %v4983 = vcvt.s32.f32 %v4919
        %v4984 = vcvt.s32.f32 %v4920
        %v4985 = vcvt.s32.f32 %v4921
        %v4986 = vcvt.s32.f32 %v4922
        %v4987 = vcvt.s32.f32 %v4923
        %v4988 = vcvt.s32.f32 %v4924
        %v4989 = vcvt.s32.f32 %v4925
        %v4990 = vcvt.s32.f32 %v4926
        %v4991 = vcvt.s32.f32 %v4927
        %v4992 = vcvt.s32.f32 %v4928
        %v4993 = vcvt.s32.f32 %v4929
        %v4994 = vcvt.s32.f32 %v4930
        %v4995 = vcvt.s32.f32 %v4931
        %v4996 = vcvt.s32.f32 %v4932
        %v4997 = vcvt.s32.f32 %v4933
        %v4998 = vcvt.s32.f32 %v4934
        %v4999 = vcvt.s32.f32 %v4935
        %v5000 = vcvt.s32.f32 %v4936
        %v5001 = vcvt.s32.f32 %v4937
        %v5002 = vcvt.s32.f32 %v4938
        %v5003 = vcvt.s32.f32 %v4939
        %v5004 = vcvt.s32.f32 %v4940
        %v5005 = vcvt.s32.f32 %v4941
        %v5006 = vcvt.s32.f32 %v4942
        %v5007 = vcvt.s32.f32 %v4943
        %v5008 = vcvt.s32.f32 %v4944
        %v5009 = vcvt.s32.f32 %v4945
        %v5010 = vcvt.s32.f32 %v4946
        %v5011 = vcvt.s32.f32 %v4947
        %v5012 = vpack.c.bf16 %v4950, %v4948
        %v5013 = vpack.c.bf16 %v4951, %v4949
        %v5014 = vpack.c.bf16 %v4954, %v4952
        %v5015 = vpack.c.bf16 %v4955, %v4953
        %v5016 = vpack.c.bf16 %v4958, %v4956
        %v5017 = vpack.c.bf16 %v4959, %v4957
        %v5018 = vpack.c.bf16 %v4962, %v4960
        %v5019 = vpack.c.bf16 %v4963, %v4961
        %v5020 = vpack.c.bf16 %v4966, %v4964
        %v5021 = vpack.c.bf16 %v4967, %v4965
        %v5022 = vpack.c.bf16 %v4970, %v4968
        %v5023 = vpack.c.bf16 %v4971, %v4969
        %v5024 = vpack.c.bf16 %v4974, %v4972
        %v5025 = vpack.c.bf16 %v4975, %v4973
        %v5026 = vpack.c.bf16 %v4978, %v4976
        %v5027 = vpack.c.bf16 %v4979, %v4977
        %v5028 = vpack.c.bf16 %v4982, %v4980
        %v5029 = vpack.c.bf16 %v4983, %v4981
        %v5030 = vpack.c.bf16 %v4986, %v4984
        %v5031 = vpack.c.bf16 %v4987, %v4985
        %v5032 = vpack.c.bf16 %v4990, %v4988
        %v5033 = vpack.c.bf16 %v4991, %v4989
        %v5034 = vpack.c.bf16 %v4994, %v4992
        %v5035 = vpack.c.bf16 %v4995, %v4993
        %v5036 = vpack.c.bf16 %v4998, %v4996
        %v5037 = vpack.c.bf16 %v4999, %v4997
        %v5038 = vpack.c.bf16 %v5002, %v5000
        %v5039 = vpack.c.bf16 %v5003, %v5001
        %v5040 = vpack.c.bf16 %v5006, %v5004
        %v5041 = vpack.c.bf16 %v5007, %v5005
        %v5042 = vpack.c.bf16 %v5010, %v5008
        %v5043 = vpack.c.bf16 %v5011, %v5009
        %5044 = vmatprep.subr.bf16.mxu0 %v614
        %5045 = vmatpush1.bf16.msra.mxu0 %v613
        %5046 = vmatprep.subr.bf16.mxu0 %v618
        %5047 = vmatpush1.bf16.msra.mxu0 %v617
        %5048 = vmatprep.subr.bf16.mxu0 %v622
        %5049 = vmatpush1.bf16.msra.mxu0 %v621
        %5050 = vmatprep.subr.bf16.mxu0 %v626
        %5051 = vmatpush1.bf16.msra.mxu0 %v625
        %5052 = vmatprep.subr.bf16.mxu0 %v630
        %5053 = vmatpush1.bf16.msra.mxu0 %v629
        %5054 = vmatprep.subr.bf16.mxu0 %v634
        %5055 = vmatpush1.bf16.msra.mxu0 %v633
        %5056 = vmatprep.subr.bf16.mxu0 %v638
        %5057 = vmatpush1.bf16.msra.mxu0 %v637
        %5058 = vmatprep.subr.bf16.mxu0 %v642
        %5059 = vmatpush1.bf16.msra.mxu0 %v641
        %5060 = vmatprep.subr.bf16.mxu0 %v646
        %5061 = vmatpush1.bf16.msra.mxu0 %v645
        %5062 = vmatprep.subr.bf16.mxu0 %v650
        %5063 = vmatpush1.bf16.msra.mxu0 %v649
        %5064 = vmatprep.subr.bf16.mxu0 %v654
        %5065 = vmatpush1.bf16.msra.mxu0 %v653
        %5066 = vmatprep.subr.bf16.mxu0 %v658
        %5067 = vmatpush1.bf16.msra.mxu0 %v657
        %5068 = vmatprep.subr.bf16.mxu0 %v662
        %5069 = vmatpush1.bf16.msra.mxu0 %v661
        %5070 = vmatprep.subr.bf16.mxu0 %v666
        %5071 = vmatpush1.bf16.msra.mxu0 %v665
        %5072 = vmatprep.subr.bf16.mxu0 %v670
        %5073 = vmatpush1.bf16.msra.mxu0 %v669
        %5074 = vmatprep.subr.bf16.mxu0 %v674
        %5075 = vmatpush1.bf16.msra.mxu0 %v673
        %5076 = vmatprep.mubr.bf16.mxu0 %v5013
        %5077 = vmatmul.mubr.bf16.gmra.mrb[0].mxu0 %v5012
        %v5078 = vpop.f32.mrb[0].mxu0
        %v5079 = vadd.f32 %v886, %v5078
        %v5080 = vpop.f32.mrb[0].mxu0
        %v5081 = vadd.f32 %v890, %v5080
        %v5082 = vpop.f32.mrb[0].mxu0
        %v5083 = vadd.f32 %v886, %v5082
        %v5084 = vpop.f32.mrb[0].mxu0
        %v5085 = vadd.f32 %v890, %v5084
        %5086 = vmatprep.mubr.bf16.mxu0 %v5015
        %5087 = vmatmul.mubr.bf16.gmra.mrb[0].mxu0 %v5014
        %v5088 = vpop.f32.mrb[0].mxu0
        %v5089 = vadd.f32 %v886, %v5088
        %v5090 = vpop.f32.mrb[0].mxu0
        %v5091 = vadd.f32 %v890, %v5090
        %v5092 = vpop.f32.mrb[0].mxu0
        %v5093 = vadd.f32 %v886, %v5092
        %v5094 = vpop.f32.mrb[0].mxu0
        %v5095 = vadd.f32 %v890, %v5094
        %5096 = vmatprep.mubr.bf16.mxu0 %v5017
        %5097 = vmatmul.mubr.bf16.gmra.mrb[0].mxu0 %v5016
        %v5098 = vpop.f32.mrb[0].mxu0
        %v5099 = vadd.f32 %v886, %v5098
        %v5100 = vpop.f32.mrb[0].mxu0
        %v5101 = vadd.f32 %v890, %v5100
        %v5102 = vpop.f32.mrb[0].mxu0
        %v5103 = vadd.f32 %v886, %v5102
        %v5104 = vpop.f32.mrb[0].mxu0
        %v5105 = vadd.f32 %v890, %v5104
        %5106 = vmatprep.mubr.bf16.mxu0 %v5019
        %5107 = vmatmul.mubr.bf16.gmra.mrb[0].mxu0 %v5018
        %v5108 = vpop.f32.mrb[0].mxu0
        %v5109 = vadd.f32 %v886, %v5108
        %v5110 = vpop.f32.mrb[0].mxu0
        %v5111 = vadd.f32 %v890, %v5110
        %v5112 = vpop.f32.mrb[0].mxu0
        %v5113 = vadd.f32 %v886, %v5112
        %v5114 = vpop.f32.mrb[0].mxu0
        %v5115 = vadd.f32 %v890, %v5114
        %5116 = vmatprep.mubr.bf16.mxu0 %v5021
        %5117 = vmatmul.mubr.bf16.gmra.mrb[0].mxu0 %v5020
        %v5118 = vpop.f32.mrb[0].mxu0
        %v5119 = vadd.f32 %v886, %v5118
        %v5120 = vpop.f32.mrb[0].mxu0
        %v5121 = vadd.f32 %v890, %v5120
        %v5122 = vpop.f32.mrb[0].mxu0
        %v5123 = vadd.f32 %v886, %v5122
        %v5124 = vpop.f32.mrb[0].mxu0
        %v5125 = vadd.f32 %v890, %v5124
        %5126 = vmatprep.mubr.bf16.mxu0 %v5023
        %5127 = vmatmul.mubr.bf16.gmra.mrb[0].mxu0 %v5022
        %v5128 = vpop.f32.mrb[0].mxu0
        %v5129 = vadd.f32 %v886, %v5128
        %v5130 = vpop.f32.mrb[0].mxu0
        %v5131 = vadd.f32 %v890, %v5130
        %v5132 = vpop.f32.mrb[0].mxu0
        %v5133 = vadd.f32 %v886, %v5132
        %v5134 = vpop.f32.mrb[0].mxu0
        %v5135 = vadd.f32 %v890, %v5134
        %5136 = vmatprep.mubr.bf16.mxu0 %v5025
        %5137 = vmatmul.mubr.bf16.gmra.mrb[0].mxu0 %v5024
        %v5138 = vpop.f32.mrb[0].mxu0
        %v5139 = vadd.f32 %v886, %v5138
        %v5140 = vpop.f32.mrb[0].mxu0
        %v5141 = vadd.f32 %v890, %v5140
        %v5142 = vpop.f32.mrb[0].mxu0
        %v5143 = vadd.f32 %v886, %v5142
        %v5144 = vpop.f32.mrb[0].mxu0
        %v5145 = vadd.f32 %v890, %v5144
        %5146 = vmatprep.mubr.bf16.mxu0 %v5027
        %5147 = vmatmul.mubr.bf16.gmra.mrb[0].mxu0 %v5026
        %v5148 = vpop.f32.mrb[0].mxu0
        %v5149 = vadd.f32 %v886, %v5148
        %v5150 = vpop.f32.mrb[0].mxu0
        %v5151 = vadd.f32 %v890, %v5150
        %v5152 = vpop.f32.mrb[0].mxu0
        %v5153 = vadd.f32 %v886, %v5152
        %v5154 = vpop.f32.mrb[0].mxu0
        %v5155 = vadd.f32 %v890, %v5154
        %5156 = vmatprep.mubr.bf16.mxu0 %v5029
        %5157 = vmatmul.mubr.bf16.gmra.mrb[0].mxu0 %v5028
        %v5158 = vpop.f32.mrb[0].mxu0
        %v5159 = vadd.f32 %v886, %v5158
        %v5160 = vpop.f32.mrb[0].mxu0
        %v5161 = vadd.f32 %v890, %v5160
        %v5162 = vpop.f32.mrb[0].mxu0
        %v5163 = vadd.f32 %v886, %v5162
        %v5164 = vpop.f32.mrb[0].mxu0
        %v5165 = vadd.f32 %v890, %v5164
        %5166 = vmatprep.mubr.bf16.mxu0 %v5031
        %5167 = vmatmul.mubr.bf16.gmra.mrb[0].mxu0 %v5030
        %v5168 = vpop.f32.mrb[0].mxu0
        %v5169 = vadd.f32 %v886, %v5168
        %v5170 = vpop.f32.mrb[0].mxu0
        %v5171 = vadd.f32 %v890, %v5170
        %v5172 = vpop.f32.mrb[0].mxu0
        %v5173 = vadd.f32 %v886, %v5172
        %v5174 = vpop.f32.mrb[0].mxu0
        %v5175 = vadd.f32 %v890, %v5174
        %5176 = vmatprep.mubr.bf16.mxu0 %v5033
        %5177 = vmatmul.mubr.bf16.gmra.mrb[0].mxu0 %v5032
        %v5178 = vpop.f32.mrb[0].mxu0
        %v5179 = vadd.f32 %v886, %v5178
        %v5180 = vpop.f32.mrb[0].mxu0
        %v5181 = vadd.f32 %v890, %v5180
        %v5182 = vpop.f32.mrb[0].mxu0
        %v5183 = vadd.f32 %v886, %v5182
        %v5184 = vpop.f32.mrb[0].mxu0
        %v5185 = vadd.f32 %v890, %v5184
        %5186 = vmatprep.mubr.bf16.mxu0 %v5035
        %5187 = vmatmul.mubr.bf16.gmra.mrb[0].mxu0 %v5034
        %v5188 = vpop.f32.mrb[0].mxu0
        %v5189 = vadd.f32 %v886, %v5188
        %v5190 = vpop.f32.mrb[0].mxu0
        %v5191 = vadd.f32 %v890, %v5190
        %v5192 = vpop.f32.mrb[0].mxu0
        %v5193 = vadd.f32 %v886, %v5192
        %v5194 = vpop.f32.mrb[0].mxu0
        %v5195 = vadd.f32 %v890, %v5194
        %5196 = vmatprep.mubr.bf16.mxu0 %v5037
        %5197 = vmatmul.mubr.bf16.gmra.mrb[0].mxu0 %v5036
        %v5198 = vpop.f32.mrb[0].mxu0
        %v5199 = vadd.f32 %v886, %v5198
        %v5200 = vpop.f32.mrb[0].mxu0
        %v5201 = vadd.f32 %v890, %v5200
        %v5202 = vpop.f32.mrb[0].mxu0
        %v5203 = vadd.f32 %v886, %v5202
        %v5204 = vpop.f32.mrb[0].mxu0
        %v5205 = vadd.f32 %v890, %v5204
        %5206 = vmatprep.mubr.bf16.mxu0 %v5039
        %5207 = vmatmul.mubr.bf16.gmra.mrb[0].mxu0 %v5038
        %v5208 = vpop.f32.mrb[0].mxu0
        %v5209 = vadd.f32 %v886, %v5208
        %v5210 = vpop.f32.mrb[0].mxu0
        %v5211 = vadd.f32 %v890, %v5210
        %v5212 = vpop.f32.mrb[0].mxu0
        %v5213 = vadd.f32 %v886, %v5212
        %v5214 = vpop.f32.mrb[0].mxu0
        %v5215 = vadd.f32 %v890, %v5214
        %5216 = vmatprep.mubr.bf16.mxu0 %v5041
        %5217 = vmatmul.mubr.bf16.gmra.mrb[0].mxu0 %v5040
        %v5218 = vpop.f32.mrb[0].mxu0
        %v5219 = vadd.f32 %v886, %v5218
        %v5220 = vpop.f32.mrb[0].mxu0
        %v5221 = vadd.f32 %v890, %v5220
        %v5222 = vpop.f32.mrb[0].mxu0
        %v5223 = vadd.f32 %v886, %v5222
        %v5224 = vpop.f32.mrb[0].mxu0
        %v5225 = vadd.f32 %v890, %v5224
        %5226 = vmatprep.mubr.bf16.mxu0 %v5043
        %5227 = vmatmul.mubr.bf16.gmra.mrb[0].mxu0 %v5042
        %v5228 = vpop.f32.mrb[0].mxu0
        %v5229 = vadd.f32 %v886, %v5228
        %v5230 = vpop.f32.mrb[0].mxu0
        %v5231 = vadd.f32 %v890, %v5230
        %v5232 = vpop.f32.mrb[0].mxu0
        %v5233 = vadd.f32 %v886, %v5232
        %v5234 = vpop.f32.mrb[0].mxu0
        %v5235 = vadd.f32 %v890, %v5234
        %5236 = vdwg.mxu0
        %5237 = vmatprep.subr.bf16.mxu0 %v616
        %5238 = vmatpush1.bf16.msra.mxu0 %v615
        %5239 = vmatprep.subr.bf16.mxu0 %v620
        %5240 = vmatpush1.bf16.msra.mxu0 %v619
        %5241 = vmatprep.subr.bf16.mxu0 %v624
        %5242 = vmatpush1.bf16.msra.mxu0 %v623
        %5243 = vmatprep.subr.bf16.mxu0 %v628
        %5244 = vmatpush1.bf16.msra.mxu0 %v627
        %5245 = vmatprep.subr.bf16.mxu0 %v632
        %5246 = vmatpush1.bf16.msra.mxu0 %v631
        %5247 = vmatprep.subr.bf16.mxu0 %v636
        %5248 = vmatpush1.bf16.msra.mxu0 %v635
        %5249 = vmatprep.subr.bf16.mxu0 %v640
        %5250 = vmatpush1.bf16.msra.mxu0 %v639
        %5251 = vmatprep.subr.bf16.mxu0 %v644
        %5252 = vmatpush1.bf16.msra.mxu0 %v643
        %5253 = vmatprep.subr.bf16.mxu0 %v648
        %5254 = vmatpush1.bf16.msra.mxu0 %v647
        %5255 = vmatprep.subr.bf16.mxu0 %v652
        %5256 = vmatpush1.bf16.msra.mxu0 %v651
        %5257 = vmatprep.subr.bf16.mxu0 %v656
        %5258 = vmatpush1.bf16.msra.mxu0 %v655
        %5259 = vmatprep.subr.bf16.mxu0 %v660
        %5260 = vmatpush1.bf16.msra.mxu0 %v659
        %5261 = vmatprep.subr.bf16.mxu0 %v664
        %5262 = vmatpush1.bf16.msra.mxu0 %v663
        %5263 = vmatprep.subr.bf16.mxu0 %v668
        %5264 = vmatpush1.bf16.msra.mxu0 %v667
        %5265 = vmatprep.subr.bf16.mxu0 %v672
        %5266 = vmatpush1.bf16.msra.mxu0 %v671
        %5267 = vmatprep.subr.bf16.mxu0 %v676
        %5268 = vmatpush1.bf16.msra.mxu0 %v675
        %5269 = vmatprep.mubr.bf16.mxu0 %v5013
        %5270 = vmatmul.mubr.bf16.gmra.mrb[0].mxu0 %v5012
        %v5271 = vpop.f32.mrb[0].mxu0
        %v5272 = vadd.f32 %v894, %v5271
        %v5273 = vpop.f32.mrb[0].mxu0
        %v5274 = vadd.f32 %v898, %v5273
        %v5275 = vpop.f32.mrb[0].mxu0
        %v5276 = vadd.f32 %v894, %v5275
        %v5277 = vpop.f32.mrb[0].mxu0
        %v5278 = vadd.f32 %v898, %v5277
        %5279 = vmatprep.mubr.bf16.mxu0 %v5015
        %5280 = vmatmul.mubr.bf16.gmra.mrb[0].mxu0 %v5014
        %v5281 = vpop.f32.mrb[0].mxu0
        %v5282 = vadd.f32 %v894, %v5281
        %v5283 = vpop.f32.mrb[0].mxu0
        %v5284 = vadd.f32 %v898, %v5283
        %v5285 = vpop.f32.mrb[0].mxu0
        %v5286 = vadd.f32 %v894, %v5285
        %v5287 = vpop.f32.mrb[0].mxu0
        %v5288 = vadd.f32 %v898, %v5287
        %5289 = vmatprep.mubr.bf16.mxu0 %v5017
        %5290 = vmatmul.mubr.bf16.gmra.mrb[0].mxu0 %v5016
        %v5291 = vpop.f32.mrb[0].mxu0
        %v5292 = vadd.f32 %v894, %v5291
        %v5293 = vpop.f32.mrb[0].mxu0
        %v5294 = vadd.f32 %v898, %v5293
        %v5295 = vpop.f32.mrb[0].mxu0
        %v5296 = vadd.f32 %v894, %v5295
        %v5297 = vpop.f32.mrb[0].mxu0
        %v5298 = vadd.f32 %v898, %v5297
        %5299 = vmatprep.mubr.bf16.mxu0 %v5019
        %5300 = vmatmul.mubr.bf16.gmra.mrb[0].mxu0 %v5018
        %v5301 = vpop.f32.mrb[0].mxu0
        %v5302 = vadd.f32 %v894, %v5301
        %v5303 = vpop.f32.mrb[0].mxu0
        %v5304 = vadd.f32 %v898, %v5303
        %v5305 = vpop.f32.mrb[0].mxu0
        %v5306 = vadd.f32 %v894, %v5305
        %v5307 = vpop.f32.mrb[0].mxu0
        %v5308 = vadd.f32 %v898, %v5307
        %5309 = vmatprep.mubr.bf16.mxu0 %v5021
        %5310 = vmatmul.mubr.bf16.gmra.mrb[0].mxu0 %v5020
        %v5311 = vpop.f32.mrb[0].mxu0
        %v5312 = vadd.f32 %v894, %v5311
        %v5313 = vpop.f32.mrb[0].mxu0
        %v5314 = vadd.f32 %v898, %v5313
        %v5315 = vpop.f32.mrb[0].mxu0
        %v5316 = vadd.f32 %v894, %v5315
        %v5317 = vpop.f32.mrb[0].mxu0
        %v5318 = vadd.f32 %v898, %v5317
        %5319 = vmatprep.mubr.bf16.mxu0 %v5023
        %5320 = vmatmul.mubr.bf16.gmra.mrb[0].mxu0 %v5022
        %v5321 = vpop.f32.mrb[0].mxu0
        %v5322 = vadd.f32 %v894, %v5321
        %v5323 = vpop.f32.mrb[0].mxu0
        %v5324 = vadd.f32 %v898, %v5323
        %v5325 = vpop.f32.mrb[0].mxu0
        %v5326 = vadd.f32 %v894, %v5325
        %v5327 = vpop.f32.mrb[0].mxu0
        %v5328 = vadd.f32 %v898, %v5327
        %5329 = vmatprep.mubr.bf16.mxu0 %v5025
        %5330 = vmatmul.mubr.bf16.gmra.mrb[0].mxu0 %v5024
        %v5331 = vpop.f32.mrb[0].mxu0
        %v5332 = vadd.f32 %v894, %v5331
        %v5333 = vpop.f32.mrb[0].mxu0
        %v5334 = vadd.f32 %v898, %v5333
        %v5335 = vpop.f32.mrb[0].mxu0
        %v5336 = vadd.f32 %v894, %v5335
        %v5337 = vpop.f32.mrb[0].mxu0
        %v5338 = vadd.f32 %v898, %v5337
        %5339 = vmatprep.mubr.bf16.mxu0 %v5027
        %5340 = vmatmul.mubr.bf16.gmra.mrb[0].mxu0 %v5026
        %v5341 = vpop.f32.mrb[0].mxu0
        %v5342 = vadd.f32 %v894, %v5341
        %v5343 = vpop.f32.mrb[0].mxu0
        %v5344 = vadd.f32 %v898, %v5343
        %v5345 = vpop.f32.mrb[0].mxu0
        %v5346 = vadd.f32 %v894, %v5345
        %v5347 = vpop.f32.mrb[0].mxu0
        %v5348 = vadd.f32 %v898, %v5347
        %5349 = vmatprep.mubr.bf16.mxu0 %v5029
        %5350 = vmatmul.mubr.bf16.gmra.mrb[0].mxu0 %v5028
        %v5351 = vpop.f32.mrb[0].mxu0
        %v5352 = vadd.f32 %v894, %v5351
        %v5353 = vpop.f32.mrb[0].mxu0
        %v5354 = vadd.f32 %v898, %v5353
        %v5355 = vpop.f32.mrb[0].mxu0
        %v5356 = vadd.f32 %v894, %v5355
        %v5357 = vpop.f32.mrb[0].mxu0
        %v5358 = vadd.f32 %v898, %v5357
        %5359 = vmatprep.mubr.bf16.mxu0 %v5031
        %5360 = vmatmul.mubr.bf16.gmra.mrb[0].mxu0 %v5030
        %v5361 = vpop.f32.mrb[0].mxu0
        %v5362 = vadd.f32 %v894, %v5361
        %v5363 = vpop.f32.mrb[0].mxu0
        %v5364 = vadd.f32 %v898, %v5363
        %v5365 = vpop.f32.mrb[0].mxu0
        %v5366 = vadd.f32 %v894, %v5365
        %v5367 = vpop.f32.mrb[0].mxu0
        %v5368 = vadd.f32 %v898, %v5367
        %5369 = vmatprep.mubr.bf16.mxu0 %v5033
        %5370 = vmatmul.mubr.bf16.gmra.mrb[0].mxu0 %v5032
        %v5371 = vpop.f32.mrb[0].mxu0
        %v5372 = vadd.f32 %v894, %v5371
        %v5373 = vpop.f32.mrb[0].mxu0
        %v5374 = vadd.f32 %v898, %v5373
        %v5375 = vpop.f32.mrb[0].mxu0
        %v5376 = vadd.f32 %v894, %v5375
        %v5377 = vpop.f32.mrb[0].mxu0
        %v5378 = vadd.f32 %v898, %v5377
        %5379 = vmatprep.mubr.bf16.mxu0 %v5035
        %5380 = vmatmul.mubr.bf16.gmra.mrb[0].mxu0 %v5034
        %v5381 = vpop.f32.mrb[0].mxu0
        %v5382 = vadd.f32 %v894, %v5381
        %v5383 = vpop.f32.mrb[0].mxu0
        %v5384 = vadd.f32 %v898, %v5383
        %v5385 = vpop.f32.mrb[0].mxu0
        %v5386 = vadd.f32 %v894, %v5385
        %v5387 = vpop.f32.mrb[0].mxu0
        %v5388 = vadd.f32 %v898, %v5387
        %5389 = vmatprep.mubr.bf16.mxu0 %v5037
        %5390 = vmatmul.mubr.bf16.gmra.mrb[0].mxu0 %v5036
        %v5391 = vpop.f32.mrb[0].mxu0
        %v5392 = vadd.f32 %v894, %v5391
        %v5393 = vpop.f32.mrb[0].mxu0
        %v5394 = vadd.f32 %v898, %v5393
        %v5395 = vpop.f32.mrb[0].mxu0
        %v5396 = vadd.f32 %v894, %v5395
        %v5397 = vpop.f32.mrb[0].mxu0
        %v5398 = vadd.f32 %v898, %v5397
        %5399 = vmatprep.mubr.bf16.mxu0 %v5039
        %5400 = vmatmul.mubr.bf16.gmra.mrb[0].mxu0 %v5038
        %v5401 = vpop.f32.mrb[0].mxu0
        %v5402 = vadd.f32 %v894, %v5401
        %v5403 = vpop.f32.mrb[0].mxu0
        %v5404 = vadd.f32 %v898, %v5403
        %v5405 = vpop.f32.mrb[0].mxu0
        %v5406 = vadd.f32 %v894, %v5405
        %v5407 = vpop.f32.mrb[0].mxu0
        %v5408 = vadd.f32 %v898, %v5407
        %5409 = vmatprep.mubr.bf16.mxu0 %v5041
        %5410 = vmatmul.mubr.bf16.gmra.mrb[0].mxu0 %v5040
        %v5411 = vpop.f32.mrb[0].mxu0
        %v5412 = vadd.f32 %v894, %v5411
        %v5413 = vpop.f32.mrb[0].mxu0
        %v5414 = vadd.f32 %v898, %v5413
        %v5415 = vpop.f32.mrb[0].mxu0
        %v5416 = vadd.f32 %v894, %v5415
        %v5417 = vpop.f32.mrb[0].mxu0
        %v5418 = vadd.f32 %v898, %v5417
        %5419 = vmatprep.mubr.bf16.mxu0 %v5043
        %5420 = vmatmul.mubr.bf16.gmra.mrb[0].mxu0 %v5042
        %v5421 = vpop.f32.mrb[0].mxu0
        %v5422 = vadd.f32 %v894, %v5421
        %v5423 = vpop.f32.mrb[0].mxu0
        %v5424 = vadd.f32 %v898, %v5423
        %v5425 = vpop.f32.mrb[0].mxu0
        %v5426 = vadd.f32 %v894, %v5425
        %v5427 = vpop.f32.mrb[0].mxu0
        %v5428 = vadd.f32 %v898, %v5427
        %5429 = vdwg.mxu0
        %s5430 = scalar_lea.vmem %s440, 2048 [#allocation13]
        %v5431 = vld [vmem:[%s5430] sm:$0xff]
        %v5432 = vld [vmem:[%s5430 + $0x8] sm:$0xff]
        %v5433 = vld [vmem:[%s5430 + $0x10] sm:$0xff]
        %v5434 = vld [vmem:[%s5430 + $0x18] sm:$0xff]
        %v5435 = vld [vmem:[%s5430 + $0x20] sm:$0xff]
        %v5436 = vld [vmem:[%s5430 + $0x28] sm:$0xff]
        %v5437 = vld [vmem:[%s5430 + $0x30] sm:$0xff]
        %v5438 = vld [vmem:[%s5430 + $0x38] sm:$0xff]
        %v5439 = vld [vmem:[%s5430 + $0x40] sm:$0xff]
        %v5440 = vld [vmem:[%s5430 + $0x48] sm:$0xff]
        %v5441 = vld [vmem:[%s5430 + $0x50] sm:$0xff]
        %v5442 = vld [vmem:[%s5430 + $0x58] sm:$0xff]
        %v5443 = vld [vmem:[%s5430 + $0x60] sm:$0xff]
        %v5444 = vld [vmem:[%s5430 + $0x68] sm:$0xff]
        %v5445 = vld [vmem:[%s5430 + $0x70] sm:$0xff]
        %v5446 = vld [vmem:[%s5430 + $0x78] sm:$0xff]
        %v5447 = vld [vmem:[%s5430 + $0x80] sm:$0xff]
        %v5448 = vld [vmem:[%s5430 + $0x88] sm:$0xff]
        %v5449 = vld [vmem:[%s5430 + $0x90] sm:$0xff]
        %v5450 = vld [vmem:[%s5430 + $0x98] sm:$0xff]
        %v5451 = vld [vmem:[%s5430 + $0xa0] sm:$0xff]
        %v5452 = vld [vmem:[%s5430 + $0xa8] sm:$0xff]
        %v5453 = vld [vmem:[%s5430 + $0xb0] sm:$0xff]
        %v5454 = vld [vmem:[%s5430 + $0xb8] sm:$0xff]
        %v5455 = vld [vmem:[%s5430 + $0xc0] sm:$0xff]
        %v5456 = vld [vmem:[%s5430 + $0xc8] sm:$0xff]
        %v5457 = vld [vmem:[%s5430 + $0xd0] sm:$0xff]
        %v5458 = vld [vmem:[%s5430 + $0xd8] sm:$0xff]
        %v5459 = vld [vmem:[%s5430 + $0xe0] sm:$0xff]
        %v5460 = vld [vmem:[%s5430 + $0xe8] sm:$0xff]
        %v5461 = vld [vmem:[%s5430 + $0xf0] sm:$0xff]
        %v5462 = vld [vmem:[%s5430 + $0xf8] sm:$0xff]
        %v5463 = vld [vmem:[%s5430 + $0x100] sm:$0xff]
        %v5464 = vld [vmem:[%s5430 + $0x108] sm:$0xff]
        %v5465 = vld [vmem:[%s5430 + $0x110] sm:$0xff]
        %v5466 = vld [vmem:[%s5430 + $0x118] sm:$0xff]
        %v5467 = vld [vmem:[%s5430 + $0x120] sm:$0xff]
        %v5468 = vld [vmem:[%s5430 + $0x128] sm:$0xff]
        %v5469 = vld [vmem:[%s5430 + $0x130] sm:$0xff]
        %v5470 = vld [vmem:[%s5430 + $0x138] sm:$0xff]
        %v5471 = vld [vmem:[%s5430 + $0x140] sm:$0xff]
        %v5472 = vld [vmem:[%s5430 + $0x148] sm:$0xff]
        %v5473 = vld [vmem:[%s5430 + $0x150] sm:$0xff]
        %v5474 = vld [vmem:[%s5430 + $0x158] sm:$0xff]
        %v5475 = vld [vmem:[%s5430 + $0x160] sm:$0xff]
        %v5476 = vld [vmem:[%s5430 + $0x168] sm:$0xff]
        %v5477 = vld [vmem:[%s5430 + $0x170] sm:$0xff]
        %v5478 = vld [vmem:[%s5430 + $0x178] sm:$0xff]
        %v5479 = vld [vmem:[%s5430 + $0x180] sm:$0xff]
        %v5480 = vld [vmem:[%s5430 + $0x188] sm:$0xff]
        %v5481 = vld [vmem:[%s5430 + $0x190] sm:$0xff]
        %v5482 = vld [vmem:[%s5430 + $0x198] sm:$0xff]
        %v5483 = vld [vmem:[%s5430 + $0x1a0] sm:$0xff]
        %v5484 = vld [vmem:[%s5430 + $0x1a8] sm:$0xff]
        %v5485 = vld [vmem:[%s5430 + $0x1b0] sm:$0xff]
        %v5486 = vld [vmem:[%s5430 + $0x1b8] sm:$0xff]
        %v5487 = vld [vmem:[%s5430 + $0x1c0] sm:$0xff]
        %v5488 = vld [vmem:[%s5430 + $0x1c8] sm:$0xff]
        %v5489 = vld [vmem:[%s5430 + $0x1d0] sm:$0xff]
        %v5490 = vld [vmem:[%s5430 + $0x1d8] sm:$0xff]
        %v5491 = vld [vmem:[%s5430 + $0x1e0] sm:$0xff]
        %v5492 = vld [vmem:[%s5430 + $0x1e8] sm:$0xff]
        %v5493 = vld [vmem:[%s5430 + $0x1f0] sm:$0xff]
        %v5494 = vld [vmem:[%s5430 + $0x1f8] sm:$0xff]
        %v5495 = vld [vmem:[%s5430 + $0x200] sm:$0xff]
        %v5496 = vld [vmem:[%s5430 + $0x208] sm:$0xff]
        %v5497 = vld [vmem:[%s5430 + $0x210] sm:$0xff]
        %v5498 = vld [vmem:[%s5430 + $0x218] sm:$0xff]
        %v5499 = vld [vmem:[%s5430 + $0x220] sm:$0xff]
        %v5500 = vld [vmem:[%s5430 + $0x228] sm:$0xff]
        %v5501 = vld [vmem:[%s5430 + $0x230] sm:$0xff]
        %v5502 = vld [vmem:[%s5430 + $0x238] sm:$0xff]
        %v5503 = vld [vmem:[%s5430 + $0x240] sm:$0xff]
        %v5504 = vld [vmem:[%s5430 + $0x248] sm:$0xff]
        %v5505 = vld [vmem:[%s5430 + $0x250] sm:$0xff]
        %v5506 = vld [vmem:[%s5430 + $0x258] sm:$0xff]
        %v5507 = vld [vmem:[%s5430 + $0x260] sm:$0xff]
        %v5508 = vld [vmem:[%s5430 + $0x268] sm:$0xff]
        %v5509 = vld [vmem:[%s5430 + $0x270] sm:$0xff]
        %v5510 = vld [vmem:[%s5430 + $0x278] sm:$0xff]
        %v5511 = vld [vmem:[%s5430 + $0x280] sm:$0xff]
        %v5512 = vld [vmem:[%s5430 + $0x288] sm:$0xff]
        %v5513 = vld [vmem:[%s5430 + $0x290] sm:$0xff]
        %v5514 = vld [vmem:[%s5430 + $0x298] sm:$0xff]
        %v5515 = vld [vmem:[%s5430 + $0x2a0] sm:$0xff]
        %v5516 = vld [vmem:[%s5430 + $0x2a8] sm:$0xff]
        %v5517 = vld [vmem:[%s5430 + $0x2b0] sm:$0xff]
        %v5518 = vld [vmem:[%s5430 + $0x2b8] sm:$0xff]
        %v5519 = vld [vmem:[%s5430 + $0x2c0] sm:$0xff]
        %v5520 = vld [vmem:[%s5430 + $0x2c8] sm:$0xff]
        %v5521 = vld [vmem:[%s5430 + $0x2d0] sm:$0xff]
        %v5522 = vld [vmem:[%s5430 + $0x2d8] sm:$0xff]
        %v5523 = vld [vmem:[%s5430 + $0x2e0] sm:$0xff]
        %v5524 = vld [vmem:[%s5430 + $0x2e8] sm:$0xff]
        %v5525 = vld [vmem:[%s5430 + $0x2f0] sm:$0xff]
        %v5526 = vld [vmem:[%s5430 + $0x2f8] sm:$0xff]
        %v5527 = vld [vmem:[%s5430 + $0x300] sm:$0xff]
        %v5528 = vld [vmem:[%s5430 + $0x308] sm:$0xff]
        %v5529 = vld [vmem:[%s5430 + $0x310] sm:$0xff]
        %v5530 = vld [vmem:[%s5430 + $0x318] sm:$0xff]
        %v5531 = vld [vmem:[%s5430 + $0x320] sm:$0xff]
        %v5532 = vld [vmem:[%s5430 + $0x328] sm:$0xff]
        %v5533 = vld [vmem:[%s5430 + $0x330] sm:$0xff]
        %v5534 = vld [vmem:[%s5430 + $0x338] sm:$0xff]
        %v5535 = vld [vmem:[%s5430 + $0x340] sm:$0xff]
        %v5536 = vld [vmem:[%s5430 + $0x348] sm:$0xff]
        %v5537 = vld [vmem:[%s5430 + $0x350] sm:$0xff]
        %v5538 = vld [vmem:[%s5430 + $0x358] sm:$0xff]
        %v5539 = vld [vmem:[%s5430 + $0x360] sm:$0xff]
        %v5540 = vld [vmem:[%s5430 + $0x368] sm:$0xff]
        %v5541 = vld [vmem:[%s5430 + $0x370] sm:$0xff]
        %v5542 = vld [vmem:[%s5430 + $0x378] sm:$0xff]
        %v5543 = vld [vmem:[%s5430 + $0x380] sm:$0xff]
        %v5544 = vld [vmem:[%s5430 + $0x388] sm:$0xff]
        %v5545 = vld [vmem:[%s5430 + $0x390] sm:$0xff]
        %v5546 = vld [vmem:[%s5430 + $0x398] sm:$0xff]
        %v5547 = vld [vmem:[%s5430 + $0x3a0] sm:$0xff]
        %v5548 = vld [vmem:[%s5430 + $0x3a8] sm:$0xff]
        %v5549 = vld [vmem:[%s5430 + $0x3b0] sm:$0xff]
        %v5550 = vld [vmem:[%s5430 + $0x3b8] sm:$0xff]
        %v5551 = vld [vmem:[%s5430 + $0x3c0] sm:$0xff]
        %v5552 = vld [vmem:[%s5430 + $0x3c8] sm:$0xff]
        %v5553 = vld [vmem:[%s5430 + $0x3d0] sm:$0xff]
        %v5554 = vld [vmem:[%s5430 + $0x3d8] sm:$0xff]
        %v5555 = vld [vmem:[%s5430 + $0x3e0] sm:$0xff]
        %v5556 = vld [vmem:[%s5430 + $0x3e8] sm:$0xff]
        %v5557 = vld [vmem:[%s5430 + $0x3f0] sm:$0xff]
        %v5558 = vld [vmem:[%s5430 + $0x3f8] sm:$0xff]
        %vm5559 = vcmp.gt.f32.partialorder %v5079, %v5431
        %vm5560 = vcmp.gt.f32.partialorder %v5081, %v5432
        %vm5561 = vcmp.gt.f32.partialorder %v5272, %v5433
        %vm5562 = vcmp.gt.f32.partialorder %v5274, %v5434
        %vm5563 = vcmp.gt.f32.partialorder %v5083, %v5435
        %vm5564 = vcmp.gt.f32.partialorder %v5085, %v5436
        %vm5565 = vcmp.gt.f32.partialorder %v5276, %v5437
        %vm5566 = vcmp.gt.f32.partialorder %v5278, %v5438
        %vm5567 = vcmp.gt.f32.partialorder %v5089, %v5439
        %vm5568 = vcmp.gt.f32.partialorder %v5091, %v5440
        %vm5569 = vcmp.gt.f32.partialorder %v5282, %v5441
        %vm5570 = vcmp.gt.f32.partialorder %v5284, %v5442
        %vm5571 = vcmp.gt.f32.partialorder %v5093, %v5443
        %vm5572 = vcmp.gt.f32.partialorder %v5095, %v5444
        %vm5573 = vcmp.gt.f32.partialorder %v5286, %v5445
        %vm5574 = vcmp.gt.f32.partialorder %v5288, %v5446
        %vm5575 = vcmp.gt.f32.partialorder %v5099, %v5447
        %vm5576 = vcmp.gt.f32.partialorder %v5101, %v5448
        %vm5577 = vcmp.gt.f32.partialorder %v5292, %v5449
        %vm5578 = vcmp.gt.f32.partialorder %v5294, %v5450
        %vm5579 = vcmp.gt.f32.partialorder %v5103, %v5451
        %vm5580 = vcmp.gt.f32.partialorder %v5105, %v5452
        %vm5581 = vcmp.gt.f32.partialorder %v5296, %v5453
        %vm5582 = vcmp.gt.f32.partialorder %v5298, %v5454
        %vm5583 = vcmp.gt.f32.partialorder %v5109, %v5455
        %vm5584 = vcmp.gt.f32.partialorder %v5111, %v5456
        %vm5585 = vcmp.gt.f32.partialorder %v5302, %v5457
        %vm5586 = vcmp.gt.f32.partialorder %v5304, %v5458
        %vm5587 = vcmp.gt.f32.partialorder %v5113, %v5459
        %vm5588 = vcmp.gt.f32.partialorder %v5115, %v5460
        %vm5589 = vcmp.gt.f32.partialorder %v5306, %v5461
        %vm5590 = vcmp.gt.f32.partialorder %v5308, %v5462
        %vm5591 = vcmp.gt.f32.partialorder %v5119, %v5463
        %vm5592 = vcmp.gt.f32.partialorder %v5121, %v5464
        %vm5593 = vcmp.gt.f32.partialorder %v5312, %v5465
        %vm5594 = vcmp.gt.f32.partialorder %v5314, %v5466
        %vm5595 = vcmp.gt.f32.partialorder %v5123, %v5467
        %vm5596 = vcmp.gt.f32.partialorder %v5125, %v5468
        %vm5597 = vcmp.gt.f32.partialorder %v5316, %v5469
        %vm5598 = vcmp.gt.f32.partialorder %v5318, %v5470
        %vm5599 = vcmp.gt.f32.partialorder %v5129, %v5471
        %vm5600 = vcmp.gt.f32.partialorder %v5131, %v5472
        %vm5601 = vcmp.gt.f32.partialorder %v5322, %v5473
        %vm5602 = vcmp.gt.f32.partialorder %v5324, %v5474
        %vm5603 = vcmp.gt.f32.partialorder %v5133, %v5475
        %vm5604 = vcmp.gt.f32.partialorder %v5135, %v5476
        %vm5605 = vcmp.gt.f32.partialorder %v5326, %v5477
        %vm5606 = vcmp.gt.f32.partialorder %v5328, %v5478
        %vm5607 = vcmp.gt.f32.partialorder %v5139, %v5479
        %vm5608 = vcmp.gt.f32.partialorder %v5141, %v5480
        %vm5609 = vcmp.gt.f32.partialorder %v5332, %v5481
        %vm5610 = vcmp.gt.f32.partialorder %v5334, %v5482
        %vm5611 = vcmp.gt.f32.partialorder %v5143, %v5483
        %vm5612 = vcmp.gt.f32.partialorder %v5145, %v5484
        %vm5613 = vcmp.gt.f32.partialorder %v5336, %v5485
        %vm5614 = vcmp.gt.f32.partialorder %v5338, %v5486
        %vm5615 = vcmp.gt.f32.partialorder %v5149, %v5487
        %vm5616 = vcmp.gt.f32.partialorder %v5151, %v5488
        %vm5617 = vcmp.gt.f32.partialorder %v5342, %v5489
        %vm5618 = vcmp.gt.f32.partialorder %v5344, %v5490
        %vm5619 = vcmp.gt.f32.partialorder %v5153, %v5491
        %vm5620 = vcmp.gt.f32.partialorder %v5155, %v5492
        %vm5621 = vcmp.gt.f32.partialorder %v5346, %v5493
        %vm5622 = vcmp.gt.f32.partialorder %v5348, %v5494
        %vm5623 = vcmp.gt.f32.partialorder %v5159, %v5495
        %vm5624 = vcmp.gt.f32.partialorder %v5161, %v5496
        %vm5625 = vcmp.gt.f32.partialorder %v5352, %v5497
        %vm5626 = vcmp.gt.f32.partialorder %v5354, %v5498
        %vm5627 = vcmp.gt.f32.partialorder %v5163, %v5499
        %vm5628 = vcmp.gt.f32.partialorder %v5165, %v5500
        %vm5629 = vcmp.gt.f32.partialorder %v5356, %v5501
        %vm5630 = vcmp.gt.f32.partialorder %v5358, %v5502
        %vm5631 = vcmp.gt.f32.partialorder %v5169, %v5503
        %vm5632 = vcmp.gt.f32.partialorder %v5171, %v5504
        %vm5633 = vcmp.gt.f32.partialorder %v5362, %v5505
        %vm5634 = vcmp.gt.f32.partialorder %v5364, %v5506
        %vm5635 = vcmp.gt.f32.partialorder %v5173, %v5507
        %vm5636 = vcmp.gt.f32.partialorder %v5175, %v5508
        %vm5637 = vcmp.gt.f32.partialorder %v5366, %v5509
        %vm5638 = vcmp.gt.f32.partialorder %v5368, %v5510
        %vm5639 = vcmp.gt.f32.partialorder %v5179, %v5511
        %vm5640 = vcmp.gt.f32.partialorder %v5181, %v5512
        %vm5641 = vcmp.gt.f32.partialorder %v5372, %v5513
        %vm5642 = vcmp.gt.f32.partialorder %v5374, %v5514
        %vm5643 = vcmp.gt.f32.partialorder %v5183, %v5515
        %vm5644 = vcmp.gt.f32.partialorder %v5185, %v5516
        %vm5645 = vcmp.gt.f32.partialorder %v5376, %v5517
        %vm5646 = vcmp.gt.f32.partialorder %v5378, %v5518
        %vm5647 = vcmp.gt.f32.partialorder %v5189, %v5519
        %vm5648 = vcmp.gt.f32.partialorder %v5191, %v5520
        %vm5649 = vcmp.gt.f32.partialorder %v5382, %v5521
        %vm5650 = vcmp.gt.f32.partialorder %v5384, %v5522
        %vm5651 = vcmp.gt.f32.partialorder %v5193, %v5523
        %vm5652 = vcmp.gt.f32.partialorder %v5195, %v5524
        %vm5653 = vcmp.gt.f32.partialorder %v5386, %v5525
        %vm5654 = vcmp.gt.f32.partialorder %v5388, %v5526
        %vm5655 = vcmp.gt.f32.partialorder %v5199, %v5527
        %vm5656 = vcmp.gt.f32.partialorder %v5201, %v5528
        %vm5657 = vcmp.gt.f32.partialorder %v5392, %v5529
        %vm5658 = vcmp.gt.f32.partialorder %v5394, %v5530
        %vm5659 = vcmp.gt.f32.partialorder %v5203, %v5531
        %vm5660 = vcmp.gt.f32.partialorder %v5205, %v5532
        %vm5661 = vcmp.gt.f32.partialorder %v5396, %v5533
        %vm5662 = vcmp.gt.f32.partialorder %v5398, %v5534
        %vm5663 = vcmp.gt.f32.partialorder %v5209, %v5535
        %vm5664 = vcmp.gt.f32.partialorder %v5211, %v5536
        %vm5665 = vcmp.gt.f32.partialorder %v5402, %v5537
        %vm5666 = vcmp.gt.f32.partialorder %v5404, %v5538
        %vm5667 = vcmp.gt.f32.partialorder %v5213, %v5539
        %vm5668 = vcmp.gt.f32.partialorder %v5215, %v5540
        %vm5669 = vcmp.gt.f32.partialorder %v5406, %v5541
        %vm5670 = vcmp.gt.f32.partialorder %v5408, %v5542
        %vm5671 = vcmp.gt.f32.partialorder %v5219, %v5543
        %vm5672 = vcmp.gt.f32.partialorder %v5221, %v5544
        %vm5673 = vcmp.gt.f32.partialorder %v5412, %v5545
        %vm5674 = vcmp.gt.f32.partialorder %v5414, %v5546
        %vm5675 = vcmp.gt.f32.partialorder %v5223, %v5547
        %vm5676 = vcmp.gt.f32.partialorder %v5225, %v5548
        %vm5677 = vcmp.gt.f32.partialorder %v5416, %v5549
        %vm5678 = vcmp.gt.f32.partialorder %v5418, %v5550
        %vm5679 = vcmp.gt.f32.partialorder %v5229, %v5551
        %vm5680 = vcmp.gt.f32.partialorder %v5231, %v5552
        %vm5681 = vcmp.gt.f32.partialorder %v5422, %v5553
        %vm5682 = vcmp.gt.f32.partialorder %v5424, %v5554
        %vm5683 = vcmp.gt.f32.partialorder %v5233, %v5555
        %vm5684 = vcmp.gt.f32.partialorder %v5235, %v5556
        %vm5685 = vcmp.gt.f32.partialorder %v5426, %v5557
        %vm5686 = vcmp.gt.f32.partialorder %v5428, %v5558
        %v5687 = vsel %vm5559, 1, 0
        %v5688 = vsel %vm5560, 1, 0
        %v5689 = vsel %vm5561, 1, 0
        %v5690 = vsel %vm5562, 1, 0
        %v5691 = vsel %vm5563, 1, 0
        %v5692 = vsel %vm5564, 1, 0
        %v5693 = vsel %vm5565, 1, 0
        %v5694 = vsel %vm5566, 1, 0
        %v5695 = vsel %vm5567, 1, 0
        %v5696 = vsel %vm5568, 1, 0
        %v5697 = vsel %vm5569, 1, 0
        %v5698 = vsel %vm5570, 1, 0
        %v5699 = vsel %vm5571, 1, 0
        %v5700 = vsel %vm5572, 1, 0
        %v5701 = vsel %vm5573, 1, 0
        %v5702 = vsel %vm5574, 1, 0
        %v5703 = vsel %vm5575, 1, 0
        %v5704 = vsel %vm5576, 1, 0
        %v5705 = vsel %vm5577, 1, 0
        %v5706 = vsel %vm5578, 1, 0
        %v5707 = vsel %vm5579, 1, 0
        %v5708 = vsel %vm5580, 1, 0
        %v5709 = vsel %vm5581, 1, 0
        %v5710 = vsel %vm5582, 1, 0
        %v5711 = vsel %vm5583, 1, 0
        %v5712 = vsel %vm5584, 1, 0
        %v5713 = vsel %vm5585, 1, 0
        %v5714 = vsel %vm5586, 1, 0
        %v5715 = vsel %vm5587, 1, 0
        %v5716 = vsel %vm5588, 1, 0
        %v5717 = vsel %vm5589, 1, 0
        %v5718 = vsel %vm5590, 1, 0
        %v5719 = vsel %vm5591, 1, 0
        %v5720 = vsel %vm5592, 1, 0
        %v5721 = vsel %vm5593, 1, 0
        %v5722 = vsel %vm5594, 1, 0
        %v5723 = vsel %vm5595, 1, 0
        %v5724 = vsel %vm5596, 1, 0
        %v5725 = vsel %vm5597, 1, 0
        %v5726 = vsel %vm5598, 1, 0
        %v5727 = vsel %vm5599, 1, 0
        %v5728 = vsel %vm5600, 1, 0
        %v5729 = vsel %vm5601, 1, 0
        %v5730 = vsel %vm5602, 1, 0
        %v5731 = vsel %vm5603, 1, 0
        %v5732 = vsel %vm5604, 1, 0
        %v5733 = vsel %vm5605, 1, 0
        %v5734 = vsel %vm5606, 1, 0
        %v5735 = vsel %vm5607, 1, 0
        %v5736 = vsel %vm5608, 1, 0
        %v5737 = vsel %vm5609, 1, 0
        %v5738 = vsel %vm5610, 1, 0
        %v5739 = vsel %vm5611, 1, 0
        %v5740 = vsel %vm5612, 1, 0
        %v5741 = vsel %vm5613, 1, 0
        %v5742 = vsel %vm5614, 1, 0
        %v5743 = vsel %vm5615, 1, 0
        %v5744 = vsel %vm5616, 1, 0
        %v5745 = vsel %vm5617, 1, 0
        %v5746 = vsel %vm5618, 1, 0
        %v5747 = vsel %vm5619, 1, 0
        %v5748 = vsel %vm5620, 1, 0
        %v5749 = vsel %vm5621, 1, 0
        %v5750 = vsel %vm5622, 1, 0
        %v5751 = vsel %vm5623, 1, 0
        %v5752 = vsel %vm5624, 1, 0
        %v5753 = vsel %vm5625, 1, 0
        %v5754 = vsel %vm5626, 1, 0
        %v5755 = vsel %vm5627, 1, 0
        %v5756 = vsel %vm5628, 1, 0
        %v5757 = vsel %vm5629, 1, 0
        %v5758 = vsel %vm5630, 1, 0
        %v5759 = vsel %vm5631, 1, 0
        %v5760 = vsel %vm5632, 1, 0
        %v5761 = vsel %vm5633, 1, 0
        %v5762 = vsel %vm5634, 1, 0
        %v5763 = vsel %vm5635, 1, 0
        %v5764 = vsel %vm5636, 1, 0
        %v5765 = vsel %vm5637, 1, 0
        %v5766 = vsel %vm5638, 1, 0
        %v5767 = vsel %vm5639, 1, 0
        %v5768 = vsel %vm5640, 1, 0
        %v5769 = vsel %vm5641, 1, 0
        %v5770 = vsel %vm5642, 1, 0
        %v5771 = vsel %vm5643, 1, 0
        %v5772 = vsel %vm5644, 1, 0
        %v5773 = vsel %vm5645, 1, 0
        %v5774 = vsel %vm5646, 1, 0
        %v5775 = vsel %vm5647, 1, 0
        %v5776 = vsel %vm5648, 1, 0
        %v5777 = vsel %vm5649, 1, 0
        %v5778 = vsel %vm5650, 1, 0
        %v5779 = vsel %vm5651, 1, 0
        %v5780 = vsel %vm5652, 1, 0
        %v5781 = vsel %vm5653, 1, 0
        %v5782 = vsel %vm5654, 1, 0
        %v5783 = vsel %vm5655, 1, 0
        %v5784 = vsel %vm5656, 1, 0
        %v5785 = vsel %vm5657, 1, 0
        %v5786 = vsel %vm5658, 1, 0
        %v5787 = vsel %vm5659, 1, 0
        %v5788 = vsel %vm5660, 1, 0
        %v5789 = vsel %vm5661, 1, 0
        %v5790 = vsel %vm5662, 1, 0
        %v5791 = vsel %vm5663, 1, 0
        %v5792 = vsel %vm5664, 1, 0
        %v5793 = vsel %vm5665, 1, 0
        %v5794 = vsel %vm5666, 1, 0
        %v5795 = vsel %vm5667, 1, 0
        %v5796 = vsel %vm5668, 1, 0
        %v5797 = vsel %vm5669, 1, 0
        %v5798 = vsel %vm5670, 1, 0
        %v5799 = vsel %vm5671, 1, 0
        %v5800 = vsel %vm5672, 1, 0
        %v5801 = vsel %vm5673, 1, 0
        %v5802 = vsel %vm5674, 1, 0
        %v5803 = vsel %vm5675, 1, 0
        %v5804 = vsel %vm5676, 1, 0
        %v5805 = vsel %vm5677, 1, 0
        %v5806 = vsel %vm5678, 1, 0
        %v5807 = vsel %vm5679, 1, 0
        %v5808 = vsel %vm5680, 1, 0
        %v5809 = vsel %vm5681, 1, 0
        %v5810 = vsel %vm5682, 1, 0
        %v5811 = vsel %vm5683, 1, 0
        %v5812 = vsel %vm5684, 1, 0
        %v5813 = vsel %vm5685, 1, 0
        %v5814 = vsel %vm5686, 1, 0
        %v5815 = vcvt.s32.f32 %v5687
        %v5816 = vcvt.s32.f32 %v5688
        %v5817 = vcvt.s32.f32 %v5689
        %v5818 = vcvt.s32.f32 %v5690
        %v5819 = vcvt.s32.f32 %v5691
        %v5820 = vcvt.s32.f32 %v5692
        %v5821 = vcvt.s32.f32 %v5693
        %v5822 = vcvt.s32.f32 %v5694
        %v5823 = vcvt.s32.f32 %v5695
        %v5824 = vcvt.s32.f32 %v5696
        %v5825 = vcvt.s32.f32 %v5697
        %v5826 = vcvt.s32.f32 %v5698
        %v5827 = vcvt.s32.f32 %v5699
        %v5828 = vcvt.s32.f32 %v5700
        %v5829 = vcvt.s32.f32 %v5701
        %v5830 = vcvt.s32.f32 %v5702
        %v5831 = vcvt.s32.f32 %v5703
        %v5832 = vcvt.s32.f32 %v5704
        %v5833 = vcvt.s32.f32 %v5705
        %v5834 = vcvt.s32.f32 %v5706
        %v5835 = vcvt.s32.f32 %v5707
        %v5836 = vcvt.s32.f32 %v5708
        %v5837 = vcvt.s32.f32 %v5709
        %v5838 = vcvt.s32.f32 %v5710
        %v5839 = vcvt.s32.f32 %v5711
        %v5840 = vcvt.s32.f32 %v5712
        %v5841 = vcvt.s32.f32 %v5713
        %v5842 = vcvt.s32.f32 %v5714
        %v5843 = vcvt.s32.f32 %v5715
        %v5844 = vcvt.s32.f32 %v5716
        %v5845 = vcvt.s32.f32 %v5717
        %v5846 = vcvt.s32.f32 %v5718
        %v5847 = vcvt.s32.f32 %v5719
        %v5848 = vcvt.s32.f32 %v5720
        %v5849 = vcvt.s32.f32 %v5721
        %v5850 = vcvt.s32.f32 %v5722
        %v5851 = vcvt.s32.f32 %v5723
        %v5852 = vcvt.s32.f32 %v5724
        %v5853 = vcvt.s32.f32 %v5725
        %v5854 = vcvt.s32.f32 %v5726
        %v5855 = vcvt.s32.f32 %v5727
        %v5856 = vcvt.s32.f32 %v5728
        %v5857 = vcvt.s32.f32 %v5729
        %v5858 = vcvt.s32.f32 %v5730
        %v5859 = vcvt.s32.f32 %v5731
        %v5860 = vcvt.s32.f32 %v5732
        %v5861 = vcvt.s32.f32 %v5733
        %v5862 = vcvt.s32.f32 %v5734
        %v5863 = vcvt.s32.f32 %v5735
        %v5864 = vcvt.s32.f32 %v5736
        %v5865 = vcvt.s32.f32 %v5737
        %v5866 = vcvt.s32.f32 %v5738
        %v5867 = vcvt.s32.f32 %v5739
        %v5868 = vcvt.s32.f32 %v5740
        %v5869 = vcvt.s32.f32 %v5741
        %v5870 = vcvt.s32.f32 %v5742
        %v5871 = vcvt.s32.f32 %v5743
        %v5872 = vcvt.s32.f32 %v5744
        %v5873 = vcvt.s32.f32 %v5745
        %v5874 = vcvt.s32.f32 %v5746
        %v5875 = vcvt.s32.f32 %v5747
        %v5876 = vcvt.s32.f32 %v5748
        %v5877 = vcvt.s32.f32 %v5749
        %v5878 = vcvt.s32.f32 %v5750
        %v5879 = vcvt.s32.f32 %v5751
        %v5880 = vcvt.s32.f32 %v5752
        %v5881 = vcvt.s32.f32 %v5753
        %v5882 = vcvt.s32.f32 %v5754
        %v5883 = vcvt.s32.f32 %v5755
        %v5884 = vcvt.s32.f32 %v5756
        %v5885 = vcvt.s32.f32 %v5757
        %v5886 = vcvt.s32.f32 %v5758
        %v5887 = vcvt.s32.f32 %v5759
        %v5888 = vcvt.s32.f32 %v5760
        %v5889 = vcvt.s32.f32 %v5761
        %v5890 = vcvt.s32.f32 %v5762
        %v5891 = vcvt.s32.f32 %v5763
        %v5892 = vcvt.s32.f32 %v5764
        %v5893 = vcvt.s32.f32 %v5765
        %v5894 = vcvt.s32.f32 %v5766
        %v5895 = vcvt.s32.f32 %v5767
        %v5896 = vcvt.s32.f32 %v5768
        %v5897 = vcvt.s32.f32 %v5769
        %v5898 = vcvt.s32.f32 %v5770
        %v5899 = vcvt.s32.f32 %v5771
        %v5900 = vcvt.s32.f32 %v5772
        %v5901 = vcvt.s32.f32 %v5773
        %v5902 = vcvt.s32.f32 %v5774
        %v5903 = vcvt.s32.f32 %v5775
        %v5904 = vcvt.s32.f32 %v5776
        %v5905 = vcvt.s32.f32 %v5777
        %v5906 = vcvt.s32.f32 %v5778
        %v5907 = vcvt.s32.f32 %v5779
        %v5908 = vcvt.s32.f32 %v5780
        %v5909 = vcvt.s32.f32 %v5781
        %v5910 = vcvt.s32.f32 %v5782
        %v5911 = vcvt.s32.f32 %v5783
        %v5912 = vcvt.s32.f32 %v5784
        %v5913 = vcvt.s32.f32 %v5785
        %v5914 = vcvt.s32.f32 %v5786
        %v5915 = vcvt.s32.f32 %v5787
        %v5916 = vcvt.s32.f32 %v5788
        %v5917 = vcvt.s32.f32 %v5789
        %v5918 = vcvt.s32.f32 %v5790
        %v5919 = vcvt.s32.f32 %v5791
        %v5920 = vcvt.s32.f32 %v5792
        %v5921 = vcvt.s32.f32 %v5793
        %v5922 = vcvt.s32.f32 %v5794
        %v5923 = vcvt.s32.f32 %v5795
        %v5924 = vcvt.s32.f32 %v5796
        %v5925 = vcvt.s32.f32 %v5797
        %v5926 = vcvt.s32.f32 %v5798
        %v5927 = vcvt.s32.f32 %v5799
        %v5928 = vcvt.s32.f32 %v5800
        %v5929 = vcvt.s32.f32 %v5801
        %v5930 = vcvt.s32.f32 %v5802
        %v5931 = vcvt.s32.f32 %v5803
        %v5932 = vcvt.s32.f32 %v5804
        %v5933 = vcvt.s32.f32 %v5805
        %v5934 = vcvt.s32.f32 %v5806
        %v5935 = vcvt.s32.f32 %v5807
        %v5936 = vcvt.s32.f32 %v5808
        %v5937 = vcvt.s32.f32 %v5809
        %v5938 = vcvt.s32.f32 %v5810
        %v5939 = vcvt.s32.f32 %v5811
        %v5940 = vcvt.s32.f32 %v5812
        %v5941 = vcvt.s32.f32 %v5813
        %v5942 = vcvt.s32.f32 %v5814
        %v5943 = vpack.c.bf16 %v5819, %v5815
        %v5944 = vpack.c.bf16 %v5820, %v5816
        %v5945 = vpack.c.bf16 %v5821, %v5817
        %v5946 = vpack.c.bf16 %v5822, %v5818
        %v5947 = vpack.c.bf16 %v5827, %v5823
        %v5948 = vpack.c.bf16 %v5828, %v5824
        %v5949 = vpack.c.bf16 %v5829, %v5825
        %v5950 = vpack.c.bf16 %v5830, %v5826
        %v5951 = vpack.c.bf16 %v5835, %v5831
        %v5952 = vpack.c.bf16 %v5836, %v5832
        %v5953 = vpack.c.bf16 %v5837, %v5833
        %v5954 = vpack.c.bf16 %v5838, %v5834
        %v5955 = vpack.c.bf16 %v5843, %v5839
        %v5956 = vpack.c.bf16 %v5844, %v5840
        %v5957 = vpack.c.bf16 %v5845, %v5841
        %v5958 = vpack.c.bf16 %v5846, %v5842
        %v5959 = vpack.c.bf16 %v5851, %v5847
        %v5960 = vpack.c.bf16 %v5852, %v5848
        %v5961 = vpack.c.bf16 %v5853, %v5849
        %v5962 = vpack.c.bf16 %v5854, %v5850
        %v5963 = vpack.c.bf16 %v5859, %v5855
        %v5964 = vpack.c.bf16 %v5860, %v5856
        %v5965 = vpack.c.bf16 %v5861, %v5857
        %v5966 = vpack.c.bf16 %v5862, %v5858
        %v5967 = vpack.c.bf16 %v5867, %v5863
        %v5968 = vpack.c.bf16 %v5868, %v5864
        %v5969 = vpack.c.bf16 %v5869, %v5865
        %v5970 = vpack.c.bf16 %v5870, %v5866
        %v5971 = vpack.c.bf16 %v5875, %v5871
        %v5972 = vpack.c.bf16 %v5876, %v5872
        %v5973 = vpack.c.bf16 %v5877, %v5873
        %v5974 = vpack.c.bf16 %v5878, %v5874
        %v5975 = vpack.c.bf16 %v5883, %v5879
        %v5976 = vpack.c.bf16 %v5884, %v5880
        %v5977 = vpack.c.bf16 %v5885, %v5881
        %v5978 = vpack.c.bf16 %v5886, %v5882
        %v5979 = vpack.c.bf16 %v5891, %v5887
        %v5980 = vpack.c.bf16 %v5892, %v5888
        %v5981 = vpack.c.bf16 %v5893, %v5889
        %v5982 = vpack.c.bf16 %v5894, %v5890
        %v5983 = vpack.c.bf16 %v5899, %v5895
        %v5984 = vpack.c.bf16 %v5900, %v5896
        %v5985 = vpack.c.bf16 %v5901, %v5897
        %v5986 = vpack.c.bf16 %v5902, %v5898
        %v5987 = vpack.c.bf16 %v5907, %v5903
        %v5988 = vpack.c.bf16 %v5908, %v5904
        %v5989 = vpack.c.bf16 %v5909, %v5905
        %v5990 = vpack.c.bf16 %v5910, %v5906
        %v5991 = vpack.c.bf16 %v5915, %v5911
        %v5992 = vpack.c.bf16 %v5916, %v5912
        %v5993 = vpack.c.bf16 %v5917, %v5913
        %v5994 = vpack.c.bf16 %v5918, %v5914
        %v5995 = vpack.c.bf16 %v5923, %v5919
        %v5996 = vpack.c.bf16 %v5924, %v5920
        %v5997 = vpack.c.bf16 %v5925, %v5921
        %v5998 = vpack.c.bf16 %v5926, %v5922
        %v5999 = vpack.c.bf16 %v5931, %v5927
        %v6000 = vpack.c.bf16 %v5932, %v5928
        %v6001 = vpack.c.bf16 %v5933, %v5929
        %v6002 = vpack.c.bf16 %v5934, %v5930
        %v6003 = vpack.c.bf16 %v5939, %v5935
        %v6004 = vpack.c.bf16 %v5940, %v5936
        %v6005 = vpack.c.bf16 %v5941, %v5937
        %v6006 = vpack.c.bf16 %v5942, %v5938
        %v6007 = vunpack.c.l.bf16 %v5943
        %v6008 = vunpack.c.l.bf16 %v5944
        %v6009 = vunpack.c.l.bf16 %v5945
        %v6010 = vunpack.c.l.bf16 %v5946
        %v6011 = vunpack.c.h.bf16 %v5943
        %v6012 = vunpack.c.h.bf16 %v5944
        %v6013 = vunpack.c.h.bf16 %v5945
        %v6014 = vunpack.c.h.bf16 %v5946
        %v6015 = vunpack.c.l.bf16 %v5947
        %v6016 = vunpack.c.l.bf16 %v5948
        %v6017 = vunpack.c.l.bf16 %v5949
        %v6018 = vunpack.c.l.bf16 %v5950
        %v6019 = vunpack.c.h.bf16 %v5947
        %v6020 = vunpack.c.h.bf16 %v5948
        %v6021 = vunpack.c.h.bf16 %v5949
        %v6022 = vunpack.c.h.bf16 %v5950
        %v6023 = vunpack.c.l.bf16 %v5951
        %v6024 = vunpack.c.l.bf16 %v5952
        %v6025 = vunpack.c.l.bf16 %v5953
        %v6026 = vunpack.c.l.bf16 %v5954
        %v6027 = vunpack.c.h.bf16 %v5951
        %v6028 = vunpack.c.h.bf16 %v5952
        %v6029 = vunpack.c.h.bf16 %v5953
        %v6030 = vunpack.c.h.bf16 %v5954
        %v6031 = vunpack.c.l.bf16 %v5955
        %v6032 = vunpack.c.l.bf16 %v5956
        %v6033 = vunpack.c.l.bf16 %v5957
        %v6034 = vunpack.c.l.bf16 %v5958
        %v6035 = vunpack.c.h.bf16 %v5955
        %v6036 = vunpack.c.h.bf16 %v5956
        %v6037 = vunpack.c.h.bf16 %v5957
        %v6038 = vunpack.c.h.bf16 %v5958
        %v6039 = vunpack.c.l.bf16 %v5959
        %v6040 = vunpack.c.l.bf16 %v5960
        %v6041 = vunpack.c.l.bf16 %v5961
        %v6042 = vunpack.c.l.bf16 %v5962
        %v6043 = vunpack.c.h.bf16 %v5959
        %v6044 = vunpack.c.h.bf16 %v5960
        %v6045 = vunpack.c.h.bf16 %v5961
        %v6046 = vunpack.c.h.bf16 %v5962
        %v6047 = vunpack.c.l.bf16 %v5963
        %v6048 = vunpack.c.l.bf16 %v5964
        %v6049 = vunpack.c.l.bf16 %v5965
        %v6050 = vunpack.c.l.bf16 %v5966
        %v6051 = vunpack.c.h.bf16 %v5963
        %v6052 = vunpack.c.h.bf16 %v5964
        %v6053 = vunpack.c.h.bf16 %v5965
        %v6054 = vunpack.c.h.bf16 %v5966
        %v6055 = vunpack.c.l.bf16 %v5967
        %v6056 = vunpack.c.l.bf16 %v5968
        %v6057 = vunpack.c.l.bf16 %v5969
        %v6058 = vunpack.c.l.bf16 %v5970
        %v6059 = vunpack.c.h.bf16 %v5967
        %v6060 = vunpack.c.h.bf16 %v5968
        %v6061 = vunpack.c.h.bf16 %v5969
        %v6062 = vunpack.c.h.bf16 %v5970
        %v6063 = vunpack.c.l.bf16 %v5971
        %v6064 = vunpack.c.l.bf16 %v5972
        %v6065 = vunpack.c.l.bf16 %v5973
        %v6066 = vunpack.c.l.bf16 %v5974
        %v6067 = vunpack.c.h.bf16 %v5971
        %v6068 = vunpack.c.h.bf16 %v5972
        %v6069 = vunpack.c.h.bf16 %v5973
        %v6070 = vunpack.c.h.bf16 %v5974
        %v6071 = vunpack.c.l.bf16 %v5975
        %v6072 = vunpack.c.l.bf16 %v5976
        %v6073 = vunpack.c.l.bf16 %v5977
        %v6074 = vunpack.c.l.bf16 %v5978
        %v6075 = vunpack.c.h.bf16 %v5975
        %v6076 = vunpack.c.h.bf16 %v5976
        %v6077 = vunpack.c.h.bf16 %v5977
        %v6078 = vunpack.c.h.bf16 %v5978
        %v6079 = vunpack.c.l.bf16 %v5979
        %v6080 = vunpack.c.l.bf16 %v5980
        %v6081 = vunpack.c.l.bf16 %v5981
        %v6082 = vunpack.c.l.bf16 %v5982
        %v6083 = vunpack.c.h.bf16 %v5979
        %v6084 = vunpack.c.h.bf16 %v5980
        %v6085 = vunpack.c.h.bf16 %v5981
        %v6086 = vunpack.c.h.bf16 %v5982
        %v6087 = vunpack.c.l.bf16 %v5983
        %v6088 = vunpack.c.l.bf16 %v5984
        %v6089 = vunpack.c.l.bf16 %v5985
        %v6090 = vunpack.c.l.bf16 %v5986
        %v6091 = vunpack.c.h.bf16 %v5983
        %v6092 = vunpack.c.h.bf16 %v5984
        %v6093 = vunpack.c.h.bf16 %v5985
        %v6094 = vunpack.c.h.bf16 %v5986
        %v6095 = vunpack.c.l.bf16 %v5987
        %v6096 = vunpack.c.l.bf16 %v5988
        %v6097 = vunpack.c.l.bf16 %v5989
        %v6098 = vunpack.c.l.bf16 %v5990
        %v6099 = vunpack.c.h.bf16 %v5987
        %v6100 = vunpack.c.h.bf16 %v5988
        %v6101 = vunpack.c.h.bf16 %v5989
        %v6102 = vunpack.c.h.bf16 %v5990
        %v6103 = vunpack.c.l.bf16 %v5991
        %v6104 = vunpack.c.l.bf16 %v5992
        %v6105 = vunpack.c.l.bf16 %v5993
        %v6106 = vunpack.c.l.bf16 %v5994
        %v6107 = vunpack.c.h.bf16 %v5991
        %v6108 = vunpack.c.h.bf16 %v5992
        %v6109 = vunpack.c.h.bf16 %v5993
        %v6110 = vunpack.c.h.bf16 %v5994
        %v6111 = vunpack.c.l.bf16 %v5995
        %v6112 = vunpack.c.l.bf16 %v5996
        %v6113 = vunpack.c.l.bf16 %v5997
        %v6114 = vunpack.c.l.bf16 %v5998
        %v6115 = vunpack.c.h.bf16 %v5995
        %v6116 = vunpack.c.h.bf16 %v5996
        %v6117 = vunpack.c.h.bf16 %v5997
        %v6118 = vunpack.c.h.bf16 %v5998
        %v6119 = vunpack.c.l.bf16 %v5999
        %v6120 = vunpack.c.l.bf16 %v6000
        %v6121 = vunpack.c.l.bf16 %v6001
        %v6122 = vunpack.c.l.bf16 %v6002
        %v6123 = vunpack.c.h.bf16 %v5999
        %v6124 = vunpack.c.h.bf16 %v6000
        %v6125 = vunpack.c.h.bf16 %v6001
        %v6126 = vunpack.c.h.bf16 %v6002
        %v6127 = vunpack.c.l.bf16 %v6003
        %v6128 = vunpack.c.l.bf16 %v6004
        %v6129 = vunpack.c.l.bf16 %v6005
        %v6130 = vunpack.c.l.bf16 %v6006
        %v6131 = vunpack.c.h.bf16 %v6003
        %v6132 = vunpack.c.h.bf16 %v6004
        %v6133 = vunpack.c.h.bf16 %v6005
        %v6134 = vunpack.c.h.bf16 %v6006
        %6135 = vst [vmem:[%s480] sm:$0xff] %v6007
        %6136 = vst [vmem:[%s480 + $0x8] sm:$0xff] %v6008
        %6137 = vst [vmem:[%s480 + $0x10] sm:$0xff] %v6009
        %6138 = vst [vmem:[%s480 + $0x18] sm:$0xff] %v6010
        %6139 = vst [vmem:[%s480 + $0x20] sm:$0xff] %v6011
        %6140 = vst [vmem:[%s480 + $0x28] sm:$0xff] %v6012
        %6141 = vst [vmem:[%s480 + $0x30] sm:$0xff] %v6013
        %6142 = vst [vmem:[%s480 + $0x38] sm:$0xff] %v6014
        %6143 = vst [vmem:[%s480 + $0x40] sm:$0xff] %v6015
        %6144 = vst [vmem:[%s480 + $0x48] sm:$0xff] %v6016
        %6145 = vst [vmem:[%s480 + $0x50] sm:$0xff] %v6017
        %6146 = vst [vmem:[%s480 + $0x58] sm:$0xff] %v6018
        %6147 = vst [vmem:[%s480 + $0x60] sm:$0xff] %v6019
        %6148 = vst [vmem:[%s480 + $0x68] sm:$0xff] %v6020
        %6149 = vst [vmem:[%s480 + $0x70] sm:$0xff] %v6021
        %6150 = vst [vmem:[%s480 + $0x78] sm:$0xff] %v6022
        %6151 = vst [vmem:[%s480 + $0x80] sm:$0xff] %v6023
        %6152 = vst [vmem:[%s480 + $0x88] sm:$0xff] %v6024
        %6153 = vst [vmem:[%s480 + $0x90] sm:$0xff] %v6025
        %6154 = vst [vmem:[%s480 + $0x98] sm:$0xff] %v6026
        %6155 = vst [vmem:[%s480 + $0xa0] sm:$0xff] %v6027
        %6156 = vst [vmem:[%s480 + $0xa8] sm:$0xff] %v6028
        %6157 = vst [vmem:[%s480 + $0xb0] sm:$0xff] %v6029
        %6158 = vst [vmem:[%s480 + $0xb8] sm:$0xff] %v6030
        %6159 = vst [vmem:[%s480 + $0xc0] sm:$0xff] %v6031
        %6160 = vst [vmem:[%s480 + $0xc8] sm:$0xff] %v6032
        %6161 = vst [vmem:[%s480 + $0xd0] sm:$0xff] %v6033
        %6162 = vst [vmem:[%s480 + $0xd8] sm:$0xff] %v6034
        %6163 = vst [vmem:[%s480 + $0xe0] sm:$0xff] %v6035
        %6164 = vst [vmem:[%s480 + $0xe8] sm:$0xff] %v6036
        %6165 = vst [vmem:[%s480 + $0xf0] sm:$0xff] %v6037
        %6166 = vst [vmem:[%s480 + $0xf8] sm:$0xff] %v6038
        %6167 = vst [vmem:[%s480 + $0x100] sm:$0xff] %v6039
        %6168 = vst [vmem:[%s480 + $0x108] sm:$0xff] %v6040
        %6169 = vst [vmem:[%s480 + $0x110] sm:$0xff] %v6041
        %6170 = vst [vmem:[%s480 + $0x118] sm:$0xff] %v6042
        %6171 = vst [vmem:[%s480 + $0x120] sm:$0xff] %v6043
        %6172 = vst [vmem:[%s480 + $0x128] sm:$0xff] %v6044
        %6173 = vst [vmem:[%s480 + $0x130] sm:$0xff] %v6045
        %6174 = vst [vmem:[%s480 + $0x138] sm:$0xff] %v6046
        %6175 = vst [vmem:[%s480 + $0x140] sm:$0xff] %v6047
        %6176 = vst [vmem:[%s480 + $0x148] sm:$0xff] %v6048
        %6177 = vst [vmem:[%s480 + $0x150] sm:$0xff] %v6049
        %6178 = vst [vmem:[%s480 + $0x158] sm:$0xff] %v6050
        %6179 = vst [vmem:[%s480 + $0x160] sm:$0xff] %v6051
        %6180 = vst [vmem:[%s480 + $0x168] sm:$0xff] %v6052
        %6181 = vst [vmem:[%s480 + $0x170] sm:$0xff] %v6053
        %6182 = vst [vmem:[%s480 + $0x178] sm:$0xff] %v6054
        %6183 = vst [vmem:[%s480 + $0x180] sm:$0xff] %v6055
        %6184 = vst [vmem:[%s480 + $0x188] sm:$0xff] %v6056
        %6185 = vst [vmem:[%s480 + $0x190] sm:$0xff] %v6057
        %6186 = vst [vmem:[%s480 + $0x198] sm:$0xff] %v6058
        %6187 = vst [vmem:[%s480 + $0x1a0] sm:$0xff] %v6059
        %6188 = vst [vmem:[%s480 + $0x1a8] sm:$0xff] %v6060
        %6189 = vst [vmem:[%s480 + $0x1b0] sm:$0xff] %v6061
        %6190 = vst [vmem:[%s480 + $0x1b8] sm:$0xff] %v6062
        %6191 = vst [vmem:[%s480 + $0x1c0] sm:$0xff] %v6063
        %6192 = vst [vmem:[%s480 + $0x1c8] sm:$0xff] %v6064
        %6193 = vst [vmem:[%s480 + $0x1d0] sm:$0xff] %v6065
        %6194 = vst [vmem:[%s480 + $0x1d8] sm:$0xff] %v6066
        %6195 = vst [vmem:[%s480 + $0x1e0] sm:$0xff] %v6067
        %6196 = vst [vmem:[%s480 + $0x1e8] sm:$0xff] %v6068
        %6197 = vst [vmem:[%s480 + $0x1f0] sm:$0xff] %v6069
        %6198 = vst [vmem:[%s480 + $0x1f8] sm:$0xff] %v6070
        %6199 = vst [vmem:[%s480 + $0x200] sm:$0xff] %v6071
        %6200 = vst [vmem:[%s480 + $0x208] sm:$0xff] %v6072
        %6201 = vst [vmem:[%s480 + $0x210] sm:$0xff] %v6073
        %6202 = vst [vmem:[%s480 + $0x218] sm:$0xff] %v6074
        %6203 = vst [vmem:[%s480 + $0x220] sm:$0xff] %v6075
        %6204 = vst [vmem:[%s480 + $0x228] sm:$0xff] %v6076
        %6205 = vst [vmem:[%s480 + $0x230] sm:$0xff] %v6077
        %6206 = vst [vmem:[%s480 + $0x238] sm:$0xff] %v6078
        %6207 = vst [vmem:[%s480 + $0x240] sm:$0xff] %v6079
        %6208 = vst [vmem:[%s480 + $0x248] sm:$0xff] %v6080
        %6209 = vst [vmem:[%s480 + $0x250] sm:$0xff] %v6081
        %6210 = vst [vmem:[%s480 + $0x258] sm:$0xff] %v6082
        %6211 = vst [vmem:[%s480 + $0x260] sm:$0xff] %v6083
        %6212 = vst [vmem:[%s480 + $0x268] sm:$0xff] %v6084
        %6213 = vst [vmem:[%s480 + $0x270] sm:$0xff] %v6085
        %6214 = vst [vmem:[%s480 + $0x278] sm:$0xff] %v6086
        %6215 = vst [vmem:[%s480 + $0x280] sm:$0xff] %v6087
        %6216 = vst [vmem:[%s480 + $0x288] sm:$0xff] %v6088
        %6217 = vst [vmem:[%s480 + $0x290] sm:$0xff] %v6089
        %6218 = vst [vmem:[%s480 + $0x298] sm:$0xff] %v6090
        %6219 = vst [vmem:[%s480 + $0x2a0] sm:$0xff] %v6091
        %6220 = vst [vmem:[%s480 + $0x2a8] sm:$0xff] %v6092
        %6221 = vst [vmem:[%s480 + $0x2b0] sm:$0xff] %v6093
        %6222 = vst [vmem:[%s480 + $0x2b8] sm:$0xff] %v6094
        %6223 = vst [vmem:[%s480 + $0x2c0] sm:$0xff] %v6095
        %6224 = vst [vmem:[%s480 + $0x2c8] sm:$0xff] %v6096
        %6225 = vst [vmem:[%s480 + $0x2d0] sm:$0xff] %v6097
        %6226 = vst [vmem:[%s480 + $0x2d8] sm:$0xff] %v6098
        %6227 = vst [vmem:[%s480 + $0x2e0] sm:$0xff] %v6099
        %6228 = vst [vmem:[%s480 + $0x2e8] sm:$0xff] %v6100
        %6229 = vst [vmem:[%s480 + $0x2f0] sm:$0xff] %v6101
        %6230 = vst [vmem:[%s480 + $0x2f8] sm:$0xff] %v6102
        %6231 = vst [vmem:[%s480 + $0x300] sm:$0xff] %v6103
        %6232 = vst [vmem:[%s480 + $0x308] sm:$0xff] %v6104
        %6233 = vst [vmem:[%s480 + $0x310] sm:$0xff] %v6105
        %6234 = vst [vmem:[%s480 + $0x318] sm:$0xff] %v6106
        %6235 = vst [vmem:[%s480 + $0x320] sm:$0xff] %v6107
        %6236 = vst [vmem:[%s480 + $0x328] sm:$0xff] %v6108
        %6237 = vst [vmem:[%s480 + $0x330] sm:$0xff] %v6109
        %6238 = vst [vmem:[%s480 + $0x338] sm:$0xff] %v6110
        %6239 = vst [vmem:[%s480 + $0x340] sm:$0xff] %v6111
        %6240 = vst [vmem:[%s480 + $0x348] sm:$0xff] %v6112
        %6241 = vst [vmem:[%s480 + $0x350] sm:$0xff] %v6113
        %6242 = vst [vmem:[%s480 + $0x358] sm:$0xff] %v6114
        %6243 = vst [vmem:[%s480 + $0x360] sm:$0xff] %v6115
        %6244 = vst [vmem:[%s480 + $0x368] sm:$0xff] %v6116
        %6245 = vst [vmem:[%s480 + $0x370] sm:$0xff] %v6117
        %6246 = vst [vmem:[%s480 + $0x378] sm:$0xff] %v6118
        %6247 = vst [vmem:[%s480 + $0x380] sm:$0xff] %v6119
        %6248 = vst [vmem:[%s480 + $0x388] sm:$0xff] %v6120
        %6249 = vst [vmem:[%s480 + $0x390] sm:$0xff] %v6121
        %6250 = vst [vmem:[%s480 + $0x398] sm:$0xff] %v6122
        %6251 = vst [vmem:[%s480 + $0x3a0] sm:$0xff] %v6123
        %6252 = vst [vmem:[%s480 + $0x3a8] sm:$0xff] %v6124
        %6253 = vst [vmem:[%s480 + $0x3b0] sm:$0xff] %v6125
        %6254 = vst [vmem:[%s480 + $0x3b8] sm:$0xff] %v6126
        %6255 = vst [vmem:[%s480 + $0x3c0] sm:$0xff] %v6127
        %6256 = vst [vmem:[%s480 + $0x3c8] sm:$0xff] %v6128
        %6257 = vst [vmem:[%s480 + $0x3d0] sm:$0xff] %v6129
        %6258 = vst [vmem:[%s480 + $0x3d8] sm:$0xff] %v6130
        %6259 = vst [vmem:[%s480 + $0x3e0] sm:$0xff] %v6131
        %6260 = vst [vmem:[%s480 + $0x3e8] sm:$0xff] %v6132
        %6261 = vst [vmem:[%s480 + $0x3f0] sm:$0xff] %v6133
        %6262 = vst [vmem:[%s480 + $0x3f8] sm:$0xff] %v6134
        %s6263 = sand.u32 %s199, 1
        %s6264 = scalar_lea.sflag [#allocation4], %s6263
        %s6265 = sand.u32 %s199, 1
        %s6266 = smul.addr %s6265, 1024
        %s6267 = scalar_lea.vmem [#allocation14], %s6266
        // Predicated region
        $region77: #{tpu_custom_call.1} parent=47 // pred_check
          %p6268 = pneg %p209
        $region78: #{tpu_custom_call.1} parent=47 // pred_check_branch
          %6270 = sbr.rel (%p6268) target = $region80
        $region79: #{tpu_custom_call.1} parent=47 // pred_region
          %s6271 = smul.u32 32, %s29
          %s6273 = ssub.s32 16384, 16384
          %6274 = vsyncadd %s6264, %s6273
          %s6275 = smul.addr %s6271, 4
          %s6276 = smul.addr %s6275, 128
          %s6277 = scalar_lea.hbm %s7, %s6276
          %s6278 = sshll.u32 %s6267, 4
          %s6279 = int_to_ptr.vmem [resolvable:$true] %s6278
          %6284 = dma.vmem_to_hbm [thread:$0]  %s6279, 16384, %s6277, %s6264, 512, 512, 32
        $region80: #{tpu_custom_call.1} parent=47 // pred_fallthru
          _
      $region48: #{tpu_custom_call.1} parent=5 // pred_fallthru
        _
      %p6285 = scmp.le.s32.totalorder 2, %s24
      // Predicated region
      $region81: #{tpu_custom_call.1} parent=5 // pred_check
        %p6286 = pneg %p6285
      $region82: #{tpu_custom_call.1} parent=5 // pred_check_branch
        %6288 = sbr.rel (%p6286) target = $region84
      $region83: #{tpu_custom_call.1} parent=5 // pred_region
        %s6289 = ssub.s32 %s24, 2
        // Predicated region
        $region85: #{tpu_custom_call.1} parent=83 // pred_check
          %p6290 = pneg %p215
        $region86: #{tpu_custom_call.1} parent=83 // pred_check_branch
          %6292 = sbr.rel (%p6290) target = $region88
        $region87: #{tpu_custom_call.1} parent=83 // pred_region
          %s6293 = sand.u32 %s200, 1
          %s6294 = scalar_lea.sflag [#allocation4], %s6293
          %s6295 = sand.u32 %s200, 1
          %s6296 = smul.addr %s6295, 1024
          %s6297 = scalar_lea.vmem [#allocation14], %s6296
          %6298 = dma.done %s6294, 16384
        $region88: #{tpu_custom_call.1} parent=83 // pred_fallthru
          _
      $region84: #{tpu_custom_call.1} parent=5 // pred_fallthru
        _
    $region6: #{tpu_custom_call.1} parent=1 // loop_footer
      %s28 = sadd.s32 1, %s24
    $region7: #{tpu_custom_call.1} parent=1 // loop_footer_branch
      %23 = sbr.rel target = $region3
    $region8: #{tpu_custom_call.1} parent=1 // loop_exit
      _
    %6299 = vsyncpa [#allocation3], 1
    %s6300 = scalar_lea.sflag [#allocation3], 1
    %6301 = vsyncpa %s6300, 1
    %6302 = vsyncpa [#allocation6], 1
    %6303 = vsyncpa [#allocation9], 1
    %6304 = vsyncpa [#allocation12], 1
    %s6305 = scalar_lea.sflag [#allocation12], 1
    %6306 = vsyncpa %s6305, 1
    %6307 = vsyncpa [#allocation4], 1
    %s6308 = scalar_lea.sflag [#allocation4], 1
    %6309 = vsyncpa %s6308, 1

</llo_original>
